<compile_context>
chip_gen: v7x
topology: tpu7x:2x2x1
jax: 0.10.0
libtpu: 0.0.40
codegen_flags: <defaults>
</compile_context>

<pallas_src>
import functools
import math

import jax
import jax.numpy as jnp
import numpy as np
from jax import lax
from jax.experimental import pallas as pl
from jax.experimental.pallas import tpu as pltpu


_ROW_BLOCK = 1024                       # target rows per grid step (multiple of 8)
_VMEM_LIMIT = 64 * 1024 * 1024


def _round_up(x, m):
    return -(-x // m) * m


# ----------------------------- Pallas kernels ------------------------------ #

def _stage_kernel(x_ref, w1_ref, wd_ref, t2_ref, s_ref, wsc_ref, o_ref, y_scr, *, wp):
    """Fused UP_layer + shortcut residual for one row block.

    x_ref : (Mp, Cin+1)  bf16  padded/flattened input; last channel = interior mask
    w1_ref: (Cin+1, Cmid) bf16 1x1 weights, BN1 scale folded; mask row = BN1 shift
    wd_ref: (9*Cmid, 4*Cout) bf16 deconv weights grouped (dr, dc, ci) x (phase, co)
    t2_ref: (1, 4*Cout) f32  BN2 shift (tiled per phase)
    s_ref : (tm, 4*Cs) bf16  phase-stacked shortcut input block
    wsc_ref:(4*Cs, 4*Cout) bf16 block-diagonal shortcut 1x1
    o_ref : (tm, 4*Cout) bf16 phase-stacked output block
    y_scr : (tm + 2*wp, 3*Cmid) bf16 dc-widened intermediate
    """
    tm = o_ref.shape[0]
    nw = y_scr.shape[0]                 # tm + 2*wp
    rows = nw + 2                       # block rows + halo needed by the taps
    row0 = pl.multiple_of(pl.program_id(0) * tm, 8)

    # 1x1 conv + BN1 + ReLU (mask & BN1 shift folded into the extra channel).
    xa = x_ref[pl.ds(row0, rows), :]
    y = jnp.dot(xa, w1_ref[...], preferred_element_type=jnp.float32)
    yb = jnp.maximum(y, 0.0).astype(jnp.bfloat16)

    # dc-widened intermediate: row r holds [y[r], y[r+1], y[r+2]].
    y_scr[...] = jnp.concatenate([yb[0:nw], yb[1:nw + 1], yb[2:nw + 2]], axis=1)

    # 4x4/stride-2 transposed conv == 3 matmuls (one per 3x3-window row), K=3*Cmid.
    kw = y_scr.shape[1]
    acc = jnp.dot(y_scr[0:tm, :], wd_ref[0:kw, :],
                  preferred_element_type=jnp.float32)
    acc += jnp.dot(y_scr[wp:wp + tm, :], wd_ref[kw:2 * kw, :],
                   preferred_element_type=jnp.float32)
    acc += jnp.dot(y_scr[2 * wp:2 * wp + tm, :], wd_ref[2 * kw:3 * kw, :],
                   preferred_element_type=jnp.float32)

    up = jnp.maximum(acc + t2_ref[...], 0.0)                 # BN2 shift + ReLU
    sc = jnp.dot(s_ref[...], wsc_ref[...], preferred_element_type=jnp.float32)
    o_ref[...] = (up + sc).astype(o_ref.dtype)               # residual add


def _head_kernel(x_ref, w3_ref, b1_ref, w2_ref, b2_ref, o_ref, x_scr, *, wp):
    """Fused heatmap/offset/wh heads for one row block: shared-input 3x3 conv
    (three heads' Cout concatenated along lanes, dc-widened so K=3*Cin) + bias
    + ReLU, then one block-diagonal 1x1 projection padded to 128 output lanes."""
    tm = o_ref.shape[0]
    nw = x_scr.shape[0]                 # tm + 2*wp
    rows = nw + 2
    row0 = pl.multiple_of(pl.program_id(0) * tm, 8)

    xb = x_ref[pl.ds(row0, rows), :]
    x_scr[...] = jnp.concatenate([xb[0:nw], xb[1:nw + 1], xb[2:nw + 2]], axis=1)

    kw = x_scr.shape[1]
    acc = jnp.dot(x_scr[0:tm, :], w3_ref[0:kw, :],
                  preferred_element_type=jnp.float32)
    acc += jnp.dot(x_scr[wp:wp + tm, :], w3_ref[kw:2 * kw, :],
                   preferred_element_type=jnp.float32)
    acc += jnp.dot(x_scr[2 * wp:2 * wp + tm, :], w3_ref[2 * kw:3 * kw, :],
                   preferred_element_type=jnp.float32)
    h = jnp.maximum(acc + b1_ref[...], 0.0).astype(jnp.bfloat16)
    o_ref[...] = jnp.dot(h, w2_ref[...], preferred_element_type=jnp.float32) + b2_ref[...]


# --------------------------- XLA-side glue helpers -------------------------- #

def _flatten_padded(x_nhwc, wp, total_rows, *, append_mask):
    """Zero-pad spatially (1 top/left, up to (H+2, wp) bottom/right), optionally
    append a 1.0 interior-mask channel, flatten rows, pad with zero tail rows."""
    B, H, W, C = x_nhwc.shape
    hp = H + 2
    if append_mask:
        x_nhwc = jnp.concatenate(
            [x_nhwc, jnp.ones((B, H, W, 1), x_nhwc.dtype)], axis=-1)
        C += 1
    xp = jnp.pad(x_nhwc, ((0, 0), (1, 1), (1, wp - W - 1), (0, 0)))
    xf = xp.reshape(B * hp * wp, C)
    return jnp.pad(xf, ((0, total_rows - xf.shape[0]), (0, 0)))


def _phase_stack(x):
    """(B, 2H, 2W, C) -> (B, H, W, 4C); channel block p = 2a+b holds x[:, 2i+a, 2j+b]."""
    B, H2, W2, C = x.shape
    H, W = H2 // 2, W2 // 2
    y = x.reshape(B, H, 2, W, 2, C)
    y = jnp.transpose(y, (0, 1, 3, 2, 4, 5))
    return y.reshape(B, H, W, 4 * C)


def _phase_unstack(x, cout):
    """(B, H, W, 4*cout) -> (B, 2H, 2W, cout) (inverse of _phase_stack)."""
    B, H, W, _ = x.shape
    y = x.reshape(B, H, W, 2, 2, cout)
    y = jnp.transpose(y, (0, 1, 3, 2, 4, 5))
    return y.reshape(B, 2 * H, 2 * W, cout)


# ------------------------------ stage / heads ------------------------------- #

def _stage_call(x_flat, s_flat, sp, *, nblk, tm, wp, nout):
    full = lambda a: pl.BlockSpec(a.shape, lambda i: (0, 0))
    return pl.pallas_call(
        functools.partial(_stage_kernel, wp=wp),
        out_shape=jax.ShapeDtypeStruct((nblk * tm, nout), jnp.bfloat16),
        grid=(nblk,),
        in_specs=[full(x_flat), full(sp["w1"]), full(sp["wd"]), full(sp["t2"]),
                  pl.BlockSpec((tm, s_flat.shape[1]), lambda i: (i, 0)),
                  full(sp["wsc"])],
        out_specs=pl.BlockSpec((tm, nout), lambda i: (i, 0)),
        scratch_shapes=[pltpu.VMEM((tm + 2 * wp, 3 * sp["cmid"]), jnp.bfloat16)],
        compiler_params=pltpu.CompilerParams(
            dimension_semantics=("parallel",),
            vmem_limit_bytes=_VMEM_LIMIT),
    )(x_flat, sp["w1"], sp["wd"], sp["t2"], s_flat, sp["wsc"])


def _up_shortcut_stage(x, short, sp):
    """x: (B,H,W,Cin) up-layer input; short: (B,2H,2W,Cs). Returns (B,2H,2W,Cout) bf16."""
    B, H, W, _ = x.shape
    hp, wp = H + 2, _round_up(W + 2, 8)
    mq = B * hp * wp
    nblk = max(1, -(-mq // _ROW_BLOCK))
    tm = _round_up(-(-mq // nblk), 8)
    rows_out = nblk * tm
    tail = 2 * wp + 2
    x_flat = _flatten_padded(x, wp, rows_out + tail,
                             append_mask=True).astype(jnp.bfloat16)
    s4 = jnp.pad(_phase_stack(short), ((0, 0), (0, hp - H), (0, wp - W), (0, 0)))
    s_flat = jnp.pad(s4.reshape(mq, s4.shape[-1]),
                     ((0, rows_out - mq), (0, 0))).astype(jnp.bfloat16)
    nout = 4 * sp["cout"]
    out = _stage_call(x_flat, s_flat, sp, nblk=nblk, tm=tm, wp=wp, nout=nout)
    out = out[:mq].reshape(B, hp, wp, nout)[:, :H, :W, :]
    return _phase_unstack(out, sp["cout"])


def _run_heads(x, hp_):
    """x: (B,H,W,64) -> (heatmap, offset, wh) in NHWC (f32)."""
    B, H, W, _ = x.shape
    hp, wp = H + 2, _round_up(W + 2, 8)
    mq = B * hp * wp
    nblk = max(1, -(-mq // _ROW_BLOCK))
    tm = _round_up(-(-mq // nblk), 8)
    rows_out = nblk * tm
    tail = 2 * wp + 2
    x_flat = _flatten_padded(x, wp, rows_out + tail,
                             append_mask=False).astype(jnp.bfloat16)
    npad = hp_["w2"].shape[1]
    full = lambda a: pl.BlockSpec(a.shape, lambda i: (0, 0))
    out = pl.pallas_call(
        functools.partial(_head_kernel, wp=wp),
        out_shape=jax.ShapeDtypeStruct((rows_out, npad), jnp.float32),
        grid=(nblk,),
        in_specs=[full(x_flat), full(hp_["w3"]), full(hp_["b1"]),
                  full(hp_["w2"]), full(hp_["b2"])],
        out_specs=pl.BlockSpec((tm, npad), lambda i: (i, 0)),
        scratch_shapes=[pltpu.VMEM((tm + 2 * wp, 3 * hp_["cin"]), jnp.bfloat16)],
        compiler_params=pltpu.CompilerParams(
            dimension_semantics=("parallel",),
            vmem_limit_bytes=_VMEM_LIMIT),
    )(x_flat, hp_["w3"], hp_["b1"], hp_["w2"], hp_["b2"])
    out = out[:mq].reshape(B, hp, wp, npad)[:, :H, :W, :]
    nh, no, nw = hp_["splits"]
    return out[..., :nh], out[..., nh:nh + no], out[..., nh + no:nh + no + nw]


# --------------------------- parameter preparation -------------------------- #

def fold_bn(bn, eps=1e-5):
    scale = np.asarray(bn["gamma"]) / np.sqrt(np.asarray(bn["var"]) + eps)
    shift = np.asarray(bn["beta"]) - np.asarray(bn["mean"]) * scale
    return scale, shift


# For output row phase a and window row offset dr (3x3 window over the 1-padded
# intermediate), which transposed-conv kernel row kh contributes (missing = zero).
_KH_OF = {0: {0: 3, 1: 1}, 1: {1: 2, 2: 0}}


def _pack_up(up, wsc):
    """Fold BN into weights; build (dr, dc)-grouped deconv + block-diag shortcut."""
    w1 = np.asarray(up["w1"], np.float32)          # (Cin, Cmid)
    wt = np.asarray(up["wt"], np.float32)          # (Cmid, Cout, 4, 4) ConvTranspose layout
    cin, cmid = w1.shape
    cout = wt.shape[1]
    s1, t1 = fold_bn(up["bn1"])
    s2, t2 = fold_bn(up["bn2"])
    # 1x1 with BN1 scale folded; extra "interior mask" input row carries BN1 shift.
    w1a = np.concatenate([w1 * s1[None, :], t1.reshape(1, cmid)], axis=0)
    # deconv weights grouped (dr, dc, ci) x (phase, co), BN2 scale folded.
    wd = np.zeros((3, 3, cmid, 4, cout), np.float32)
    for a in (0, 1):
        for b in (0, 1):
            p = 2 * a + b
            for dr, kh in _KH_OF[a].items():
                for dc, kw in _KH_OF[b].items():
                    wd[dr, dc, :, p, :] = wt[:, :, kh, kw] * s2[None, :]
    wsc_np = np.asarray(wsc, np.float32)           # (Cs, Cout)
    cs = wsc_np.shape[0]
    wscb = np.zeros((4, cs, 4, cout), np.float32)
    for p in range(4):
        wscb[p, :, p, :] = wsc_np
    return dict(
        w1=jnp.asarray(w1a, jnp.bfloat16),
        wd=jnp.asarray(wd.reshape(9 * cmid, 4 * cout), jnp.bfloat16),
        t2=jnp.asarray(np.tile(t2, 4).reshape(1, 4 * cout), jnp.float32),
        wsc=jnp.asarray(wscb.reshape(4 * cs, 4 * cout), jnp.bfloat16),
        cmid=cmid, cout=cout)


def _pack_head(hm, off, wh, pad_to=128):
    w1h, w1o, w1w = (np.asarray(h["w1"], np.float32) for h in (hm, off, wh))
    cin, chid = w1h.shape[2], w1h.shape[3]
    w3 = np.concatenate([w1h.reshape(9 * cin, chid),
                         w1o.reshape(9 * cin, chid),
                         w1w.reshape(9 * cin, chid)], axis=1)
    b1 = np.concatenate([np.asarray(hm["b1"]), np.asarray(off["b1"]),
                         np.asarray(wh["b1"])]).astype(np.float32)
    w2h, w2o, w2w = (np.asarray(h["w2"], np.float32) for h in (hm, off, wh))
    nh, no, nw = w2h.shape[1], w2o.shape[1], w2w.shape[1]
    w2 = np.zeros((3 * chid, pad_to), np.float32)
    w2[0:chid, 0:nh] = w2h
    w2[chid:2 * chid, nh:nh + no] = w2o
    w2[2 * chid:3 * chid, nh + no:nh + no + nw] = w2w
    b2 = np.zeros((pad_to,), np.float32)
    b2[0:nh] = np.asarray(hm["b2"])
    b2[nh:nh + no] = np.asarray(off["b2"])
    b2[nh + no:nh + no + nw] = np.asarray(wh["b2"])
    return dict(w3=jnp.asarray(w3, jnp.bfloat16),
                b1=jnp.asarray(b1.reshape(1, 3 * chid), jnp.float32),
                w2=jnp.asarray(w2, jnp.bfloat16),
                b2=jnp.asarray(b2.reshape(1, pad_to), jnp.float32),
                cin=cin, splits=(nh, no, nw))


def prepare_params(params):
    return dict(
        s4=_pack_up(params["up5t4"], params["shortcut4"]),
        s3=_pack_up(params["up4t3"], params["shortcut3"]),
        s2=_pack_up(params["up3t2"], params["shortcut2"]),
        head=_pack_head(params["heatmap"], params["offset"], params["wh"]),
    )


# ------------------------------ parameter init ------------------------------ #

def bilinear_deconv_weight(key, cin, cout, k=4):
    """Mimics UP_layer's ConvTranspose2d init: bilinear kernel written into
    out-channel slot 0 for every input channel, small random elsewhere."""
    w = 0.001 * jax.random.normal(key, (cin, cout, k, k), jnp.float32)
    f = math.ceil(k / 2)
    c = (2 * f - 1 - f % 2) / (2.0 * f)
    bil = jnp.array([[(1 - abs(i / f - c)) * (1 - abs(j / f - c))
                      for j in range(k)] for i in range(k)], jnp.float32)
    return w.at[:, 0, :, :].set(bil)


def init_params(key, C5_inplanes=64, num_classes=4, out_channels=(32, 32, 64)):
    keys = iter(jax.random.split(key, 32))

    def nrm(shape, std=0.001):
        return std * jax.random.normal(next(keys), shape, jnp.float32)

    def bn(c):  # fresh BatchNorm2d, eval mode
        return dict(gamma=jnp.ones(c), beta=jnp.zeros(c),
                    mean=jnp.zeros(c), var=jnp.ones(c))

    def up(cin, cout):
        return dict(w1=nrm((cin, cout)), bn1=bn(cout),
                    wt=bilinear_deconv_weight(next(keys), cout, cout), bn2=bn(cout))

    def head(cin, hid, cout, std, last_bias):
        return dict(w1=nrm((3, 3, cin, hid), std), b1=jnp.zeros(hid),
                    w2=nrm((hid, cout), std),
                    b2=jnp.full((cout,), last_bias, jnp.float32))

    return dict(
        up5t4=up(C5_inplanes, out_channels[0]),
        up4t3=up(out_channels[0], out_channels[1]),
        up3t2=up(out_channels[1], out_channels[2]),
        shortcut4=nrm((C5_inplanes // 2, out_channels[0])),   # selayer=False: plain 1x1
        shortcut3=nrm((C5_inplanes // 4, out_channels[1])),
        shortcut2=nrm((C5_inplanes // 8, out_channels[2])),
        heatmap=head(64, out_channels[-1], num_classes, 0.01, -2.19),
        offset=head(64, out_channels[-1], 2, 0.001, 0.0),
        wh=head(64, out_channels[-1], 2, 0.001, 0.0),
    )
# TODO(synk): selayer=True path (SEBlock channel/spatial attention) not instantiated;
# this script builds the module with selayer=False, matching that configuration exactly.


# ------------------------------ forward pass -------------------------------- #

def ttf_head_forward(packed, C2, C3, C4, C5):
    """Inputs in NCHW (PyTorch convention); returns (heatmap, offset, wh) in NCHW."""
    to_nhwc = lambda t: jnp.transpose(t, (0, 2, 3, 1))
    to_nchw = lambda t: jnp.transpose(t, (0, 3, 1, 2))
    c2, c3, c4, c5 = map(to_nhwc, (C2, C3, C4, C5))

    c4_up = _up_shortcut_stage(c5, c4, packed["s4"])   # up5t4(C5) + shortcut4(C4)
    c3_up = _up_shortcut_stage(c4_up, c3, packed["s3"])
    c2_up = _up_shortcut_stage(c3_up, c2, packed["s2"])

    heatmap, offset, wh = _run_heads(c2_up, packed["head"])
    return to_nchw(heatmap), to_nchw(offset), to_nchw(wh)


# --------------------------- f32 XLA reference ------------------------------ #

def _ref_up(x, up):
    s1, t1 = fold_bn(up["bn1"])
    s2, t2 = fold_bn(up["bn2"])
    y = jnp.einsum("bhwc,cd->bhwd", x, jnp.asarray(up["w1"], jnp.float32))
    y = jnp.maximum(y * s1 + t1, 0.0)
    wt = jnp.asarray(up["wt"], jnp.float32)                  # (Cin, Cout, kh, kw)
    wf = jnp.transpose(wt[:, :, ::-1, ::-1], (1, 0, 2, 3))   # (Cout, Cin, kh, kw)
    z = lax.conv_general_dilated(jnp.transpose(y, (0, 3, 1, 2)), wf,
                                 window_strides=(1, 1), padding=((2, 2), (2, 2)),
                                 lhs_dilation=(2, 2),
                                 dimension_numbers=("NCHW", "OIHW", "NCHW"))
    z = jnp.transpose(z, (0, 2, 3, 1))
    return jnp.maximum(z * s2 + t2, 0.0)


def _ref_head(x, h):
    y = lax.conv_general_dilated(x, jnp.asarray(h["w1"], jnp.float32),
                                 window_strides=(1, 1), padding=((1, 1), (1, 1)),
                                 dimension_numbers=("NHWC", "HWIO", "NHWC"))
    y = jnp.maximum(y + h["b1"], 0.0)
    return jnp.einsum("bhwc,cd->bhwd", y, h["w2"]) + h["b2"]


def ttf_head_reference(params, C2, C3, C4, C5):
    to_nhwc = lambda t: jnp.transpose(t, (0, 2, 3, 1))
    to_nchw = lambda t: jnp.transpose(t, (0, 3, 1, 2))
    c2, c3, c4, c5 = map(to_nhwc, (C2, C3, C4, C5))
    sc = lambda x, w: jnp.einsum("bhwc,cd->bhwd", x, w)
    c4u = _ref_up(c5, params["up5t4"]) + sc(c4, params["shortcut4"])
    c3u = _ref_up(c4u, params["up4t3"]) + sc(c3, params["shortcut3"])
    c2u = _ref_up(c3u, params["up3t2"]) + sc(c2, params["shortcut2"])
    outs = tuple(_ref_head(c2u, params[k]) for k in ("heatmap", "offset", "wh"))
    return tuple(to_nchw(o) for o in outs)


# ---------------------------------- main ------------------------------------ #

if __name__ == "__main__":
    key = jax.random.PRNGKey(0)
    kp, k2, k3, k4, k5 = jax.random.split(key, 5)

    B = 2
    C5_inplanes = 64
    num_classes = 4
    # FPN pyramid: C5 coarsest, channel counts C5/8, C5/4, C5/2, C5.
    C5 = jax.random.normal(k5, (B, C5_inplanes, 2, 2), jnp.float32)
    C4 = jax.random.normal(k4, (B, C5_inplanes // 2, 4, 4), jnp.float32)
    C3 = jax.random.normal(k3, (B, C5_inplanes // 4, 8, 8), jnp.float32)
    C2 = jax.random.normal(k2, (B, C5_inplanes // 8, 16, 16), jnp.float32)

    params = init_params(kp, C5_inplanes, num_classes, out_channels=(32, 32, 64))
    packed = prepare_params(params)   # fold BN / arrange deconv taps ONCE, outside jit

    fwd = jax.jit(functools.partial(ttf_head_forward, packed))
    heatmap, offset, wh = fwd(C2, C3, C4, C5)
    jax.block_until_ready((heatmap, offset, wh))

    assert heatmap.shape == (B, num_classes, 16, 16), heatmap.shape
    assert offset.shape == (B, 2, 16, 16), offset.shape
    assert wh.shape == (B, 2, 16, 16), wh.shape
    assert heatmap.dtype == jnp.float32

    # numeric check against an f32 XLA reference (loose tol: bf16 MXU operands)
    ref_hm, ref_off, ref_wh = ttf_head_reference(params, C2, C3, C4, C5)
    for got, want in ((heatmap, ref_hm), (offset, ref_off), (wh, ref_wh)):
        np.testing.assert_allclose(np.asarray(got), np.asarray(want),
                                   atol=1e-2, rtol=1e-2)

    print("KERNEL_OK")
</pallas_src>

<mosaic_0001>
module attributes {stable_mosaic.version = 11 : i64} {
  func.func @_stage_kernel(%arg0: i32, %arg1: memref<82x65xbf16, #tpu.memory_space<vmem>>, %arg2: memref<65x32xbf16, #tpu.memory_space<vmem>>, %arg3: memref<288x128xbf16, #tpu.memory_space<vmem>>, %arg4: memref<1x128xf32, #tpu.memory_space<vmem>>, %arg5: memref<64x128xbf16, #tpu.memory_space<vmem>>, %arg6: memref<128x128xbf16, #tpu.memory_space<vmem>>, %arg7: memref<64x128xbf16, #tpu.memory_space<vmem>>, %arg8: memref<80x96xbf16, #tpu.memory_space<vmem>>) attributes {dimension_semantics = [#tpu.dimension_semantics<parallel>], iteration_bounds = array<i64: 1>, scalar_prefetch = 0 : i64, scratch_operands = 1 : i64, tpu.core_type = #tpu.core_type<tc>, window_params = [{pipeline_mode = #tpu.pipeline_mode<synchronous>, transform_indices = @transform_0, window_bounds = array<i64: 82, 65>}, {pipeline_mode = #tpu.pipeline_mode<synchronous>, transform_indices = @transform_1, window_bounds = array<i64: 65, 32>}, {pipeline_mode = #tpu.pipeline_mode<synchronous>, transform_indices = @transform_2, window_bounds = array<i64: 288, 128>}, {pipeline_mode = #tpu.pipeline_mode<synchronous>, transform_indices = @transform_3, window_bounds = array<i64: 1, 128>}, {transform_indices = @transform_4, window_bounds = array<i64: 64, 128>}, {pipeline_mode = #tpu.pipeline_mode<synchronous>, transform_indices = @transform_5, window_bounds = array<i64: 128, 128>}, {transform_indices = @transform_6, window_bounds = array<i64: 64, 128>}]} {
    %c64_i32 = arith.constant 64 : i32
    %0 = arith.muli %arg0, %c64_i32 : i32
    %1 = tpu.assume_multiple %0, 8 : i32
    %2 = arith.index_cast %1 : i32 to index
    %c0 = arith.constant 0 : index
    %3 = vector.load %arg1[%2, %c0] : memref<82x65xbf16, #tpu.memory_space<vmem>>, vector<82x65xbf16>
    %c0_0 = arith.constant 0 : index
    %c0_1 = arith.constant 0 : index
    %4 = vector.load %arg2[%c0_0, %c0_1] : memref<65x32xbf16, #tpu.memory_space<vmem>>, vector<65x32xbf16>
    %cst = arith.constant dense<0.000000e+00> : vector<82x32xf32>
    %5 = tpu.matmul %3, %4, %cst {dimension_numbers = #tpu.dot_dimension_numbers<[1], [0], [0], [1], [0, 0, 1, 1], [], []>} : vector<82x65xbf16>, vector<65x32xbf16>, vector<82x32xf32> -> vector<82x32xf32>
    %cst_2 = arith.constant 0.000000e+00 : f32
    %6 = vector.broadcast %cst_2 : f32 to vector<82x32xf32>
    %7 = arith.maximumf %5, %6 : vector<82x32xf32>
    %8 = arith.truncf %7 : vector<82x32xf32> to vector<82x32xbf16>
    %9 = vector.extract_strided_slice %8 {offsets = [0, 0], sizes = [80, 32], strides = [1, 1]} : vector<82x32xbf16> to vector<80x32xbf16>
    %10 = vector.extract_strided_slice %8 {offsets = [1, 0], sizes = [80, 32], strides = [1, 1]} : vector<82x32xbf16> to vector<80x32xbf16>
    %11 = vector.extract_strided_slice %8 {offsets = [2, 0], sizes = [80, 32], strides = [1, 1]} : vector<82x32xbf16> to vector<80x32xbf16>
    %12 = tpu.concatenate %9, %10, %11 in 1 : vector<80x32xbf16>, vector<80x32xbf16>, vector<80x32xbf16> -> vector<80x96xbf16>
    %c0_3 = arith.constant 0 : index
    %c0_4 = arith.constant 0 : index
    %13 = vector.load %arg8[%c0_3, %c0_4] : memref<80x96xbf16, #tpu.memory_space<vmem>>, vector<80x96xbf16>
    tpu.vector_store %arg8[%c0_3, %c0_4], %12 {strides = array<i32>} : memref<80x96xbf16, #tpu.memory_space<vmem>>, vector<80x96xbf16>,
    %c0_5 = arith.constant 0 : index
    %c0_6 = arith.constant 0 : index
    %14 = vector.load %arg8[%c0_5, %c0_6] : memref<80x96xbf16, #tpu.memory_space<vmem>>, vector<64x96xbf16>
    %c0_7 = arith.constant 0 : index
    %c0_8 = arith.constant 0 : index
    %15 = vector.load %arg3[%c0_7, %c0_8] : memref<288x128xbf16, #tpu.memory_space<vmem>>, vector<96x128xbf16>
    %cst_9 = arith.constant dense<0.000000e+00> : vector<64x128xf32>
    %16 = tpu.matmul %14, %15, %cst_9 {dimension_numbers = #tpu.dot_dimension_numbers<[1], [0], [0], [1], [0, 0, 1, 1], [], []>} : vector<64x96xbf16>, vector<96x128xbf16>, vector<64x128xf32> -> vector<64x128xf32>
    %c8 = arith.constant 8 : index
    %c0_10 = arith.constant 0 : index
    %17 = vector.load %arg8[%c8, %c0_10] : memref<80x96xbf16, #tpu.memory_space<vmem>>, vector<64x96xbf16>
    %c96 = arith.constant 96 : index
    %c0_11 = arith.constant 0 : index
    %18 = vector.load %arg3[%c96, %c0_11] : memref<288x128xbf16, #tpu.memory_space<vmem>>, vector<96x128xbf16>
    %cst_12 = arith.constant dense<0.000000e+00> : vector<64x128xf32>
    %19 = tpu.matmul %17, %18, %cst_12 {dimension_numbers = #tpu.dot_dimension_numbers<[1], [0], [0], [1], [0, 0, 1, 1], [], []>} : vector<64x96xbf16>, vector<96x128xbf16>, vector<64x128xf32> -> vector<64x128xf32>
    %20 = arith.addf %16, %19 : vector<64x128xf32>
    %c16 = arith.constant 16 : index
    %c0_13 = arith.constant 0 : index
    %21 = vector.load %arg8[%c16, %c0_13] : memref<80x96xbf16, #tpu.memory_space<vmem>>, vector<64x96xbf16>
    %c192 = arith.constant 192 : index
    %c0_14 = arith.constant 0 : index
    %22 = vector.load %arg3[%c192, %c0_14] : memref<288x128xbf16, #tpu.memory_space<vmem>>, vector<96x128xbf16>
    %cst_15 = arith.constant dense<0.000000e+00> : vector<64x128xf32>
    %23 = tpu.matmul %21, %22, %cst_15 {dimension_numbers = #tpu.dot_dimension_numbers<[1], [0], [0], [1], [0, 0, 1, 1], [], []>} : vector<64x96xbf16>, vector<96x128xbf16>, vector<64x128xf32> -> vector<64x128xf32>
    %24 = arith.addf %20, %23 : vector<64x128xf32>
    %c0_16 = arith.constant 0 : index
    %c0_17 = arith.constant 0 : index
    %25 = vector.load %arg4[%c0_16, %c0_17] : memref<1x128xf32, #tpu.memory_space<vmem>>, vector<1x128xf32>
    %26 = vector.broadcast %25 : vector<1x128xf32> to vector<64x128xf32>
    %27 = arith.addf %24, %26 : vector<64x128xf32>
    %cst_18 = arith.constant 0.000000e+00 : f32
    %28 = vector.broadcast %cst_18 : f32 to vector<64x128xf32>
    %29 = arith.maximumf %27, %28 : vector<64x128xf32>
    %c0_19 = arith.constant 0 : index
    %c0_20 = arith.constant 0 : index
    %30 = vector.load %arg5[%c0_19, %c0_20] : memref<64x128xbf16, #tpu.memory_space<vmem>>, vector<64x128xbf16>
    %c0_21 = arith.constant 0 : index
    %c0_22 = arith.constant 0 : index
    %31 = vector.load %arg6[%c0_21, %c0_22] : memref<128x128xbf16, #tpu.memory_space<vmem>>, vector<128x128xbf16>
    %cst_23 = arith.constant dense<0.000000e+00> : vector<64x128xf32>
    %32 = tpu.matmul %30, %31, %cst_23 {dimension_numbers = #tpu.dot_dimension_numbers<[1], [0], [0], [1], [0, 0, 1, 1], [], []>} : vector<64x128xbf16>, vector<128x128xbf16>, vector<64x128xf32> -> vector<64x128xf32>
    %33 = arith.addf %29, %32 : vector<64x128xf32>
    %34 = arith.truncf %33 : vector<64x128xf32> to vector<64x128xbf16>
    %c0_24 = arith.constant 0 : index
    %c0_25 = arith.constant 0 : index
    %35 = vector.load %arg7[%c0_24, %c0_25] : memref<64x128xbf16, #tpu.memory_space<vmem>>, vector<64x128xbf16>
    tpu.vector_store %arg7[%c0_24, %c0_25], %34 {strides = array<i32>} : memref<64x128xbf16, #tpu.memory_space<vmem>>, vector<64x128xbf16>,
    return
  }
  func.func @transform_0(%arg0: i32) -> (i32, i32) {
    %c0_i32 = arith.constant 0 : i32
    %c0_i32_0 = arith.constant 0 : i32
    %c0_i32_1 = arith.constant 0 : i32
    return %c0_i32, %c0_i32_0 : i32, i32
  }
  func.func @transform_1(%arg0: i32) -> (i32, i32) {
    %c0_i32 = arith.constant 0 : i32
    %c0_i32_0 = arith.constant 0 : i32
    %c0_i32_1 = arith.constant 0 : i32
    return %c0_i32, %c0_i32_0 : i32, i32
  }
  func.func @transform_2(%arg0: i32) -> (i32, i32) {
    %c0_i32 = arith.constant 0 : i32
    %c0_i32_0 = arith.constant 0 : i32
    %c0_i32_1 = arith.constant 0 : i32
    return %c0_i32, %c0_i32_0 : i32, i32
  }
  func.func @transform_3(%arg0: i32) -> (i32, i32) {
    %c0_i32 = arith.constant 0 : i32
    %c0_i32_0 = arith.constant 0 : i32
    %c0_i32_1 = arith.constant 0 : i32
    return %c0_i32, %c0_i32_0 : i32, i32
  }
  func.func @transform_4(%arg0: i32) -> (i32, i32) {
    %c0_i32 = arith.constant 0 : i32
    %c0_i32_0 = arith.constant 0 : i32
    return %arg0, %c0_i32 : i32, i32
  }
  func.func @transform_5(%arg0: i32) -> (i32, i32) {
    %c0_i32 = arith.constant 0 : i32
    %c0_i32_0 = arith.constant 0 : i32
    %c0_i32_1 = arith.constant 0 : i32
    return %c0_i32, %c0_i32_0 : i32, i32
  }
  func.func @transform_6(%arg0: i32) -> (i32, i32) {
    %c0_i32 = arith.constant 0 : i32
    %c0_i32_0 = arith.constant 0 : i32
    return %arg0, %c0_i32 : i32, i32
  }
}

module attributes {stable_mosaic.version = 11 : i64} {
  func.func @_stage_kernel(%arg0: i32, %arg1: memref<114x33xbf16, #tpu.memory_space<vmem>>, %arg2: memref<33x32xbf16, #tpu.memory_space<vmem>>, %arg3: memref<288x128xbf16, #tpu.memory_space<vmem>>, %arg4: memref<1x128xf32, #tpu.memory_space<vmem>>, %arg5: memref<96x64xbf16, #tpu.memory_space<vmem>>, %arg6: memref<64x128xbf16, #tpu.memory_space<vmem>>, %arg7: memref<96x128xbf16, #tpu.memory_space<vmem>>, %arg8: memref<112x96xbf16, #tpu.memory_space<vmem>>) attributes {dimension_semantics = [#tpu.dimension_semantics<parallel>], iteration_bounds = array<i64: 1>, scalar_prefetch = 0 : i64, scratch_operands = 1 : i64, tpu.core_type = #tpu.core_type<tc>, window_params = [{pipeline_mode = #tpu.pipeline_mode<synchronous>, transform_indices = @transform_0, window_bounds = array<i64: 114, 33>}, {pipeline_mode = #tpu.pipeline_mode<synchronous>, transform_indices = @transform_1, window_bounds = array<i64: 33, 32>}, {pipeline_mode = #tpu.pipeline_mode<synchronous>, transform_indices = @transform_2, window_bounds = array<i64: 288, 128>}, {pipeline_mode = #tpu.pipeline_mode<synchronous>, transform_indices = @transform_3, window_bounds = array<i64: 1, 128>}, {transform_indices = @transform_4, window_bounds = array<i64: 96, 64>}, {pipeline_mode = #tpu.pipeline_mode<synchronous>, transform_indices = @transform_5, window_bounds = array<i64: 64, 128>}, {transform_indices = @transform_6, window_bounds = array<i64: 96, 128>}]} {
    %c96_i32 = arith.constant 96 : i32
    %0 = arith.muli %arg0, %c96_i32 : i32
    %1 = tpu.assume_multiple %0, 8 : i32
    %2 = arith.index_cast %1 : i32 to index
    %c0 = arith.constant 0 : index
    %3 = vector.load %arg1[%2, %c0] : memref<114x33xbf16, #tpu.memory_space<vmem>>, vector<114x33xbf16>
    %c0_0 = arith.constant 0 : index
    %c0_1 = arith.constant 0 : index
    %4 = vector.load %arg2[%c0_0, %c0_1] : memref<33x32xbf16, #tpu.memory_space<vmem>>, vector<33x32xbf16>
    %cst = arith.constant dense<0.000000e+00> : vector<114x32xf32>
    %5 = tpu.matmul %3, %4, %cst {dimension_numbers = #tpu.dot_dimension_numbers<[1], [0], [0], [1], [0, 0, 1, 1], [], []>} : vector<114x33xbf16>, vector<33x32xbf16>, vector<114x32xf32> -> vector<114x32xf32>
    %cst_2 = arith.constant 0.000000e+00 : f32
    %6 = vector.broadcast %cst_2 : f32 to vector<114x32xf32>
    %7 = arith.maximumf %5, %6 : vector<114x32xf32>
    %8 = arith.truncf %7 : vector<114x32xf32> to vector<114x32xbf16>
    %9 = vector.extract_strided_slice %8 {offsets = [0, 0], sizes = [112, 32], strides = [1, 1]} : vector<114x32xbf16> to vector<112x32xbf16>
    %10 = vector.extract_strided_slice %8 {offsets = [1, 0], sizes = [112, 32], strides = [1, 1]} : vector<114x32xbf16> to vector<112x32xbf16>
    %11 = vector.extract_strided_slice %8 {offsets = [2, 0], sizes = [112, 32], strides = [1, 1]} : vector<114x32xbf16> to vector<112x32xbf16>
    %12 = tpu.concatenate %9, %10, %11 in 1 : vector<112x32xbf16>, vector<112x32xbf16>, vector<112x32xbf16> -> vector<112x96xbf16>
    %c0_3 = arith.constant 0 : index
    %c0_4 = arith.constant 0 : index
    %13 = vector.load %arg8[%c0_3, %c0_4] : memref<112x96xbf16, #tpu.memory_space<vmem>>, vector<112x96xbf16>
    tpu.vector_store %arg8[%c0_3, %c0_4], %12 {strides = array<i32>} : memref<112x96xbf16, #tpu.memory_space<vmem>>, vector<112x96xbf16>,
    %c0_5 = arith.constant 0 : index
    %c0_6 = arith.constant 0 : index
    %14 = vector.load %arg8[%c0_5, %c0_6] : memref<112x96xbf16, #tpu.memory_space<vmem>>, vector<96x96xbf16>
    %c0_7 = arith.constant 0 : index
    %c0_8 = arith.constant 0 : index
    %15 = vector.load %arg3[%c0_7, %c0_8] : memref<288x128xbf16, #tpu.memory_space<vmem>>, vector<96x128xbf16>
    %cst_9 = arith.constant dense<0.000000e+00> : vector<96x128xf32>
    %16 = tpu.matmul %14, %15, %cst_9 {dimension_numbers = #tpu.dot_dimension_numbers<[1], [0], [0], [1], [0, 0, 1, 1], [], []>} : vector<96x96xbf16>, vector<96x128xbf16>, vector<96x128xf32> -> vector<96x128xf32>
    %c8 = arith.constant 8 : index
    %c0_10 = arith.constant 0 : index
    %17 = vector.load %arg8[%c8, %c0_10] : memref<112x96xbf16, #tpu.memory_space<vmem>>, vector<96x96xbf16>
    %c96 = arith.constant 96 : index
    %c0_11 = arith.constant 0 : index
    %18 = vector.load %arg3[%c96, %c0_11] : memref<288x128xbf16, #tpu.memory_space<vmem>>, vector<96x128xbf16>
    %cst_12 = arith.constant dense<0.000000e+00> : vector<96x128xf32>
    %19 = tpu.matmul %17, %18, %cst_12 {dimension_numbers = #tpu.dot_dimension_numbers<[1], [0], [0], [1], [0, 0, 1, 1], [], []>} : vector<96x96xbf16>, vector<96x128xbf16>, vector<96x128xf32> -> vector<96x128xf32>
    %20 = arith.addf %16, %19 : vector<96x128xf32>
    %c16 = arith.constant 16 : index
    %c0_13 = arith.constant 0 : index
    %21 = vector.load %arg8[%c16, %c0_13] : memref<112x96xbf16, #tpu.memory_space<vmem>>, vector<96x96xbf16>
    %c192 = arith.constant 192 : index
    %c0_14 = arith.constant 0 : index
    %22 = vector.load %arg3[%c192, %c0_14] : memref<288x128xbf16, #tpu.memory_space<vmem>>, vector<96x128xbf16>
    %cst_15 = arith.constant dense<0.000000e+00> : vector<96x128xf32>
    %23 = tpu.matmul %21, %22, %cst_15 {dimension_numbers = #tpu.dot_dimension_numbers<[1], [0], [0], [1], [0, 0, 1, 1], [], []>} : vector<96x96xbf16>, vector<96x128xbf16>, vector<96x128xf32> -> vector<96x128xf32>
    %24 = arith.addf %20, %23 : vector<96x128xf32>
    %c0_16 = arith.constant 0 : index
    %c0_17 = arith.constant 0 : index
    %25 = vector.load %arg4[%c0_16, %c0_17] : memref<1x128xf32, #tpu.memory_space<vmem>>, vector<1x128xf32>
    %26 = vector.broadcast %25 : vector<1x128xf32> to vector<96x128xf32>
    %27 = arith.addf %24, %26 : vector<96x128xf32>
    %cst_18 = arith.constant 0.000000e+00 : f32
    %28 = vector.broadcast %cst_18 : f32 to vector<96x128xf32>
    %29 = arith.maximumf %27, %28 : vector<96x128xf32>
    %c0_19 = arith.constant 0 : index
    %c0_20 = arith.constant 0 : index
    %30 = vector.load %arg5[%c0_19, %c0_20] : memref<96x64xbf16, #tpu.memory_space<vmem>>, vector<96x64xbf16>
    %c0_21 = arith.constant 0 : index
    %c0_22 = arith.constant 0 : index
    %31 = vector.load %arg6[%c0_21, %c0_22] : memref<64x128xbf16, #tpu.memory_space<vmem>>, vector<64x128xbf16>
    %cst_23 = arith.constant dense<0.000000e+00> : vector<96x128xf32>
    %32 = tpu.matmul %30, %31, %cst_23 {dimension_numbers = #tpu.dot_dimension_numbers<[1], [0], [0], [1], [0, 0, 1, 1], [], []>} : vector<96x64xbf16>, vector<64x128xbf16>, vector<96x128xf32> -> vector<96x128xf32>
    %33 = arith.addf %29, %32 : vector<96x128xf32>
    %34 = arith.truncf %33 : vector<96x128xf32> to vector<96x128xbf16>
    %c0_24 = arith.constant 0 : index
    %c0_25 = arith.constant 0 : index
    %35 = vector.load %arg7[%c0_24, %c0_25] : memref<96x128xbf16, #tpu.memory_space<vmem>>, vector<96x128xbf16>
    tpu.vector_store %arg7[%c0_24, %c0_25], %34 {strides = array<i32>} : memref<96x128xbf16, #tpu.memory_space<vmem>>, vector<96x128xbf16>,
    return
  }
  func.func @transform_0(%arg0: i32) -> (i32, i32) {
    %c0_i32 = arith.constant 0 : i32
    %c0_i32_0 = arith.constant 0 : i32
    %c0_i32_1 = arith.constant 0 : i32
    return %c0_i32, %c0_i32_0 : i32, i32
  }
  func.func @transform_1(%arg0: i32) -> (i32, i32) {
    %c0_i32 = arith.constant 0 : i32
    %c0_i32_0 = arith.constant 0 : i32
    %c0_i32_1 = arith.constant 0 : i32
    return %c0_i32, %c0_i32_0 : i32, i32
  }
  func.func @transform_2(%arg0: i32) -> (i32, i32) {
    %c0_i32 = arith.constant 0 : i32
    %c0_i32_0 = arith.constant 0 : i32
    %c0_i32_1 = arith.constant 0 : i32
    return %c0_i32, %c0_i32_0 : i32, i32
  }
  func.func @transform_3(%arg0: i32) -> (i32, i32) {
    %c0_i32 = arith.constant 0 : i32
    %c0_i32_0 = arith.constant 0 : i32
    %c0_i32_1 = arith.constant 0 : i32
    return %c0_i32, %c0_i32_0 : i32, i32
  }
  func.func @transform_4(%arg0: i32) -> (i32, i32) {
    %c0_i32 = arith.constant 0 : i32
    %c0_i32_0 = arith.constant 0 : i32
    return %arg0, %c0_i32 : i32, i32
  }
  func.func @transform_5(%arg0: i32) -> (i32, i32) {
    %c0_i32 = arith.constant 0 : i32
    %c0_i32_0 = arith.constant 0 : i32
    %c0_i32_1 = arith.constant 0 : i32
    return %c0_i32, %c0_i32_0 : i32, i32
  }
  func.func @transform_6(%arg0: i32) -> (i32, i32) {
    %c0_i32 = arith.constant 0 : i32
    %c0_i32_0 = arith.constant 0 : i32
    return %arg0, %c0_i32 : i32, i32
  }
}

module attributes {stable_mosaic.version = 11 : i64} {
  func.func @_stage_kernel(%arg0: i32, %arg1: memref<354x33xbf16, #tpu.memory_space<vmem>>, %arg2: memref<33x64xbf16, #tpu.memory_space<vmem>>, %arg3: memref<576x256xbf16, #tpu.memory_space<vmem>>, %arg4: memref<1x256xf32, #tpu.memory_space<vmem>>, %arg5: memref<320x32xbf16, #tpu.memory_space<vmem>>, %arg6: memref<32x256xbf16, #tpu.memory_space<vmem>>, %arg7: memref<320x256xbf16, #tpu.memory_space<vmem>>, %arg8: memref<352x192xbf16, #tpu.memory_space<vmem>>) attributes {dimension_semantics = [#tpu.dimension_semantics<parallel>], iteration_bounds = array<i64: 1>, scalar_prefetch = 0 : i64, scratch_operands = 1 : i64, tpu.core_type = #tpu.core_type<tc>, window_params = [{pipeline_mode = #tpu.pipeline_mode<synchronous>, transform_indices = @transform_0, window_bounds = array<i64: 354, 33>}, {pipeline_mode = #tpu.pipeline_mode<synchronous>, transform_indices = @transform_1, window_bounds = array<i64: 33, 64>}, {pipeline_mode = #tpu.pipeline_mode<synchronous>, transform_indices = @transform_2, window_bounds = array<i64: 576, 256>}, {pipeline_mode = #tpu.pipeline_mode<synchronous>, transform_indices = @transform_3, window_bounds = array<i64: 1, 256>}, {transform_indices = @transform_4, window_bounds = array<i64: 320, 32>}, {pipeline_mode = #tpu.pipeline_mode<synchronous>, transform_indices = @transform_5, window_bounds = array<i64: 32, 256>}, {transform_indices = @transform_6, window_bounds = array<i64: 320, 256>}]} {
    %c320_i32 = arith.constant 320 : i32
    %0 = arith.muli %arg0, %c320_i32 : i32
    %1 = tpu.assume_multiple %0, 8 : i32
    %2 = arith.index_cast %1 : i32 to index
    %c0 = arith.constant 0 : index
    %3 = vector.load %arg1[%2, %c0] : memref<354x33xbf16, #tpu.memory_space<vmem>>, vector<354x33xbf16>
    %c0_0 = arith.constant 0 : index
    %c0_1 = arith.constant 0 : index
    %4 = vector.load %arg2[%c0_0, %c0_1] : memref<33x64xbf16, #tpu.memory_space<vmem>>, vector<33x64xbf16>
    %cst = arith.constant dense<0.000000e+00> : vector<354x64xf32>
    %5 = tpu.matmul %3, %4, %cst {dimension_numbers = #tpu.dot_dimension_numbers<[1], [0], [0], [1], [0, 0, 1, 1], [], []>} : vector<354x33xbf16>, vector<33x64xbf16>, vector<354x64xf32> -> vector<354x64xf32>
    %cst_2 = arith.constant 0.000000e+00 : f32
    %6 = vector.broadcast %cst_2 : f32 to vector<354x64xf32>
    %7 = arith.maximumf %5, %6 : vector<354x64xf32>
    %8 = arith.truncf %7 : vector<354x64xf32> to vector<354x64xbf16>
    %9 = vector.extract_strided_slice %8 {offsets = [0, 0], sizes = [352, 64], strides = [1, 1]} : vector<354x64xbf16> to vector<352x64xbf16>
    %10 = vector.extract_strided_slice %8 {offsets = [1, 0], sizes = [352, 64], strides = [1, 1]} : vector<354x64xbf16> to vector<352x64xbf16>
    %11 = vector.extract_strided_slice %8 {offsets = [2, 0], sizes = [352, 64], strides = [1, 1]} : vector<354x64xbf16> to vector<352x64xbf16>
    %12 = tpu.concatenate %9, %10, %11 in 1 : vector<352x64xbf16>, vector<352x64xbf16>, vector<352x64xbf16> -> vector<352x192xbf16>
    %c0_3 = arith.constant 0 : index
    %c0_4 = arith.constant 0 : index
    %13 = vector.load %arg8[%c0_3, %c0_4] : memref<352x192xbf16, #tpu.memory_space<vmem>>, vector<352x192xbf16>
    tpu.vector_store %arg8[%c0_3, %c0_4], %12 {strides = array<i32>} : memref<352x192xbf16, #tpu.memory_space<vmem>>, vector<352x192xbf16>,
    %c0_5 = arith.constant 0 : index
    %c0_6 = arith.constant 0 : index
    %14 = vector.load %arg8[%c0_5, %c0_6] : memref<352x192xbf16, #tpu.memory_space<vmem>>, vector<320x192xbf16>
    %c0_7 = arith.constant 0 : index
    %c0_8 = arith.constant 0 : index
    %15 = vector.load %arg3[%c0_7, %c0_8] : memref<576x256xbf16, #tpu.memory_space<vmem>>, vector<192x256xbf16>
    %cst_9 = arith.constant dense<0.000000e+00> : vector<320x256xf32>
    %16 = tpu.matmul %14, %15, %cst_9 {dimension_numbers = #tpu.dot_dimension_numbers<[1], [0], [0], [1], [0, 0, 1, 1], [], []>} : vector<320x192xbf16>, vector<192x256xbf16>, vector<320x256xf32> -> vector<320x256xf32>
    %c16 = arith.constant 16 : index
    %c0_10 = arith.constant 0 : index
    %17 = vector.load %arg8[%c16, %c0_10] : memref<352x192xbf16, #tpu.memory_space<vmem>>, vector<320x192xbf16>
    %c192 = arith.constant 192 : index
    %c0_11 = arith.constant 0 : index
    %18 = vector.load %arg3[%c192, %c0_11] : memref<576x256xbf16, #tpu.memory_space<vmem>>, vector<192x256xbf16>
    %cst_12 = arith.constant dense<0.000000e+00> : vector<320x256xf32>
    %19 = tpu.matmul %17, %18, %cst_12 {dimension_numbers = #tpu.dot_dimension_numbers<[1], [0], [0], [1], [0, 0, 1, 1], [], []>} : vector<320x192xbf16>, vector<192x256xbf16>, vector<320x256xf32> -> vector<320x256xf32>
    %20 = arith.addf %16, %19 : vector<320x256xf32>
    %c32 = arith.constant 32 : index
    %c0_13 = arith.constant 0 : index
    %21 = vector.load %arg8[%c32, %c0_13] : memref<352x192xbf16, #tpu.memory_space<vmem>>, vector<320x192xbf16>
    %c384 = arith.constant 384 : index
    %c0_14 = arith.constant 0 : index
    %22 = vector.load %arg3[%c384, %c0_14] : memref<576x256xbf16, #tpu.memory_space<vmem>>, vector<192x256xbf16>
    %cst_15 = arith.constant dense<0.000000e+00> : vector<320x256xf32>
    %23 = tpu.matmul %21, %22, %cst_15 {dimension_numbers = #tpu.dot_dimension_numbers<[1], [0], [0], [1], [0, 0, 1, 1], [], []>} : vector<320x192xbf16>, vector<192x256xbf16>, vector<320x256xf32> -> vector<320x256xf32>
    %24 = arith.addf %20, %23 : vector<320x256xf32>
    %c0_16 = arith.constant 0 : index
    %c0_17 = arith.constant 0 : index
    %25 = vector.load %arg4[%c0_16, %c0_17] : memref<1x256xf32, #tpu.memory_space<vmem>>, vector<1x256xf32>
    %26 = vector.broadcast %25 : vector<1x256xf32> to vector<320x256xf32>
    %27 = arith.addf %24, %26 : vector<320x256xf32>
    %cst_18 = arith.constant 0.000000e+00 : f32
    %28 = vector.broadcast %cst_18 : f32 to vector<320x256xf32>
    %29 = arith.maximumf %27, %28 : vector<320x256xf32>
    %c0_19 = arith.constant 0 : index
    %c0_20 = arith.constant 0 : index
    %30 = vector.load %arg5[%c0_19, %c0_20] : memref<320x32xbf16, #tpu.memory_space<vmem>>, vector<320x32xbf16>
    %c0_21 = arith.constant 0 : index
    %c0_22 = arith.constant 0 : index
    %31 = vector.load %arg6[%c0_21, %c0_22] : memref<32x256xbf16, #tpu.memory_space<vmem>>, vector<32x256xbf16>
    %cst_23 = arith.constant dense<0.000000e+00> : vector<320x256xf32>
    %32 = tpu.matmul %30, %31, %cst_23 {dimension_numbers = #tpu.dot_dimension_numbers<[1], [0], [0], [1], [0, 0, 1, 1], [], []>} : vector<320x32xbf16>, vector<32x256xbf16>, vector<320x256xf32> -> vector<320x256xf32>
    %33 = arith.addf %29, %32 : vector<320x256xf32>
    %34 = arith.truncf %33 : vector<320x256xf32> to vector<320x256xbf16>
    %c0_24 = arith.constant 0 : index
    %c0_25 = arith.constant 0 : index
    %35 = vector.load %arg7[%c0_24, %c0_25] : memref<320x256xbf16, #tpu.memory_space<vmem>>, vector<320x256xbf16>
    tpu.vector_store %arg7[%c0_24, %c0_25], %34 {strides = array<i32>} : memref<320x256xbf16, #tpu.memory_space<vmem>>, vector<320x256xbf16>,
    return
  }
  func.func @transform_0(%arg0: i32) -> (i32, i32) {
    %c0_i32 = arith.constant 0 : i32
    %c0_i32_0 = arith.constant 0 : i32
    %c0_i32_1 = arith.constant 0 : i32
    return %c0_i32, %c0_i32_0 : i32, i32
  }
  func.func @transform_1(%arg0: i32) -> (i32, i32) {
    %c0_i32 = arith.constant 0 : i32
    %c0_i32_0 = arith.constant 0 : i32
    %c0_i32_1 = arith.constant 0 : i32
    return %c0_i32, %c0_i32_0 : i32, i32
  }
  func.func @transform_2(%arg0: i32) -> (i32, i32) {
    %c0_i32 = arith.constant 0 : i32
    %c0_i32_0 = arith.constant 0 : i32
    %c0_i32_1 = arith.constant 0 : i32
    return %c0_i32, %c0_i32_0 : i32, i32
  }
  func.func @transform_3(%arg0: i32) -> (i32, i32) {
    %c0_i32 = arith.constant 0 : i32
    %c0_i32_0 = arith.constant 0 : i32
    %c0_i32_1 = arith.constant 0 : i32
    return %c0_i32, %c0_i32_0 : i32, i32
  }
  func.func @transform_4(%arg0: i32) -> (i32, i32) {
    %c0_i32 = arith.constant 0 : i32
    %c0_i32_0 = arith.constant 0 : i32
    return %arg0, %c0_i32 : i32, i32
  }
  func.func @transform_5(%arg0: i32) -> (i32, i32) {
    %c0_i32 = arith.constant 0 : i32
    %c0_i32_0 = arith.constant 0 : i32
    %c0_i32_1 = arith.constant 0 : i32
    return %c0_i32, %c0_i32_0 : i32, i32
  }
  func.func @transform_6(%arg0: i32) -> (i32, i32) {
    %c0_i32 = arith.constant 0 : i32
    %c0_i32_0 = arith.constant 0 : i32
    return %arg0, %c0_i32 : i32, i32
  }
}

module attributes {stable_mosaic.version = 11 : i64} {
  func.func @_head_kernel(%arg0: i32, %arg1: memref<914x64xbf16, #tpu.memory_space<vmem>>, %arg2: memref<576x192xbf16, #tpu.memory_space<vmem>>, %arg3: memref<1x192xf32, #tpu.memory_space<vmem>>, %arg4: memref<192x128xbf16, #tpu.memory_space<vmem>>, %arg5: memref<1x128xf32, #tpu.memory_space<vmem>>, %arg6: memref<864x128xf32, #tpu.memory_space<vmem>>, %arg7: memref<912x192xbf16, #tpu.memory_space<vmem>>) attributes {dimension_semantics = [#tpu.dimension_semantics<parallel>], iteration_bounds = array<i64: 1>, scalar_prefetch = 0 : i64, scratch_operands = 1 : i64, tpu.core_type = #tpu.core_type<tc>, window_params = [{pipeline_mode = #tpu.pipeline_mode<synchronous>, transform_indices = @transform_0, window_bounds = array<i64: 914, 64>}, {pipeline_mode = #tpu.pipeline_mode<synchronous>, transform_indices = @transform_1, window_bounds = array<i64: 576, 192>}, {pipeline_mode = #tpu.pipeline_mode<synchronous>, transform_indices = @transform_2, window_bounds = array<i64: 1, 192>}, {pipeline_mode = #tpu.pipeline_mode<synchronous>, transform_indices = @transform_3, window_bounds = array<i64: 192, 128>}, {pipeline_mode = #tpu.pipeline_mode<synchronous>, transform_indices = @transform_4, window_bounds = array<i64: 1, 128>}, {transform_indices = @transform_5, window_bounds = array<i64: 864, 128>}]} {
    %c864_i32 = arith.constant 864 : i32
    %0 = arith.muli %arg0, %c864_i32 : i32
    %1 = tpu.assume_multiple %0, 8 : i32
    %2 = arith.index_cast %1 : i32 to index
    %c0 = arith.constant 0 : index
    %3 = vector.load %arg1[%2, %c0] : memref<914x64xbf16, #tpu.memory_space<vmem>>, vector<914x64xbf16>
    %4 = vector.extract_strided_slice %3 {offsets = [0, 0], sizes = [912, 64], strides = [1, 1]} : vector<914x64xbf16> to vector<912x64xbf16>
    %5 = vector.extract_strided_slice %3 {offsets = [1, 0], sizes = [912, 64], strides = [1, 1]} : vector<914x64xbf16> to vector<912x64xbf16>
    %6 = vector.extract_strided_slice %3 {offsets = [2, 0], sizes = [912, 64], strides = [1, 1]} : vector<914x64xbf16> to vector<912x64xbf16>
    %7 = tpu.concatenate %4, %5, %6 in 1 : vector<912x64xbf16>, vector<912x64xbf16>, vector<912x64xbf16> -> vector<912x192xbf16>
    %c0_0 = arith.constant 0 : index
    %c0_1 = arith.constant 0 : index
    %8 = vector.load %arg7[%c0_0, %c0_1] : memref<912x192xbf16, #tpu.memory_space<vmem>>, vector<912x192xbf16>
    tpu.vector_store %arg7[%c0_0, %c0_1], %7 {strides = array<i32>} : memref<912x192xbf16, #tpu.memory_space<vmem>>, vector<912x192xbf16>,
    %c0_2 = arith.constant 0 : index
    %c0_3 = arith.constant 0 : index
    %9 = vector.load %arg7[%c0_2, %c0_3] : memref<912x192xbf16, #tpu.memory_space<vmem>>, vector<864x192xbf16>
    %c0_4 = arith.constant 0 : index
    %c0_5 = arith.constant 0 : index
    %10 = vector.load %arg2[%c0_4, %c0_5] : memref<576x192xbf16, #tpu.memory_space<vmem>>, vector<192x192xbf16>
    %cst = arith.constant dense<0.000000e+00> : vector<864x192xf32>
    %11 = tpu.matmul %9, %10, %cst {dimension_numbers = #tpu.dot_dimension_numbers<[1], [0], [0], [1], [0, 0, 1, 1], [], []>} : vector<864x192xbf16>, vector<192x192xbf16>, vector<864x192xf32> -> vector<864x192xf32>
    %c24 = arith.constant 24 : index
    %c0_6 = arith.constant 0 : index
    %12 = vector.load %arg7[%c24, %c0_6] : memref<912x192xbf16, #tpu.memory_space<vmem>>, vector<864x192xbf16>
    %c192 = arith.constant 192 : index
    %c0_7 = arith.constant 0 : index
    %13 = vector.load %arg2[%c192, %c0_7] : memref<576x192xbf16, #tpu.memory_space<vmem>>, vector<192x192xbf16>
    %cst_8 = arith.constant dense<0.000000e+00> : vector<864x192xf32>
    %14 = tpu.matmul %12, %13, %cst_8 {dimension_numbers = #tpu.dot_dimension_numbers<[1], [0], [0], [1], [0, 0, 1, 1], [], []>} : vector<864x192xbf16>, vector<192x192xbf16>, vector<864x192xf32> -> vector<864x192xf32>
    %15 = arith.addf %11, %14 : vector<864x192xf32>
    %c48 = arith.constant 48 : index
    %c0_9 = arith.constant 0 : index
    %16 = vector.load %arg7[%c48, %c0_9] : memref<912x192xbf16, #tpu.memory_space<vmem>>, vector<864x192xbf16>
    %c384 = arith.constant 384 : index
    %c0_10 = arith.constant 0 : index
    %17 = vector.load %arg2[%c384, %c0_10] : memref<576x192xbf16, #tpu.memory_space<vmem>>, vector<192x192xbf16>
    %cst_11 = arith.constant dense<0.000000e+00> : vector<864x192xf32>
    %18 = tpu.matmul %16, %17, %cst_11 {dimension_numbers = #tpu.dot_dimension_numbers<[1], [0], [0], [1], [0, 0, 1, 1], [], []>} : vector<864x192xbf16>, vector<192x192xbf16>, vector<864x192xf32> -> vector<864x192xf32>
    %19 = arith.addf %15, %18 : vector<864x192xf32>
    %c0_12 = arith.constant 0 : index
    %c0_13 = arith.constant 0 : index
    %20 = vector.load %arg3[%c0_12, %c0_13] : memref<1x192xf32, #tpu.memory_space<vmem>>, vector<1x192xf32>
    %21 = vector.broadcast %20 : vector<1x192xf32> to vector<864x192xf32>
    %22 = arith.addf %19, %21 : vector<864x192xf32>
    %cst_14 = arith.constant 0.000000e+00 : f32
    %23 = vector.broadcast %cst_14 : f32 to vector<864x192xf32>
    %24 = arith.maximumf %22, %23 : vector<864x192xf32>
    %25 = arith.truncf %24 : vector<864x192xf32> to vector<864x192xbf16>
    %c0_15 = arith.constant 0 : index
    %c0_16 = arith.constant 0 : index
    %26 = vector.load %arg4[%c0_15, %c0_16] : memref<192x128xbf16, #tpu.memory_space<vmem>>, vector<192x128xbf16>
    %cst_17 = arith.constant dense<0.000000e+00> : vector<864x128xf32>
    %27 = tpu.matmul %25, %26, %cst_17 {dimension_numbers = #tpu.dot_dimension_numbers<[1], [0], [0], [1], [0, 0, 1, 1], [], []>} : vector<864x192xbf16>, vector<192x128xbf16>, vector<864x128xf32> -> vector<864x128xf32>
    %c0_18 = arith.constant 0 : index
    %c0_19 = arith.constant 0 : index
    %28 = vector.load %arg5[%c0_18, %c0_19] : memref<1x128xf32, #tpu.memory_space<vmem>>, vector<1x128xf32>
    %29 = vector.broadcast %28 : vector<1x128xf32> to vector<864x128xf32>
    %30 = arith.addf %27, %29 : vector<864x128xf32>
    %c0_20 = arith.constant 0 : index
    %c0_21 = arith.constant 0 : index
    %31 = vector.load %arg6[%c0_20, %c0_21] : memref<864x128xf32, #tpu.memory_space<vmem>>, vector<864x128xf32>
    tpu.vector_store %arg6[%c0_20, %c0_21], %30 {strides = array<i32>} : memref<864x128xf32, #tpu.memory_space<vmem>>, vector<864x128xf32>,
    return
  }
  func.func @transform_0(%arg0: i32) -> (i32, i32) {
    %c0_i32 = arith.constant 0 : i32
    %c0_i32_0 = arith.constant 0 : i32
    %c0_i32_1 = arith.constant 0 : i32
    return %c0_i32, %c0_i32_0 : i32, i32
  }
  func.func @transform_1(%arg0: i32) -> (i32, i32) {
    %c0_i32 = arith.constant 0 : i32
    %c0_i32_0 = arith.constant 0 : i32
    %c0_i32_1 = arith.constant 0 : i32
    return %c0_i32, %c0_i32_0 : i32, i32
  }
  func.func @transform_2(%arg0: i32) -> (i32, i32) {
    %c0_i32 = arith.constant 0 : i32
    %c0_i32_0 = arith.constant 0 : i32
    %c0_i32_1 = arith.constant 0 : i32
    return %c0_i32, %c0_i32_0 : i32, i32
  }
  func.func @transform_3(%arg0: i32) -> (i32, i32) {
    %c0_i32 = arith.constant 0 : i32
    %c0_i32_0 = arith.constant 0 : i32
    %c0_i32_1 = arith.constant 0 : i32
    return %c0_i32, %c0_i32_0 : i32, i32
  }
  func.func @transform_4(%arg0: i32) -> (i32, i32) {
    %c0_i32 = arith.constant 0 : i32
    %c0_i32_0 = arith.constant 0 : i32
    %c0_i32_1 = arith.constant 0 : i32
    return %c0_i32, %c0_i32_0 : i32, i32
  }
  func.func @transform_5(%arg0: i32) -> (i32, i32) {
    %c0_i32 = arith.constant 0 : i32
    %c0_i32_0 = arith.constant 0 : i32
    return %arg0, %c0_i32 : i32, i32
  }
}

</mosaic_0001>

<llo_original>
// kernel: ttf_head_forward.4
$region0: #{ttf_head_forward.4}
  #allocation0 [shape = 'u32[]', space=smem, size = 0x4, offset = 0x4, fixed_abs, tag = 'smem constant byte address 0x4 - core index']
  #allocation1 [shape = 'u32[144,128]{1,0:T(1,128)}', space=vmem, size = 0x12000, scoped, tag = 'internal scratch']
  #allocation2 [shape = 'bf16[80,96]{1,0:T(16,128)(2,1)}', space=vmem, size = 0x5000, scoped, tag = 'scratch operand']
  %s0 = inlined_call_operand.hbm [shape: bf16[82,65], index: 0, kind: input, shape index: {}]
  %s1 = inlined_call_operand.hbm [shape: bf16[65,32], index: 1, kind: input, shape index: {}]
  %s2 = inlined_call_operand.hbm [shape: bf16[288,128], index: 2, kind: input, shape index: {}]
  %s3 = inlined_call_operand.hbm [shape: f32[1,128], index: 3, kind: input, shape index: {}]
  %s4 = inlined_call_operand.hbm [shape: bf16[64,128], index: 4, kind: input, shape index: {}]
  %s5 = inlined_call_operand.hbm [shape: bf16[128,128], index: 5, kind: input, shape index: {}]
  %s6 = inlined_call_operand.hbm [shape: bf16[64,128], index: 6, kind: output, shape index: {}]
  %s7 = sld [smem:[#allocation0]]
  $region58: #{ttf_head_forward.4} parent=0
    _
  %s9 = ssub.s32 1, %s7
  %s10 = scalar_select 0, %s9, %s7
  $region1: #{ttf_head_forward.4} parent=0
    #allocation3 [shape = 'u8[22528]{0}', space=vmem, size = 0x5800, scoped, tag = 'input window, operand 0, single buffered']
    #allocation4 [shape = 's32[1]{0}', space=sflag, size = 0x4, scoped, tag = 'scoped memory for ttf_head_forward.4']
    #allocation5 [shape = 's32[1]{0}', space=sflag, size = 0x4, scoped, tag = 'scoped memory for ttf_head_forward.4']
    #allocation6 [shape = 'u8[18432]{0}', space=vmem, size = 0x4800, scoped, tag = 'input window, operand 1, single buffered']
    #allocation7 [shape = 's32[1]{0}', space=sflag, size = 0x4, scoped, tag = 'scoped memory for ttf_head_forward.4']
    #allocation8 [shape = 'u8[73728]{0}', space=vmem, size = 0x12000, scoped, tag = 'input window, operand 2, single buffered']
    #allocation9 [shape = 'u8[512]{0}', space=vmem, size = 0x400, scoped, tag = 'input window, operand 3, single buffered']
    #allocation10 [shape = 's32[1]{0}', space=sflag, size = 0x4, scoped, tag = 'scoped memory for ttf_head_forward.4']
    #allocation11 [shape = 'u8[16384]{0}', space=vmem, size = 0x4000, scoped, tag = 'input window, operand 4, single buffered']
    #allocation12 [shape = 'u8[32768]{0}', space=vmem, size = 0x8000, scoped, tag = 'input window, operand 5, single buffered']
    #allocation13 [shape = 's32[1]{0}', space=sflag, size = 0x4, scoped, tag = 'scoped memory for ttf_head_forward.4']
    #allocation14 [shape = 'u8[16384]{0}', space=vmem, size = 0x4000, scoped, tag = 'output window, operand 0, single buffered']
    %11 = vsyncpa [#allocation4], 0
    %12 = vsyncpa [#allocation7], 0
    %13 = vsyncpa [#allocation10], 0
    %14 = vsyncpa [#allocation13], 0
    %15 = vsyncpa [#allocation5], 0
    // Predicated region
    $region2: #{ttf_head_forward.4} parent=1 // pred_check
      _
    $region3: #{ttf_head_forward.4} parent=1 // pred_check_branch
      %17 = sbr.rel (0) target = $region5
    $region4: #{ttf_head_forward.4} parent=1 // pred_region
      %s19 = ssub.s32 704, 704
      %20 = vsyncadd [#allocation4], %s19
      %s21 = sshll.u32 [#allocation3], 4
      %s22 = int_to_ptr.vmem [resolvable:$true] %s21
      %27 = dma.hbm_to_vmem [thread:$0]  %s0, 704, %s22, [#allocation4], 64, 64, 4
    $region5: #{ttf_head_forward.4} parent=1 // pred_fallthru
      _
    // Predicated region
    $region6: #{ttf_head_forward.4} parent=1 // pred_check
      _
    $region7: #{ttf_head_forward.4} parent=1 // pred_check_branch
      %29 = sbr.rel (0) target = $region9
    $region8: #{ttf_head_forward.4} parent=1 // pred_region
      %s31 = ssub.s32 576, 576
      %32 = vsyncadd [#allocation7], %s31
      %s33 = sshll.u32 [#allocation6], 4
      %s34 = int_to_ptr.vmem [resolvable:$true] %s33
      %39 = dma.hbm_to_vmem [thread:$0]  %s1, 576, %s34, [#allocation7], 64, 64, 4
    $region9: #{ttf_head_forward.4} parent=1 // pred_fallthru
      _
    // Predicated region
    $region10: #{ttf_head_forward.4} parent=1 // pred_check
      _
    $region11: #{ttf_head_forward.4} parent=1 // pred_check_branch
      %41 = sbr.rel (0) target = $region13
    $region12: #{ttf_head_forward.4} parent=1 // pred_region
      %s43 = ssub.s32 2304, 2304
      %44 = vsyncadd [#allocation7], %s43
      %s45 = sshll.u32 [#allocation8], 4
      %s46 = int_to_ptr.vmem [resolvable:$true] %s45
      %51 = dma.hbm_to_vmem [thread:$0]  %s2, 2304, %s46, [#allocation7], 64, 64, 4
    $region13: #{ttf_head_forward.4} parent=1 // pred_fallthru
      _
    // Predicated region
    $region14: #{ttf_head_forward.4} parent=1 // pred_check
      _
    $region15: #{ttf_head_forward.4} parent=1 // pred_check_branch
      %53 = sbr.rel (0) target = $region17
    $region16: #{ttf_head_forward.4} parent=1 // pred_region
      %s55 = ssub.s32 16, 16
      %56 = vsyncadd [#allocation10], %s55
      %s58 = sshll.u32 [#allocation9], 4
      %s59 = int_to_ptr.vmem [resolvable:$true] %s58
      %61 = dma.hbm_to_vmem [thread:$0]  %s3, 16, %s59, [#allocation10]
    $region17: #{ttf_head_forward.4} parent=1 // pred_fallthru
      _
    // Predicated region
    $region18: #{ttf_head_forward.4} parent=1 // pred_check
      _
    $region19: #{ttf_head_forward.4} parent=1 // pred_check_branch
      %63 = sbr.rel (0) target = $region21
    $region20: #{ttf_head_forward.4} parent=1 // pred_region
      %s65 = ssub.s32 512, 512
      %66 = vsyncadd [#allocation10], %s65
      %s67 = sshll.u32 [#allocation11], 4
      %s68 = int_to_ptr.vmem [resolvable:$true] %s67
      %73 = dma.hbm_to_vmem [thread:$0]  %s4, 512, %s68, [#allocation10], 64, 64, 4
    $region21: #{ttf_head_forward.4} parent=1 // pred_fallthru
      _
    // Predicated region
    $region22: #{ttf_head_forward.4} parent=1 // pred_check
      _
    $region23: #{ttf_head_forward.4} parent=1 // pred_check_branch
      %75 = sbr.rel (0) target = $region25
    $region24: #{ttf_head_forward.4} parent=1 // pred_region
      %s77 = ssub.s32 1024, 1024
      %78 = vsyncadd [#allocation13], %s77
      %s79 = sshll.u32 [#allocation12], 4
      %s80 = int_to_ptr.vmem [resolvable:$true] %s79
      %85 = dma.hbm_to_vmem [thread:$0]  %s5, 1024, %s80, [#allocation13], 64, 64, 4
    $region25: #{ttf_head_forward.4} parent=1 // pred_fallthru
      _
    // Predicated region
    $region26: #{ttf_head_forward.4} parent=1 // pred_check
      _
    $region27: #{ttf_head_forward.4} parent=1 // pred_check_branch
      %87 = sbr.rel (0) target = $region29
    $region28: #{ttf_head_forward.4} parent=1 // pred_region
      %88 = dma.done [#allocation4], 704
    $region29: #{ttf_head_forward.4} parent=1 // pred_fallthru
      _
    // Predicated region
    $region30: #{ttf_head_forward.4} parent=1 // pred_check
      _
    $region31: #{ttf_head_forward.4} parent=1 // pred_check_branch
      %90 = sbr.rel (0) target = $region33
    $region32: #{ttf_head_forward.4} parent=1 // pred_region
      %91 = dma.done [#allocation7], 576
    $region33: #{ttf_head_forward.4} parent=1 // pred_fallthru
      _
    // Predicated region
    $region34: #{ttf_head_forward.4} parent=1 // pred_check
      _
    $region35: #{ttf_head_forward.4} parent=1 // pred_check_branch
      %93 = sbr.rel (0) target = $region37
    $region36: #{ttf_head_forward.4} parent=1 // pred_region
      %94 = dma.done [#allocation7], 2304
    $region37: #{ttf_head_forward.4} parent=1 // pred_fallthru
      _
    // Predicated region
    $region38: #{ttf_head_forward.4} parent=1 // pred_check
      _
    $region39: #{ttf_head_forward.4} parent=1 // pred_check_branch
      %96 = sbr.rel (0) target = $region41
    $region40: #{ttf_head_forward.4} parent=1 // pred_region
      %97 = dma.done [#allocation10], 16
    $region41: #{ttf_head_forward.4} parent=1 // pred_fallthru
      _
    // Predicated region
    $region42: #{ttf_head_forward.4} parent=1 // pred_check
      _
    $region43: #{ttf_head_forward.4} parent=1 // pred_check_branch
      %99 = sbr.rel (0) target = $region45
    $region44: #{ttf_head_forward.4} parent=1 // pred_region
      %100 = dma.done [#allocation10], 512
    $region45: #{ttf_head_forward.4} parent=1 // pred_fallthru
      _
    // Predicated region
    $region46: #{ttf_head_forward.4} parent=1 // pred_check
      _
    $region47: #{ttf_head_forward.4} parent=1 // pred_check_branch
      %102 = sbr.rel (0) target = $region49
    $region48: #{ttf_head_forward.4} parent=1 // pred_region
      %103 = dma.done [#allocation13], 1024
    $region49: #{ttf_head_forward.4} parent=1 // pred_fallthru
      _
    %s105 = smul.u32 0, 64
    %s106 = sshra.s32 %s105, 3
    %s107 = sand.u32 %s105, 7
    %s108 = smul.addr %s106, 4
    %s109 = scalar_lea.vmem [#allocation3], %s108
    %v110 = vld [vmem:[%s109] sm:$0xf]
    %v111 = vld [vmem:[%s109 + $0x4] sm:$0xf]
    %v112 = vld [vmem:[%s109 + $0x8] sm:$0xf]
    %v113 = vld [vmem:[%s109 + $0xc] sm:$0xf]
    %v114 = vld [vmem:[%s109 + $0x10] sm:$0xf]
    %v115 = vld [vmem:[%s109 + $0x14] sm:$0xf]
    %v116 = vld [vmem:[%s109 + $0x18] sm:$0xf]
    %v117 = vld [vmem:[%s109 + $0x1c] sm:$0xf]
    %v118 = vld [vmem:[%s109 + $0x20] sm:$0xf]
    %v119 = vld [vmem:[%s109 + $0x24] sm:$0xf]
    %v120 = vld [vmem:[%s109 + $0x28] sm:$0x1]
    %v121 = vld [vmem:[#allocation6] sm:$0xf]
    %v122 = vld [vmem:[#allocation6 + $0x4] sm:$0xf]
    %v123 = vld [vmem:[#allocation6 + $0x8] sm:$0xf]
    %v124 = vld [vmem:[#allocation6 + $0xc] sm:$0xf]
    %v125 = vld [vmem:[#allocation6 + $0x10] sm:$0xf]
    %v126 = vld [vmem:[#allocation6 + $0x14] sm:$0xf]
    %v127 = vld [vmem:[#allocation6 + $0x18] sm:$0xf]
    %v128 = vld [vmem:[#allocation6 + $0x1c] sm:$0xf]
    %v129 = vld [vmem:[#allocation6 + $0x20] sm:$0x1]
    %v141 = vunpack.c.l.b16 %v110
    %v142 = vunpack.c.l.b16 %v111
    %v143 = vunpack.c.l.b16 %v112
    %v144 = vunpack.c.l.b16 %v113
    %v145 = vunpack.c.l.b16 %v114
    %v146 = vunpack.c.l.b16 %v115
    %v147 = vunpack.c.l.b16 %v116
    %v148 = vunpack.c.l.b16 %v117
    %v149 = vunpack.c.l.b16 %v118
    %v150 = vunpack.c.l.b16 %v119
    %v151 = vunpack.c.l.b16 %v120
    %v152 = vpack.c.b16 %v142, %v141
    %v153 = vpack.c.b16 %v144, %v143
    %v154 = vpack.c.b16 %v146, %v145
    %v155 = vpack.c.b16 %v148, %v147
    %v156 = vpack.c.b16 %v150, %v149
    %v157 = vpack.c.b16 %v151, %v151
    %v167 = vunpack.c.l.b16 %v121
    %v168 = vunpack.c.l.b16 %v122
    %v169 = vunpack.c.l.b16 %v123
    %v170 = vunpack.c.l.b16 %v124
    %v171 = vunpack.c.l.b16 %v125
    %v172 = vunpack.c.l.b16 %v126
    %v173 = vunpack.c.l.b16 %v127
    %v174 = vunpack.c.l.b16 %v128
    %v175 = vunpack.c.l.b16 %v129
    %v176 = vpack.c.b16 %v168, %v167
    %v177 = vpack.c.b16 %v170, %v169
    %v178 = vpack.c.b16 %v172, %v171
    %v179 = vpack.c.b16 %v174, %v173
    %v180 = vpack.c.b16 %v175, %v175
    %vm185 = vcmask 531456
    %v187 = vsel %vm185, %v152, 0
    %v190 = vsel %vm185, %v153, 0
    %v193 = vsel %vm185, %v154, 0
    %v196 = vsel %vm185, %v155, 0
    %v199 = vsel %vm185, %v156, 0
    %v202 = vsel %vm185, %v157, 0
    %vm204 = vcmask 1040384
    %v205 = vsel 0, 4294967295, 65535
    %v206 = vsel %vm204, %v205, 0
    %v208 = vand.u32 %v180, %v206
    %210 = vmatprep.subr.bf16.mxu0 0
    %211 = vmatpush1.bf16.msra.mxu0 %v176
    %212 = vmatprep.subr.bf16.mxu0 0
    %213 = vmatpush1.bf16.msra.mxu0 %v177
    %214 = vmatprep.subr.bf16.mxu0 0
    %215 = vmatpush1.bf16.msra.mxu0 %v178
    %216 = vmatprep.subr.bf16.mxu0 0
    %217 = vmatpush1.bf16.msra.mxu0 %v179
    %218 = vmatprep.subr.bf16.mxu0 0
    %219 = vmatpush1.bf16.msra.mxu0 %v208
    %220 = vmatprep.subr.bf16.mxu0 0
    %221 = vmatpush1.bf16.msra.mxu0 0
    %222 = vmatprep.subr.bf16.mxu0 0
    %223 = vmatpush1.bf16.msra.mxu0 0
    %224 = vmatprep.subr.bf16.mxu0 0
    %225 = vmatpush1.bf16.msra.mxu0 0
    %226 = vmatprep.subr.bf16.mxu0 0
    %227 = vmatpush1.bf16.msra.mxu0 0
    %228 = vmatprep.subr.bf16.mxu0 0
    %229 = vmatpush1.bf16.msra.mxu0 0
    %230 = vmatprep.subr.bf16.mxu0 0
    %231 = vmatpush1.bf16.msra.mxu0 0
    %232 = vmatprep.subr.bf16.mxu0 0
    %233 = vmatpush1.bf16.msra.mxu0 0
    %234 = vmatprep.subr.bf16.mxu0 0
    %235 = vmatpush1.bf16.msra.mxu0 0
    %236 = vmatprep.subr.bf16.mxu0 0
    %237 = vmatpush1.bf16.msra.mxu0 0
    %238 = vmatprep.subr.bf16.mxu0 0
    %239 = vmatpush1.bf16.msra.mxu0 0
    %240 = vmatprep.subr.bf16.mxu0 0
    %241 = vmatpush1.bf16.msra.mxu0 0
    %242 = vmatprep.mubr.bf16.mxu0 0
    %243 = vmatmul.mubr.bf16.gmra.mrb[0].mxu0 %v187
    %v244 = vpop.f32.mrb[0].mxu0
    %v245 = vadd.f32 0.0, %v244
    %v246 = vpop.f32.mrb[0].mxu0
    %v247 = vpop.f32.mrb[0].mxu0
    %v248 = vadd.f32 0.0, %v247
    %v249 = vpop.f32.mrb[0].mxu0
    %250 = vmatprep.mubr.bf16.mxu0 0
    %251 = vmatmul.mubr.bf16.gmra.mrb[0].mxu0 %v190
    %v252 = vpop.f32.mrb[0].mxu0
    %v253 = vadd.f32 0.0, %v252
    %v254 = vpop.f32.mrb[0].mxu0
    %v255 = vpop.f32.mrb[0].mxu0
    %v256 = vadd.f32 0.0, %v255
    %v257 = vpop.f32.mrb[0].mxu0
    %258 = vmatprep.mubr.bf16.mxu0 0
    %259 = vmatmul.mubr.bf16.gmra.mrb[0].mxu0 %v193
    %v260 = vpop.f32.mrb[0].mxu0
    %v261 = vadd.f32 0.0, %v260
    %v262 = vpop.f32.mrb[0].mxu0
    %v263 = vpop.f32.mrb[0].mxu0
    %v264 = vadd.f32 0.0, %v263
    %v265 = vpop.f32.mrb[0].mxu0
    %266 = vmatprep.mubr.bf16.mxu0 0
    %267 = vmatmul.mubr.bf16.gmra.mrb[0].mxu0 %v196
    %v268 = vpop.f32.mrb[0].mxu0
    %v269 = vadd.f32 0.0, %v268
    %v270 = vpop.f32.mrb[0].mxu0
    %v271 = vpop.f32.mrb[0].mxu0
    %v272 = vadd.f32 0.0, %v271
    %v273 = vpop.f32.mrb[0].mxu0
    %274 = vmatprep.mubr.bf16.mxu0 0
    %275 = vmatmul.mubr.bf16.gmra.mrb[0].mxu0 %v199
    %v276 = vpop.f32.mrb[0].mxu0
    %v277 = vadd.f32 0.0, %v276
    %v278 = vpop.f32.mrb[0].mxu0
    %v279 = vpop.f32.mrb[0].mxu0
    %v280 = vadd.f32 0.0, %v279
    %v281 = vpop.f32.mrb[0].mxu0
    %282 = vmatprep.mubr.bf16.mxu0 0
    %283 = vmatmul.mubr.bf16.gmra.mrb[0].mxu0 %v202
    %v284 = vpop.f32.mrb[0].mxu0
    %v285 = vadd.f32 0.0, %v284
    %v286 = vpop.f32.mrb[0].mxu0
    %v287 = vpop.f32.mrb[0].mxu0
    %v288 = vpop.f32.mrb[0].mxu0
    %289 = vdwg.mxu0
    %v290 = vmax.f32 %v245, 0.0
    %v291 = vmax.f32 %v248, 0.0
    %v292 = vmax.f32 %v253, 0.0
    %v293 = vmax.f32 %v256, 0.0
    %v294 = vmax.f32 %v261, 0.0
    %v295 = vmax.f32 %v264, 0.0
    %v296 = vmax.f32 %v269, 0.0
    %v297 = vmax.f32 %v272, 0.0
    %v298 = vmax.f32 %v277, 0.0
    %v299 = vmax.f32 %v280, 0.0
    %v300 = vmax.f32 %v285, 0.0
    %v301 = vpack.c.bf16 %v291, %v290
    %v302 = vpack.c.bf16 %v293, %v292
    %v303 = vpack.c.bf16 %v295, %v294
    %v304 = vpack.c.bf16 %v297, %v296
    %v305 = vpack.c.bf16 %v299, %v298
    %v306 = vpack.c.bf16 %v300, %v300
    %vm307 = vsmask.f32 7424
    %v309 = vshrl.u32 %v301, 16
    %v311 = vshll.u32 %v301, 16
    %v313 = vrot.slane %v311, 1
    %v314 = vor.u32 %v309, %v313
    %v316 = vshll.u32 %v302, 16
    %v318 = vrot.slane %v316, 1
    %v319 = vsel %vm307, %v314, %v318
    %v320 = vshrl.u32 %v302, 16
    %v322 = vor.u32 %v320, %v318
    %v324 = vshll.u32 %v303, 16
    %v326 = vrot.slane %v324, 1
    %v327 = vsel %vm307, %v322, %v326
    %v328 = vshrl.u32 %v303, 16
    %v330 = vor.u32 %v328, %v326
    %v332 = vshll.u32 %v304, 16
    %v334 = vrot.slane %v332, 1
    %v335 = vsel %vm307, %v330, %v334
    %v336 = vshrl.u32 %v304, 16
    %v338 = vor.u32 %v336, %v334
    %v340 = vshll.u32 %v305, 16
    %v342 = vrot.slane %v340, 1
    %v343 = vsel %vm307, %v338, %v342
    %v344 = vshrl.u32 %v305, 16
    %v346 = vor.u32 %v344, %v342
    %v348 = vshll.u32 %v306, 16
    %v350 = vrot.slane %v348, 1
    %v351 = vsel %vm307, %v346, %v350
    %352 = vrot.lane.b32.xlu0 %v319, 32
    %v353 = vpop.permute.xlu0 %352
    %354 = vrot.lane.b32.xlu0 %v327, 32
    %v355 = vpop.permute.xlu0 %354
    %356 = vrot.lane.b32.xlu0 %v335, 32
    %v357 = vpop.permute.xlu0 %356
    %358 = vrot.lane.b32.xlu0 %v343, 32
    %v359 = vpop.permute.xlu0 %358
    %360 = vrot.lane.b32.xlu0 %v351, 32
    %v361 = vpop.permute.xlu0 %360
    %vm368 = vcmask 1046528
    %v369 = vrot.slane %v301, 1
    %v370 = vrot.slane %v302, 1
    %v371 = vsel %vm368, %v369, %v370
    %v372 = vrot.slane %v303, 1
    %v373 = vsel %vm368, %v370, %v372
    %v374 = vrot.slane %v304, 1
    %v375 = vsel %vm368, %v372, %v374
    %v376 = vrot.slane %v305, 1
    %v377 = vsel %vm368, %v374, %v376
    %v378 = vrot.slane %v306, 1
    %v379 = vsel %vm368, %v376, %v378
    %380 = vrot.lane.b32.xlu0 %v371, 64
    %v381 = vpop.permute.xlu0 %380
    %382 = vrot.lane.b32.xlu0 %v373, 64
    %v383 = vpop.permute.xlu0 %382
    %384 = vrot.lane.b32.xlu0 %v375, 64
    %v385 = vpop.permute.xlu0 %384
    %386 = vrot.lane.b32.xlu0 %v377, 64
    %v387 = vpop.permute.xlu0 %386
    %388 = vrot.lane.b32.xlu0 %v379, 64
    %v389 = vpop.permute.xlu0 %388
    %vm390 = vcmask 261120
    %v392 = vsel %vm390, %v301, %v353
    %v394 = vsel %vm390, %v302, %v355
    %v396 = vsel %vm390, %v303, %v357
    %v398 = vsel %vm390, %v304, %v359
    %v400 = vsel %vm390, %v305, %v361
    %vm401 = vcmask 523264
    %v403 = vsel %vm401, %v392, %v381
    %v406 = vsel %vm401, %v394, %v383
    %v409 = vsel %vm401, %v396, %v385
    %v412 = vsel %vm401, %v398, %v387
    %v415 = vsel %vm401, %v400, %v389
    %vm417 = vcmask 785408
    %418 = vst.msk [vmem:[#allocation2] sm:$0xff] %vm417, %v403
    %419 = vst.msk [vmem:[#allocation2 + $0x8] sm:$0xff] %vm417, %v406
    %420 = vst.msk [vmem:[#allocation2 + $0x10] sm:$0xff] %vm417, %v409
    %421 = vst.msk [vmem:[#allocation2 + $0x18] sm:$0xff] %vm417, %v412
    %422 = vst.msk [vmem:[#allocation2 + $0x20] sm:$0xff] %vm417, %v415
    %v423 = vld [vmem:[#allocation2] sm:$0xff]
    %v424 = vld [vmem:[#allocation2 + $0x8] sm:$0xff]
    %v425 = vld [vmem:[#allocation2 + $0x10] sm:$0xff]
    %v426 = vld [vmem:[#allocation2 + $0x18] sm:$0xff]
    %v427 = vld [vmem:[#allocation8] sm:$0xf]
    %v428 = vld [vmem:[#allocation8 + $0x4] sm:$0xf]
    %v429 = vld [vmem:[#allocation8 + $0x8] sm:$0xf]
    %v430 = vld [vmem:[#allocation8 + $0xc] sm:$0xf]
    %v431 = vld [vmem:[#allocation8 + $0x10] sm:$0xf]
    %v432 = vld [vmem:[#allocation8 + $0x14] sm:$0xf]
    %v433 = vld [vmem:[#allocation8 + $0x18] sm:$0xf]
    %v434 = vld [vmem:[#allocation8 + $0x1c] sm:$0xf]
    %v435 = vld [vmem:[#allocation8 + $0x20] sm:$0xf]
    %v436 = vld [vmem:[#allocation8 + $0x24] sm:$0xf]
    %v437 = vld [vmem:[#allocation8 + $0x28] sm:$0xf]
    %v438 = vld [vmem:[#allocation8 + $0x2c] sm:$0xf]
    %v439 = vld [vmem:[#allocation2] sm:$0xf0]
    %v440 = vld [vmem:[#allocation2 + $0x20] sm:$0xf]
    %v441 = vld [vmem:[#allocation8 + $0x30] sm:$0xf]
    %v442 = vld [vmem:[#allocation8 + $0x34] sm:$0xf]
    %v443 = vld [vmem:[#allocation8 + $0x38] sm:$0xf]
    %v444 = vld [vmem:[#allocation8 + $0x3c] sm:$0xf]
    %v445 = vld [vmem:[#allocation8 + $0x40] sm:$0xf]
    %v446 = vld [vmem:[#allocation8 + $0x44] sm:$0xf]
    %v447 = vld [vmem:[#allocation8 + $0x48] sm:$0xf]
    %v448 = vld [vmem:[#allocation8 + $0x4c] sm:$0xf]
    %v449 = vld [vmem:[#allocation8 + $0x50] sm:$0xf]
    %v450 = vld [vmem:[#allocation8 + $0x54] sm:$0xf]
    %v451 = vld [vmem:[#allocation8 + $0x58] sm:$0xf]
    %v452 = vld [vmem:[#allocation8 + $0x5c] sm:$0xf]
    %vm458 = vcmask 1043456
    %v459 = vrot.slane %v439, 4
    %v460 = vrot.slane %v424, 4
    %v461 = vsel %vm458, %v459, %v460
    %v462 = vrot.slane %v425, 4
    %v463 = vsel %vm458, %v460, %v462
    %v464 = vrot.slane %v426, 4
    %v465 = vsel %vm458, %v462, %v464
    %v466 = vrot.slane %v440, 4
    %v467 = vsel %vm458, %v464, %v466
    %v480 = vunpack.c.l.b16 %v441
    %v481 = vunpack.c.l.b16 %v442
    %v482 = vunpack.c.l.b16 %v443
    %v483 = vunpack.c.l.b16 %v444
    %v484 = vunpack.c.l.b16 %v445
    %v485 = vunpack.c.l.b16 %v446
    %v486 = vunpack.c.l.b16 %v447
    %v487 = vunpack.c.l.b16 %v448
    %v488 = vunpack.c.l.b16 %v449
    %v489 = vunpack.c.l.b16 %v450
    %v490 = vunpack.c.l.b16 %v451
    %v491 = vunpack.c.l.b16 %v452
    %v492 = vpack.c.b16 %v481, %v480
    %v493 = vpack.c.b16 %v483, %v482
    %v494 = vpack.c.b16 %v485, %v484
    %v495 = vpack.c.b16 %v487, %v486
    %v496 = vpack.c.b16 %v489, %v488
    %v497 = vpack.c.b16 %v491, %v490
    %v505 = vsel %vm417, %v461, 0
    %v508 = vsel %vm417, %v463, 0
    %v511 = vsel %vm417, %v465, 0
    %v514 = vsel %vm417, %v467, 0
    %516 = vmatprep.subr.bf16.mxu0 0
    %517 = vmatpush1.bf16.msra.mxu0 %v492
    %518 = vmatprep.subr.bf16.mxu0 0
    %519 = vmatpush1.bf16.msra.mxu0 %v493
    %520 = vmatprep.subr.bf16.mxu0 0
    %521 = vmatpush1.bf16.msra.mxu0 %v494
    %522 = vmatprep.subr.bf16.mxu0 0
    %523 = vmatpush1.bf16.msra.mxu0 %v495
    %524 = vmatprep.subr.bf16.mxu0 0
    %525 = vmatpush1.bf16.msra.mxu0 %v496
    %526 = vmatprep.subr.bf16.mxu0 0
    %527 = vmatpush1.bf16.msra.mxu0 %v497
    %528 = vmatprep.subr.bf16.mxu0 0
    %529 = vmatpush1.bf16.msra.mxu0 0
    %530 = vmatprep.subr.bf16.mxu0 0
    %531 = vmatpush1.bf16.msra.mxu0 0
    %532 = vmatprep.subr.bf16.mxu0 0
    %533 = vmatpush1.bf16.msra.mxu0 0
    %534 = vmatprep.subr.bf16.mxu0 0
    %535 = vmatpush1.bf16.msra.mxu0 0
    %536 = vmatprep.subr.bf16.mxu0 0
    %537 = vmatpush1.bf16.msra.mxu0 0
    %538 = vmatprep.subr.bf16.mxu0 0
    %539 = vmatpush1.bf16.msra.mxu0 0
    %540 = vmatprep.subr.bf16.mxu0 0
    %541 = vmatpush1.bf16.msra.mxu0 0
    %542 = vmatprep.subr.bf16.mxu0 0
    %543 = vmatpush1.bf16.msra.mxu0 0
    %544 = vmatprep.subr.bf16.mxu0 0
    %545 = vmatpush1.bf16.msra.mxu0 0
    %546 = vmatprep.subr.bf16.mxu0 0
    %547 = vmatpush1.bf16.msra.mxu0 0
    %548 = vmatprep.mubr.bf16.mxu0 0
    %549 = vmatmul.mubr.bf16.gmra.mrb[0].mxu0 %v505
    %v550 = vpop.f32.mrb[0].mxu0
    %v551 = vadd.f32 0.0, %v550
    %v552 = vpop.f32.mrb[0].mxu0
    %v553 = vpop.f32.mrb[0].mxu0
    %v554 = vadd.f32 0.0, %v553
    %v555 = vpop.f32.mrb[0].mxu0
    %556 = vmatprep.mubr.bf16.mxu0 0
    %557 = vmatmul.mubr.bf16.gmra.mrb[0].mxu0 %v508
    %v558 = vpop.f32.mrb[0].mxu0
    %v559 = vadd.f32 0.0, %v558
    %v560 = vpop.f32.mrb[0].mxu0
    %v561 = vpop.f32.mrb[0].mxu0
    %v562 = vadd.f32 0.0, %v561
    %v563 = vpop.f32.mrb[0].mxu0
    %564 = vmatprep.mubr.bf16.mxu0 0
    %565 = vmatmul.mubr.bf16.gmra.mrb[0].mxu0 %v511
    %v566 = vpop.f32.mrb[0].mxu0
    %v567 = vadd.f32 0.0, %v566
    %v568 = vpop.f32.mrb[0].mxu0
    %v569 = vpop.f32.mrb[0].mxu0
    %v570 = vadd.f32 0.0, %v569
    %v571 = vpop.f32.mrb[0].mxu0
    %572 = vmatprep.mubr.bf16.mxu0 0
    %573 = vmatmul.mubr.bf16.gmra.mrb[0].mxu0 %v514
    %v574 = vpop.f32.mrb[0].mxu0
    %v575 = vadd.f32 0.0, %v574
    %v576 = vpop.f32.mrb[0].mxu0
    %v577 = vpop.f32.mrb[0].mxu0
    %v578 = vadd.f32 0.0, %v577
    %v579 = vpop.f32.mrb[0].mxu0
    %580 = vdwg.mxu0
    %v593 = vunpack.c.l.b16 %v427
    %v594 = vunpack.c.l.b16 %v428
    %v595 = vunpack.c.l.b16 %v429
    %v596 = vunpack.c.l.b16 %v430
    %v597 = vunpack.c.l.b16 %v431
    %v598 = vunpack.c.l.b16 %v432
    %v599 = vunpack.c.l.b16 %v433
    %v600 = vunpack.c.l.b16 %v434
    %v601 = vunpack.c.l.b16 %v435
    %v602 = vunpack.c.l.b16 %v436
    %v603 = vunpack.c.l.b16 %v437
    %v604 = vunpack.c.l.b16 %v438
    %v605 = vpack.c.b16 %v594, %v593
    %v606 = vpack.c.b16 %v596, %v595
    %v607 = vpack.c.b16 %v598, %v597
    %v608 = vpack.c.b16 %v600, %v599
    %v609 = vpack.c.b16 %v602, %v601
    %v610 = vpack.c.b16 %v604, %v603
    %v618 = vsel %vm417, %v423, 0
    %v621 = vsel %vm417, %v424, 0
    %v624 = vsel %vm417, %v425, 0
    %v627 = vsel %vm417, %v426, 0
    %629 = vmatprep.subr.bf16.mxu0 0
    %630 = vmatpush1.bf16.msra.mxu0 %v605
    %631 = vmatprep.subr.bf16.mxu0 0
    %632 = vmatpush1.bf16.msra.mxu0 %v606
    %633 = vmatprep.subr.bf16.mxu0 0
    %634 = vmatpush1.bf16.msra.mxu0 %v607
    %635 = vmatprep.subr.bf16.mxu0 0
    %636 = vmatpush1.bf16.msra.mxu0 %v608
    %637 = vmatprep.subr.bf16.mxu0 0
    %638 = vmatpush1.bf16.msra.mxu0 %v609
    %639 = vmatprep.subr.bf16.mxu0 0
    %640 = vmatpush1.bf16.msra.mxu0 %v610
    %641 = vmatprep.subr.bf16.mxu0 0
    %642 = vmatpush1.bf16.msra.mxu0 0
    %643 = vmatprep.subr.bf16.mxu0 0
    %644 = vmatpush1.bf16.msra.mxu0 0
    %645 = vmatprep.subr.bf16.mxu0 0
    %646 = vmatpush1.bf16.msra.mxu0 0
    %647 = vmatprep.subr.bf16.mxu0 0
    %648 = vmatpush1.bf16.msra.mxu0 0
    %649 = vmatprep.subr.bf16.mxu0 0
    %650 = vmatpush1.bf16.msra.mxu0 0
    %651 = vmatprep.subr.bf16.mxu0 0
    %652 = vmatpush1.bf16.msra.mxu0 0
    %653 = vmatprep.subr.bf16.mxu0 0
    %654 = vmatpush1.bf16.msra.mxu0 0
    %655 = vmatprep.subr.bf16.mxu0 0
    %656 = vmatpush1.bf16.msra.mxu0 0
    %657 = vmatprep.subr.bf16.mxu0 0
    %658 = vmatpush1.bf16.msra.mxu0 0
    %659 = vmatprep.subr.bf16.mxu0 0
    %660 = vmatpush1.bf16.msra.mxu0 0
    %661 = vmatprep.mubr.bf16.mxu0 0
    %662 = vmatmul.mubr.bf16.gmra.mrb[0].mxu0 %v618
    %v663 = vpop.f32.mrb[0].mxu0
    %v664 = vadd.f32 %v551, %v663
    %v665 = vpop.f32.mrb[0].mxu0
    %v666 = vpop.f32.mrb[0].mxu0
    %v667 = vadd.f32 %v554, %v666
    %v668 = vpop.f32.mrb[0].mxu0
    %669 = vmatprep.mubr.bf16.mxu0 0
    %670 = vmatmul.mubr.bf16.gmra.mrb[0].mxu0 %v621
    %v671 = vpop.f32.mrb[0].mxu0
    %v672 = vadd.f32 %v559, %v671
    %v673 = vpop.f32.mrb[0].mxu0
    %v674 = vpop.f32.mrb[0].mxu0
    %v675 = vadd.f32 %v562, %v674
    %v676 = vpop.f32.mrb[0].mxu0
    %677 = vmatprep.mubr.bf16.mxu0 0
    %678 = vmatmul.mubr.bf16.gmra.mrb[0].mxu0 %v624
    %v679 = vpop.f32.mrb[0].mxu0
    %v680 = vadd.f32 %v567, %v679
    %v681 = vpop.f32.mrb[0].mxu0
    %v682 = vpop.f32.mrb[0].mxu0
    %v683 = vadd.f32 %v570, %v682
    %v684 = vpop.f32.mrb[0].mxu0
    %685 = vmatprep.mubr.bf16.mxu0 0
    %686 = vmatmul.mubr.bf16.gmra.mrb[0].mxu0 %v627
    %v687 = vpop.f32.mrb[0].mxu0
    %v688 = vadd.f32 %v575, %v687
    %v689 = vpop.f32.mrb[0].mxu0
    %v690 = vpop.f32.mrb[0].mxu0
    %v691 = vadd.f32 %v578, %v690
    %v692 = vpop.f32.mrb[0].mxu0
    %693 = vdwg.mxu0
    %v694 = vld [vmem:[#allocation2 + $0x20] sm:$0xff]
    %v695 = vld [vmem:[#allocation8 + $0x60] sm:$0xf]
    %v696 = vld [vmem:[#allocation8 + $0x64] sm:$0xf]
    %v697 = vld [vmem:[#allocation8 + $0x68] sm:$0xf]
    %v698 = vld [vmem:[#allocation8 + $0x6c] sm:$0xf]
    %v699 = vld [vmem:[#allocation8 + $0x70] sm:$0xf]
    %v700 = vld [vmem:[#allocation8 + $0x74] sm:$0xf]
    %v701 = vld [vmem:[#allocation8 + $0x78] sm:$0xf]
    %v702 = vld [vmem:[#allocation8 + $0x7c] sm:$0xf]
    %v703 = vld [vmem:[#allocation8 + $0x80] sm:$0xf]
    %v704 = vld [vmem:[#allocation8 + $0x84] sm:$0xf]
    %v705 = vld [vmem:[#allocation8 + $0x88] sm:$0xf]
    %v706 = vld [vmem:[#allocation8 + $0x8c] sm:$0xf]
    %v719 = vunpack.c.l.b16 %v695
    %v720 = vunpack.c.l.b16 %v696
    %v721 = vunpack.c.l.b16 %v697
    %v722 = vunpack.c.l.b16 %v698
    %v723 = vunpack.c.l.b16 %v699
    %v724 = vunpack.c.l.b16 %v700
    %v725 = vunpack.c.l.b16 %v701
    %v726 = vunpack.c.l.b16 %v702
    %v727 = vunpack.c.l.b16 %v703
    %v728 = vunpack.c.l.b16 %v704
    %v729 = vunpack.c.l.b16 %v705
    %v730 = vunpack.c.l.b16 %v706
    %v731 = vpack.c.b16 %v720, %v719
    %v732 = vpack.c.b16 %v722, %v721
    %v733 = vpack.c.b16 %v724, %v723
    %v734 = vpack.c.b16 %v726, %v725
    %v735 = vpack.c.b16 %v728, %v727
    %v736 = vpack.c.b16 %v730, %v729
    %v744 = vsel %vm417, %v694, 0
    %746 = vmatprep.subr.bf16.mxu0 0
    %747 = vmatpush1.bf16.msra.mxu0 %v731
    %748 = vmatprep.subr.bf16.mxu0 0
    %749 = vmatpush1.bf16.msra.mxu0 %v732
    %750 = vmatprep.subr.bf16.mxu0 0
    %751 = vmatpush1.bf16.msra.mxu0 %v733
    %752 = vmatprep.subr.bf16.mxu0 0
    %753 = vmatpush1.bf16.msra.mxu0 %v734
    %754 = vmatprep.subr.bf16.mxu0 0
    %755 = vmatpush1.bf16.msra.mxu0 %v735
    %756 = vmatprep.subr.bf16.mxu0 0
    %757 = vmatpush1.bf16.msra.mxu0 %v736
    %758 = vmatprep.subr.bf16.mxu0 0
    %759 = vmatpush1.bf16.msra.mxu0 0
    %760 = vmatprep.subr.bf16.mxu0 0
    %761 = vmatpush1.bf16.msra.mxu0 0
    %762 = vmatprep.subr.bf16.mxu0 0
    %763 = vmatpush1.bf16.msra.mxu0 0
    %764 = vmatprep.subr.bf16.mxu0 0
    %765 = vmatpush1.bf16.msra.mxu0 0
    %766 = vmatprep.subr.bf16.mxu0 0
    %767 = vmatpush1.bf16.msra.mxu0 0
    %768 = vmatprep.subr.bf16.mxu0 0
    %769 = vmatpush1.bf16.msra.mxu0 0
    %770 = vmatprep.subr.bf16.mxu0 0
    %771 = vmatpush1.bf16.msra.mxu0 0
    %772 = vmatprep.subr.bf16.mxu0 0
    %773 = vmatpush1.bf16.msra.mxu0 0
    %774 = vmatprep.subr.bf16.mxu0 0
    %775 = vmatpush1.bf16.msra.mxu0 0
    %776 = vmatprep.subr.bf16.mxu0 0
    %777 = vmatpush1.bf16.msra.mxu0 0
    %778 = vmatprep.mubr.bf16.mxu0 0
    %779 = vmatmul.mubr.bf16.gmra.mrb[0].mxu0 %v621
    %v780 = vpop.f32.mrb[0].mxu0
    %v781 = vadd.f32 0.0, %v780
    %v782 = vpop.f32.mrb[0].mxu0
    %v783 = vpop.f32.mrb[0].mxu0
    %v784 = vadd.f32 0.0, %v783
    %v785 = vpop.f32.mrb[0].mxu0
    %786 = vmatprep.mubr.bf16.mxu0 0
    %787 = vmatmul.mubr.bf16.gmra.mrb[0].mxu0 %v624
    %v788 = vpop.f32.mrb[0].mxu0
    %v789 = vadd.f32 0.0, %v788
    %v790 = vpop.f32.mrb[0].mxu0
    %v791 = vpop.f32.mrb[0].mxu0
    %v792 = vadd.f32 0.0, %v791
    %v793 = vpop.f32.mrb[0].mxu0
    %794 = vmatprep.mubr.bf16.mxu0 0
    %795 = vmatmul.mubr.bf16.gmra.mrb[0].mxu0 %v627
    %v796 = vpop.f32.mrb[0].mxu0
    %v797 = vadd.f32 0.0, %v796
    %v798 = vpop.f32.mrb[0].mxu0
    %v799 = vpop.f32.mrb[0].mxu0
    %v800 = vadd.f32 0.0, %v799
    %v801 = vpop.f32.mrb[0].mxu0
    %802 = vmatprep.mubr.bf16.mxu0 0
    %803 = vmatmul.mubr.bf16.gmra.mrb[0].mxu0 %v744
    %v804 = vpop.f32.mrb[0].mxu0
    %v805 = vadd.f32 0.0, %v804
    %v806 = vpop.f32.mrb[0].mxu0
    %v807 = vpop.f32.mrb[0].mxu0
    %v808 = vadd.f32 0.0, %v807
    %v809 = vpop.f32.mrb[0].mxu0
    %810 = vdwg.mxu0
    %v811 = vadd.f32 %v664, %v781
    %v812 = vadd.f32 %v667, %v784
    %v813 = vadd.f32 %v672, %v789
    %v814 = vadd.f32 %v675, %v792
    %v815 = vadd.f32 %v680, %v797
    %v816 = vadd.f32 %v683, %v800
    %v817 = vadd.f32 %v688, %v805
    %v818 = vadd.f32 %v691, %v808
    %v819 = vld [vmem:[#allocation9] sm:$0x1]
    %v821 = vlaneseq
    %v822 = vshrl.u32 %v821, 7
    %v823 = vsub.s32 0, %v822
    %v824 = vrot.slane %v819, %v823
    %v826 = vadd.f32 %v811, %v824
    %v827 = vadd.f32 %v812, %v824
    %v828 = vadd.f32 %v813, %v824
    %v829 = vadd.f32 %v814, %v824
    %v830 = vadd.f32 %v815, %v824
    %v831 = vadd.f32 %v816, %v824
    %v832 = vadd.f32 %v817, %v824
    %v833 = vadd.f32 %v818, %v824
    %v834 = vmax.f32 %v826, 0.0
    %v835 = vmax.f32 %v827, 0.0
    %v836 = vmax.f32 %v828, 0.0
    %v837 = vmax.f32 %v829, 0.0
    %v838 = vmax.f32 %v830, 0.0
    %v839 = vmax.f32 %v831, 0.0
    %v840 = vmax.f32 %v832, 0.0
    %v841 = vmax.f32 %v833, 0.0
    %v842 = vld [vmem:[#allocation11] sm:$0xf]
    %v843 = vld [vmem:[#allocation11 + $0x4] sm:$0xf]
    %v844 = vld [vmem:[#allocation11 + $0x8] sm:$0xf]
    %v845 = vld [vmem:[#allocation11 + $0xc] sm:$0xf]
    %v846 = vld [vmem:[#allocation11 + $0x10] sm:$0xf]
    %v847 = vld [vmem:[#allocation11 + $0x14] sm:$0xf]
    %v848 = vld [vmem:[#allocation11 + $0x18] sm:$0xf]
    %v849 = vld [vmem:[#allocation11 + $0x1c] sm:$0xf]
    %v850 = vld [vmem:[#allocation12] sm:$0xf]
    %v851 = vld [vmem:[#allocation12 + $0x4] sm:$0xf]
    %v852 = vld [vmem:[#allocation12 + $0x8] sm:$0xf]
    %v853 = vld [vmem:[#allocation12 + $0xc] sm:$0xf]
    %v854 = vld [vmem:[#allocation12 + $0x10] sm:$0xf]
    %v855 = vld [vmem:[#allocation12 + $0x14] sm:$0xf]
    %v856 = vld [vmem:[#allocation12 + $0x18] sm:$0xf]
    %v857 = vld [vmem:[#allocation12 + $0x1c] sm:$0xf]
    %v858 = vld [vmem:[#allocation12 + $0x20] sm:$0xf]
    %v859 = vld [vmem:[#allocation12 + $0x24] sm:$0xf]
    %v860 = vld [vmem:[#allocation12 + $0x28] sm:$0xf]
    %v861 = vld [vmem:[#allocation12 + $0x2c] sm:$0xf]
    %v862 = vld [vmem:[#allocation12 + $0x30] sm:$0xf]
    %v863 = vld [vmem:[#allocation12 + $0x34] sm:$0xf]
    %v864 = vld [vmem:[#allocation12 + $0x38] sm:$0xf]
    %v865 = vld [vmem:[#allocation12 + $0x3c] sm:$0xf]
    %v874 = vunpack.c.l.b16 %v842
    %v875 = vunpack.c.l.b16 %v843
    %v876 = vunpack.c.l.b16 %v844
    %v877 = vunpack.c.l.b16 %v845
    %v878 = vunpack.c.l.b16 %v846
    %v879 = vunpack.c.l.b16 %v847
    %v880 = vunpack.c.l.b16 %v848
    %v881 = vunpack.c.l.b16 %v849
    %v882 = vpack.c.b16 %v875, %v874
    %v883 = vpack.c.b16 %v877, %v876
    %v884 = vpack.c.b16 %v879, %v878
    %v885 = vpack.c.b16 %v881, %v880
    %v906 = vunpack.c.l.b16 %v850
    %v907 = vunpack.c.l.b16 %v851
    %v908 = vunpack.c.l.b16 %v852
    %v909 = vunpack.c.l.b16 %v853
    %v910 = vunpack.c.l.b16 %v854
    %v911 = vunpack.c.l.b16 %v855
    %v912 = vunpack.c.l.b16 %v856
    %v913 = vunpack.c.l.b16 %v857
    %v914 = vunpack.c.l.b16 %v858
    %v915 = vunpack.c.l.b16 %v859
    %v916 = vunpack.c.l.b16 %v860
    %v917 = vunpack.c.l.b16 %v861
    %v918 = vunpack.c.l.b16 %v862
    %v919 = vunpack.c.l.b16 %v863
    %v920 = vunpack.c.l.b16 %v864
    %v921 = vunpack.c.l.b16 %v865
    %v922 = vpack.c.b16 %v907, %v906
    %v923 = vpack.c.b16 %v909, %v908
    %v924 = vpack.c.b16 %v911, %v910
    %v925 = vpack.c.b16 %v913, %v912
    %v926 = vpack.c.b16 %v915, %v914
    %v927 = vpack.c.b16 %v917, %v916
    %v928 = vpack.c.b16 %v919, %v918
    %v929 = vpack.c.b16 %v921, %v920
    %938 = vmatprep.subr.bf16.mxu0 0
    %939 = vmatpush1.bf16.msra.mxu0 %v922
    %940 = vmatprep.subr.bf16.mxu0 0
    %941 = vmatpush1.bf16.msra.mxu0 %v923
    %942 = vmatprep.subr.bf16.mxu0 0
    %943 = vmatpush1.bf16.msra.mxu0 %v924
    %944 = vmatprep.subr.bf16.mxu0 0
    %945 = vmatpush1.bf16.msra.mxu0 %v925
    %946 = vmatprep.subr.bf16.mxu0 0
    %947 = vmatpush1.bf16.msra.mxu0 %v926
    %948 = vmatprep.subr.bf16.mxu0 0
    %949 = vmatpush1.bf16.msra.mxu0 %v927
    %950 = vmatprep.subr.bf16.mxu0 0
    %951 = vmatpush1.bf16.msra.mxu0 %v928
    %952 = vmatprep.subr.bf16.mxu0 0
    %953 = vmatpush1.bf16.msra.mxu0 %v929
    %954 = vmatprep.subr.bf16.mxu0 0
    %955 = vmatpush1.bf16.msra.mxu0 0
    %956 = vmatprep.subr.bf16.mxu0 0
    %957 = vmatpush1.bf16.msra.mxu0 0
    %958 = vmatprep.subr.bf16.mxu0 0
    %959 = vmatpush1.bf16.msra.mxu0 0
    %960 = vmatprep.subr.bf16.mxu0 0
    %961 = vmatpush1.bf16.msra.mxu0 0
    %962 = vmatprep.subr.bf16.mxu0 0
    %963 = vmatpush1.bf16.msra.mxu0 0
    %964 = vmatprep.subr.bf16.mxu0 0
    %965 = vmatpush1.bf16.msra.mxu0 0
    %966 = vmatprep.subr.bf16.mxu0 0
    %967 = vmatpush1.bf16.msra.mxu0 0
    %968 = vmatprep.subr.bf16.mxu0 0
    %969 = vmatpush1.bf16.msra.mxu0 0
    %970 = vmatprep.mubr.bf16.mxu0 0
    %971 = vmatmul.mubr.bf16.gmra.mrb[0].mxu0 %v882
    %v972 = vpop.f32.mrb[0].mxu0
    %v973 = vadd.f32 0.0, %v972
    %v974 = vpop.f32.mrb[0].mxu0
    %v975 = vpop.f32.mrb[0].mxu0
    %v976 = vadd.f32 0.0, %v975
    %v977 = vpop.f32.mrb[0].mxu0
    %978 = vmatprep.mubr.bf16.mxu0 0
    %979 = vmatmul.mubr.bf16.gmra.mrb[0].mxu0 %v883
    %v980 = vpop.f32.mrb[0].mxu0
    %v981 = vadd.f32 0.0, %v980
    %v982 = vpop.f32.mrb[0].mxu0
    %v983 = vpop.f32.mrb[0].mxu0
    %v984 = vadd.f32 0.0, %v983
    %v985 = vpop.f32.mrb[0].mxu0
    %986 = vmatprep.mubr.bf16.mxu0 0
    %987 = vmatmul.mubr.bf16.gmra.mrb[0].mxu0 %v884
    %v988 = vpop.f32.mrb[0].mxu0
    %v989 = vadd.f32 0.0, %v988
    %v990 = vpop.f32.mrb[0].mxu0
    %v991 = vpop.f32.mrb[0].mxu0
    %v992 = vadd.f32 0.0, %v991
    %v993 = vpop.f32.mrb[0].mxu0
    %994 = vmatprep.mubr.bf16.mxu0 0
    %995 = vmatmul.mubr.bf16.gmra.mrb[0].mxu0 %v885
    %v996 = vpop.f32.mrb[0].mxu0
    %v997 = vadd.f32 0.0, %v996
    %v998 = vpop.f32.mrb[0].mxu0
    %v999 = vpop.f32.mrb[0].mxu0
    %v1000 = vadd.f32 0.0, %v999
    %v1001 = vpop.f32.mrb[0].mxu0
    %1002 = vdwg.mxu0
    %v1003 = vadd.f32 %v834, %v973
    %v1004 = vadd.f32 %v835, %v976
    %v1005 = vadd.f32 %v836, %v981
    %v1006 = vadd.f32 %v837, %v984
    %v1007 = vadd.f32 %v838, %v989
    %v1008 = vadd.f32 %v839, %v992
    %v1009 = vadd.f32 %v840, %v997
    %v1010 = vadd.f32 %v841, %v1000
    %v1011 = vpack.c.bf16 %v1004, %v1003
    %v1012 = vpack.c.bf16 %v1006, %v1005
    %v1013 = vpack.c.bf16 %v1008, %v1007
    %v1014 = vpack.c.bf16 %v1010, %v1009
    %v1019 = vunpack.c.l.b16 %v1011
    %v1020 = vunpack.c.h.b16 %v1011
    %v1021 = vunpack.c.l.b16 %v1012
    %v1022 = vunpack.c.h.b16 %v1012
    %v1023 = vunpack.c.l.b16 %v1013
    %v1024 = vunpack.c.h.b16 %v1013
    %v1025 = vunpack.c.l.b16 %v1014
    %v1026 = vunpack.c.h.b16 %v1014
    %v1027 = vpack.c.b16 %v1019, %v1019
    %v1028 = vpack.c.b16 %v1020, %v1020
    %v1029 = vpack.c.b16 %v1021, %v1021
    %v1030 = vpack.c.b16 %v1022, %v1022
    %v1031 = vpack.c.b16 %v1023, %v1023
    %v1032 = vpack.c.b16 %v1024, %v1024
    %v1033 = vpack.c.b16 %v1025, %v1025
    %v1034 = vpack.c.b16 %v1026, %v1026
    %1043 = vst [vmem:[#allocation14] sm:$0xf] %v1027
    %1044 = vst [vmem:[#allocation14 + $0x4] sm:$0xf] %v1028
    %1045 = vst [vmem:[#allocation14 + $0x8] sm:$0xf] %v1029
    %1046 = vst [vmem:[#allocation14 + $0xc] sm:$0xf] %v1030
    %1047 = vst [vmem:[#allocation14 + $0x10] sm:$0xf] %v1031
    %1048 = vst [vmem:[#allocation14 + $0x14] sm:$0xf] %v1032
    %1049 = vst [vmem:[#allocation14 + $0x18] sm:$0xf] %v1033
    %1050 = vst [vmem:[#allocation14 + $0x1c] sm:$0xf] %v1034
    // Predicated region
    $region50: #{ttf_head_forward.4} parent=1 // pred_check
      _
    $region51: #{ttf_head_forward.4} parent=1 // pred_check_branch
      %1052 = sbr.rel (0) target = $region53
    $region52: #{ttf_head_forward.4} parent=1 // pred_region
      %s1054 = ssub.s32 512, 512
      %1055 = vsyncadd [#allocation5], %s1054
      %s1056 = sshll.u32 [#allocation14], 4
      %s1057 = int_to_ptr.vmem [resolvable:$true] %s1056
      %1062 = dma.vmem_to_hbm [thread:$0]  %s1057, 512, %s6, [#allocation5], 64, 64, 4
    $region53: #{ttf_head_forward.4} parent=1 // pred_fallthru
      _
    // Predicated region
    $region54: #{ttf_head_forward.4} parent=1 // pred_check
      _
    $region55: #{ttf_head_forward.4} parent=1 // pred_check_branch
      %1064 = sbr.rel (0) target = $region57
    $region56: #{ttf_head_forward.4} parent=1 // pred_region
      %1065 = dma.done [#allocation5], 512
    $region57: #{ttf_head_forward.4} parent=1 // pred_fallthru
      _
    %1066 = vsyncpa [#allocation4], 1
    %1067 = vsyncpa [#allocation7], 1
    %1068 = vsyncpa [#allocation10], 1
    %1069 = vsyncpa [#allocation13], 1
    %1070 = vsyncpa [#allocation5], 1

// kernel: ttf_head_forward.5
$region0: #{ttf_head_forward.5}
  #allocation0 [shape = 'u32[]', space=smem, size = 0x4, offset = 0x4, fixed_abs, tag = 'smem constant byte address 0x4 - core index']
  #allocation1 [shape = 'u32[144,128]{1,0:T(1,128)}', space=vmem, size = 0x12000, scoped, tag = 'internal scratch']
  #allocation2 [shape = 'bf16[112,96]{1,0:T(16,128)(2,1)}', space=vmem, size = 0x7000, scoped, tag = 'scratch operand']
  %s0 = inlined_call_operand.hbm [shape: bf16[114,33], index: 0, kind: input, shape index: {}]
  %s1 = inlined_call_operand.hbm [shape: bf16[33,32], index: 1, kind: input, shape index: {}]
  %s2 = inlined_call_operand.hbm [shape: bf16[288,128], index: 2, kind: input, shape index: {}]
  %s3 = inlined_call_operand.hbm [shape: f32[1,128], index: 3, kind: input, shape index: {}]
  %s4 = inlined_call_operand.hbm [shape: bf16[96,64], index: 4, kind: input, shape index: {}]
  %s5 = inlined_call_operand.hbm [shape: bf16[64,128], index: 5, kind: input, shape index: {}]
  %s6 = inlined_call_operand.hbm [shape: bf16[96,128], index: 6, kind: output, shape index: {}]
  %s7 = sld [smem:[#allocation0]]
  $region58: #{ttf_head_forward.5} parent=0
    _
  %s9 = ssub.s32 1, %s7
  %s10 = scalar_select 0, %s9, %s7
  $region1: #{ttf_head_forward.5} parent=0
    #allocation3 [shape = 'u8[30720]{0}', space=vmem, size = 0x7800, scoped, tag = 'input window, operand 0, single buffered']
    #allocation4 [shape = 's32[1]{0}', space=sflag, size = 0x4, scoped, tag = 'scoped memory for ttf_head_forward.5']
    #allocation5 [shape = 's32[1]{0}', space=sflag, size = 0x4, scoped, tag = 'scoped memory for ttf_head_forward.5']
    #allocation6 [shape = 'u8[10240]{0}', space=vmem, size = 0x2800, scoped, tag = 'input window, operand 1, single buffered']
    #allocation7 [shape = 's32[1]{0}', space=sflag, size = 0x4, scoped, tag = 'scoped memory for ttf_head_forward.5']
    #allocation8 [shape = 'u8[73728]{0}', space=vmem, size = 0x12000, scoped, tag = 'input window, operand 2, single buffered']
    #allocation9 [shape = 'u8[512]{0}', space=vmem, size = 0x400, scoped, tag = 'input window, operand 3, single buffered']
    #allocation10 [shape = 's32[1]{0}', space=sflag, size = 0x4, scoped, tag = 'scoped memory for ttf_head_forward.5']
    #allocation11 [shape = 'u8[24576]{0}', space=vmem, size = 0x6000, scoped, tag = 'input window, operand 4, single buffered']
    #allocation12 [shape = 'u8[16384]{0}', space=vmem, size = 0x4000, scoped, tag = 'input window, operand 5, single buffered']
    #allocation13 [shape = 's32[1]{0}', space=sflag, size = 0x4, scoped, tag = 'scoped memory for ttf_head_forward.5']
    #allocation14 [shape = 'u8[24576]{0}', space=vmem, size = 0x6000, scoped, tag = 'output window, operand 0, single buffered']
    %11 = vsyncpa [#allocation4], 0
    %12 = vsyncpa [#allocation7], 0
    %13 = vsyncpa [#allocation10], 0
    %14 = vsyncpa [#allocation13], 0
    %15 = vsyncpa [#allocation5], 0
    // Predicated region
    $region2: #{ttf_head_forward.5} parent=1 // pred_check
      _
    $region3: #{ttf_head_forward.5} parent=1 // pred_check_branch
      %17 = sbr.rel (0) target = $region5
    $region4: #{ttf_head_forward.5} parent=1 // pred_region
      %s19 = ssub.s32 960, 960
      %20 = vsyncadd [#allocation4], %s19
      %s21 = sshll.u32 [#allocation3], 4
      %s22 = int_to_ptr.vmem [resolvable:$true] %s21
      %27 = dma.hbm_to_vmem [thread:$0]  %s0, 960, %s22, [#allocation4], 64, 64, 4
    $region5: #{ttf_head_forward.5} parent=1 // pred_fallthru
      _
    // Predicated region
    $region6: #{ttf_head_forward.5} parent=1 // pred_check
      _
    $region7: #{ttf_head_forward.5} parent=1 // pred_check_branch
      %29 = sbr.rel (0) target = $region9
    $region8: #{ttf_head_forward.5} parent=1 // pred_region
      %s31 = ssub.s32 320, 320
      %32 = vsyncadd [#allocation7], %s31
      %s33 = sshll.u32 [#allocation6], 4
      %s34 = int_to_ptr.vmem [resolvable:$true] %s33
      %39 = dma.hbm_to_vmem [thread:$0]  %s1, 320, %s34, [#allocation7], 64, 64, 4
    $region9: #{ttf_head_forward.5} parent=1 // pred_fallthru
      _
    // Predicated region
    $region10: #{ttf_head_forward.5} parent=1 // pred_check
      _
    $region11: #{ttf_head_forward.5} parent=1 // pred_check_branch
      %41 = sbr.rel (0) target = $region13
    $region12: #{ttf_head_forward.5} parent=1 // pred_region
      %s43 = ssub.s32 2304, 2304
      %44 = vsyncadd [#allocation7], %s43
      %s45 = sshll.u32 [#allocation8], 4
      %s46 = int_to_ptr.vmem [resolvable:$true] %s45
      %51 = dma.hbm_to_vmem [thread:$0]  %s2, 2304, %s46, [#allocation7], 64, 64, 4
    $region13: #{ttf_head_forward.5} parent=1 // pred_fallthru
      _
    // Predicated region
    $region14: #{ttf_head_forward.5} parent=1 // pred_check
      _
    $region15: #{ttf_head_forward.5} parent=1 // pred_check_branch
      %53 = sbr.rel (0) target = $region17
    $region16: #{ttf_head_forward.5} parent=1 // pred_region
      %s55 = ssub.s32 16, 16
      %56 = vsyncadd [#allocation10], %s55
      %s58 = sshll.u32 [#allocation9], 4
      %s59 = int_to_ptr.vmem [resolvable:$true] %s58
      %61 = dma.hbm_to_vmem [thread:$0]  %s3, 16, %s59, [#allocation10]
    $region17: #{ttf_head_forward.5} parent=1 // pred_fallthru
      _
    // Predicated region
    $region18: #{ttf_head_forward.5} parent=1 // pred_check
      _
    $region19: #{ttf_head_forward.5} parent=1 // pred_check_branch
      %63 = sbr.rel (0) target = $region21
    $region20: #{ttf_head_forward.5} parent=1 // pred_region
      %s65 = ssub.s32 768, 768
      %66 = vsyncadd [#allocation10], %s65
      %s67 = sshll.u32 [#allocation11], 4
      %s68 = int_to_ptr.vmem [resolvable:$true] %s67
      %73 = dma.hbm_to_vmem [thread:$0]  %s4, 768, %s68, [#allocation10], 64, 64, 4
    $region21: #{ttf_head_forward.5} parent=1 // pred_fallthru
      _
    // Predicated region
    $region22: #{ttf_head_forward.5} parent=1 // pred_check
      _
    $region23: #{ttf_head_forward.5} parent=1 // pred_check_branch
      %75 = sbr.rel (0) target = $region25
    $region24: #{ttf_head_forward.5} parent=1 // pred_region
      %s77 = ssub.s32 512, 512
      %78 = vsyncadd [#allocation13], %s77
      %s79 = sshll.u32 [#allocation12], 4
      %s80 = int_to_ptr.vmem [resolvable:$true] %s79
      %85 = dma.hbm_to_vmem [thread:$0]  %s5, 512, %s80, [#allocation13], 64, 64, 4
    $region25: #{ttf_head_forward.5} parent=1 // pred_fallthru
      _
    // Predicated region
    $region26: #{ttf_head_forward.5} parent=1 // pred_check
      _
    $region27: #{ttf_head_forward.5} parent=1 // pred_check_branch
      %87 = sbr.rel (0) target = $region29
    $region28: #{ttf_head_forward.5} parent=1 // pred_region
      %88 = dma.done [#allocation4], 960
    $region29: #{ttf_head_forward.5} parent=1 // pred_fallthru
      _
    // Predicated region
    $region30: #{ttf_head_forward.5} parent=1 // pred_check
      _
    $region31: #{ttf_head_forward.5} parent=1 // pred_check_branch
      %90 = sbr.rel (0) target = $region33
    $region32: #{ttf_head_forward.5} parent=1 // pred_region
      %91 = dma.done [#allocation7], 320
    $region33: #{ttf_head_forward.5} parent=1 // pred_fallthru
      _
    // Predicated region
    $region34: #{ttf_head_forward.5} parent=1 // pred_check
      _
    $region35: #{ttf_head_forward.5} parent=1 // pred_check_branch
      %93 = sbr.rel (0) target = $region37
    $region36: #{ttf_head_forward.5} parent=1 // pred_region
      %94 = dma.done [#allocation7], 2304
    $region37: #{ttf_head_forward.5} parent=1 // pred_fallthru
      _
    // Predicated region
    $region38: #{ttf_head_forward.5} parent=1 // pred_check
      _
    $region39: #{ttf_head_forward.5} parent=1 // pred_check_branch
      %96 = sbr.rel (0) target = $region41
    $region40: #{ttf_head_forward.5} parent=1 // pred_region
      %97 = dma.done [#allocation10], 16
    $region41: #{ttf_head_forward.5} parent=1 // pred_fallthru
      _
    // Predicated region
    $region42: #{ttf_head_forward.5} parent=1 // pred_check
      _
    $region43: #{ttf_head_forward.5} parent=1 // pred_check_branch
      %99 = sbr.rel (0) target = $region45
    $region44: #{ttf_head_forward.5} parent=1 // pred_region
      %100 = dma.done [#allocation10], 768
    $region45: #{ttf_head_forward.5} parent=1 // pred_fallthru
      _
    // Predicated region
    $region46: #{ttf_head_forward.5} parent=1 // pred_check
      _
    $region47: #{ttf_head_forward.5} parent=1 // pred_check_branch
      %102 = sbr.rel (0) target = $region49
    $region48: #{ttf_head_forward.5} parent=1 // pred_region
      %103 = dma.done [#allocation13], 512
    $region49: #{ttf_head_forward.5} parent=1 // pred_fallthru
      _
    %s105 = smul.u32 0, 96
    %s106 = sshra.s32 %s105, 3
    %s107 = sand.u32 %s105, 7
    %s108 = smul.addr %s106, 4
    %s109 = scalar_lea.vmem [#allocation3], %s108
    %v110 = vld [vmem:[%s109] sm:$0xf]
    %v111 = vld [vmem:[%s109 + $0x4] sm:$0xf]
    %v112 = vld [vmem:[%s109 + $0x8] sm:$0xf]
    %v113 = vld [vmem:[%s109 + $0xc] sm:$0xf]
    %v114 = vld [vmem:[%s109 + $0x10] sm:$0xf]
    %v115 = vld [vmem:[%s109 + $0x14] sm:$0xf]
    %v116 = vld [vmem:[%s109 + $0x18] sm:$0xf]
    %v117 = vld [vmem:[%s109 + $0x1c] sm:$0xf]
    %v118 = vld [vmem:[%s109 + $0x20] sm:$0xf]
    %v119 = vld [vmem:[%s109 + $0x24] sm:$0xf]
    %v120 = vld [vmem:[%s109 + $0x28] sm:$0xf]
    %v121 = vld [vmem:[%s109 + $0x2c] sm:$0xf]
    %v122 = vld [vmem:[%s109 + $0x30] sm:$0xf]
    %v123 = vld [vmem:[%s109 + $0x34] sm:$0xf]
    %v124 = vld [vmem:[%s109 + $0x38] sm:$0x1]
    %v125 = vld [vmem:[#allocation6] sm:$0xf]
    %v126 = vld [vmem:[#allocation6 + $0x4] sm:$0xf]
    %v127 = vld [vmem:[#allocation6 + $0x8] sm:$0xf]
    %v128 = vld [vmem:[#allocation6 + $0xc] sm:$0xf]
    %v129 = vld [vmem:[#allocation6 + $0x10] sm:$0x1]
    %v145 = vunpack.c.l.b16 %v110
    %v146 = vunpack.c.l.b16 %v111
    %v147 = vunpack.c.l.b16 %v112
    %v148 = vunpack.c.l.b16 %v113
    %v149 = vunpack.c.l.b16 %v114
    %v150 = vunpack.c.l.b16 %v115
    %v151 = vunpack.c.l.b16 %v116
    %v152 = vunpack.c.l.b16 %v117
    %v153 = vunpack.c.l.b16 %v118
    %v154 = vunpack.c.l.b16 %v119
    %v155 = vunpack.c.l.b16 %v120
    %v156 = vunpack.c.l.b16 %v121
    %v157 = vunpack.c.l.b16 %v122
    %v158 = vunpack.c.l.b16 %v123
    %v159 = vunpack.c.l.b16 %v124
    %v160 = vpack.c.b16 %v146, %v145
    %v161 = vpack.c.b16 %v148, %v147
    %v162 = vpack.c.b16 %v150, %v149
    %v163 = vpack.c.b16 %v152, %v151
    %v164 = vpack.c.b16 %v154, %v153
    %v165 = vpack.c.b16 %v156, %v155
    %v166 = vpack.c.b16 %v158, %v157
    %v167 = vpack.c.b16 %v159, %v159
    %v173 = vunpack.c.l.b16 %v125
    %v174 = vunpack.c.l.b16 %v126
    %v175 = vunpack.c.l.b16 %v127
    %v176 = vunpack.c.l.b16 %v128
    %v177 = vunpack.c.l.b16 %v129
    %v178 = vpack.c.b16 %v174, %v173
    %v179 = vpack.c.b16 %v176, %v175
    %v180 = vpack.c.b16 %v177, %v177
    %vm183 = vcmask 269312
    %v185 = vsel %vm183, %v160, 0
    %v188 = vsel %vm183, %v161, 0
    %v191 = vsel %vm183, %v162, 0
    %v194 = vsel %vm183, %v163, 0
    %v197 = vsel %vm183, %v164, 0
    %v200 = vsel %vm183, %v165, 0
    %v203 = vsel %vm183, %v166, 0
    %v206 = vsel %vm183, %v167, 0
    %vm208 = vcmask 1040384
    %v209 = vsel 0, 4294967295, 65535
    %v210 = vsel %vm208, %v209, 0
    %v212 = vand.u32 %v180, %v210
    %214 = vmatprep.subr.bf16.mxu0 0
    %215 = vmatpush1.bf16.msra.mxu0 %v178
    %216 = vmatprep.subr.bf16.mxu0 0
    %217 = vmatpush1.bf16.msra.mxu0 %v179
    %218 = vmatprep.subr.bf16.mxu0 0
    %219 = vmatpush1.bf16.msra.mxu0 %v212
    %220 = vmatprep.subr.bf16.mxu0 0
    %221 = vmatpush1.bf16.msra.mxu0 0
    %222 = vmatprep.subr.bf16.mxu0 0
    %223 = vmatpush1.bf16.msra.mxu0 0
    %224 = vmatprep.subr.bf16.mxu0 0
    %225 = vmatpush1.bf16.msra.mxu0 0
    %226 = vmatprep.subr.bf16.mxu0 0
    %227 = vmatpush1.bf16.msra.mxu0 0
    %228 = vmatprep.subr.bf16.mxu0 0
    %229 = vmatpush1.bf16.msra.mxu0 0
    %230 = vmatprep.subr.bf16.mxu0 0
    %231 = vmatpush1.bf16.msra.mxu0 0
    %232 = vmatprep.subr.bf16.mxu0 0
    %233 = vmatpush1.bf16.msra.mxu0 0
    %234 = vmatprep.subr.bf16.mxu0 0
    %235 = vmatpush1.bf16.msra.mxu0 0
    %236 = vmatprep.subr.bf16.mxu0 0
    %237 = vmatpush1.bf16.msra.mxu0 0
    %238 = vmatprep.subr.bf16.mxu0 0
    %239 = vmatpush1.bf16.msra.mxu0 0
    %240 = vmatprep.subr.bf16.mxu0 0
    %241 = vmatpush1.bf16.msra.mxu0 0
    %242 = vmatprep.subr.bf16.mxu0 0
    %243 = vmatpush1.bf16.msra.mxu0 0
    %244 = vmatprep.subr.bf16.mxu0 0
    %245 = vmatpush1.bf16.msra.mxu0 0
    %246 = vmatprep.mubr.bf16.mxu0 0
    %247 = vmatmul.mubr.bf16.gmra.mrb[0].mxu0 %v185
    %v248 = vpop.f32.mrb[0].mxu0
    %v249 = vadd.f32 0.0, %v248
    %v250 = vpop.f32.mrb[0].mxu0
    %v251 = vpop.f32.mrb[0].mxu0
    %v252 = vadd.f32 0.0, %v251
    %v253 = vpop.f32.mrb[0].mxu0
    %254 = vmatprep.mubr.bf16.mxu0 0
    %255 = vmatmul.mubr.bf16.gmra.mrb[0].mxu0 %v188
    %v256 = vpop.f32.mrb[0].mxu0
    %v257 = vadd.f32 0.0, %v256
    %v258 = vpop.f32.mrb[0].mxu0
    %v259 = vpop.f32.mrb[0].mxu0
    %v260 = vadd.f32 0.0, %v259
    %v261 = vpop.f32.mrb[0].mxu0
    %262 = vmatprep.mubr.bf16.mxu0 0
    %263 = vmatmul.mubr.bf16.gmra.mrb[0].mxu0 %v191
    %v264 = vpop.f32.mrb[0].mxu0
    %v265 = vadd.f32 0.0, %v264
    %v266 = vpop.f32.mrb[0].mxu0
    %v267 = vpop.f32.mrb[0].mxu0
    %v268 = vadd.f32 0.0, %v267
    %v269 = vpop.f32.mrb[0].mxu0
    %270 = vmatprep.mubr.bf16.mxu0 0
    %271 = vmatmul.mubr.bf16.gmra.mrb[0].mxu0 %v194
    %v272 = vpop.f32.mrb[0].mxu0
    %v273 = vadd.f32 0.0, %v272
    %v274 = vpop.f32.mrb[0].mxu0
    %v275 = vpop.f32.mrb[0].mxu0
    %v276 = vadd.f32 0.0, %v275
    %v277 = vpop.f32.mrb[0].mxu0
    %278 = vmatprep.mubr.bf16.mxu0 0
    %279 = vmatmul.mubr.bf16.gmra.mrb[0].mxu0 %v197
    %v280 = vpop.f32.mrb[0].mxu0
    %v281 = vadd.f32 0.0, %v280
    %v282 = vpop.f32.mrb[0].mxu0
    %v283 = vpop.f32.mrb[0].mxu0
    %v284 = vadd.f32 0.0, %v283
    %v285 = vpop.f32.mrb[0].mxu0
    %286 = vmatprep.mubr.bf16.mxu0 0
    %287 = vmatmul.mubr.bf16.gmra.mrb[0].mxu0 %v200
    %v288 = vpop.f32.mrb[0].mxu0
    %v289 = vadd.f32 0.0, %v288
    %v290 = vpop.f32.mrb[0].mxu0
    %v291 = vpop.f32.mrb[0].mxu0
    %v292 = vadd.f32 0.0, %v291
    %v293 = vpop.f32.mrb[0].mxu0
    %294 = vmatprep.mubr.bf16.mxu0 0
    %295 = vmatmul.mubr.bf16.gmra.mrb[0].mxu0 %v203
    %v296 = vpop.f32.mrb[0].mxu0
    %v297 = vadd.f32 0.0, %v296
    %v298 = vpop.f32.mrb[0].mxu0
    %v299 = vpop.f32.mrb[0].mxu0
    %v300 = vadd.f32 0.0, %v299
    %v301 = vpop.f32.mrb[0].mxu0
    %302 = vmatprep.mubr.bf16.mxu0 0
    %303 = vmatmul.mubr.bf16.gmra.mrb[0].mxu0 %v206
    %v304 = vpop.f32.mrb[0].mxu0
    %v305 = vadd.f32 0.0, %v304
    %v306 = vpop.f32.mrb[0].mxu0
    %v307 = vpop.f32.mrb[0].mxu0
    %v308 = vpop.f32.mrb[0].mxu0
    %309 = vdwg.mxu0
    %v310 = vmax.f32 %v249, 0.0
    %v311 = vmax.f32 %v252, 0.0
    %v312 = vmax.f32 %v257, 0.0
    %v313 = vmax.f32 %v260, 0.0
    %v314 = vmax.f32 %v265, 0.0
    %v315 = vmax.f32 %v268, 0.0
    %v316 = vmax.f32 %v273, 0.0
    %v317 = vmax.f32 %v276, 0.0
    %v318 = vmax.f32 %v281, 0.0
    %v319 = vmax.f32 %v284, 0.0
    %v320 = vmax.f32 %v289, 0.0
    %v321 = vmax.f32 %v292, 0.0
    %v322 = vmax.f32 %v297, 0.0
    %v323 = vmax.f32 %v300, 0.0
    %v324 = vmax.f32 %v305, 0.0
    %v325 = vpack.c.bf16 %v311, %v310
    %v326 = vpack.c.bf16 %v313, %v312
    %v327 = vpack.c.bf16 %v315, %v314
    %v328 = vpack.c.bf16 %v317, %v316
    %v329 = vpack.c.bf16 %v319, %v318
    %v330 = vpack.c.bf16 %v321, %v320
    %v331 = vpack.c.bf16 %v323, %v322
    %v332 = vpack.c.bf16 %v324, %v324
    %vm333 = vsmask.f32 7424
    %v335 = vshrl.u32 %v325, 16
    %v337 = vshll.u32 %v325, 16
    %v339 = vrot.slane %v337, 1
    %v340 = vor.u32 %v335, %v339
    %v342 = vshll.u32 %v326, 16
    %v344 = vrot.slane %v342, 1
    %v345 = vsel %vm333, %v340, %v344
    %v346 = vshrl.u32 %v326, 16
    %v348 = vor.u32 %v346, %v344
    %v350 = vshll.u32 %v327, 16
    %v352 = vrot.slane %v350, 1
    %v353 = vsel %vm333, %v348, %v352
    %v354 = vshrl.u32 %v327, 16
    %v356 = vor.u32 %v354, %v352
    %v358 = vshll.u32 %v328, 16
    %v360 = vrot.slane %v358, 1
    %v361 = vsel %vm333, %v356, %v360
    %v362 = vshrl.u32 %v328, 16
    %v364 = vor.u32 %v362, %v360
    %v366 = vshll.u32 %v329, 16
    %v368 = vrot.slane %v366, 1
    %v369 = vsel %vm333, %v364, %v368
    %v370 = vshrl.u32 %v329, 16
    %v372 = vor.u32 %v370, %v368
    %v374 = vshll.u32 %v330, 16
    %v376 = vrot.slane %v374, 1
    %v377 = vsel %vm333, %v372, %v376
    %v378 = vshrl.u32 %v330, 16
    %v380 = vor.u32 %v378, %v376
    %v382 = vshll.u32 %v331, 16
    %v384 = vrot.slane %v382, 1
    %v385 = vsel %vm333, %v380, %v384
    %v386 = vshrl.u32 %v331, 16
    %v388 = vor.u32 %v386, %v384
    %v390 = vshll.u32 %v332, 16
    %v392 = vrot.slane %v390, 1
    %v393 = vsel %vm333, %v388, %v392
    %394 = vrot.lane.b32.xlu0 %v345, 32
    %v395 = vpop.permute.xlu0 %394
    %396 = vrot.lane.b32.xlu0 %v353, 32
    %v397 = vpop.permute.xlu0 %396
    %398 = vrot.lane.b32.xlu0 %v361, 32
    %v399 = vpop.permute.xlu0 %398
    %400 = vrot.lane.b32.xlu0 %v369, 32
    %v401 = vpop.permute.xlu0 %400
    %402 = vrot.lane.b32.xlu0 %v377, 32
    %v403 = vpop.permute.xlu0 %402
    %404 = vrot.lane.b32.xlu0 %v385, 32
    %v405 = vpop.permute.xlu0 %404
    %406 = vrot.lane.b32.xlu0 %v393, 32
    %v407 = vpop.permute.xlu0 %406
    %vm416 = vcmask 1046528
    %v417 = vrot.slane %v325, 1
    %v418 = vrot.slane %v326, 1
    %v419 = vsel %vm416, %v417, %v418
    %v420 = vrot.slane %v327, 1
    %v421 = vsel %vm416, %v418, %v420
    %v422 = vrot.slane %v328, 1
    %v423 = vsel %vm416, %v420, %v422
    %v424 = vrot.slane %v329, 1
    %v425 = vsel %vm416, %v422, %v424
    %v426 = vrot.slane %v330, 1
    %v427 = vsel %vm416, %v424, %v426
    %v428 = vrot.slane %v331, 1
    %v429 = vsel %vm416, %v426, %v428
    %v430 = vrot.slane %v332, 1
    %v431 = vsel %vm416, %v428, %v430
    %432 = vrot.lane.b32.xlu0 %v419, 64
    %v433 = vpop.permute.xlu0 %432
    %434 = vrot.lane.b32.xlu0 %v421, 64
    %v435 = vpop.permute.xlu0 %434
    %436 = vrot.lane.b32.xlu0 %v423, 64
    %v437 = vpop.permute.xlu0 %436
    %438 = vrot.lane.b32.xlu0 %v425, 64
    %v439 = vpop.permute.xlu0 %438
    %440 = vrot.lane.b32.xlu0 %v427, 64
    %v441 = vpop.permute.xlu0 %440
    %442 = vrot.lane.b32.xlu0 %v429, 64
    %v443 = vpop.permute.xlu0 %442
    %444 = vrot.lane.b32.xlu0 %v431, 64
    %v445 = vpop.permute.xlu0 %444
    %vm446 = vcmask 261120
    %v448 = vsel %vm446, %v325, %v395
    %v450 = vsel %vm446, %v326, %v397
    %v452 = vsel %vm446, %v327, %v399
    %v454 = vsel %vm446, %v328, %v401
    %v456 = vsel %vm446, %v329, %v403
    %v458 = vsel %vm446, %v330, %v405
    %v460 = vsel %vm446, %v331, %v407
    %vm461 = vcmask 523264
    %v463 = vsel %vm461, %v448, %v433
    %v466 = vsel %vm461, %v450, %v435
    %v469 = vsel %vm461, %v452, %v437
    %v472 = vsel %vm461, %v454, %v439
    %v475 = vsel %vm461, %v456, %v441
    %v478 = vsel %vm461, %v458, %v443
    %v481 = vsel %vm461, %v460, %v445
    %vm483 = vcmask 785408
    %484 = vst.msk [vmem:[#allocation2] sm:$0xff] %vm483, %v463
    %485 = vst.msk [vmem:[#allocation2 + $0x8] sm:$0xff] %vm483, %v466
    %486 = vst.msk [vmem:[#allocation2 + $0x10] sm:$0xff] %vm483, %v469
    %487 = vst.msk [vmem:[#allocation2 + $0x18] sm:$0xff] %vm483, %v472
    %488 = vst.msk [vmem:[#allocation2 + $0x20] sm:$0xff] %vm483, %v475
    %489 = vst.msk [vmem:[#allocation2 + $0x28] sm:$0xff] %vm483, %v478
    %490 = vst.msk [vmem:[#allocation2 + $0x30] sm:$0xff] %vm483, %v481
    %v491 = vld [vmem:[#allocation2] sm:$0xff]
    %v492 = vld [vmem:[#allocation2 + $0x8] sm:$0xff]
    %v493 = vld [vmem:[#allocation2 + $0x10] sm:$0xff]
    %v494 = vld [vmem:[#allocation2 + $0x18] sm:$0xff]
    %v495 = vld [vmem:[#allocation2 + $0x20] sm:$0xff]
    %v496 = vld [vmem:[#allocation2 + $0x28] sm:$0xff]
    %v497 = vld [vmem:[#allocation8] sm:$0xf]
    %v498 = vld [vmem:[#allocation8 + $0x4] sm:$0xf]
    %v499 = vld [vmem:[#allocation8 + $0x8] sm:$0xf]
    %v500 = vld [vmem:[#allocation8 + $0xc] sm:$0xf]
    %v501 = vld [vmem:[#allocation8 + $0x10] sm:$0xf]
    %v502 = vld [vmem:[#allocation8 + $0x14] sm:$0xf]
    %v503 = vld [vmem:[#allocation8 + $0x18] sm:$0xf]
    %v504 = vld [vmem:[#allocation8 + $0x1c] sm:$0xf]
    %v505 = vld [vmem:[#allocation8 + $0x20] sm:$0xf]
    %v506 = vld [vmem:[#allocation8 + $0x24] sm:$0xf]
    %v507 = vld [vmem:[#allocation8 + $0x28] sm:$0xf]
    %v508 = vld [vmem:[#allocation8 + $0x2c] sm:$0xf]
    %v509 = vld [vmem:[#allocation2] sm:$0xf0]
    %v510 = vld [vmem:[#allocation2 + $0x30] sm:$0xf]
    %v511 = vld [vmem:[#allocation8 + $0x30] sm:$0xf]
    %v512 = vld [vmem:[#allocation8 + $0x34] sm:$0xf]
    %v513 = vld [vmem:[#allocation8 + $0x38] sm:$0xf]
    %v514 = vld [vmem:[#allocation8 + $0x3c] sm:$0xf]
    %v515 = vld [vmem:[#allocation8 + $0x40] sm:$0xf]
    %v516 = vld [vmem:[#allocation8 + $0x44] sm:$0xf]
    %v517 = vld [vmem:[#allocation8 + $0x48] sm:$0xf]
    %v518 = vld [vmem:[#allocation8 + $0x4c] sm:$0xf]
    %v519 = vld [vmem:[#allocation8 + $0x50] sm:$0xf]
    %v520 = vld [vmem:[#allocation8 + $0x54] sm:$0xf]
    %v521 = vld [vmem:[#allocation8 + $0x58] sm:$0xf]
    %v522 = vld [vmem:[#allocation8 + $0x5c] sm:$0xf]
    %vm530 = vcmask 1043456
    %v531 = vrot.slane %v509, 4
    %v532 = vrot.slane %v492, 4
    %v533 = vsel %vm530, %v531, %v532
    %v534 = vrot.slane %v493, 4
    %v535 = vsel %vm530, %v532, %v534
    %v536 = vrot.slane %v494, 4
    %v537 = vsel %vm530, %v534, %v536
    %v538 = vrot.slane %v495, 4
    %v539 = vsel %vm530, %v536, %v538
    %v540 = vrot.slane %v496, 4
    %v541 = vsel %vm530, %v538, %v540
    %v542 = vrot.slane %v510, 4
    %v543 = vsel %vm530, %v540, %v542
    %v556 = vunpack.c.l.b16 %v511
    %v557 = vunpack.c.l.b16 %v512
    %v558 = vunpack.c.l.b16 %v513
    %v559 = vunpack.c.l.b16 %v514
    %v560 = vunpack.c.l.b16 %v515
    %v561 = vunpack.c.l.b16 %v516
    %v562 = vunpack.c.l.b16 %v517
    %v563 = vunpack.c.l.b16 %v518
    %v564 = vunpack.c.l.b16 %v519
    %v565 = vunpack.c.l.b16 %v520
    %v566 = vunpack.c.l.b16 %v521
    %v567 = vunpack.c.l.b16 %v522
    %v568 = vpack.c.b16 %v557, %v556
    %v569 = vpack.c.b16 %v559, %v558
    %v570 = vpack.c.b16 %v561, %v560
    %v571 = vpack.c.b16 %v563, %v562
    %v572 = vpack.c.b16 %v565, %v564
    %v573 = vpack.c.b16 %v567, %v566
    %v581 = vsel %vm483, %v533, 0
    %v584 = vsel %vm483, %v535, 0
    %v587 = vsel %vm483, %v537, 0
    %v590 = vsel %vm483, %v539, 0
    %v593 = vsel %vm483, %v541, 0
    %v596 = vsel %vm483, %v543, 0
    %598 = vmatprep.subr.bf16.mxu0 0
    %599 = vmatpush1.bf16.msra.mxu0 %v568
    %600 = vmatprep.subr.bf16.mxu0 0
    %601 = vmatpush1.bf16.msra.mxu0 %v569
    %602 = vmatprep.subr.bf16.mxu0 0
    %603 = vmatpush1.bf16.msra.mxu0 %v570
    %604 = vmatprep.subr.bf16.mxu0 0
    %605 = vmatpush1.bf16.msra.mxu0 %v571
    %606 = vmatprep.subr.bf16.mxu0 0
    %607 = vmatpush1.bf16.msra.mxu0 %v572
    %608 = vmatprep.subr.bf16.mxu0 0
    %609 = vmatpush1.bf16.msra.mxu0 %v573
    %610 = vmatprep.subr.bf16.mxu0 0
    %611 = vmatpush1.bf16.msra.mxu0 0
    %612 = vmatprep.subr.bf16.mxu0 0
    %613 = vmatpush1.bf16.msra.mxu0 0
    %614 = vmatprep.subr.bf16.mxu0 0
    %615 = vmatpush1.bf16.msra.mxu0 0
    %616 = vmatprep.subr.bf16.mxu0 0
    %617 = vmatpush1.bf16.msra.mxu0 0
    %618 = vmatprep.subr.bf16.mxu0 0
    %619 = vmatpush1.bf16.msra.mxu0 0
    %620 = vmatprep.subr.bf16.mxu0 0
    %621 = vmatpush1.bf16.msra.mxu0 0
    %622 = vmatprep.subr.bf16.mxu0 0
    %623 = vmatpush1.bf16.msra.mxu0 0
    %624 = vmatprep.subr.bf16.mxu0 0
    %625 = vmatpush1.bf16.msra.mxu0 0
    %626 = vmatprep.subr.bf16.mxu0 0
    %627 = vmatpush1.bf16.msra.mxu0 0
    %628 = vmatprep.subr.bf16.mxu0 0
    %629 = vmatpush1.bf16.msra.mxu0 0
    %630 = vmatprep.mubr.bf16.mxu0 0
    %631 = vmatmul.mubr.bf16.gmra.mrb[0].mxu0 %v581
    %v632 = vpop.f32.mrb[0].mxu0
    %v633 = vadd.f32 0.0, %v632
    %v634 = vpop.f32.mrb[0].mxu0
    %v635 = vpop.f32.mrb[0].mxu0
    %v636 = vadd.f32 0.0, %v635
    %v637 = vpop.f32.mrb[0].mxu0
    %638 = vmatprep.mubr.bf16.mxu0 0
    %639 = vmatmul.mubr.bf16.gmra.mrb[0].mxu0 %v584
    %v640 = vpop.f32.mrb[0].mxu0
    %v641 = vadd.f32 0.0, %v640
    %v642 = vpop.f32.mrb[0].mxu0
    %v643 = vpop.f32.mrb[0].mxu0
    %v644 = vadd.f32 0.0, %v643
    %v645 = vpop.f32.mrb[0].mxu0
    %646 = vmatprep.mubr.bf16.mxu0 0
    %647 = vmatmul.mubr.bf16.gmra.mrb[0].mxu0 %v587
    %v648 = vpop.f32.mrb[0].mxu0
    %v649 = vadd.f32 0.0, %v648
    %v650 = vpop.f32.mrb[0].mxu0
    %v651 = vpop.f32.mrb[0].mxu0
    %v652 = vadd.f32 0.0, %v651
    %v653 = vpop.f32.mrb[0].mxu0
    %654 = vmatprep.mubr.bf16.mxu0 0
    %655 = vmatmul.mubr.bf16.gmra.mrb[0].mxu0 %v590
    %v656 = vpop.f32.mrb[0].mxu0
    %v657 = vadd.f32 0.0, %v656
    %v658 = vpop.f32.mrb[0].mxu0
    %v659 = vpop.f32.mrb[0].mxu0
    %v660 = vadd.f32 0.0, %v659
    %v661 = vpop.f32.mrb[0].mxu0
    %662 = vmatprep.mubr.bf16.mxu0 0
    %663 = vmatmul.mubr.bf16.gmra.mrb[0].mxu0 %v593
    %v664 = vpop.f32.mrb[0].mxu0
    %v665 = vadd.f32 0.0, %v664
    %v666 = vpop.f32.mrb[0].mxu0
    %v667 = vpop.f32.mrb[0].mxu0
    %v668 = vadd.f32 0.0, %v667
    %v669 = vpop.f32.mrb[0].mxu0
    %670 = vmatprep.mubr.bf16.mxu0 0
    %671 = vmatmul.mubr.bf16.gmra.mrb[0].mxu0 %v596
    %v672 = vpop.f32.mrb[0].mxu0
    %v673 = vadd.f32 0.0, %v672
    %v674 = vpop.f32.mrb[0].mxu0
    %v675 = vpop.f32.mrb[0].mxu0
    %v676 = vadd.f32 0.0, %v675
    %v677 = vpop.f32.mrb[0].mxu0
    %678 = vdwg.mxu0
    %v691 = vunpack.c.l.b16 %v497
    %v692 = vunpack.c.l.b16 %v498
    %v693 = vunpack.c.l.b16 %v499
    %v694 = vunpack.c.l.b16 %v500
    %v695 = vunpack.c.l.b16 %v501
    %v696 = vunpack.c.l.b16 %v502
    %v697 = vunpack.c.l.b16 %v503
    %v698 = vunpack.c.l.b16 %v504
    %v699 = vunpack.c.l.b16 %v505
    %v700 = vunpack.c.l.b16 %v506
    %v701 = vunpack.c.l.b16 %v507
    %v702 = vunpack.c.l.b16 %v508
    %v703 = vpack.c.b16 %v692, %v691
    %v704 = vpack.c.b16 %v694, %v693
    %v705 = vpack.c.b16 %v696, %v695
    %v706 = vpack.c.b16 %v698, %v697
    %v707 = vpack.c.b16 %v700, %v699
    %v708 = vpack.c.b16 %v702, %v701
    %v716 = vsel %vm483, %v491, 0
    %v719 = vsel %vm483, %v492, 0
    %v722 = vsel %vm483, %v493, 0
    %v725 = vsel %vm483, %v494, 0
    %v728 = vsel %vm483, %v495, 0
    %v731 = vsel %vm483, %v496, 0
    %733 = vmatprep.subr.bf16.mxu0 0
    %734 = vmatpush1.bf16.msra.mxu0 %v703
    %735 = vmatprep.subr.bf16.mxu0 0
    %736 = vmatpush1.bf16.msra.mxu0 %v704
    %737 = vmatprep.subr.bf16.mxu0 0
    %738 = vmatpush1.bf16.msra.mxu0 %v705
    %739 = vmatprep.subr.bf16.mxu0 0
    %740 = vmatpush1.bf16.msra.mxu0 %v706
    %741 = vmatprep.subr.bf16.mxu0 0
    %742 = vmatpush1.bf16.msra.mxu0 %v707
    %743 = vmatprep.subr.bf16.mxu0 0
    %744 = vmatpush1.bf16.msra.mxu0 %v708
    %745 = vmatprep.subr.bf16.mxu0 0
    %746 = vmatpush1.bf16.msra.mxu0 0
    %747 = vmatprep.subr.bf16.mxu0 0
    %748 = vmatpush1.bf16.msra.mxu0 0
    %749 = vmatprep.subr.bf16.mxu0 0
    %750 = vmatpush1.bf16.msra.mxu0 0
    %751 = vmatprep.subr.bf16.mxu0 0
    %752 = vmatpush1.bf16.msra.mxu0 0
    %753 = vmatprep.subr.bf16.mxu0 0
    %754 = vmatpush1.bf16.msra.mxu0 0
    %755 = vmatprep.subr.bf16.mxu0 0
    %756 = vmatpush1.bf16.msra.mxu0 0
    %757 = vmatprep.subr.bf16.mxu0 0
    %758 = vmatpush1.bf16.msra.mxu0 0
    %759 = vmatprep.subr.bf16.mxu0 0
    %760 = vmatpush1.bf16.msra.mxu0 0
    %761 = vmatprep.subr.bf16.mxu0 0
    %762 = vmatpush1.bf16.msra.mxu0 0
    %763 = vmatprep.subr.bf16.mxu0 0
    %764 = vmatpush1.bf16.msra.mxu0 0
    %765 = vmatprep.mubr.bf16.mxu0 0
    %766 = vmatmul.mubr.bf16.gmra.mrb[0].mxu0 %v716
    %v767 = vpop.f32.mrb[0].mxu0
    %v768 = vadd.f32 %v633, %v767
    %v769 = vpop.f32.mrb[0].mxu0
    %v770 = vpop.f32.mrb[0].mxu0
    %v771 = vadd.f32 %v636, %v770
    %v772 = vpop.f32.mrb[0].mxu0
    %773 = vmatprep.mubr.bf16.mxu0 0
    %774 = vmatmul.mubr.bf16.gmra.mrb[0].mxu0 %v719
    %v775 = vpop.f32.mrb[0].mxu0
    %v776 = vadd.f32 %v641, %v775
    %v777 = vpop.f32.mrb[0].mxu0
    %v778 = vpop.f32.mrb[0].mxu0
    %v779 = vadd.f32 %v644, %v778
    %v780 = vpop.f32.mrb[0].mxu0
    %781 = vmatprep.mubr.bf16.mxu0 0
    %782 = vmatmul.mubr.bf16.gmra.mrb[0].mxu0 %v722
    %v783 = vpop.f32.mrb[0].mxu0
    %v784 = vadd.f32 %v649, %v783
    %v785 = vpop.f32.mrb[0].mxu0
    %v786 = vpop.f32.mrb[0].mxu0
    %v787 = vadd.f32 %v652, %v786
    %v788 = vpop.f32.mrb[0].mxu0
    %789 = vmatprep.mubr.bf16.mxu0 0
    %790 = vmatmul.mubr.bf16.gmra.mrb[0].mxu0 %v725
    %v791 = vpop.f32.mrb[0].mxu0
    %v792 = vadd.f32 %v657, %v791
    %v793 = vpop.f32.mrb[0].mxu0
    %v794 = vpop.f32.mrb[0].mxu0
    %v795 = vadd.f32 %v660, %v794
    %v796 = vpop.f32.mrb[0].mxu0
    %797 = vmatprep.mubr.bf16.mxu0 0
    %798 = vmatmul.mubr.bf16.gmra.mrb[0].mxu0 %v728
    %v799 = vpop.f32.mrb[0].mxu0
    %v800 = vadd.f32 %v665, %v799
    %v801 = vpop.f32.mrb[0].mxu0
    %v802 = vpop.f32.mrb[0].mxu0
    %v803 = vadd.f32 %v668, %v802
    %v804 = vpop.f32.mrb[0].mxu0
    %805 = vmatprep.mubr.bf16.mxu0 0
    %806 = vmatmul.mubr.bf16.gmra.mrb[0].mxu0 %v731
    %v807 = vpop.f32.mrb[0].mxu0
    %v808 = vadd.f32 %v673, %v807
    %v809 = vpop.f32.mrb[0].mxu0
    %v810 = vpop.f32.mrb[0].mxu0
    %v811 = vadd.f32 %v676, %v810
    %v812 = vpop.f32.mrb[0].mxu0
    %813 = vdwg.mxu0
    %v814 = vld [vmem:[#allocation2 + $0x30] sm:$0xff]
    %v815 = vld [vmem:[#allocation8 + $0x60] sm:$0xf]
    %v816 = vld [vmem:[#allocation8 + $0x64] sm:$0xf]
    %v817 = vld [vmem:[#allocation8 + $0x68] sm:$0xf]
    %v818 = vld [vmem:[#allocation8 + $0x6c] sm:$0xf]
    %v819 = vld [vmem:[#allocation8 + $0x70] sm:$0xf]
    %v820 = vld [vmem:[#allocation8 + $0x74] sm:$0xf]
    %v821 = vld [vmem:[#allocation8 + $0x78] sm:$0xf]
    %v822 = vld [vmem:[#allocation8 + $0x7c] sm:$0xf]
    %v823 = vld [vmem:[#allocation8 + $0x80] sm:$0xf]
    %v824 = vld [vmem:[#allocation8 + $0x84] sm:$0xf]
    %v825 = vld [vmem:[#allocation8 + $0x88] sm:$0xf]
    %v826 = vld [vmem:[#allocation8 + $0x8c] sm:$0xf]
    %v839 = vunpack.c.l.b16 %v815
    %v840 = vunpack.c.l.b16 %v816
    %v841 = vunpack.c.l.b16 %v817
    %v842 = vunpack.c.l.b16 %v818
    %v843 = vunpack.c.l.b16 %v819
    %v844 = vunpack.c.l.b16 %v820
    %v845 = vunpack.c.l.b16 %v821
    %v846 = vunpack.c.l.b16 %v822
    %v847 = vunpack.c.l.b16 %v823
    %v848 = vunpack.c.l.b16 %v824
    %v849 = vunpack.c.l.b16 %v825
    %v850 = vunpack.c.l.b16 %v826
    %v851 = vpack.c.b16 %v840, %v839
    %v852 = vpack.c.b16 %v842, %v841
    %v853 = vpack.c.b16 %v844, %v843
    %v854 = vpack.c.b16 %v846, %v845
    %v855 = vpack.c.b16 %v848, %v847
    %v856 = vpack.c.b16 %v850, %v849
    %v864 = vsel %vm483, %v814, 0
    %866 = vmatprep.subr.bf16.mxu0 0
    %867 = vmatpush1.bf16.msra.mxu0 %v851
    %868 = vmatprep.subr.bf16.mxu0 0
    %869 = vmatpush1.bf16.msra.mxu0 %v852
    %870 = vmatprep.subr.bf16.mxu0 0
    %871 = vmatpush1.bf16.msra.mxu0 %v853
    %872 = vmatprep.subr.bf16.mxu0 0
    %873 = vmatpush1.bf16.msra.mxu0 %v854
    %874 = vmatprep.subr.bf16.mxu0 0
    %875 = vmatpush1.bf16.msra.mxu0 %v855
    %876 = vmatprep.subr.bf16.mxu0 0
    %877 = vmatpush1.bf16.msra.mxu0 %v856
    %878 = vmatprep.subr.bf16.mxu0 0
    %879 = vmatpush1.bf16.msra.mxu0 0
    %880 = vmatprep.subr.bf16.mxu0 0
    %881 = vmatpush1.bf16.msra.mxu0 0
    %882 = vmatprep.subr.bf16.mxu0 0
    %883 = vmatpush1.bf16.msra.mxu0 0
    %884 = vmatprep.subr.bf16.mxu0 0
    %885 = vmatpush1.bf16.msra.mxu0 0
    %886 = vmatprep.subr.bf16.mxu0 0
    %887 = vmatpush1.bf16.msra.mxu0 0
    %888 = vmatprep.subr.bf16.mxu0 0
    %889 = vmatpush1.bf16.msra.mxu0 0
    %890 = vmatprep.subr.bf16.mxu0 0
    %891 = vmatpush1.bf16.msra.mxu0 0
    %892 = vmatprep.subr.bf16.mxu0 0
    %893 = vmatpush1.bf16.msra.mxu0 0
    %894 = vmatprep.subr.bf16.mxu0 0
    %895 = vmatpush1.bf16.msra.mxu0 0
    %896 = vmatprep.subr.bf16.mxu0 0
    %897 = vmatpush1.bf16.msra.mxu0 0
    %898 = vmatprep.mubr.bf16.mxu0 0
    %899 = vmatmul.mubr.bf16.gmra.mrb[0].mxu0 %v719
    %v900 = vpop.f32.mrb[0].mxu0
    %v901 = vadd.f32 0.0, %v900
    %v902 = vpop.f32.mrb[0].mxu0
    %v903 = vpop.f32.mrb[0].mxu0
    %v904 = vadd.f32 0.0, %v903
    %v905 = vpop.f32.mrb[0].mxu0
    %906 = vmatprep.mubr.bf16.mxu0 0
    %907 = vmatmul.mubr.bf16.gmra.mrb[0].mxu0 %v722
    %v908 = vpop.f32.mrb[0].mxu0
    %v909 = vadd.f32 0.0, %v908
    %v910 = vpop.f32.mrb[0].mxu0
    %v911 = vpop.f32.mrb[0].mxu0
    %v912 = vadd.f32 0.0, %v911
    %v913 = vpop.f32.mrb[0].mxu0
    %914 = vmatprep.mubr.bf16.mxu0 0
    %915 = vmatmul.mubr.bf16.gmra.mrb[0].mxu0 %v725
    %v916 = vpop.f32.mrb[0].mxu0
    %v917 = vadd.f32 0.0, %v916
    %v918 = vpop.f32.mrb[0].mxu0
    %v919 = vpop.f32.mrb[0].mxu0
    %v920 = vadd.f32 0.0, %v919
    %v921 = vpop.f32.mrb[0].mxu0
    %922 = vmatprep.mubr.bf16.mxu0 0
    %923 = vmatmul.mubr.bf16.gmra.mrb[0].mxu0 %v728
    %v924 = vpop.f32.mrb[0].mxu0
    %v925 = vadd.f32 0.0, %v924
    %v926 = vpop.f32.mrb[0].mxu0
    %v927 = vpop.f32.mrb[0].mxu0
    %v928 = vadd.f32 0.0, %v927
    %v929 = vpop.f32.mrb[0].mxu0
    %930 = vmatprep.mubr.bf16.mxu0 0
    %931 = vmatmul.mubr.bf16.gmra.mrb[0].mxu0 %v731
    %v932 = vpop.f32.mrb[0].mxu0
    %v933 = vadd.f32 0.0, %v932
    %v934 = vpop.f32.mrb[0].mxu0
    %v935 = vpop.f32.mrb[0].mxu0
    %v936 = vadd.f32 0.0, %v935
    %v937 = vpop.f32.mrb[0].mxu0
    %938 = vmatprep.mubr.bf16.mxu0 0
    %939 = vmatmul.mubr.bf16.gmra.mrb[0].mxu0 %v864
    %v940 = vpop.f32.mrb[0].mxu0
    %v941 = vadd.f32 0.0, %v940
    %v942 = vpop.f32.mrb[0].mxu0
    %v943 = vpop.f32.mrb[0].mxu0
    %v944 = vadd.f32 0.0, %v943
    %v945 = vpop.f32.mrb[0].mxu0
    %946 = vdwg.mxu0
    %v947 = vadd.f32 %v768, %v901
    %v948 = vadd.f32 %v771, %v904
    %v949 = vadd.f32 %v776, %v909
    %v950 = vadd.f32 %v779, %v912
    %v951 = vadd.f32 %v784, %v917
    %v952 = vadd.f32 %v787, %v920
    %v953 = vadd.f32 %v792, %v925
    %v954 = vadd.f32 %v795, %v928
    %v955 = vadd.f32 %v800, %v933
    %v956 = vadd.f32 %v803, %v936
    %v957 = vadd.f32 %v808, %v941
    %v958 = vadd.f32 %v811, %v944
    %v959 = vld [vmem:[#allocation9] sm:$0x1]
    %v961 = vlaneseq
    %v962 = vshrl.u32 %v961, 7
    %v963 = vsub.s32 0, %v962
    %v964 = vrot.slane %v959, %v963
    %v966 = vadd.f32 %v947, %v964
    %v967 = vadd.f32 %v948, %v964
    %v968 = vadd.f32 %v949, %v964
    %v969 = vadd.f32 %v950, %v964
    %v970 = vadd.f32 %v951, %v964
    %v971 = vadd.f32 %v952, %v964
    %v972 = vadd.f32 %v953, %v964
    %v973 = vadd.f32 %v954, %v964
    %v974 = vadd.f32 %v955, %v964
    %v975 = vadd.f32 %v956, %v964
    %v976 = vadd.f32 %v957, %v964
    %v977 = vadd.f32 %v958, %v964
    %v978 = vmax.f32 %v966, 0.0
    %v979 = vmax.f32 %v967, 0.0
    %v980 = vmax.f32 %v968, 0.0
    %v981 = vmax.f32 %v969, 0.0
    %v982 = vmax.f32 %v970, 0.0
    %v983 = vmax.f32 %v971, 0.0
    %v984 = vmax.f32 %v972, 0.0
    %v985 = vmax.f32 %v973, 0.0
    %v986 = vmax.f32 %v974, 0.0
    %v987 = vmax.f32 %v975, 0.0
    %v988 = vmax.f32 %v976, 0.0
    %v989 = vmax.f32 %v977, 0.0
    %v990 = vld [vmem:[#allocation11] sm:$0xf]
    %v991 = vld [vmem:[#allocation11 + $0x4] sm:$0xf]
    %v992 = vld [vmem:[#allocation11 + $0x8] sm:$0xf]
    %v993 = vld [vmem:[#allocation11 + $0xc] sm:$0xf]
    %v994 = vld [vmem:[#allocation11 + $0x10] sm:$0xf]
    %v995 = vld [vmem:[#allocation11 + $0x14] sm:$0xf]
    %v996 = vld [vmem:[#allocation11 + $0x18] sm:$0xf]
    %v997 = vld [vmem:[#allocation11 + $0x1c] sm:$0xf]
    %v998 = vld [vmem:[#allocation11 + $0x20] sm:$0xf]
    %v999 = vld [vmem:[#allocation11 + $0x24] sm:$0xf]
    %v1000 = vld [vmem:[#allocation11 + $0x28] sm:$0xf]
    %v1001 = vld [vmem:[#allocation11 + $0x2c] sm:$0xf]
    %v1002 = vld [vmem:[#allocation12] sm:$0xf]
    %v1003 = vld [vmem:[#allocation12 + $0x4] sm:$0xf]
    %v1004 = vld [vmem:[#allocation12 + $0x8] sm:$0xf]
    %v1005 = vld [vmem:[#allocation12 + $0xc] sm:$0xf]
    %v1006 = vld [vmem:[#allocation12 + $0x10] sm:$0xf]
    %v1007 = vld [vmem:[#allocation12 + $0x14] sm:$0xf]
    %v1008 = vld [vmem:[#allocation12 + $0x18] sm:$0xf]
    %v1009 = vld [vmem:[#allocation12 + $0x1c] sm:$0xf]
    %v1022 = vunpack.c.l.b16 %v990
    %v1023 = vunpack.c.l.b16 %v991
    %v1024 = vunpack.c.l.b16 %v992
    %v1025 = vunpack.c.l.b16 %v993
    %v1026 = vunpack.c.l.b16 %v994
    %v1027 = vunpack.c.l.b16 %v995
    %v1028 = vunpack.c.l.b16 %v996
    %v1029 = vunpack.c.l.b16 %v997
    %v1030 = vunpack.c.l.b16 %v998
    %v1031 = vunpack.c.l.b16 %v999
    %v1032 = vunpack.c.l.b16 %v1000
    %v1033 = vunpack.c.l.b16 %v1001
    %v1034 = vpack.c.b16 %v1023, %v1022
    %v1035 = vpack.c.b16 %v1025, %v1024
    %v1036 = vpack.c.b16 %v1027, %v1026
    %v1037 = vpack.c.b16 %v1029, %v1028
    %v1038 = vpack.c.b16 %v1031, %v1030
    %v1039 = vpack.c.b16 %v1033, %v1032
    %v1048 = vunpack.c.l.b16 %v1002
    %v1049 = vunpack.c.l.b16 %v1003
    %v1050 = vunpack.c.l.b16 %v1004
    %v1051 = vunpack.c.l.b16 %v1005
    %v1052 = vunpack.c.l.b16 %v1006
    %v1053 = vunpack.c.l.b16 %v1007
    %v1054 = vunpack.c.l.b16 %v1008
    %v1055 = vunpack.c.l.b16 %v1009
    %v1056 = vpack.c.b16 %v1049, %v1048
    %v1057 = vpack.c.b16 %v1051, %v1050
    %v1058 = vpack.c.b16 %v1053, %v1052
    %v1059 = vpack.c.b16 %v1055, %v1054
    %v1065 = vsel %vm461, %v1034, 0
    %v1068 = vsel %vm461, %v1035, 0
    %v1071 = vsel %vm461, %v1036, 0
    %v1074 = vsel %vm461, %v1037, 0
    %v1077 = vsel %vm461, %v1038, 0
    %v1080 = vsel %vm461, %v1039, 0
    %1082 = vmatprep.subr.bf16.mxu0 0
    %1083 = vmatpush1.bf16.msra.mxu0 %v1056
    %1084 = vmatprep.subr.bf16.mxu0 0
    %1085 = vmatpush1.bf16.msra.mxu0 %v1057
    %1086 = vmatprep.subr.bf16.mxu0 0
    %1087 = vmatpush1.bf16.msra.mxu0 %v1058
    %1088 = vmatprep.subr.bf16.mxu0 0
    %1089 = vmatpush1.bf16.msra.mxu0 %v1059
    %1090 = vmatprep.subr.bf16.mxu0 0
    %1091 = vmatpush1.bf16.msra.mxu0 0
    %1092 = vmatprep.subr.bf16.mxu0 0
    %1093 = vmatpush1.bf16.msra.mxu0 0
    %1094 = vmatprep.subr.bf16.mxu0 0
    %1095 = vmatpush1.bf16.msra.mxu0 0
    %1096 = vmatprep.subr.bf16.mxu0 0
    %1097 = vmatpush1.bf16.msra.mxu0 0
    %1098 = vmatprep.subr.bf16.mxu0 0
    %1099 = vmatpush1.bf16.msra.mxu0 0
    %1100 = vmatprep.subr.bf16.mxu0 0
    %1101 = vmatpush1.bf16.msra.mxu0 0
    %1102 = vmatprep.subr.bf16.mxu0 0
    %1103 = vmatpush1.bf16.msra.mxu0 0
    %1104 = vmatprep.subr.bf16.mxu0 0
    %1105 = vmatpush1.bf16.msra.mxu0 0
    %1106 = vmatprep.subr.bf16.mxu0 0
    %1107 = vmatpush1.bf16.msra.mxu0 0
    %1108 = vmatprep.subr.bf16.mxu0 0
    %1109 = vmatpush1.bf16.msra.mxu0 0
    %1110 = vmatprep.subr.bf16.mxu0 0
    %1111 = vmatpush1.bf16.msra.mxu0 0
    %1112 = vmatprep.subr.bf16.mxu0 0
    %1113 = vmatpush1.bf16.msra.mxu0 0
    %1114 = vmatprep.mubr.bf16.mxu0 0
    %1115 = vmatmul.mubr.bf16.gmra.mrb[0].mxu0 %v1065
    %v1116 = vpop.f32.mrb[0].mxu0
    %v1117 = vadd.f32 0.0, %v1116
    %v1118 = vpop.f32.mrb[0].mxu0
    %v1119 = vpop.f32.mrb[0].mxu0
    %v1120 = vadd.f32 0.0, %v1119
    %v1121 = vpop.f32.mrb[0].mxu0
    %1122 = vmatprep.mubr.bf16.mxu0 0
    %1123 = vmatmul.mubr.bf16.gmra.mrb[0].mxu0 %v1068
    %v1124 = vpop.f32.mrb[0].mxu0
    %v1125 = vadd.f32 0.0, %v1124
    %v1126 = vpop.f32.mrb[0].mxu0
    %v1127 = vpop.f32.mrb[0].mxu0
    %v1128 = vadd.f32 0.0, %v1127
    %v1129 = vpop.f32.mrb[0].mxu0
    %1130 = vmatprep.mubr.bf16.mxu0 0
    %1131 = vmatmul.mubr.bf16.gmra.mrb[0].mxu0 %v1071
    %v1132 = vpop.f32.mrb[0].mxu0
    %v1133 = vadd.f32 0.0, %v1132
    %v1134 = vpop.f32.mrb[0].mxu0
    %v1135 = vpop.f32.mrb[0].mxu0
    %v1136 = vadd.f32 0.0, %v1135
    %v1137 = vpop.f32.mrb[0].mxu0
    %1138 = vmatprep.mubr.bf16.mxu0 0
    %1139 = vmatmul.mubr.bf16.gmra.mrb[0].mxu0 %v1074
    %v1140 = vpop.f32.mrb[0].mxu0
    %v1141 = vadd.f32 0.0, %v1140
    %v1142 = vpop.f32.mrb[0].mxu0
    %v1143 = vpop.f32.mrb[0].mxu0
    %v1144 = vadd.f32 0.0, %v1143
    %v1145 = vpop.f32.mrb[0].mxu0
    %1146 = vmatprep.mubr.bf16.mxu0 0
    %1147 = vmatmul.mubr.bf16.gmra.mrb[0].mxu0 %v1077
    %v1148 = vpop.f32.mrb[0].mxu0
    %v1149 = vadd.f32 0.0, %v1148
    %v1150 = vpop.f32.mrb[0].mxu0
    %v1151 = vpop.f32.mrb[0].mxu0
    %v1152 = vadd.f32 0.0, %v1151
    %v1153 = vpop.f32.mrb[0].mxu0
    %1154 = vmatprep.mubr.bf16.mxu0 0
    %1155 = vmatmul.mubr.bf16.gmra.mrb[0].mxu0 %v1080
    %v1156 = vpop.f32.mrb[0].mxu0
    %v1157 = vadd.f32 0.0, %v1156
    %v1158 = vpop.f32.mrb[0].mxu0
    %v1159 = vpop.f32.mrb[0].mxu0
    %v1160 = vadd.f32 0.0, %v1159
    %v1161 = vpop.f32.mrb[0].mxu0
    %1162 = vdwg.mxu0
    %v1163 = vadd.f32 %v978, %v1117
    %v1164 = vadd.f32 %v979, %v1120
    %v1165 = vadd.f32 %v980, %v1125
    %v1166 = vadd.f32 %v981, %v1128
    %v1167 = vadd.f32 %v982, %v1133
    %v1168 = vadd.f32 %v983, %v1136
    %v1169 = vadd.f32 %v984, %v1141
    %v1170 = vadd.f32 %v985, %v1144
    %v1171 = vadd.f32 %v986, %v1149
    %v1172 = vadd.f32 %v987, %v1152
    %v1173 = vadd.f32 %v988, %v1157
    %v1174 = vadd.f32 %v989, %v1160
    %v1175 = vpack.c.bf16 %v1164, %v1163
    %v1176 = vpack.c.bf16 %v1166, %v1165
    %v1177 = vpack.c.bf16 %v1168, %v1167
    %v1178 = vpack.c.bf16 %v1170, %v1169
    %v1179 = vpack.c.bf16 %v1172, %v1171
    %v1180 = vpack.c.bf16 %v1174, %v1173
    %v1187 = vunpack.c.l.b16 %v1175
    %v1188 = vunpack.c.h.b16 %v1175
    %v1189 = vunpack.c.l.b16 %v1176
    %v1190 = vunpack.c.h.b16 %v1176
    %v1191 = vunpack.c.l.b16 %v1177
    %v1192 = vunpack.c.h.b16 %v1177
    %v1193 = vunpack.c.l.b16 %v1178
    %v1194 = vunpack.c.h.b16 %v1178
    %v1195 = vunpack.c.l.b16 %v1179
    %v1196 = vunpack.c.h.b16 %v1179
    %v1197 = vunpack.c.l.b16 %v1180
    %v1198 = vunpack.c.h.b16 %v1180
    %v1199 = vpack.c.b16 %v1187, %v1187
    %v1200 = vpack.c.b16 %v1188, %v1188
    %v1201 = vpack.c.b16 %v1189, %v1189
    %v1202 = vpack.c.b16 %v1190, %v1190
    %v1203 = vpack.c.b16 %v1191, %v1191
    %v1204 = vpack.c.b16 %v1192, %v1192
    %v1205 = vpack.c.b16 %v1193, %v1193
    %v1206 = vpack.c.b16 %v1194, %v1194
    %v1207 = vpack.c.b16 %v1195, %v1195
    %v1208 = vpack.c.b16 %v1196, %v1196
    %v1209 = vpack.c.b16 %v1197, %v1197
    %v1210 = vpack.c.b16 %v1198, %v1198
    %1223 = vst [vmem:[#allocation14] sm:$0xf] %v1199
    %1224 = vst [vmem:[#allocation14 + $0x4] sm:$0xf] %v1200
    %1225 = vst [vmem:[#allocation14 + $0x8] sm:$0xf] %v1201
    %1226 = vst [vmem:[#allocation14 + $0xc] sm:$0xf] %v1202
    %1227 = vst [vmem:[#allocation14 + $0x10] sm:$0xf] %v1203
    %1228 = vst [vmem:[#allocation14 + $0x14] sm:$0xf] %v1204
    %1229 = vst [vmem:[#allocation14 + $0x18] sm:$0xf] %v1205
    %1230 = vst [vmem:[#allocation14 + $0x1c] sm:$0xf] %v1206
    %1231 = vst [vmem:[#allocation14 + $0x20] sm:$0xf] %v1207
    %1232 = vst [vmem:[#allocation14 + $0x24] sm:$0xf] %v1208
    %1233 = vst [vmem:[#allocation14 + $0x28] sm:$0xf] %v1209
    %1234 = vst [vmem:[#allocation14 + $0x2c] sm:$0xf] %v1210
    // Predicated region
    $region50: #{ttf_head_forward.5} parent=1 // pred_check
      _
    $region51: #{ttf_head_forward.5} parent=1 // pred_check_branch
      %1236 = sbr.rel (0) target = $region53
    $region52: #{ttf_head_forward.5} parent=1 // pred_region
      %s1238 = ssub.s32 768, 768
      %1239 = vsyncadd [#allocation5], %s1238
      %s1240 = sshll.u32 [#allocation14], 4
      %s1241 = int_to_ptr.vmem [resolvable:$true] %s1240
      %1246 = dma.vmem_to_hbm [thread:$0]  %s1241, 768, %s6, [#allocation5], 64, 64, 4
    $region53: #{ttf_head_forward.5} parent=1 // pred_fallthru
      _
    // Predicated region
    $region54: #{ttf_head_forward.5} parent=1 // pred_check
      _
    $region55: #{ttf_head_forward.5} parent=1 // pred_check_branch
      %1248 = sbr.rel (0) target = $region57
    $region56: #{ttf_head_forward.5} parent=1 // pred_region
      %1249 = dma.done [#allocation5], 768
    $region57: #{ttf_head_forward.5} parent=1 // pred_fallthru
      _
    %1250 = vsyncpa [#allocation4], 1
    %1251 = vsyncpa [#allocation7], 1
    %1252 = vsyncpa [#allocation10], 1
    %1253 = vsyncpa [#allocation13], 1
    %1254 = vsyncpa [#allocation5], 1

// kernel: ttf_head_forward.6
$region0: #{ttf_head_forward.6}
  #allocation0 [shape = 'u32[]', space=smem, size = 0x4, offset = 0x4, fixed_abs, tag = 'smem constant byte address 0x4 - core index']
  #allocation1 [shape = 'u32[144,128]{1,0:T(1,128)}', space=vmem, size = 0x12000, scoped, tag = 'internal scratch']
  #allocation2 [shape = 'bf16[352,192]{1,0:T(16,128)(2,1)}', space=vmem, size = 0x2c000, scoped, tag = 'scratch operand']
  %s0 = inlined_call_operand.hbm [shape: bf16[354,33], index: 0, kind: input, shape index: {}]
  %s1 = inlined_call_operand.hbm [shape: bf16[33,64], index: 1, kind: input, shape index: {}]
  %s2 = inlined_call_operand.hbm [shape: bf16[576,256], index: 2, kind: input, shape index: {}]
  %s3 = inlined_call_operand.hbm [shape: f32[1,256], index: 3, kind: input, shape index: {}]
  %s4 = inlined_call_operand.hbm [shape: bf16[320,32], index: 4, kind: input, shape index: {}]
  %s5 = inlined_call_operand.hbm [shape: bf16[32,256], index: 5, kind: input, shape index: {}]
  %s6 = inlined_call_operand.hbm [shape: bf16[320,256], index: 6, kind: output, shape index: {}]
  %s7 = sld [smem:[#allocation0]]
  $region58: #{ttf_head_forward.6} parent=0
    _
  %s9 = ssub.s32 1, %s7
  %s10 = scalar_select 0, %s9, %s7
  $region1: #{ttf_head_forward.6} parent=0
    #allocation3 [shape = 'u8[92160]{0}', space=vmem, size = 0x16800, scoped, tag = 'input window, operand 0, single buffered']
    #allocation4 [shape = 's32[1]{0}', space=sflag, size = 0x4, scoped, tag = 'scoped memory for ttf_head_forward.6']
    #allocation5 [shape = 's32[1]{0}', space=sflag, size = 0x4, scoped, tag = 'scoped memory for ttf_head_forward.6']
    #allocation6 [shape = 'u8[10240]{0}', space=vmem, size = 0x2800, scoped, tag = 'input window, operand 1, single buffered']
    #allocation7 [shape = 's32[1]{0}', space=sflag, size = 0x4, scoped, tag = 'scoped memory for ttf_head_forward.6']
    #allocation8 [shape = 'u8[294912]{0}', space=vmem, size = 0x48000, scoped, tag = 'input window, operand 2, single buffered']
    #allocation9 [shape = 'u8[1024]{0}', space=vmem, size = 0x400, scoped, tag = 'input window, operand 3, single buffered']
    #allocation10 [shape = 's32[1]{0}', space=sflag, size = 0x4, scoped, tag = 'scoped memory for ttf_head_forward.6']
    #allocation11 [shape = 'u8[81920]{0}', space=vmem, size = 0x14000, scoped, tag = 'input window, operand 4, single buffered']
    #allocation12 [shape = 'u8[16384]{0}', space=vmem, size = 0x4000, scoped, tag = 'input window, operand 5, single buffered']
    #allocation13 [shape = 's32[1]{0}', space=sflag, size = 0x4, scoped, tag = 'scoped memory for ttf_head_forward.6']
    #allocation14 [shape = 'u8[163840]{0}', space=vmem, size = 0x28000, scoped, tag = 'output window, operand 0, single buffered']
    %11 = vsyncpa [#allocation4], 0
    %12 = vsyncpa [#allocation7], 0
    %13 = vsyncpa [#allocation10], 0
    %14 = vsyncpa [#allocation13], 0
    %15 = vsyncpa [#allocation5], 0
    // Predicated region
    $region2: #{ttf_head_forward.6} parent=1 // pred_check
      _
    $region3: #{ttf_head_forward.6} parent=1 // pred_check_branch
      %17 = sbr.rel (0) target = $region5
    $region4: #{ttf_head_forward.6} parent=1 // pred_region
      %s19 = ssub.s32 2880, 2880
      %20 = vsyncadd [#allocation4], %s19
      %s21 = sshll.u32 [#allocation3], 4
      %s22 = int_to_ptr.vmem [resolvable:$true] %s21
      %27 = dma.hbm_to_vmem [thread:$0]  %s0, 2880, %s22, [#allocation4], 64, 64, 4
    $region5: #{ttf_head_forward.6} parent=1 // pred_fallthru
      _
    // Predicated region
    $region6: #{ttf_head_forward.6} parent=1 // pred_check
      _
    $region7: #{ttf_head_forward.6} parent=1 // pred_check_branch
      %29 = sbr.rel (0) target = $region9
    $region8: #{ttf_head_forward.6} parent=1 // pred_region
      %s31 = ssub.s32 320, 320
      %32 = vsyncadd [#allocation7], %s31
      %s33 = sshll.u32 [#allocation6], 4
      %s34 = int_to_ptr.vmem [resolvable:$true] %s33
      %39 = dma.hbm_to_vmem [thread:$0]  %s1, 320, %s34, [#allocation7], 64, 64, 4
    $region9: #{ttf_head_forward.6} parent=1 // pred_fallthru
      _
    // Predicated region
    $region10: #{ttf_head_forward.6} parent=1 // pred_check
      _
    $region11: #{ttf_head_forward.6} parent=1 // pred_check_branch
      %41 = sbr.rel (0) target = $region13
    $region12: #{ttf_head_forward.6} parent=1 // pred_region
      %s43 = ssub.s32 9216, 9216
      %44 = vsyncadd [#allocation7], %s43
      %s45 = sshll.u32 [#allocation8], 4
      %s46 = int_to_ptr.vmem [resolvable:$true] %s45
      %51 = dma.hbm_to_vmem [thread:$0]  %s2, 9216, %s46, [#allocation7], 128, 128, 8
    $region13: #{ttf_head_forward.6} parent=1 // pred_fallthru
      _
    // Predicated region
    $region14: #{ttf_head_forward.6} parent=1 // pred_check
      _
    $region15: #{ttf_head_forward.6} parent=1 // pred_check_branch
      %53 = sbr.rel (0) target = $region17
    $region16: #{ttf_head_forward.6} parent=1 // pred_region
      %s55 = ssub.s32 32, 32
      %56 = vsyncadd [#allocation10], %s55
      %s58 = sshll.u32 [#allocation9], 4
      %s59 = int_to_ptr.vmem [resolvable:$true] %s58
      %61 = dma.hbm_to_vmem [thread:$0]  %s3, 32, %s59, [#allocation10]
    $region17: #{ttf_head_forward.6} parent=1 // pred_fallthru
      _
    // Predicated region
    $region18: #{ttf_head_forward.6} parent=1 // pred_check
      _
    $region19: #{ttf_head_forward.6} parent=1 // pred_check_branch
      %63 = sbr.rel (0) target = $region21
    $region20: #{ttf_head_forward.6} parent=1 // pred_region
      %s65 = ssub.s32 2560, 2560
      %66 = vsyncadd [#allocation10], %s65
      %s67 = sshll.u32 [#allocation11], 4
      %s68 = int_to_ptr.vmem [resolvable:$true] %s67
      %73 = dma.hbm_to_vmem [thread:$0]  %s4, 2560, %s68, [#allocation10], 64, 64, 4
    $region21: #{ttf_head_forward.6} parent=1 // pred_fallthru
      _
    // Predicated region
    $region22: #{ttf_head_forward.6} parent=1 // pred_check
      _
    $region23: #{ttf_head_forward.6} parent=1 // pred_check_branch
      %75 = sbr.rel (0) target = $region25
    $region24: #{ttf_head_forward.6} parent=1 // pred_region
      %s77 = ssub.s32 512, 512
      %78 = vsyncadd [#allocation13], %s77
      %s79 = sshll.u32 [#allocation12], 4
      %s80 = int_to_ptr.vmem [resolvable:$true] %s79
      %85 = dma.hbm_to_vmem [thread:$0]  %s5, 512, %s80, [#allocation13], 128, 128, 8
    $region25: #{ttf_head_forward.6} parent=1 // pred_fallthru
      _
    // Predicated region
    $region26: #{ttf_head_forward.6} parent=1 // pred_check
      _
    $region27: #{ttf_head_forward.6} parent=1 // pred_check_branch
      %87 = sbr.rel (0) target = $region29
    $region28: #{ttf_head_forward.6} parent=1 // pred_region
      %88 = dma.done [#allocation4], 2880
    $region29: #{ttf_head_forward.6} parent=1 // pred_fallthru
      _
    // Predicated region
    $region30: #{ttf_head_forward.6} parent=1 // pred_check
      _
    $region31: #{ttf_head_forward.6} parent=1 // pred_check_branch
      %90 = sbr.rel (0) target = $region33
    $region32: #{ttf_head_forward.6} parent=1 // pred_region
      %91 = dma.done [#allocation7], 320
    $region33: #{ttf_head_forward.6} parent=1 // pred_fallthru
      _
    // Predicated region
    $region34: #{ttf_head_forward.6} parent=1 // pred_check
      _
    $region35: #{ttf_head_forward.6} parent=1 // pred_check_branch
      %93 = sbr.rel (0) target = $region37
    $region36: #{ttf_head_forward.6} parent=1 // pred_region
      %94 = dma.done [#allocation7], 9216
    $region37: #{ttf_head_forward.6} parent=1 // pred_fallthru
      _
    // Predicated region
    $region38: #{ttf_head_forward.6} parent=1 // pred_check
      _
    $region39: #{ttf_head_forward.6} parent=1 // pred_check_branch
      %96 = sbr.rel (0) target = $region41
    $region40: #{ttf_head_forward.6} parent=1 // pred_region
      %97 = dma.done [#allocation10], 32
    $region41: #{ttf_head_forward.6} parent=1 // pred_fallthru
      _
    // Predicated region
    $region42: #{ttf_head_forward.6} parent=1 // pred_check
      _
    $region43: #{ttf_head_forward.6} parent=1 // pred_check_branch
      %99 = sbr.rel (0) target = $region45
    $region44: #{ttf_head_forward.6} parent=1 // pred_region
      %100 = dma.done [#allocation10], 2560
    $region45: #{ttf_head_forward.6} parent=1 // pred_fallthru
      _
    // Predicated region
    $region46: #{ttf_head_forward.6} parent=1 // pred_check
      _
    $region47: #{ttf_head_forward.6} parent=1 // pred_check_branch
      %102 = sbr.rel (0) target = $region49
    $region48: #{ttf_head_forward.6} parent=1 // pred_region
      %103 = dma.done [#allocation13], 512
    $region49: #{ttf_head_forward.6} parent=1 // pred_fallthru
      _
    %s105 = smul.u32 0, 320
    %s106 = sshra.s32 %s105, 3
    %s107 = sand.u32 %s105, 7
    %s108 = smul.addr %s106, 4
    %s109 = scalar_lea.vmem [#allocation3], %s108
    %v110 = vld [vmem:[%s109] sm:$0xf]
    %v111 = vld [vmem:[%s109 + $0x4] sm:$0xf]
    %v112 = vld [vmem:[%s109 + $0x8] sm:$0xf]
    %v113 = vld [vmem:[%s109 + $0xc] sm:$0xf]
    %v114 = vld [vmem:[%s109 + $0x10] sm:$0xf]
    %v115 = vld [vmem:[%s109 + $0x14] sm:$0xf]
    %v116 = vld [vmem:[%s109 + $0x18] sm:$0xf]
    %v117 = vld [vmem:[%s109 + $0x1c] sm:$0xf]
    %v118 = vld [vmem:[%s109 + $0x20] sm:$0xf]
    %v119 = vld [vmem:[%s109 + $0x24] sm:$0xf]
    %v120 = vld [vmem:[%s109 + $0x28] sm:$0xf]
    %v121 = vld [vmem:[%s109 + $0x2c] sm:$0xf]
    %v122 = vld [vmem:[%s109 + $0x30] sm:$0xf]
    %v123 = vld [vmem:[%s109 + $0x34] sm:$0xf]
    %v124 = vld [vmem:[%s109 + $0x38] sm:$0xf]
    %v125 = vld [vmem:[%s109 + $0x3c] sm:$0xf]
    %v126 = vld [vmem:[%s109 + $0x40] sm:$0xf]
    %v127 = vld [vmem:[%s109 + $0x44] sm:$0xf]
    %v128 = vld [vmem:[%s109 + $0x48] sm:$0xf]
    %v129 = vld [vmem:[%s109 + $0x4c] sm:$0xf]
    %v130 = vld [vmem:[%s109 + $0x50] sm:$0xf]
    %v131 = vld [vmem:[%s109 + $0x54] sm:$0xf]
    %v132 = vld [vmem:[%s109 + $0x58] sm:$0xf]
    %v133 = vld [vmem:[%s109 + $0x5c] sm:$0xf]
    %v134 = vld [vmem:[%s109 + $0x60] sm:$0xf]
    %v135 = vld [vmem:[%s109 + $0x64] sm:$0xf]
    %v136 = vld [vmem:[%s109 + $0x68] sm:$0xf]
    %v137 = vld [vmem:[%s109 + $0x6c] sm:$0xf]
    %v138 = vld [vmem:[%s109 + $0x70] sm:$0xf]
    %v139 = vld [vmem:[%s109 + $0x74] sm:$0xf]
    %v140 = vld [vmem:[%s109 + $0x78] sm:$0xf]
    %v141 = vld [vmem:[%s109 + $0x7c] sm:$0xf]
    %v142 = vld [vmem:[%s109 + $0x80] sm:$0xf]
    %v143 = vld [vmem:[%s109 + $0x84] sm:$0xf]
    %v144 = vld [vmem:[%s109 + $0x88] sm:$0xf]
    %v145 = vld [vmem:[%s109 + $0x8c] sm:$0xf]
    %v146 = vld [vmem:[%s109 + $0x90] sm:$0xf]
    %v147 = vld [vmem:[%s109 + $0x94] sm:$0xf]
    %v148 = vld [vmem:[%s109 + $0x98] sm:$0xf]
    %v149 = vld [vmem:[%s109 + $0x9c] sm:$0xf]
    %v150 = vld [vmem:[%s109 + $0xa0] sm:$0xf]
    %v151 = vld [vmem:[%s109 + $0xa4] sm:$0xf]
    %v152 = vld [vmem:[%s109 + $0xa8] sm:$0xf]
    %v153 = vld [vmem:[%s109 + $0xac] sm:$0xf]
    %v154 = vld [vmem:[%s109 + $0xb0] sm:$0x1]
    %v155 = vld [vmem:[#allocation6] sm:$0xf]
    %v156 = vld [vmem:[#allocation6 + $0x4] sm:$0xf]
    %v157 = vld [vmem:[#allocation6 + $0x8] sm:$0xf]
    %v158 = vld [vmem:[#allocation6 + $0xc] sm:$0xf]
    %v159 = vld [vmem:[#allocation6 + $0x10] sm:$0x1]
    %v205 = vunpack.c.l.b16 %v110
    %v206 = vunpack.c.l.b16 %v111
    %v207 = vunpack.c.l.b16 %v112
    %v208 = vunpack.c.l.b16 %v113
    %v209 = vunpack.c.l.b16 %v114
    %v210 = vunpack.c.l.b16 %v115
    %v211 = vunpack.c.l.b16 %v116
    %v212 = vunpack.c.l.b16 %v117
    %v213 = vunpack.c.l.b16 %v118
    %v214 = vunpack.c.l.b16 %v119
    %v215 = vunpack.c.l.b16 %v120
    %v216 = vunpack.c.l.b16 %v121
    %v217 = vunpack.c.l.b16 %v122
    %v218 = vunpack.c.l.b16 %v123
    %v219 = vunpack.c.l.b16 %v124
    %v220 = vunpack.c.l.b16 %v125
    %v221 = vunpack.c.l.b16 %v126
    %v222 = vunpack.c.l.b16 %v127
    %v223 = vunpack.c.l.b16 %v128
    %v224 = vunpack.c.l.b16 %v129
    %v225 = vunpack.c.l.b16 %v130
    %v226 = vunpack.c.l.b16 %v131
    %v227 = vunpack.c.l.b16 %v132
    %v228 = vunpack.c.l.b16 %v133
    %v229 = vunpack.c.l.b16 %v134
    %v230 = vunpack.c.l.b16 %v135
    %v231 = vunpack.c.l.b16 %v136
    %v232 = vunpack.c.l.b16 %v137
    %v233 = vunpack.c.l.b16 %v138
    %v234 = vunpack.c.l.b16 %v139
    %v235 = vunpack.c.l.b16 %v140
    %v236 = vunpack.c.l.b16 %v141
    %v237 = vunpack.c.l.b16 %v142
    %v238 = vunpack.c.l.b16 %v143
    %v239 = vunpack.c.l.b16 %v144
    %v240 = vunpack.c.l.b16 %v145
    %v241 = vunpack.c.l.b16 %v146
    %v242 = vunpack.c.l.b16 %v147
    %v243 = vunpack.c.l.b16 %v148
    %v244 = vunpack.c.l.b16 %v149
    %v245 = vunpack.c.l.b16 %v150
    %v246 = vunpack.c.l.b16 %v151
    %v247 = vunpack.c.l.b16 %v152
    %v248 = vunpack.c.l.b16 %v153
    %v249 = vunpack.c.l.b16 %v154
    %v250 = vpack.c.b16 %v206, %v205
    %v251 = vpack.c.b16 %v208, %v207
    %v252 = vpack.c.b16 %v210, %v209
    %v253 = vpack.c.b16 %v212, %v211
    %v254 = vpack.c.b16 %v214, %v213
    %v255 = vpack.c.b16 %v216, %v215
    %v256 = vpack.c.b16 %v218, %v217
    %v257 = vpack.c.b16 %v220, %v219
    %v258 = vpack.c.b16 %v222, %v221
    %v259 = vpack.c.b16 %v224, %v223
    %v260 = vpack.c.b16 %v226, %v225
    %v261 = vpack.c.b16 %v228, %v227
    %v262 = vpack.c.b16 %v230, %v229
    %v263 = vpack.c.b16 %v232, %v231
    %v264 = vpack.c.b16 %v234, %v233
    %v265 = vpack.c.b16 %v236, %v235
    %v266 = vpack.c.b16 %v238, %v237
    %v267 = vpack.c.b16 %v240, %v239
    %v268 = vpack.c.b16 %v242, %v241
    %v269 = vpack.c.b16 %v244, %v243
    %v270 = vpack.c.b16 %v246, %v245
    %v271 = vpack.c.b16 %v248, %v247
    %v272 = vpack.c.b16 %v249, %v249
    %v278 = vunpack.c.l.b16 %v155
    %v279 = vunpack.c.l.b16 %v156
    %v280 = vunpack.c.l.b16 %v157
    %v281 = vunpack.c.l.b16 %v158
    %v282 = vunpack.c.l.b16 %v159
    %v283 = vpack.c.b16 %v279, %v278
    %v284 = vpack.c.b16 %v281, %v280
    %v285 = vpack.c.b16 %v282, %v282
    %vm288 = vcmask 269312
    %v290 = vsel %vm288, %v250, 0
    %v293 = vsel %vm288, %v251, 0
    %v296 = vsel %vm288, %v252, 0
    %v299 = vsel %vm288, %v253, 0
    %v302 = vsel %vm288, %v254, 0
    %v305 = vsel %vm288, %v255, 0
    %v308 = vsel %vm288, %v256, 0
    %v311 = vsel %vm288, %v257, 0
    %v314 = vsel %vm288, %v258, 0
    %v317 = vsel %vm288, %v259, 0
    %v320 = vsel %vm288, %v260, 0
    %v323 = vsel %vm288, %v261, 0
    %v326 = vsel %vm288, %v262, 0
    %v329 = vsel %vm288, %v263, 0
    %v332 = vsel %vm288, %v264, 0
    %v335 = vsel %vm288, %v265, 0
    %v338 = vsel %vm288, %v266, 0
    %v341 = vsel %vm288, %v267, 0
    %v344 = vsel %vm288, %v268, 0
    %v347 = vsel %vm288, %v269, 0
    %v350 = vsel %vm288, %v270, 0
    %v353 = vsel %vm288, %v271, 0
    %v356 = vsel %vm288, %v272, 0
    %vm358 = vcmask 1040384
    %v359 = vsel 0, 4294967295, 65535
    %v360 = vsel %vm358, %v359, 0
    %v362 = vand.u32 %v285, %v360
    %364 = vmatprep.subr.bf16.mxu0 0
    %365 = vmatpush1.bf16.msra.mxu0 %v283
    %366 = vmatprep.subr.bf16.mxu0 0
    %367 = vmatpush1.bf16.msra.mxu0 %v284
    %368 = vmatprep.subr.bf16.mxu0 0
    %369 = vmatpush1.bf16.msra.mxu0 %v362
    %370 = vmatprep.subr.bf16.mxu0 0
    %371 = vmatpush1.bf16.msra.mxu0 0
    %372 = vmatprep.subr.bf16.mxu0 0
    %373 = vmatpush1.bf16.msra.mxu0 0
    %374 = vmatprep.subr.bf16.mxu0 0
    %375 = vmatpush1.bf16.msra.mxu0 0
    %376 = vmatprep.subr.bf16.mxu0 0
    %377 = vmatpush1.bf16.msra.mxu0 0
    %378 = vmatprep.subr.bf16.mxu0 0
    %379 = vmatpush1.bf16.msra.mxu0 0
    %380 = vmatprep.subr.bf16.mxu0 0
    %381 = vmatpush1.bf16.msra.mxu0 0
    %382 = vmatprep.subr.bf16.mxu0 0
    %383 = vmatpush1.bf16.msra.mxu0 0
    %384 = vmatprep.subr.bf16.mxu0 0
    %385 = vmatpush1.bf16.msra.mxu0 0
    %386 = vmatprep.subr.bf16.mxu0 0
    %387 = vmatpush1.bf16.msra.mxu0 0
    %388 = vmatprep.subr.bf16.mxu0 0
    %389 = vmatpush1.bf16.msra.mxu0 0
    %390 = vmatprep.subr.bf16.mxu0 0
    %391 = vmatpush1.bf16.msra.mxu0 0
    %392 = vmatprep.subr.bf16.mxu0 0
    %393 = vmatpush1.bf16.msra.mxu0 0
    %394 = vmatprep.subr.bf16.mxu0 0
    %395 = vmatpush1.bf16.msra.mxu0 0
    %396 = vmatprep.mubr.bf16.mxu0 0
    %397 = vmatmul.mubr.bf16.gmra.mrb[0].mxu0 %v290
    %v398 = vpop.f32.mrb[0].mxu0
    %v399 = vadd.f32 0.0, %v398
    %v400 = vpop.f32.mrb[0].mxu0
    %v401 = vpop.f32.mrb[0].mxu0
    %v402 = vadd.f32 0.0, %v401
    %v403 = vpop.f32.mrb[0].mxu0
    %404 = vmatprep.mubr.bf16.mxu0 0
    %405 = vmatmul.mubr.bf16.gmra.mrb[0].mxu0 %v293
    %v406 = vpop.f32.mrb[0].mxu0
    %v407 = vadd.f32 0.0, %v406
    %v408 = vpop.f32.mrb[0].mxu0
    %v409 = vpop.f32.mrb[0].mxu0
    %v410 = vadd.f32 0.0, %v409
    %v411 = vpop.f32.mrb[0].mxu0
    %412 = vmatprep.mubr.bf16.mxu0 0
    %413 = vmatmul.mubr.bf16.gmra.mrb[0].mxu0 %v296
    %v414 = vpop.f32.mrb[0].mxu0
    %v415 = vadd.f32 0.0, %v414
    %v416 = vpop.f32.mrb[0].mxu0
    %v417 = vpop.f32.mrb[0].mxu0
    %v418 = vadd.f32 0.0, %v417
    %v419 = vpop.f32.mrb[0].mxu0
    %420 = vmatprep.mubr.bf16.mxu0 0
    %421 = vmatmul.mubr.bf16.gmra.mrb[0].mxu0 %v299
    %v422 = vpop.f32.mrb[0].mxu0
    %v423 = vadd.f32 0.0, %v422
    %v424 = vpop.f32.mrb[0].mxu0
    %v425 = vpop.f32.mrb[0].mxu0
    %v426 = vadd.f32 0.0, %v425
    %v427 = vpop.f32.mrb[0].mxu0
    %428 = vmatprep.mubr.bf16.mxu0 0
    %429 = vmatmul.mubr.bf16.gmra.mrb[0].mxu0 %v302
    %v430 = vpop.f32.mrb[0].mxu0
    %v431 = vadd.f32 0.0, %v430
    %v432 = vpop.f32.mrb[0].mxu0
    %v433 = vpop.f32.mrb[0].mxu0
    %v434 = vadd.f32 0.0, %v433
    %v435 = vpop.f32.mrb[0].mxu0
    %436 = vmatprep.mubr.bf16.mxu0 0
    %437 = vmatmul.mubr.bf16.gmra.mrb[0].mxu0 %v305
    %v438 = vpop.f32.mrb[0].mxu0
    %v439 = vadd.f32 0.0, %v438
    %v440 = vpop.f32.mrb[0].mxu0
    %v441 = vpop.f32.mrb[0].mxu0
    %v442 = vadd.f32 0.0, %v441
    %v443 = vpop.f32.mrb[0].mxu0
    %444 = vmatprep.mubr.bf16.mxu0 0
    %445 = vmatmul.mubr.bf16.gmra.mrb[0].mxu0 %v308
    %v446 = vpop.f32.mrb[0].mxu0
    %v447 = vadd.f32 0.0, %v446
    %v448 = vpop.f32.mrb[0].mxu0
    %v449 = vpop.f32.mrb[0].mxu0
    %v450 = vadd.f32 0.0, %v449
    %v451 = vpop.f32.mrb[0].mxu0
    %452 = vmatprep.mubr.bf16.mxu0 0
    %453 = vmatmul.mubr.bf16.gmra.mrb[0].mxu0 %v311
    %v454 = vpop.f32.mrb[0].mxu0
    %v455 = vadd.f32 0.0, %v454
    %v456 = vpop.f32.mrb[0].mxu0
    %v457 = vpop.f32.mrb[0].mxu0
    %v458 = vadd.f32 0.0, %v457
    %v459 = vpop.f32.mrb[0].mxu0
    %460 = vmatprep.mubr.bf16.mxu0 0
    %461 = vmatmul.mubr.bf16.gmra.mrb[0].mxu0 %v314
    %v462 = vpop.f32.mrb[0].mxu0
    %v463 = vadd.f32 0.0, %v462
    %v464 = vpop.f32.mrb[0].mxu0
    %v465 = vpop.f32.mrb[0].mxu0
    %v466 = vadd.f32 0.0, %v465
    %v467 = vpop.f32.mrb[0].mxu0
    %468 = vmatprep.mubr.bf16.mxu0 0
    %469 = vmatmul.mubr.bf16.gmra.mrb[0].mxu0 %v317
    %v470 = vpop.f32.mrb[0].mxu0
    %v471 = vadd.f32 0.0, %v470
    %v472 = vpop.f32.mrb[0].mxu0
    %v473 = vpop.f32.mrb[0].mxu0
    %v474 = vadd.f32 0.0, %v473
    %v475 = vpop.f32.mrb[0].mxu0
    %476 = vmatprep.mubr.bf16.mxu0 0
    %477 = vmatmul.mubr.bf16.gmra.mrb[0].mxu0 %v320
    %v478 = vpop.f32.mrb[0].mxu0
    %v479 = vadd.f32 0.0, %v478
    %v480 = vpop.f32.mrb[0].mxu0
    %v481 = vpop.f32.mrb[0].mxu0
    %v482 = vadd.f32 0.0, %v481
    %v483 = vpop.f32.mrb[0].mxu0
    %484 = vmatprep.mubr.bf16.mxu0 0
    %485 = vmatmul.mubr.bf16.gmra.mrb[0].mxu0 %v323
    %v486 = vpop.f32.mrb[0].mxu0
    %v487 = vadd.f32 0.0, %v486
    %v488 = vpop.f32.mrb[0].mxu0
    %v489 = vpop.f32.mrb[0].mxu0
    %v490 = vadd.f32 0.0, %v489
    %v491 = vpop.f32.mrb[0].mxu0
    %492 = vmatprep.mubr.bf16.mxu0 0
    %493 = vmatmul.mubr.bf16.gmra.mrb[0].mxu0 %v326
    %v494 = vpop.f32.mrb[0].mxu0
    %v495 = vadd.f32 0.0, %v494
    %v496 = vpop.f32.mrb[0].mxu0
    %v497 = vpop.f32.mrb[0].mxu0
    %v498 = vadd.f32 0.0, %v497
    %v499 = vpop.f32.mrb[0].mxu0
    %500 = vmatprep.mubr.bf16.mxu0 0
    %501 = vmatmul.mubr.bf16.gmra.mrb[0].mxu0 %v329
    %v502 = vpop.f32.mrb[0].mxu0
    %v503 = vadd.f32 0.0, %v502
    %v504 = vpop.f32.mrb[0].mxu0
    %v505 = vpop.f32.mrb[0].mxu0
    %v506 = vadd.f32 0.0, %v505
    %v507 = vpop.f32.mrb[0].mxu0
    %508 = vmatprep.mubr.bf16.mxu0 0
    %509 = vmatmul.mubr.bf16.gmra.mrb[0].mxu0 %v332
    %v510 = vpop.f32.mrb[0].mxu0
    %v511 = vadd.f32 0.0, %v510
    %v512 = vpop.f32.mrb[0].mxu0
    %v513 = vpop.f32.mrb[0].mxu0
    %v514 = vadd.f32 0.0, %v513
    %v515 = vpop.f32.mrb[0].mxu0
    %516 = vmatprep.mubr.bf16.mxu0 0
    %517 = vmatmul.mubr.bf16.gmra.mrb[0].mxu0 %v335
    %v518 = vpop.f32.mrb[0].mxu0
    %v519 = vadd.f32 0.0, %v518
    %v520 = vpop.f32.mrb[0].mxu0
    %v521 = vpop.f32.mrb[0].mxu0
    %v522 = vadd.f32 0.0, %v521
    %v523 = vpop.f32.mrb[0].mxu0
    %524 = vmatprep.mubr.bf16.mxu0 0
    %525 = vmatmul.mubr.bf16.gmra.mrb[0].mxu0 %v338
    %v526 = vpop.f32.mrb[0].mxu0
    %v527 = vadd.f32 0.0, %v526
    %v528 = vpop.f32.mrb[0].mxu0
    %v529 = vpop.f32.mrb[0].mxu0
    %v530 = vadd.f32 0.0, %v529
    %v531 = vpop.f32.mrb[0].mxu0
    %532 = vmatprep.mubr.bf16.mxu0 0
    %533 = vmatmul.mubr.bf16.gmra.mrb[0].mxu0 %v341
    %v534 = vpop.f32.mrb[0].mxu0
    %v535 = vadd.f32 0.0, %v534
    %v536 = vpop.f32.mrb[0].mxu0
    %v537 = vpop.f32.mrb[0].mxu0
    %v538 = vadd.f32 0.0, %v537
    %v539 = vpop.f32.mrb[0].mxu0
    %540 = vmatprep.mubr.bf16.mxu0 0
    %541 = vmatmul.mubr.bf16.gmra.mrb[0].mxu0 %v344
    %v542 = vpop.f32.mrb[0].mxu0
    %v543 = vadd.f32 0.0, %v542
    %v544 = vpop.f32.mrb[0].mxu0
    %v545 = vpop.f32.mrb[0].mxu0
    %v546 = vadd.f32 0.0, %v545
    %v547 = vpop.f32.mrb[0].mxu0
    %548 = vmatprep.mubr.bf16.mxu0 0
    %549 = vmatmul.mubr.bf16.gmra.mrb[0].mxu0 %v347
    %v550 = vpop.f32.mrb[0].mxu0
    %v551 = vadd.f32 0.0, %v550
    %v552 = vpop.f32.mrb[0].mxu0
    %v553 = vpop.f32.mrb[0].mxu0
    %v554 = vadd.f32 0.0, %v553
    %v555 = vpop.f32.mrb[0].mxu0
    %556 = vmatprep.mubr.bf16.mxu0 0
    %557 = vmatmul.mubr.bf16.gmra.mrb[0].mxu0 %v350
    %v558 = vpop.f32.mrb[0].mxu0
    %v559 = vadd.f32 0.0, %v558
    %v560 = vpop.f32.mrb[0].mxu0
    %v561 = vpop.f32.mrb[0].mxu0
    %v562 = vadd.f32 0.0, %v561
    %v563 = vpop.f32.mrb[0].mxu0
    %564 = vmatprep.mubr.bf16.mxu0 0
    %565 = vmatmul.mubr.bf16.gmra.mrb[0].mxu0 %v353
    %v566 = vpop.f32.mrb[0].mxu0
    %v567 = vadd.f32 0.0, %v566
    %v568 = vpop.f32.mrb[0].mxu0
    %v569 = vpop.f32.mrb[0].mxu0
    %v570 = vadd.f32 0.0, %v569
    %v571 = vpop.f32.mrb[0].mxu0
    %572 = vmatprep.mubr.bf16.mxu0 0
    %573 = vmatmul.mubr.bf16.gmra.mrb[0].mxu0 %v356
    %v574 = vpop.f32.mrb[0].mxu0
    %v575 = vadd.f32 0.0, %v574
    %v576 = vpop.f32.mrb[0].mxu0
    %v577 = vpop.f32.mrb[0].mxu0
    %v578 = vpop.f32.mrb[0].mxu0
    %579 = vdwg.mxu0
    %v580 = vmax.f32 %v399, 0.0
    %v581 = vmax.f32 %v402, 0.0
    %v582 = vmax.f32 %v407, 0.0
    %v583 = vmax.f32 %v410, 0.0
    %v584 = vmax.f32 %v415, 0.0
    %v585 = vmax.f32 %v418, 0.0
    %v586 = vmax.f32 %v423, 0.0
    %v587 = vmax.f32 %v426, 0.0
    %v588 = vmax.f32 %v431, 0.0
    %v589 = vmax.f32 %v434, 0.0
    %v590 = vmax.f32 %v439, 0.0
    %v591 = vmax.f32 %v442, 0.0
    %v592 = vmax.f32 %v447, 0.0
    %v593 = vmax.f32 %v450, 0.0
    %v594 = vmax.f32 %v455, 0.0
    %v595 = vmax.f32 %v458, 0.0
    %v596 = vmax.f32 %v463, 0.0
    %v597 = vmax.f32 %v466, 0.0
    %v598 = vmax.f32 %v471, 0.0
    %v599 = vmax.f32 %v474, 0.0
    %v600 = vmax.f32 %v479, 0.0
    %v601 = vmax.f32 %v482, 0.0
    %v602 = vmax.f32 %v487, 0.0
    %v603 = vmax.f32 %v490, 0.0
    %v604 = vmax.f32 %v495, 0.0
    %v605 = vmax.f32 %v498, 0.0
    %v606 = vmax.f32 %v503, 0.0
    %v607 = vmax.f32 %v506, 0.0
    %v608 = vmax.f32 %v511, 0.0
    %v609 = vmax.f32 %v514, 0.0
    %v610 = vmax.f32 %v519, 0.0
    %v611 = vmax.f32 %v522, 0.0
    %v612 = vmax.f32 %v527, 0.0
    %v613 = vmax.f32 %v530, 0.0
    %v614 = vmax.f32 %v535, 0.0
    %v615 = vmax.f32 %v538, 0.0
    %v616 = vmax.f32 %v543, 0.0
    %v617 = vmax.f32 %v546, 0.0
    %v618 = vmax.f32 %v551, 0.0
    %v619 = vmax.f32 %v554, 0.0
    %v620 = vmax.f32 %v559, 0.0
    %v621 = vmax.f32 %v562, 0.0
    %v622 = vmax.f32 %v567, 0.0
    %v623 = vmax.f32 %v570, 0.0
    %v624 = vmax.f32 %v575, 0.0
    %v625 = vpack.c.bf16 %v581, %v580
    %v626 = vpack.c.bf16 %v583, %v582
    %v627 = vpack.c.bf16 %v585, %v584
    %v628 = vpack.c.bf16 %v587, %v586
    %v629 = vpack.c.bf16 %v589, %v588
    %v630 = vpack.c.bf16 %v591, %v590
    %v631 = vpack.c.bf16 %v593, %v592
    %v632 = vpack.c.bf16 %v595, %v594
    %v633 = vpack.c.bf16 %v597, %v596
    %v634 = vpack.c.bf16 %v599, %v598
    %v635 = vpack.c.bf16 %v601, %v600
    %v636 = vpack.c.bf16 %v603, %v602
    %v637 = vpack.c.bf16 %v605, %v604
    %v638 = vpack.c.bf16 %v607, %v606
    %v639 = vpack.c.bf16 %v609, %v608
    %v640 = vpack.c.bf16 %v611, %v610
    %v641 = vpack.c.bf16 %v613, %v612
    %v642 = vpack.c.bf16 %v615, %v614
    %v643 = vpack.c.bf16 %v617, %v616
    %v644 = vpack.c.bf16 %v619, %v618
    %v645 = vpack.c.bf16 %v621, %v620
    %v646 = vpack.c.bf16 %v623, %v622
    %v647 = vpack.c.bf16 %v624, %v624
    %vm648 = vsmask.f32 7424
    %v650 = vshrl.u32 %v625, 16
    %v652 = vshll.u32 %v625, 16
    %v654 = vrot.slane %v652, 1
    %v655 = vor.u32 %v650, %v654
    %v657 = vshll.u32 %v626, 16
    %v659 = vrot.slane %v657, 1
    %v660 = vsel %vm648, %v655, %v659
    %v661 = vshrl.u32 %v626, 16
    %v663 = vor.u32 %v661, %v659
    %v665 = vshll.u32 %v627, 16
    %v667 = vrot.slane %v665, 1
    %v668 = vsel %vm648, %v663, %v667
    %v669 = vshrl.u32 %v627, 16
    %v671 = vor.u32 %v669, %v667
    %v673 = vshll.u32 %v628, 16
    %v675 = vrot.slane %v673, 1
    %v676 = vsel %vm648, %v671, %v675
    %v677 = vshrl.u32 %v628, 16
    %v679 = vor.u32 %v677, %v675
    %v681 = vshll.u32 %v629, 16
    %v683 = vrot.slane %v681, 1
    %v684 = vsel %vm648, %v679, %v683
    %v685 = vshrl.u32 %v629, 16
    %v687 = vor.u32 %v685, %v683
    %v689 = vshll.u32 %v630, 16
    %v691 = vrot.slane %v689, 1
    %v692 = vsel %vm648, %v687, %v691
    %v693 = vshrl.u32 %v630, 16
    %v695 = vor.u32 %v693, %v691
    %v697 = vshll.u32 %v631, 16
    %v699 = vrot.slane %v697, 1
    %v700 = vsel %vm648, %v695, %v699
    %v701 = vshrl.u32 %v631, 16
    %v703 = vor.u32 %v701, %v699
    %v705 = vshll.u32 %v632, 16
    %v707 = vrot.slane %v705, 1
    %v708 = vsel %vm648, %v703, %v707
    %v709 = vshrl.u32 %v632, 16
    %v711 = vor.u32 %v709, %v707
    %v713 = vshll.u32 %v633, 16
    %v715 = vrot.slane %v713, 1
    %v716 = vsel %vm648, %v711, %v715
    %v717 = vshrl.u32 %v633, 16
    %v719 = vor.u32 %v717, %v715
    %v721 = vshll.u32 %v634, 16
    %v723 = vrot.slane %v721, 1
    %v724 = vsel %vm648, %v719, %v723
    %v725 = vshrl.u32 %v634, 16
    %v727 = vor.u32 %v725, %v723
    %v729 = vshll.u32 %v635, 16
    %v731 = vrot.slane %v729, 1
    %v732 = vsel %vm648, %v727, %v731
    %v733 = vshrl.u32 %v635, 16
    %v735 = vor.u32 %v733, %v731
    %v737 = vshll.u32 %v636, 16
    %v739 = vrot.slane %v737, 1
    %v740 = vsel %vm648, %v735, %v739
    %v741 = vshrl.u32 %v636, 16
    %v743 = vor.u32 %v741, %v739
    %v745 = vshll.u32 %v637, 16
    %v747 = vrot.slane %v745, 1
    %v748 = vsel %vm648, %v743, %v747
    %v749 = vshrl.u32 %v637, 16
    %v751 = vor.u32 %v749, %v747
    %v753 = vshll.u32 %v638, 16
    %v755 = vrot.slane %v753, 1
    %v756 = vsel %vm648, %v751, %v755
    %v757 = vshrl.u32 %v638, 16
    %v759 = vor.u32 %v757, %v755
    %v761 = vshll.u32 %v639, 16
    %v763 = vrot.slane %v761, 1
    %v764 = vsel %vm648, %v759, %v763
    %v765 = vshrl.u32 %v639, 16
    %v767 = vor.u32 %v765, %v763
    %v769 = vshll.u32 %v640, 16
    %v771 = vrot.slane %v769, 1
    %v772 = vsel %vm648, %v767, %v771
    %v773 = vshrl.u32 %v640, 16
    %v775 = vor.u32 %v773, %v771
    %v777 = vshll.u32 %v641, 16
    %v779 = vrot.slane %v777, 1
    %v780 = vsel %vm648, %v775, %v779
    %v781 = vshrl.u32 %v641, 16
    %v783 = vor.u32 %v781, %v779
    %v785 = vshll.u32 %v642, 16
    %v787 = vrot.slane %v785, 1
    %v788 = vsel %vm648, %v783, %v787
    %v789 = vshrl.u32 %v642, 16
    %v791 = vor.u32 %v789, %v787
    %v793 = vshll.u32 %v643, 16
    %v795 = vrot.slane %v793, 1
    %v796 = vsel %vm648, %v791, %v795
    %v797 = vshrl.u32 %v643, 16
    %v799 = vor.u32 %v797, %v795
    %v801 = vshll.u32 %v644, 16
    %v803 = vrot.slane %v801, 1
    %v804 = vsel %vm648, %v799, %v803
    %v805 = vshrl.u32 %v644, 16
    %v807 = vor.u32 %v805, %v803
    %v809 = vshll.u32 %v645, 16
    %v811 = vrot.slane %v809, 1
    %v812 = vsel %vm648, %v807, %v811
    %v813 = vshrl.u32 %v645, 16
    %v815 = vor.u32 %v813, %v811
    %v817 = vshll.u32 %v646, 16
    %v819 = vrot.slane %v817, 1
    %v820 = vsel %vm648, %v815, %v819
    %v821 = vshrl.u32 %v646, 16
    %v823 = vor.u32 %v821, %v819
    %v825 = vshll.u32 %v647, 16
    %v827 = vrot.slane %v825, 1
    %v828 = vsel %vm648, %v823, %v827
    %829 = vrot.lane.b32.xlu0 %v660, 64
    %v830 = vpop.permute.xlu0 %829
    %831 = vrot.lane.b32.xlu0 %v668, 64
    %v832 = vpop.permute.xlu0 %831
    %833 = vrot.lane.b32.xlu0 %v676, 64
    %v834 = vpop.permute.xlu0 %833
    %835 = vrot.lane.b32.xlu0 %v684, 64
    %v836 = vpop.permute.xlu0 %835
    %837 = vrot.lane.b32.xlu0 %v692, 64
    %v838 = vpop.permute.xlu0 %837
    %839 = vrot.lane.b32.xlu0 %v700, 64
    %v840 = vpop.permute.xlu0 %839
    %841 = vrot.lane.b32.xlu0 %v708, 64
    %v842 = vpop.permute.xlu0 %841
    %843 = vrot.lane.b32.xlu0 %v716, 64
    %v844 = vpop.permute.xlu0 %843
    %845 = vrot.lane.b32.xlu0 %v724, 64
    %v846 = vpop.permute.xlu0 %845
    %847 = vrot.lane.b32.xlu0 %v732, 64
    %v848 = vpop.permute.xlu0 %847
    %849 = vrot.lane.b32.xlu0 %v740, 64
    %v850 = vpop.permute.xlu0 %849
    %851 = vrot.lane.b32.xlu0 %v748, 64
    %v852 = vpop.permute.xlu0 %851
    %853 = vrot.lane.b32.xlu0 %v756, 64
    %v854 = vpop.permute.xlu0 %853
    %855 = vrot.lane.b32.xlu0 %v764, 64
    %v856 = vpop.permute.xlu0 %855
    %857 = vrot.lane.b32.xlu0 %v772, 64
    %v858 = vpop.permute.xlu0 %857
    %859 = vrot.lane.b32.xlu0 %v780, 64
    %v860 = vpop.permute.xlu0 %859
    %861 = vrot.lane.b32.xlu0 %v788, 64
    %v862 = vpop.permute.xlu0 %861
    %863 = vrot.lane.b32.xlu0 %v796, 64
    %v864 = vpop.permute.xlu0 %863
    %865 = vrot.lane.b32.xlu0 %v804, 64
    %v866 = vpop.permute.xlu0 %865
    %867 = vrot.lane.b32.xlu0 %v812, 64
    %v868 = vpop.permute.xlu0 %867
    %869 = vrot.lane.b32.xlu0 %v820, 64
    %v870 = vpop.permute.xlu0 %869
    %871 = vrot.lane.b32.xlu0 %v828, 64
    %v872 = vpop.permute.xlu0 %871
    %vm896 = vcmask 1046528
    %v897 = vrot.slane %v625, 1
    %v898 = vrot.slane %v626, 1
    %v899 = vsel %vm896, %v897, %v898
    %v900 = vrot.slane %v627, 1
    %v901 = vsel %vm896, %v898, %v900
    %v902 = vrot.slane %v628, 1
    %v903 = vsel %vm896, %v900, %v902
    %v904 = vrot.slane %v629, 1
    %v905 = vsel %vm896, %v902, %v904
    %v906 = vrot.slane %v630, 1
    %v907 = vsel %vm896, %v904, %v906
    %v908 = vrot.slane %v631, 1
    %v909 = vsel %vm896, %v906, %v908
    %v910 = vrot.slane %v632, 1
    %v911 = vsel %vm896, %v908, %v910
    %v912 = vrot.slane %v633, 1
    %v913 = vsel %vm896, %v910, %v912
    %v914 = vrot.slane %v634, 1
    %v915 = vsel %vm896, %v912, %v914
    %v916 = vrot.slane %v635, 1
    %v917 = vsel %vm896, %v914, %v916
    %v918 = vrot.slane %v636, 1
    %v919 = vsel %vm896, %v916, %v918
    %v920 = vrot.slane %v637, 1
    %v921 = vsel %vm896, %v918, %v920
    %v922 = vrot.slane %v638, 1
    %v923 = vsel %vm896, %v920, %v922
    %v924 = vrot.slane %v639, 1
    %v925 = vsel %vm896, %v922, %v924
    %v926 = vrot.slane %v640, 1
    %v927 = vsel %vm896, %v924, %v926
    %v928 = vrot.slane %v641, 1
    %v929 = vsel %vm896, %v926, %v928
    %v930 = vrot.slane %v642, 1
    %v931 = vsel %vm896, %v928, %v930
    %v932 = vrot.slane %v643, 1
    %v933 = vsel %vm896, %v930, %v932
    %v934 = vrot.slane %v644, 1
    %v935 = vsel %vm896, %v932, %v934
    %v936 = vrot.slane %v645, 1
    %v937 = vsel %vm896, %v934, %v936
    %v938 = vrot.slane %v646, 1
    %v939 = vsel %vm896, %v936, %v938
    %v940 = vrot.slane %v647, 1
    %v941 = vsel %vm896, %v938, %v940
    %vm964 = vcmask 523264
    %v966 = vsel %vm964, %v625, %v830
    %v969 = vsel %vm964, %v626, %v832
    %v972 = vsel %vm964, %v627, %v834
    %v975 = vsel %vm964, %v628, %v836
    %v978 = vsel %vm964, %v629, %v838
    %v981 = vsel %vm964, %v630, %v840
    %v984 = vsel %vm964, %v631, %v842
    %v987 = vsel %vm964, %v632, %v844
    %v990 = vsel %vm964, %v633, %v846
    %v993 = vsel %vm964, %v634, %v848
    %v996 = vsel %vm964, %v635, %v850
    %v999 = vsel %vm964, %v636, %v852
    %v1002 = vsel %vm964, %v637, %v854
    %v1005 = vsel %vm964, %v638, %v856
    %v1008 = vsel %vm964, %v639, %v858
    %v1011 = vsel %vm964, %v640, %v860
    %v1014 = vsel %vm964, %v641, %v862
    %v1017 = vsel %vm964, %v642, %v864
    %v1020 = vsel %vm964, %v643, %v866
    %v1023 = vsel %vm964, %v644, %v868
    %v1026 = vsel %vm964, %v645, %v870
    %v1029 = vsel %vm964, %v646, %v872
    %1031 = vst [vmem:[#allocation2] sm:$0xff] %v966
    %1032 = vst.msk [vmem:[#allocation2 + $0x8] sm:$0xff] %vm964, %v899
    %1033 = vst [vmem:[#allocation2 + $0x10] sm:$0xff] %v969
    %1034 = vst.msk [vmem:[#allocation2 + $0x18] sm:$0xff] %vm964, %v901
    %1035 = vst [vmem:[#allocation2 + $0x20] sm:$0xff] %v972
    %1036 = vst.msk [vmem:[#allocation2 + $0x28] sm:$0xff] %vm964, %v903
    %1037 = vst [vmem:[#allocation2 + $0x30] sm:$0xff] %v975
    %1038 = vst.msk [vmem:[#allocation2 + $0x38] sm:$0xff] %vm964, %v905
    %1039 = vst [vmem:[#allocation2 + $0x40] sm:$0xff] %v978
    %1040 = vst.msk [vmem:[#allocation2 + $0x48] sm:$0xff] %vm964, %v907
    %1041 = vst [vmem:[#allocation2 + $0x50] sm:$0xff] %v981
    %1042 = vst.msk [vmem:[#allocation2 + $0x58] sm:$0xff] %vm964, %v909
    %1043 = vst [vmem:[#allocation2 + $0x60] sm:$0xff] %v984
    %1044 = vst.msk [vmem:[#allocation2 + $0x68] sm:$0xff] %vm964, %v911
    %1045 = vst [vmem:[#allocation2 + $0x70] sm:$0xff] %v987
    %1046 = vst.msk [vmem:[#allocation2 + $0x78] sm:$0xff] %vm964, %v913
    %1047 = vst [vmem:[#allocation2 + $0x80] sm:$0xff] %v990
    %1048 = vst.msk [vmem:[#allocation2 + $0x88] sm:$0xff] %vm964, %v915
    %1049 = vst [vmem:[#allocation2 + $0x90] sm:$0xff] %v993
    %1050 = vst.msk [vmem:[#allocation2 + $0x98] sm:$0xff] %vm964, %v917
    %1051 = vst [vmem:[#allocation2 + $0xa0] sm:$0xff] %v996
    %1052 = vst.msk [vmem:[#allocation2 + $0xa8] sm:$0xff] %vm964, %v919
    %1053 = vst [vmem:[#allocation2 + $0xb0] sm:$0xff] %v999
    %1054 = vst.msk [vmem:[#allocation2 + $0xb8] sm:$0xff] %vm964, %v921
    %1055 = vst [vmem:[#allocation2 + $0xc0] sm:$0xff] %v1002
    %1056 = vst.msk [vmem:[#allocation2 + $0xc8] sm:$0xff] %vm964, %v923
    %1057 = vst [vmem:[#allocation2 + $0xd0] sm:$0xff] %v1005
    %1058 = vst.msk [vmem:[#allocation2 + $0xd8] sm:$0xff] %vm964, %v925
    %1059 = vst [vmem:[#allocation2 + $0xe0] sm:$0xff] %v1008
    %1060 = vst.msk [vmem:[#allocation2 + $0xe8] sm:$0xff] %vm964, %v927
    %1061 = vst [vmem:[#allocation2 + $0xf0] sm:$0xff] %v1011
    %1062 = vst.msk [vmem:[#allocation2 + $0xf8] sm:$0xff] %vm964, %v929
    %1063 = vst [vmem:[#allocation2 + $0x100] sm:$0xff] %v1014
    %1064 = vst.msk [vmem:[#allocation2 + $0x108] sm:$0xff] %vm964, %v931
    %1065 = vst [vmem:[#allocation2 + $0x110] sm:$0xff] %v1017
    %1066 = vst.msk [vmem:[#allocation2 + $0x118] sm:$0xff] %vm964, %v933
    %1067 = vst [vmem:[#allocation2 + $0x120] sm:$0xff] %v1020
    %1068 = vst.msk [vmem:[#allocation2 + $0x128] sm:$0xff] %vm964, %v935
    %1069 = vst [vmem:[#allocation2 + $0x130] sm:$0xff] %v1023
    %1070 = vst.msk [vmem:[#allocation2 + $0x138] sm:$0xff] %vm964, %v937
    %1071 = vst [vmem:[#allocation2 + $0x140] sm:$0xff] %v1026
    %1072 = vst.msk [vmem:[#allocation2 + $0x148] sm:$0xff] %vm964, %v939
    %1073 = vst [vmem:[#allocation2 + $0x150] sm:$0xff] %v1029
    %1074 = vst.msk [vmem:[#allocation2 + $0x158] sm:$0xff] %vm964, %v941
    %v1075 = vld [vmem:[#allocation2] sm:$0xff]
    %v1076 = vld [vmem:[#allocation2 + $0x8] sm:$0xff]
    %v1077 = vld [vmem:[#allocation2 + $0x10] sm:$0xff]
    %v1078 = vld [vmem:[#allocation2 + $0x18] sm:$0xff]
    %v1079 = vld [vmem:[#allocation2 + $0x20] sm:$0xff]
    %v1080 = vld [vmem:[#allocation2 + $0x28] sm:$0xff]
    %v1081 = vld [vmem:[#allocation2 + $0x30] sm:$0xff]
    %v1082 = vld [vmem:[#allocation2 + $0x38] sm:$0xff]
    %v1083 = vld [vmem:[#allocation2 + $0x40] sm:$0xff]
    %v1084 = vld [vmem:[#allocation2 + $0x48] sm:$0xff]
    %v1085 = vld [vmem:[#allocation2 + $0x50] sm:$0xff]
    %v1086 = vld [vmem:[#allocation2 + $0x58] sm:$0xff]
    %v1087 = vld [vmem:[#allocation2 + $0x60] sm:$0xff]
    %v1088 = vld [vmem:[#allocation2 + $0x68] sm:$0xff]
    %v1089 = vld [vmem:[#allocation2 + $0x70] sm:$0xff]
    %v1090 = vld [vmem:[#allocation2 + $0x78] sm:$0xff]
    %v1091 = vld [vmem:[#allocation2 + $0x80] sm:$0xff]
    %v1092 = vld [vmem:[#allocation2 + $0x88] sm:$0xff]
    %v1093 = vld [vmem:[#allocation2 + $0x90] sm:$0xff]
    %v1094 = vld [vmem:[#allocation2 + $0x98] sm:$0xff]
    %v1095 = vld [vmem:[#allocation2 + $0xa0] sm:$0xff]
    %v1096 = vld [vmem:[#allocation2 + $0xa8] sm:$0xff]
    %v1097 = vld [vmem:[#allocation2 + $0xb0] sm:$0xff]
    %v1098 = vld [vmem:[#allocation2 + $0xb8] sm:$0xff]
    %v1099 = vld [vmem:[#allocation2 + $0xc0] sm:$0xff]
    %v1100 = vld [vmem:[#allocation2 + $0xc8] sm:$0xff]
    %v1101 = vld [vmem:[#allocation2 + $0xd0] sm:$0xff]
    %v1102 = vld [vmem:[#allocation2 + $0xd8] sm:$0xff]
    %v1103 = vld [vmem:[#allocation2 + $0xe0] sm:$0xff]
    %v1104 = vld [vmem:[#allocation2 + $0xe8] sm:$0xff]
    %v1105 = vld [vmem:[#allocation2 + $0xf0] sm:$0xff]
    %v1106 = vld [vmem:[#allocation2 + $0xf8] sm:$0xff]
    %v1107 = vld [vmem:[#allocation2 + $0x100] sm:$0xff]
    %v1108 = vld [vmem:[#allocation2 + $0x108] sm:$0xff]
    %v1109 = vld [vmem:[#allocation2 + $0x110] sm:$0xff]
    %v1110 = vld [vmem:[#allocation2 + $0x118] sm:$0xff]
    %v1111 = vld [vmem:[#allocation2 + $0x120] sm:$0xff]
    %v1112 = vld [vmem:[#allocation2 + $0x128] sm:$0xff]
    %v1113 = vld [vmem:[#allocation2 + $0x130] sm:$0xff]
    %v1114 = vld [vmem:[#allocation2 + $0x138] sm:$0xff]
    %v1115 = vld [vmem:[#allocation8] sm:$0xff]
    %v1116 = vld [vmem:[#allocation8 + $0x8] sm:$0xff]
    %v1117 = vld [vmem:[#allocation8 + $0x10] sm:$0xff]
    %v1118 = vld [vmem:[#allocation8 + $0x18] sm:$0xff]
    %v1119 = vld [vmem:[#allocation8 + $0x20] sm:$0xff]
    %v1120 = vld [vmem:[#allocation8 + $0x28] sm:$0xff]
    %v1121 = vld [vmem:[#allocation8 + $0x30] sm:$0xff]
    %v1122 = vld [vmem:[#allocation8 + $0x38] sm:$0xff]
    %v1123 = vld [vmem:[#allocation8 + $0x40] sm:$0xff]
    %v1124 = vld [vmem:[#allocation8 + $0x48] sm:$0xff]
    %v1125 = vld [vmem:[#allocation8 + $0x50] sm:$0xff]
    %v1126 = vld [vmem:[#allocation8 + $0x58] sm:$0xff]
    %v1127 = vld [vmem:[#allocation8 + $0x60] sm:$0xff]
    %v1128 = vld [vmem:[#allocation8 + $0x68] sm:$0xff]
    %v1129 = vld [vmem:[#allocation8 + $0x70] sm:$0xff]
    %v1130 = vld [vmem:[#allocation8 + $0x78] sm:$0xff]
    %v1131 = vld [vmem:[#allocation8 + $0x80] sm:$0xff]
    %v1132 = vld [vmem:[#allocation8 + $0x88] sm:$0xff]
    %v1133 = vld [vmem:[#allocation8 + $0x90] sm:$0xff]
    %v1134 = vld [vmem:[#allocation8 + $0x98] sm:$0xff]
    %v1135 = vld [vmem:[#allocation8 + $0xa0] sm:$0xff]
    %v1136 = vld [vmem:[#allocation8 + $0xa8] sm:$0xff]
    %v1137 = vld [vmem:[#allocation8 + $0xb0] sm:$0xff]
    %v1138 = vld [vmem:[#allocation8 + $0xb8] sm:$0xff]
    %v1139 = vld [vmem:[#allocation2 + $0x140] sm:$0xff]
    %v1140 = vld [vmem:[#allocation2 + $0x148] sm:$0xff]
    %v1141 = vld [vmem:[#allocation8 + $0xc0] sm:$0xff]
    %v1142 = vld [vmem:[#allocation8 + $0xc8] sm:$0xff]
    %v1143 = vld [vmem:[#allocation8 + $0xd0] sm:$0xff]
    %v1144 = vld [vmem:[#allocation8 + $0xd8] sm:$0xff]
    %v1145 = vld [vmem:[#allocation8 + $0xe0] sm:$0xff]
    %v1146 = vld [vmem:[#allocation8 + $0xe8] sm:$0xff]
    %v1147 = vld [vmem:[#allocation8 + $0xf0] sm:$0xff]
    %v1148 = vld [vmem:[#allocation8 + $0xf8] sm:$0xff]
    %v1149 = vld [vmem:[#allocation8 + $0x100] sm:$0xff]
    %v1150 = vld [vmem:[#allocation8 + $0x108] sm:$0xff]
    %v1151 = vld [vmem:[#allocation8 + $0x110] sm:$0xff]
    %v1152 = vld [vmem:[#allocation8 + $0x118] sm:$0xff]
    %v1153 = vld [vmem:[#allocation8 + $0x120] sm:$0xff]
    %v1154 = vld [vmem:[#allocation8 + $0x128] sm:$0xff]
    %v1155 = vld [vmem:[#allocation8 + $0x130] sm:$0xff]
    %v1156 = vld [vmem:[#allocation8 + $0x138] sm:$0xff]
    %v1157 = vld [vmem:[#allocation8 + $0x140] sm:$0xff]
    %v1158 = vld [vmem:[#allocation8 + $0x148] sm:$0xff]
    %v1159 = vld [vmem:[#allocation8 + $0x150] sm:$0xff]
    %v1160 = vld [vmem:[#allocation8 + $0x158] sm:$0xff]
    %v1161 = vld [vmem:[#allocation8 + $0x160] sm:$0xff]
    %v1162 = vld [vmem:[#allocation8 + $0x168] sm:$0xff]
    %v1163 = vld [vmem:[#allocation8 + $0x170] sm:$0xff]
    %v1164 = vld [vmem:[#allocation8 + $0x178] sm:$0xff]
    %v1189 = vunpack.c.l.b16 %v1141
    %v1190 = vunpack.c.h.b16 %v1141
    %v1191 = vunpack.c.l.b16 %v1142
    %v1192 = vunpack.c.h.b16 %v1142
    %v1193 = vunpack.c.l.b16 %v1143
    %v1194 = vunpack.c.h.b16 %v1143
    %v1195 = vunpack.c.l.b16 %v1144
    %v1196 = vunpack.c.h.b16 %v1144
    %v1197 = vunpack.c.l.b16 %v1145
    %v1198 = vunpack.c.h.b16 %v1145
    %v1199 = vunpack.c.l.b16 %v1146
    %v1200 = vunpack.c.h.b16 %v1146
    %v1201 = vunpack.c.l.b16 %v1147
    %v1202 = vunpack.c.h.b16 %v1147
    %v1203 = vunpack.c.l.b16 %v1148
    %v1204 = vunpack.c.h.b16 %v1148
    %v1205 = vunpack.c.l.b16 %v1149
    %v1206 = vunpack.c.h.b16 %v1149
    %v1207 = vunpack.c.l.b16 %v1150
    %v1208 = vunpack.c.h.b16 %v1150
    %v1209 = vunpack.c.l.b16 %v1151
    %v1210 = vunpack.c.h.b16 %v1151
    %v1211 = vunpack.c.l.b16 %v1152
    %v1212 = vunpack.c.h.b16 %v1152
    %v1213 = vunpack.c.l.b16 %v1153
    %v1214 = vunpack.c.h.b16 %v1153
    %v1215 = vunpack.c.l.b16 %v1154
    %v1216 = vunpack.c.h.b16 %v1154
    %v1217 = vunpack.c.l.b16 %v1155
    %v1218 = vunpack.c.h.b16 %v1155
    %v1219 = vunpack.c.l.b16 %v1156
    %v1220 = vunpack.c.h.b16 %v1156
    %v1221 = vunpack.c.l.b16 %v1157
    %v1222 = vunpack.c.h.b16 %v1157
    %v1223 = vunpack.c.l.b16 %v1158
    %v1224 = vunpack.c.h.b16 %v1158
    %v1225 = vunpack.c.l.b16 %v1159
    %v1226 = vunpack.c.h.b16 %v1159
    %v1227 = vunpack.c.l.b16 %v1160
    %v1228 = vunpack.c.h.b16 %v1160
    %v1229 = vunpack.c.l.b16 %v1161
    %v1230 = vunpack.c.h.b16 %v1161
    %v1231 = vunpack.c.l.b16 %v1162
    %v1232 = vunpack.c.h.b16 %v1162
    %v1233 = vunpack.c.l.b16 %v1163
    %v1234 = vunpack.c.h.b16 %v1163
    %v1235 = vunpack.c.l.b16 %v1164
    %v1236 = vunpack.c.h.b16 %v1164
    %v1237 = vpack.c.b16 %v1191, %v1189
    %v1238 = vpack.c.b16 %v1192, %v1190
    %v1239 = vpack.c.b16 %v1195, %v1193
    %v1240 = vpack.c.b16 %v1196, %v1194
    %v1241 = vpack.c.b16 %v1199, %v1197
    %v1242 = vpack.c.b16 %v1200, %v1198
    %v1243 = vpack.c.b16 %v1203, %v1201
    %v1244 = vpack.c.b16 %v1204, %v1202
    %v1245 = vpack.c.b16 %v1207, %v1205
    %v1246 = vpack.c.b16 %v1208, %v1206
    %v1247 = vpack.c.b16 %v1211, %v1209
    %v1248 = vpack.c.b16 %v1212, %v1210
    %v1249 = vpack.c.b16 %v1215, %v1213
    %v1250 = vpack.c.b16 %v1216, %v1214
    %v1251 = vpack.c.b16 %v1219, %v1217
    %v1252 = vpack.c.b16 %v1220, %v1218
    %v1253 = vpack.c.b16 %v1223, %v1221
    %v1254 = vpack.c.b16 %v1224, %v1222
    %v1255 = vpack.c.b16 %v1227, %v1225
    %v1256 = vpack.c.b16 %v1228, %v1226
    %v1257 = vpack.c.b16 %v1231, %v1229
    %v1258 = vpack.c.b16 %v1232, %v1230
    %v1259 = vpack.c.b16 %v1235, %v1233
    %v1260 = vpack.c.b16 %v1236, %v1234
    %v1286 = vsel %vm964, %v1078, 0
    %v1289 = vsel %vm964, %v1080, 0
    %v1292 = vsel %vm964, %v1082, 0
    %v1295 = vsel %vm964, %v1084, 0
    %v1298 = vsel %vm964, %v1086, 0
    %v1301 = vsel %vm964, %v1088, 0
    %v1304 = vsel %vm964, %v1090, 0
    %v1307 = vsel %vm964, %v1092, 0
    %v1310 = vsel %vm964, %v1094, 0
    %v1313 = vsel %vm964, %v1096, 0
    %v1316 = vsel %vm964, %v1098, 0
    %v1319 = vsel %vm964, %v1100, 0
    %v1322 = vsel %vm964, %v1102, 0
    %v1325 = vsel %vm964, %v1104, 0
    %v1328 = vsel %vm964, %v1106, 0
    %v1331 = vsel %vm964, %v1108, 0
    %v1334 = vsel %vm964, %v1110, 0
    %v1337 = vsel %vm964, %v1112, 0
    %v1340 = vsel %vm964, %v1114, 0
    %v1343 = vsel %vm964, %v1140, 0
    %1345 = vmatprep.subr.bf16.mxu0 %v1238
    %1346 = vmatpush1.bf16.msra.mxu0 %v1237
    %1347 = vmatprep.subr.bf16.mxu0 %v1240
    %1348 = vmatpush1.bf16.msra.mxu0 %v1239
    %1349 = vmatprep.subr.bf16.mxu0 %v1242
    %1350 = vmatpush1.bf16.msra.mxu0 %v1241
    %1351 = vmatprep.subr.bf16.mxu0 %v1244
    %1352 = vmatpush1.bf16.msra.mxu0 %v1243
    %1353 = vmatprep.subr.bf16.mxu0 %v1246
    %1354 = vmatpush1.bf16.msra.mxu0 %v1245
    %1355 = vmatprep.subr.bf16.mxu0 %v1248
    %1356 = vmatpush1.bf16.msra.mxu0 %v1247
    %1357 = vmatprep.subr.bf16.mxu0 %v1250
    %1358 = vmatpush1.bf16.msra.mxu0 %v1249
    %1359 = vmatprep.subr.bf16.mxu0 %v1252
    %1360 = vmatpush1.bf16.msra.mxu0 %v1251
    %1361 = vmatprep.subr.bf16.mxu0 %v1254
    %1362 = vmatpush1.bf16.msra.mxu0 %v1253
    %1363 = vmatprep.subr.bf16.mxu0 %v1256
    %1364 = vmatpush1.bf16.msra.mxu0 %v1255
    %1365 = vmatprep.subr.bf16.mxu0 %v1258
    %1366 = vmatpush1.bf16.msra.mxu0 %v1257
    %1367 = vmatprep.subr.bf16.mxu0 %v1260
    %1368 = vmatpush1.bf16.msra.mxu0 %v1259
    %1369 = vmatprep.subr.bf16.mxu0 0
    %1370 = vmatpush1.bf16.msra.mxu0 0
    %1371 = vmatprep.subr.bf16.mxu0 0
    %1372 = vmatpush1.bf16.msra.mxu0 0
    %1373 = vmatprep.subr.bf16.mxu0 0
    %1374 = vmatpush1.bf16.msra.mxu0 0
    %1375 = vmatprep.subr.bf16.mxu0 0
    %1376 = vmatpush1.bf16.msra.mxu0 0
    %1377 = vmatprep.mubr.bf16.mxu0 %v1286
    %1378 = vmatmul.mubr.bf16.gmra.mrb[0].mxu0 %v1077
    %v1379 = vpop.f32.mrb[0].mxu0
    %v1380 = vadd.f32 0.0, %v1379
    %v1381 = vpop.f32.mrb[0].mxu0
    %v1382 = vadd.f32 0.0, %v1381
    %v1383 = vpop.f32.mrb[0].mxu0
    %v1384 = vadd.f32 0.0, %v1383
    %v1385 = vpop.f32.mrb[0].mxu0
    %v1386 = vadd.f32 0.0, %v1385
    %1387 = vmatprep.mubr.bf16.mxu0 %v1289
    %1388 = vmatmul.mubr.bf16.gmra.mrb[0].mxu0 %v1079
    %v1389 = vpop.f32.mrb[0].mxu0
    %v1390 = vadd.f32 0.0, %v1389
    %v1391 = vpop.f32.mrb[0].mxu0
    %v1392 = vadd.f32 0.0, %v1391
    %v1393 = vpop.f32.mrb[0].mxu0
    %v1394 = vadd.f32 0.0, %v1393
    %v1395 = vpop.f32.mrb[0].mxu0
    %v1396 = vadd.f32 0.0, %v1395
    %1397 = vmatprep.mubr.bf16.mxu0 %v1292
    %1398 = vmatmul.mubr.bf16.gmra.mrb[0].mxu0 %v1081
    %v1399 = vpop.f32.mrb[0].mxu0
    %v1400 = vadd.f32 0.0, %v1399
    %v1401 = vpop.f32.mrb[0].mxu0
    %v1402 = vadd.f32 0.0, %v1401
    %v1403 = vpop.f32.mrb[0].mxu0
    %v1404 = vadd.f32 0.0, %v1403
    %v1405 = vpop.f32.mrb[0].mxu0
    %v1406 = vadd.f32 0.0, %v1405
    %1407 = vmatprep.mubr.bf16.mxu0 %v1295
    %1408 = vmatmul.mubr.bf16.gmra.mrb[0].mxu0 %v1083
    %v1409 = vpop.f32.mrb[0].mxu0
    %v1410 = vadd.f32 0.0, %v1409
    %v1411 = vpop.f32.mrb[0].mxu0
    %v1412 = vadd.f32 0.0, %v1411
    %v1413 = vpop.f32.mrb[0].mxu0
    %v1414 = vadd.f32 0.0, %v1413
    %v1415 = vpop.f32.mrb[0].mxu0
    %v1416 = vadd.f32 0.0, %v1415
    %1417 = vmatprep.mubr.bf16.mxu0 %v1298
    %1418 = vmatmul.mubr.bf16.gmra.mrb[0].mxu0 %v1085
    %v1419 = vpop.f32.mrb[0].mxu0
    %v1420 = vadd.f32 0.0, %v1419
    %v1421 = vpop.f32.mrb[0].mxu0
    %v1422 = vadd.f32 0.0, %v1421
    %v1423 = vpop.f32.mrb[0].mxu0
    %v1424 = vadd.f32 0.0, %v1423
    %v1425 = vpop.f32.mrb[0].mxu0
    %v1426 = vadd.f32 0.0, %v1425
    %1427 = vmatprep.mubr.bf16.mxu0 %v1301
    %1428 = vmatmul.mubr.bf16.gmra.mrb[0].mxu0 %v1087
    %v1429 = vpop.f32.mrb[0].mxu0
    %v1430 = vadd.f32 0.0, %v1429
    %v1431 = vpop.f32.mrb[0].mxu0
    %v1432 = vadd.f32 0.0, %v1431
    %v1433 = vpop.f32.mrb[0].mxu0
    %v1434 = vadd.f32 0.0, %v1433
    %v1435 = vpop.f32.mrb[0].mxu0
    %v1436 = vadd.f32 0.0, %v1435
    %1437 = vmatprep.mubr.bf16.mxu0 %v1304
    %1438 = vmatmul.mubr.bf16.gmra.mrb[0].mxu0 %v1089
    %v1439 = vpop.f32.mrb[0].mxu0
    %v1440 = vadd.f32 0.0, %v1439
    %v1441 = vpop.f32.mrb[0].mxu0
    %v1442 = vadd.f32 0.0, %v1441
    %v1443 = vpop.f32.mrb[0].mxu0
    %v1444 = vadd.f32 0.0, %v1443
    %v1445 = vpop.f32.mrb[0].mxu0
    %v1446 = vadd.f32 0.0, %v1445
    %1447 = vmatprep.mubr.bf16.mxu0 %v1307
    %1448 = vmatmul.mubr.bf16.gmra.mrb[0].mxu0 %v1091
    %v1449 = vpop.f32.mrb[0].mxu0
    %v1450 = vadd.f32 0.0, %v1449
    %v1451 = vpop.f32.mrb[0].mxu0
    %v1452 = vadd.f32 0.0, %v1451
    %v1453 = vpop.f32.mrb[0].mxu0
    %v1454 = vadd.f32 0.0, %v1453
    %v1455 = vpop.f32.mrb[0].mxu0
    %v1456 = vadd.f32 0.0, %v1455
    %1457 = vmatprep.mubr.bf16.mxu0 %v1310
    %1458 = vmatmul.mubr.bf16.gmra.mrb[0].mxu0 %v1093
    %v1459 = vpop.f32.mrb[0].mxu0
    %v1460 = vadd.f32 0.0, %v1459
    %v1461 = vpop.f32.mrb[0].mxu0
    %v1462 = vadd.f32 0.0, %v1461
    %v1463 = vpop.f32.mrb[0].mxu0
    %v1464 = vadd.f32 0.0, %v1463
    %v1465 = vpop.f32.mrb[0].mxu0
    %v1466 = vadd.f32 0.0, %v1465
    %1467 = vmatprep.mubr.bf16.mxu0 %v1313
    %1468 = vmatmul.mubr.bf16.gmra.mrb[0].mxu0 %v1095
    %v1469 = vpop.f32.mrb[0].mxu0
    %v1470 = vadd.f32 0.0, %v1469
    %v1471 = vpop.f32.mrb[0].mxu0
    %v1472 = vadd.f32 0.0, %v1471
    %v1473 = vpop.f32.mrb[0].mxu0
    %v1474 = vadd.f32 0.0, %v1473
    %v1475 = vpop.f32.mrb[0].mxu0
    %v1476 = vadd.f32 0.0, %v1475
    %1477 = vmatprep.mubr.bf16.mxu0 %v1316
    %1478 = vmatmul.mubr.bf16.gmra.mrb[0].mxu0 %v1097
    %v1479 = vpop.f32.mrb[0].mxu0
    %v1480 = vadd.f32 0.0, %v1479
    %v1481 = vpop.f32.mrb[0].mxu0
    %v1482 = vadd.f32 0.0, %v1481
    %v1483 = vpop.f32.mrb[0].mxu0
    %v1484 = vadd.f32 0.0, %v1483
    %v1485 = vpop.f32.mrb[0].mxu0
    %v1486 = vadd.f32 0.0, %v1485
    %1487 = vmatprep.mubr.bf16.mxu0 %v1319
    %1488 = vmatmul.mubr.bf16.gmra.mrb[0].mxu0 %v1099
    %v1489 = vpop.f32.mrb[0].mxu0
    %v1490 = vadd.f32 0.0, %v1489
    %v1491 = vpop.f32.mrb[0].mxu0
    %v1492 = vadd.f32 0.0, %v1491
    %v1493 = vpop.f32.mrb[0].mxu0
    %v1494 = vadd.f32 0.0, %v1493
    %v1495 = vpop.f32.mrb[0].mxu0
    %v1496 = vadd.f32 0.0, %v1495
    %1497 = vmatprep.mubr.bf16.mxu0 %v1322
    %1498 = vmatmul.mubr.bf16.gmra.mrb[0].mxu0 %v1101
    %v1499 = vpop.f32.mrb[0].mxu0
    %v1500 = vadd.f32 0.0, %v1499
    %v1501 = vpop.f32.mrb[0].mxu0
    %v1502 = vadd.f32 0.0, %v1501
    %v1503 = vpop.f32.mrb[0].mxu0
    %v1504 = vadd.f32 0.0, %v1503
    %v1505 = vpop.f32.mrb[0].mxu0
    %v1506 = vadd.f32 0.0, %v1505
    %1507 = vmatprep.mubr.bf16.mxu0 %v1325
    %1508 = vmatmul.mubr.bf16.gmra.mrb[0].mxu0 %v1103
    %v1509 = vpop.f32.mrb[0].mxu0
    %v1510 = vadd.f32 0.0, %v1509
    %v1511 = vpop.f32.mrb[0].mxu0
    %v1512 = vadd.f32 0.0, %v1511
    %v1513 = vpop.f32.mrb[0].mxu0
    %v1514 = vadd.f32 0.0, %v1513
    %v1515 = vpop.f32.mrb[0].mxu0
    %v1516 = vadd.f32 0.0, %v1515
    %1517 = vmatprep.mubr.bf16.mxu0 %v1328
    %1518 = vmatmul.mubr.bf16.gmra.mrb[0].mxu0 %v1105
    %v1519 = vpop.f32.mrb[0].mxu0
    %v1520 = vadd.f32 0.0, %v1519
    %v1521 = vpop.f32.mrb[0].mxu0
    %v1522 = vadd.f32 0.0, %v1521
    %v1523 = vpop.f32.mrb[0].mxu0
    %v1524 = vadd.f32 0.0, %v1523
    %v1525 = vpop.f32.mrb[0].mxu0
    %v1526 = vadd.f32 0.0, %v1525
    %1527 = vmatprep.mubr.bf16.mxu0 %v1331
    %1528 = vmatmul.mubr.bf16.gmra.mrb[0].mxu0 %v1107
    %v1529 = vpop.f32.mrb[0].mxu0
    %v1530 = vadd.f32 0.0, %v1529
    %v1531 = vpop.f32.mrb[0].mxu0
    %v1532 = vadd.f32 0.0, %v1531
    %v1533 = vpop.f32.mrb[0].mxu0
    %v1534 = vadd.f32 0.0, %v1533
    %v1535 = vpop.f32.mrb[0].mxu0
    %v1536 = vadd.f32 0.0, %v1535
    %1537 = vmatprep.mubr.bf16.mxu0 %v1334
    %1538 = vmatmul.mubr.bf16.gmra.mrb[0].mxu0 %v1109
    %v1539 = vpop.f32.mrb[0].mxu0
    %v1540 = vadd.f32 0.0, %v1539
    %v1541 = vpop.f32.mrb[0].mxu0
    %v1542 = vadd.f32 0.0, %v1541
    %v1543 = vpop.f32.mrb[0].mxu0
    %v1544 = vadd.f32 0.0, %v1543
    %v1545 = vpop.f32.mrb[0].mxu0
    %v1546 = vadd.f32 0.0, %v1545
    %1547 = vmatprep.mubr.bf16.mxu0 %v1337
    %1548 = vmatmul.mubr.bf16.gmra.mrb[0].mxu0 %v1111
    %v1549 = vpop.f32.mrb[0].mxu0
    %v1550 = vadd.f32 0.0, %v1549
    %v1551 = vpop.f32.mrb[0].mxu0
    %v1552 = vadd.f32 0.0, %v1551
    %v1553 = vpop.f32.mrb[0].mxu0
    %v1554 = vadd.f32 0.0, %v1553
    %v1555 = vpop.f32.mrb[0].mxu0
    %v1556 = vadd.f32 0.0, %v1555
    %1557 = vmatprep.mubr.bf16.mxu0 %v1340
    %1558 = vmatmul.mubr.bf16.gmra.mrb[0].mxu0 %v1113
    %v1559 = vpop.f32.mrb[0].mxu0
    %v1560 = vadd.f32 0.0, %v1559
    %v1561 = vpop.f32.mrb[0].mxu0
    %v1562 = vadd.f32 0.0, %v1561
    %v1563 = vpop.f32.mrb[0].mxu0
    %v1564 = vadd.f32 0.0, %v1563
    %v1565 = vpop.f32.mrb[0].mxu0
    %v1566 = vadd.f32 0.0, %v1565
    %1567 = vmatprep.mubr.bf16.mxu0 %v1343
    %1568 = vmatmul.mubr.bf16.gmra.mrb[0].mxu0 %v1139
    %v1569 = vpop.f32.mrb[0].mxu0
    %v1570 = vadd.f32 0.0, %v1569
    %v1571 = vpop.f32.mrb[0].mxu0
    %v1572 = vadd.f32 0.0, %v1571
    %v1573 = vpop.f32.mrb[0].mxu0
    %v1574 = vadd.f32 0.0, %v1573
    %v1575 = vpop.f32.mrb[0].mxu0
    %v1576 = vadd.f32 0.0, %v1575
    %1577 = vdwg.mxu0
    %v1602 = vunpack.c.l.b16 %v1115
    %v1603 = vunpack.c.h.b16 %v1115
    %v1604 = vunpack.c.l.b16 %v1116
    %v1605 = vunpack.c.h.b16 %v1116
    %v1606 = vunpack.c.l.b16 %v1117
    %v1607 = vunpack.c.h.b16 %v1117
    %v1608 = vunpack.c.l.b16 %v1118
    %v1609 = vunpack.c.h.b16 %v1118
    %v1610 = vunpack.c.l.b16 %v1119
    %v1611 = vunpack.c.h.b16 %v1119
    %v1612 = vunpack.c.l.b16 %v1120
    %v1613 = vunpack.c.h.b16 %v1120
    %v1614 = vunpack.c.l.b16 %v1121
    %v1615 = vunpack.c.h.b16 %v1121
    %v1616 = vunpack.c.l.b16 %v1122
    %v1617 = vunpack.c.h.b16 %v1122
    %v1618 = vunpack.c.l.b16 %v1123
    %v1619 = vunpack.c.h.b16 %v1123
    %v1620 = vunpack.c.l.b16 %v1124
    %v1621 = vunpack.c.h.b16 %v1124
    %v1622 = vunpack.c.l.b16 %v1125
    %v1623 = vunpack.c.h.b16 %v1125
    %v1624 = vunpack.c.l.b16 %v1126
    %v1625 = vunpack.c.h.b16 %v1126
    %v1626 = vunpack.c.l.b16 %v1127
    %v1627 = vunpack.c.h.b16 %v1127
    %v1628 = vunpack.c.l.b16 %v1128
    %v1629 = vunpack.c.h.b16 %v1128
    %v1630 = vunpack.c.l.b16 %v1129
    %v1631 = vunpack.c.h.b16 %v1129
    %v1632 = vunpack.c.l.b16 %v1130
    %v1633 = vunpack.c.h.b16 %v1130
    %v1634 = vunpack.c.l.b16 %v1131
    %v1635 = vunpack.c.h.b16 %v1131
    %v1636 = vunpack.c.l.b16 %v1132
    %v1637 = vunpack.c.h.b16 %v1132
    %v1638 = vunpack.c.l.b16 %v1133
    %v1639 = vunpack.c.h.b16 %v1133
    %v1640 = vunpack.c.l.b16 %v1134
    %v1641 = vunpack.c.h.b16 %v1134
    %v1642 = vunpack.c.l.b16 %v1135
    %v1643 = vunpack.c.h.b16 %v1135
    %v1644 = vunpack.c.l.b16 %v1136
    %v1645 = vunpack.c.h.b16 %v1136
    %v1646 = vunpack.c.l.b16 %v1137
    %v1647 = vunpack.c.h.b16 %v1137
    %v1648 = vunpack.c.l.b16 %v1138
    %v1649 = vunpack.c.h.b16 %v1138
    %v1650 = vpack.c.b16 %v1604, %v1602
    %v1651 = vpack.c.b16 %v1605, %v1603
    %v1652 = vpack.c.b16 %v1608, %v1606
    %v1653 = vpack.c.b16 %v1609, %v1607
    %v1654 = vpack.c.b16 %v1612, %v1610
    %v1655 = vpack.c.b16 %v1613, %v1611
    %v1656 = vpack.c.b16 %v1616, %v1614
    %v1657 = vpack.c.b16 %v1617, %v1615
    %v1658 = vpack.c.b16 %v1620, %v1618
    %v1659 = vpack.c.b16 %v1621, %v1619
    %v1660 = vpack.c.b16 %v1624, %v1622
    %v1661 = vpack.c.b16 %v1625, %v1623
    %v1662 = vpack.c.b16 %v1628, %v1626
    %v1663 = vpack.c.b16 %v1629, %v1627
    %v1664 = vpack.c.b16 %v1632, %v1630
    %v1665 = vpack.c.b16 %v1633, %v1631
    %v1666 = vpack.c.b16 %v1636, %v1634
    %v1667 = vpack.c.b16 %v1637, %v1635
    %v1668 = vpack.c.b16 %v1640, %v1638
    %v1669 = vpack.c.b16 %v1641, %v1639
    %v1670 = vpack.c.b16 %v1644, %v1642
    %v1671 = vpack.c.b16 %v1645, %v1643
    %v1672 = vpack.c.b16 %v1648, %v1646
    %v1673 = vpack.c.b16 %v1649, %v1647
    %v1699 = vsel %vm964, %v1076, 0
    %1701 = vmatprep.subr.bf16.mxu0 %v1651
    %1702 = vmatpush1.bf16.msra.mxu0 %v1650
    %1703 = vmatprep.subr.bf16.mxu0 %v1653
    %1704 = vmatpush1.bf16.msra.mxu0 %v1652
    %1705 = vmatprep.subr.bf16.mxu0 %v1655
    %1706 = vmatpush1.bf16.msra.mxu0 %v1654
    %1707 = vmatprep.subr.bf16.mxu0 %v1657
    %1708 = vmatpush1.bf16.msra.mxu0 %v1656
    %1709 = vmatprep.subr.bf16.mxu0 %v1659
    %1710 = vmatpush1.bf16.msra.mxu0 %v1658
    %1711 = vmatprep.subr.bf16.mxu0 %v1661
    %1712 = vmatpush1.bf16.msra.mxu0 %v1660
    %1713 = vmatprep.subr.bf16.mxu0 %v1663
    %1714 = vmatpush1.bf16.msra.mxu0 %v1662
    %1715 = vmatprep.subr.bf16.mxu0 %v1665
    %1716 = vmatpush1.bf16.msra.mxu0 %v1664
    %1717 = vmatprep.subr.bf16.mxu0 %v1667
    %1718 = vmatpush1.bf16.msra.mxu0 %v1666
    %1719 = vmatprep.subr.bf16.mxu0 %v1669
    %1720 = vmatpush1.bf16.msra.mxu0 %v1668
    %1721 = vmatprep.subr.bf16.mxu0 %v1671
    %1722 = vmatpush1.bf16.msra.mxu0 %v1670
    %1723 = vmatprep.subr.bf16.mxu0 %v1673
    %1724 = vmatpush1.bf16.msra.mxu0 %v1672
    %1725 = vmatprep.subr.bf16.mxu0 0
    %1726 = vmatpush1.bf16.msra.mxu0 0
    %1727 = vmatprep.subr.bf16.mxu0 0
    %1728 = vmatpush1.bf16.msra.mxu0 0
    %1729 = vmatprep.subr.bf16.mxu0 0
    %1730 = vmatpush1.bf16.msra.mxu0 0
    %1731 = vmatprep.subr.bf16.mxu0 0
    %1732 = vmatpush1.bf16.msra.mxu0 0
    %1733 = vmatprep.mubr.bf16.mxu0 %v1699
    %1734 = vmatmul.mubr.bf16.gmra.mrb[0].mxu0 %v1075
    %v1735 = vpop.f32.mrb[0].mxu0
    %v1736 = vadd.f32 %v1380, %v1735
    %v1737 = vpop.f32.mrb[0].mxu0
    %v1738 = vadd.f32 %v1382, %v1737
    %v1739 = vpop.f32.mrb[0].mxu0
    %v1740 = vadd.f32 %v1384, %v1739
    %v1741 = vpop.f32.mrb[0].mxu0
    %v1742 = vadd.f32 %v1386, %v1741
    %1743 = vmatprep.mubr.bf16.mxu0 %v1286
    %1744 = vmatmul.mubr.bf16.gmra.mrb[0].mxu0 %v1077
    %v1745 = vpop.f32.mrb[0].mxu0
    %v1746 = vadd.f32 %v1390, %v1745
    %v1747 = vpop.f32.mrb[0].mxu0
    %v1748 = vadd.f32 %v1392, %v1747
    %v1749 = vpop.f32.mrb[0].mxu0
    %v1750 = vadd.f32 %v1394, %v1749
    %v1751 = vpop.f32.mrb[0].mxu0
    %v1752 = vadd.f32 %v1396, %v1751
    %1753 = vmatprep.mubr.bf16.mxu0 %v1289
    %1754 = vmatmul.mubr.bf16.gmra.mrb[0].mxu0 %v1079
    %v1755 = vpop.f32.mrb[0].mxu0
    %v1756 = vadd.f32 %v1400, %v1755
    %v1757 = vpop.f32.mrb[0].mxu0
    %v1758 = vadd.f32 %v1402, %v1757
    %v1759 = vpop.f32.mrb[0].mxu0
    %v1760 = vadd.f32 %v1404, %v1759
    %v1761 = vpop.f32.mrb[0].mxu0
    %v1762 = vadd.f32 %v1406, %v1761
    %1763 = vmatprep.mubr.bf16.mxu0 %v1292
    %1764 = vmatmul.mubr.bf16.gmra.mrb[0].mxu0 %v1081
    %v1765 = vpop.f32.mrb[0].mxu0
    %v1766 = vadd.f32 %v1410, %v1765
    %v1767 = vpop.f32.mrb[0].mxu0
    %v1768 = vadd.f32 %v1412, %v1767
    %v1769 = vpop.f32.mrb[0].mxu0
    %v1770 = vadd.f32 %v1414, %v1769
    %v1771 = vpop.f32.mrb[0].mxu0
    %v1772 = vadd.f32 %v1416, %v1771
    %1773 = vmatprep.mubr.bf16.mxu0 %v1295
    %1774 = vmatmul.mubr.bf16.gmra.mrb[0].mxu0 %v1083
    %v1775 = vpop.f32.mrb[0].mxu0
    %v1776 = vadd.f32 %v1420, %v1775
    %v1777 = vpop.f32.mrb[0].mxu0
    %v1778 = vadd.f32 %v1422, %v1777
    %v1779 = vpop.f32.mrb[0].mxu0
    %v1780 = vadd.f32 %v1424, %v1779
    %v1781 = vpop.f32.mrb[0].mxu0
    %v1782 = vadd.f32 %v1426, %v1781
    %1783 = vmatprep.mubr.bf16.mxu0 %v1298
    %1784 = vmatmul.mubr.bf16.gmra.mrb[0].mxu0 %v1085
    %v1785 = vpop.f32.mrb[0].mxu0
    %v1786 = vadd.f32 %v1430, %v1785
    %v1787 = vpop.f32.mrb[0].mxu0
    %v1788 = vadd.f32 %v1432, %v1787
    %v1789 = vpop.f32.mrb[0].mxu0
    %v1790 = vadd.f32 %v1434, %v1789
    %v1791 = vpop.f32.mrb[0].mxu0
    %v1792 = vadd.f32 %v1436, %v1791
    %1793 = vmatprep.mubr.bf16.mxu0 %v1301
    %1794 = vmatmul.mubr.bf16.gmra.mrb[0].mxu0 %v1087
    %v1795 = vpop.f32.mrb[0].mxu0
    %v1796 = vadd.f32 %v1440, %v1795
    %v1797 = vpop.f32.mrb[0].mxu0
    %v1798 = vadd.f32 %v1442, %v1797
    %v1799 = vpop.f32.mrb[0].mxu0
    %v1800 = vadd.f32 %v1444, %v1799
    %v1801 = vpop.f32.mrb[0].mxu0
    %v1802 = vadd.f32 %v1446, %v1801
    %1803 = vmatprep.mubr.bf16.mxu0 %v1304
    %1804 = vmatmul.mubr.bf16.gmra.mrb[0].mxu0 %v1089
    %v1805 = vpop.f32.mrb[0].mxu0
    %v1806 = vadd.f32 %v1450, %v1805
    %v1807 = vpop.f32.mrb[0].mxu0
    %v1808 = vadd.f32 %v1452, %v1807
    %v1809 = vpop.f32.mrb[0].mxu0
    %v1810 = vadd.f32 %v1454, %v1809
    %v1811 = vpop.f32.mrb[0].mxu0
    %v1812 = vadd.f32 %v1456, %v1811
    %1813 = vmatprep.mubr.bf16.mxu0 %v1307
    %1814 = vmatmul.mubr.bf16.gmra.mrb[0].mxu0 %v1091
    %v1815 = vpop.f32.mrb[0].mxu0
    %v1816 = vadd.f32 %v1460, %v1815
    %v1817 = vpop.f32.mrb[0].mxu0
    %v1818 = vadd.f32 %v1462, %v1817
    %v1819 = vpop.f32.mrb[0].mxu0
    %v1820 = vadd.f32 %v1464, %v1819
    %v1821 = vpop.f32.mrb[0].mxu0
    %v1822 = vadd.f32 %v1466, %v1821
    %1823 = vmatprep.mubr.bf16.mxu0 %v1310
    %1824 = vmatmul.mubr.bf16.gmra.mrb[0].mxu0 %v1093
    %v1825 = vpop.f32.mrb[0].mxu0
    %v1826 = vadd.f32 %v1470, %v1825
    %v1827 = vpop.f32.mrb[0].mxu0
    %v1828 = vadd.f32 %v1472, %v1827
    %v1829 = vpop.f32.mrb[0].mxu0
    %v1830 = vadd.f32 %v1474, %v1829
    %v1831 = vpop.f32.mrb[0].mxu0
    %v1832 = vadd.f32 %v1476, %v1831
    %1833 = vmatprep.mubr.bf16.mxu0 %v1313
    %1834 = vmatmul.mubr.bf16.gmra.mrb[0].mxu0 %v1095
    %v1835 = vpop.f32.mrb[0].mxu0
    %v1836 = vadd.f32 %v1480, %v1835
    %v1837 = vpop.f32.mrb[0].mxu0
    %v1838 = vadd.f32 %v1482, %v1837
    %v1839 = vpop.f32.mrb[0].mxu0
    %v1840 = vadd.f32 %v1484, %v1839
    %v1841 = vpop.f32.mrb[0].mxu0
    %v1842 = vadd.f32 %v1486, %v1841
    %1843 = vmatprep.mubr.bf16.mxu0 %v1316
    %1844 = vmatmul.mubr.bf16.gmra.mrb[0].mxu0 %v1097
    %v1845 = vpop.f32.mrb[0].mxu0
    %v1846 = vadd.f32 %v1490, %v1845
    %v1847 = vpop.f32.mrb[0].mxu0
    %v1848 = vadd.f32 %v1492, %v1847
    %v1849 = vpop.f32.mrb[0].mxu0
    %v1850 = vadd.f32 %v1494, %v1849
    %v1851 = vpop.f32.mrb[0].mxu0
    %v1852 = vadd.f32 %v1496, %v1851
    %1853 = vmatprep.mubr.bf16.mxu0 %v1319
    %1854 = vmatmul.mubr.bf16.gmra.mrb[0].mxu0 %v1099
    %v1855 = vpop.f32.mrb[0].mxu0
    %v1856 = vadd.f32 %v1500, %v1855
    %v1857 = vpop.f32.mrb[0].mxu0
    %v1858 = vadd.f32 %v1502, %v1857
    %v1859 = vpop.f32.mrb[0].mxu0
    %v1860 = vadd.f32 %v1504, %v1859
    %v1861 = vpop.f32.mrb[0].mxu0
    %v1862 = vadd.f32 %v1506, %v1861
    %1863 = vmatprep.mubr.bf16.mxu0 %v1322
    %1864 = vmatmul.mubr.bf16.gmra.mrb[0].mxu0 %v1101
    %v1865 = vpop.f32.mrb[0].mxu0
    %v1866 = vadd.f32 %v1510, %v1865
    %v1867 = vpop.f32.mrb[0].mxu0
    %v1868 = vadd.f32 %v1512, %v1867
    %v1869 = vpop.f32.mrb[0].mxu0
    %v1870 = vadd.f32 %v1514, %v1869
    %v1871 = vpop.f32.mrb[0].mxu0
    %v1872 = vadd.f32 %v1516, %v1871
    %1873 = vmatprep.mubr.bf16.mxu0 %v1325
    %1874 = vmatmul.mubr.bf16.gmra.mrb[0].mxu0 %v1103
    %v1875 = vpop.f32.mrb[0].mxu0
    %v1876 = vadd.f32 %v1520, %v1875
    %v1877 = vpop.f32.mrb[0].mxu0
    %v1878 = vadd.f32 %v1522, %v1877
    %v1879 = vpop.f32.mrb[0].mxu0
    %v1880 = vadd.f32 %v1524, %v1879
    %v1881 = vpop.f32.mrb[0].mxu0
    %v1882 = vadd.f32 %v1526, %v1881
    %1883 = vmatprep.mubr.bf16.mxu0 %v1328
    %1884 = vmatmul.mubr.bf16.gmra.mrb[0].mxu0 %v1105
    %v1885 = vpop.f32.mrb[0].mxu0
    %v1886 = vadd.f32 %v1530, %v1885
    %v1887 = vpop.f32.mrb[0].mxu0
    %v1888 = vadd.f32 %v1532, %v1887
    %v1889 = vpop.f32.mrb[0].mxu0
    %v1890 = vadd.f32 %v1534, %v1889
    %v1891 = vpop.f32.mrb[0].mxu0
    %v1892 = vadd.f32 %v1536, %v1891
    %1893 = vmatprep.mubr.bf16.mxu0 %v1331
    %1894 = vmatmul.mubr.bf16.gmra.mrb[0].mxu0 %v1107
    %v1895 = vpop.f32.mrb[0].mxu0
    %v1896 = vadd.f32 %v1540, %v1895
    %v1897 = vpop.f32.mrb[0].mxu0
    %v1898 = vadd.f32 %v1542, %v1897
    %v1899 = vpop.f32.mrb[0].mxu0
    %v1900 = vadd.f32 %v1544, %v1899
    %v1901 = vpop.f32.mrb[0].mxu0
    %v1902 = vadd.f32 %v1546, %v1901
    %1903 = vmatprep.mubr.bf16.mxu0 %v1334
    %1904 = vmatmul.mubr.bf16.gmra.mrb[0].mxu0 %v1109
    %v1905 = vpop.f32.mrb[0].mxu0
    %v1906 = vadd.f32 %v1550, %v1905
    %v1907 = vpop.f32.mrb[0].mxu0
    %v1908 = vadd.f32 %v1552, %v1907
    %v1909 = vpop.f32.mrb[0].mxu0
    %v1910 = vadd.f32 %v1554, %v1909
    %v1911 = vpop.f32.mrb[0].mxu0
    %v1912 = vadd.f32 %v1556, %v1911
    %1913 = vmatprep.mubr.bf16.mxu0 %v1337
    %1914 = vmatmul.mubr.bf16.gmra.mrb[0].mxu0 %v1111
    %v1915 = vpop.f32.mrb[0].mxu0
    %v1916 = vadd.f32 %v1560, %v1915
    %v1917 = vpop.f32.mrb[0].mxu0
    %v1918 = vadd.f32 %v1562, %v1917
    %v1919 = vpop.f32.mrb[0].mxu0
    %v1920 = vadd.f32 %v1564, %v1919
    %v1921 = vpop.f32.mrb[0].mxu0
    %v1922 = vadd.f32 %v1566, %v1921
    %1923 = vmatprep.mubr.bf16.mxu0 %v1340
    %1924 = vmatmul.mubr.bf16.gmra.mrb[0].mxu0 %v1113
    %v1925 = vpop.f32.mrb[0].mxu0
    %v1926 = vadd.f32 %v1570, %v1925
    %v1927 = vpop.f32.mrb[0].mxu0
    %v1928 = vadd.f32 %v1572, %v1927
    %v1929 = vpop.f32.mrb[0].mxu0
    %v1930 = vadd.f32 %v1574, %v1929
    %v1931 = vpop.f32.mrb[0].mxu0
    %v1932 = vadd.f32 %v1576, %v1931
    %1933 = vdwg.mxu0
    %v1934 = vld [vmem:[#allocation2 + $0x20] sm:$0xff]
    %v1935 = vld [vmem:[#allocation2 + $0x28] sm:$0xff]
    %v1936 = vld [vmem:[#allocation2 + $0x30] sm:$0xff]
    %v1937 = vld [vmem:[#allocation2 + $0x38] sm:$0xff]
    %v1938 = vld [vmem:[#allocation2 + $0x40] sm:$0xff]
    %v1939 = vld [vmem:[#allocation2 + $0x48] sm:$0xff]
    %v1940 = vld [vmem:[#allocation2 + $0x50] sm:$0xff]
    %v1941 = vld [vmem:[#allocation2 + $0x58] sm:$0xff]
    %v1942 = vld [vmem:[#allocation2 + $0x60] sm:$0xff]
    %v1943 = vld [vmem:[#allocation2 + $0x68] sm:$0xff]
    %v1944 = vld [vmem:[#allocation2 + $0x70] sm:$0xff]
    %v1945 = vld [vmem:[#allocation2 + $0x78] sm:$0xff]
    %v1946 = vld [vmem:[#allocation2 + $0x80] sm:$0xff]
    %v1947 = vld [vmem:[#allocation2 + $0x88] sm:$0xff]
    %v1948 = vld [vmem:[#allocation2 + $0x90] sm:$0xff]
    %v1949 = vld [vmem:[#allocation2 + $0x98] sm:$0xff]
    %v1950 = vld [vmem:[#allocation2 + $0xa0] sm:$0xff]
    %v1951 = vld [vmem:[#allocation2 + $0xa8] sm:$0xff]
    %v1952 = vld [vmem:[#allocation2 + $0xb0] sm:$0xff]
    %v1953 = vld [vmem:[#allocation2 + $0xb8] sm:$0xff]
    %v1954 = vld [vmem:[#allocation2 + $0xc0] sm:$0xff]
    %v1955 = vld [vmem:[#allocation2 + $0xc8] sm:$0xff]
    %v1956 = vld [vmem:[#allocation2 + $0xd0] sm:$0xff]
    %v1957 = vld [vmem:[#allocation2 + $0xd8] sm:$0xff]
    %v1958 = vld [vmem:[#allocation2 + $0xe0] sm:$0xff]
    %v1959 = vld [vmem:[#allocation2 + $0xe8] sm:$0xff]
    %v1960 = vld [vmem:[#allocation2 + $0xf0] sm:$0xff]
    %v1961 = vld [vmem:[#allocation2 + $0xf8] sm:$0xff]
    %v1962 = vld [vmem:[#allocation2 + $0x100] sm:$0xff]
    %v1963 = vld [vmem:[#allocation2 + $0x108] sm:$0xff]
    %v1964 = vld [vmem:[#allocation2 + $0x110] sm:$0xff]
    %v1965 = vld [vmem:[#allocation2 + $0x118] sm:$0xff]
    %v1966 = vld [vmem:[#allocation2 + $0x120] sm:$0xff]
    %v1967 = vld [vmem:[#allocation2 + $0x128] sm:$0xff]
    %v1968 = vld [vmem:[#allocation2 + $0x130] sm:$0xff]
    %v1969 = vld [vmem:[#allocation2 + $0x138] sm:$0xff]
    %v1970 = vld [vmem:[#allocation2 + $0x140] sm:$0xff]
    %v1971 = vld [vmem:[#allocation2 + $0x148] sm:$0xff]
    %v1972 = vld [vmem:[#allocation2 + $0x150] sm:$0xff]
    %v1973 = vld [vmem:[#allocation2 + $0x158] sm:$0xff]
    %v1974 = vld [vmem:[#allocation8 + $0x180] sm:$0xff]
    %v1975 = vld [vmem:[#allocation8 + $0x188] sm:$0xff]
    %v1976 = vld [vmem:[#allocation8 + $0x190] sm:$0xff]
    %v1977 = vld [vmem:[#allocation8 + $0x198] sm:$0xff]
    %v1978 = vld [vmem:[#allocation8 + $0x1a0] sm:$0xff]
    %v1979 = vld [vmem:[#allocation8 + $0x1a8] sm:$0xff]
    %v1980 = vld [vmem:[#allocation8 + $0x1b0] sm:$0xff]
    %v1981 = vld [vmem:[#allocation8 + $0x1b8] sm:$0xff]
    %v1982 = vld [vmem:[#allocation8 + $0x1c0] sm:$0xff]
    %v1983 = vld [vmem:[#allocation8 + $0x1c8] sm:$0xff]
    %v1984 = vld [vmem:[#allocation8 + $0x1d0] sm:$0xff]
    %v1985 = vld [vmem:[#allocation8 + $0x1d8] sm:$0xff]
    %v1986 = vld [vmem:[#allocation8 + $0x1e0] sm:$0xff]
    %v1987 = vld [vmem:[#allocation8 + $0x1e8] sm:$0xff]
    %v1988 = vld [vmem:[#allocation8 + $0x1f0] sm:$0xff]
    %v1989 = vld [vmem:[#allocation8 + $0x1f8] sm:$0xff]
    %v1990 = vld [vmem:[#allocation8 + $0x200] sm:$0xff]
    %v1991 = vld [vmem:[#allocation8 + $0x208] sm:$0xff]
    %v1992 = vld [vmem:[#allocation8 + $0x210] sm:$0xff]
    %v1993 = vld [vmem:[#allocation8 + $0x218] sm:$0xff]
    %v1994 = vld [vmem:[#allocation8 + $0x220] sm:$0xff]
    %v1995 = vld [vmem:[#allocation8 + $0x228] sm:$0xff]
    %v1996 = vld [vmem:[#allocation8 + $0x230] sm:$0xff]
    %v1997 = vld [vmem:[#allocation8 + $0x238] sm:$0xff]
    %v2022 = vunpack.c.l.b16 %v1974
    %v2023 = vunpack.c.h.b16 %v1974
    %v2024 = vunpack.c.l.b16 %v1975
    %v2025 = vunpack.c.h.b16 %v1975
    %v2026 = vunpack.c.l.b16 %v1976
    %v2027 = vunpack.c.h.b16 %v1976
    %v2028 = vunpack.c.l.b16 %v1977
    %v2029 = vunpack.c.h.b16 %v1977
    %v2030 = vunpack.c.l.b16 %v1978
    %v2031 = vunpack.c.h.b16 %v1978
    %v2032 = vunpack.c.l.b16 %v1979
    %v2033 = vunpack.c.h.b16 %v1979
    %v2034 = vunpack.c.l.b16 %v1980
    %v2035 = vunpack.c.h.b16 %v1980
    %v2036 = vunpack.c.l.b16 %v1981
    %v2037 = vunpack.c.h.b16 %v1981
    %v2038 = vunpack.c.l.b16 %v1982
    %v2039 = vunpack.c.h.b16 %v1982
    %v2040 = vunpack.c.l.b16 %v1983
    %v2041 = vunpack.c.h.b16 %v1983
    %v2042 = vunpack.c.l.b16 %v1984
    %v2043 = vunpack.c.h.b16 %v1984
    %v2044 = vunpack.c.l.b16 %v1985
    %v2045 = vunpack.c.h.b16 %v1985
    %v2046 = vunpack.c.l.b16 %v1986
    %v2047 = vunpack.c.h.b16 %v1986
    %v2048 = vunpack.c.l.b16 %v1987
    %v2049 = vunpack.c.h.b16 %v1987
    %v2050 = vunpack.c.l.b16 %v1988
    %v2051 = vunpack.c.h.b16 %v1988
    %v2052 = vunpack.c.l.b16 %v1989
    %v2053 = vunpack.c.h.b16 %v1989
    %v2054 = vunpack.c.l.b16 %v1990
    %v2055 = vunpack.c.h.b16 %v1990
    %v2056 = vunpack.c.l.b16 %v1991
    %v2057 = vunpack.c.h.b16 %v1991
    %v2058 = vunpack.c.l.b16 %v1992
    %v2059 = vunpack.c.h.b16 %v1992
    %v2060 = vunpack.c.l.b16 %v1993
    %v2061 = vunpack.c.h.b16 %v1993
    %v2062 = vunpack.c.l.b16 %v1994
    %v2063 = vunpack.c.h.b16 %v1994
    %v2064 = vunpack.c.l.b16 %v1995
    %v2065 = vunpack.c.h.b16 %v1995
    %v2066 = vunpack.c.l.b16 %v1996
    %v2067 = vunpack.c.h.b16 %v1996
    %v2068 = vunpack.c.l.b16 %v1997
    %v2069 = vunpack.c.h.b16 %v1997
    %v2070 = vpack.c.b16 %v2024, %v2022
    %v2071 = vpack.c.b16 %v2025, %v2023
    %v2072 = vpack.c.b16 %v2028, %v2026
    %v2073 = vpack.c.b16 %v2029, %v2027
    %v2074 = vpack.c.b16 %v2032, %v2030
    %v2075 = vpack.c.b16 %v2033, %v2031
    %v2076 = vpack.c.b16 %v2036, %v2034
    %v2077 = vpack.c.b16 %v2037, %v2035
    %v2078 = vpack.c.b16 %v2040, %v2038
    %v2079 = vpack.c.b16 %v2041, %v2039
    %v2080 = vpack.c.b16 %v2044, %v2042
    %v2081 = vpack.c.b16 %v2045, %v2043
    %v2082 = vpack.c.b16 %v2048, %v2046
    %v2083 = vpack.c.b16 %v2049, %v2047
    %v2084 = vpack.c.b16 %v2052, %v2050
    %v2085 = vpack.c.b16 %v2053, %v2051
    %v2086 = vpack.c.b16 %v2056, %v2054
    %v2087 = vpack.c.b16 %v2057, %v2055
    %v2088 = vpack.c.b16 %v2060, %v2058
    %v2089 = vpack.c.b16 %v2061, %v2059
    %v2090 = vpack.c.b16 %v2064, %v2062
    %v2091 = vpack.c.b16 %v2065, %v2063
    %v2092 = vpack.c.b16 %v2068, %v2066
    %v2093 = vpack.c.b16 %v2069, %v2067
    %v2119 = vsel %vm964, %v1935, 0
    %v2122 = vsel %vm964, %v1937, 0
    %v2125 = vsel %vm964, %v1939, 0
    %v2128 = vsel %vm964, %v1941, 0
    %v2131 = vsel %vm964, %v1943, 0
    %v2134 = vsel %vm964, %v1945, 0
    %v2137 = vsel %vm964, %v1947, 0
    %v2140 = vsel %vm964, %v1949, 0
    %v2143 = vsel %vm964, %v1951, 0
    %v2146 = vsel %vm964, %v1953, 0
    %v2149 = vsel %vm964, %v1955, 0
    %v2152 = vsel %vm964, %v1957, 0
    %v2155 = vsel %vm964, %v1959, 0
    %v2158 = vsel %vm964, %v1961, 0
    %v2161 = vsel %vm964, %v1963, 0
    %v2164 = vsel %vm964, %v1965, 0
    %v2167 = vsel %vm964, %v1967, 0
    %v2170 = vsel %vm964, %v1969, 0
    %v2173 = vsel %vm964, %v1971, 0
    %v2176 = vsel %vm964, %v1973, 0
    %2178 = vmatprep.subr.bf16.mxu0 %v2071
    %2179 = vmatpush1.bf16.msra.mxu0 %v2070
    %2180 = vmatprep.subr.bf16.mxu0 %v2073
    %2181 = vmatpush1.bf16.msra.mxu0 %v2072
    %2182 = vmatprep.subr.bf16.mxu0 %v2075
    %2183 = vmatpush1.bf16.msra.mxu0 %v2074
    %2184 = vmatprep.subr.bf16.mxu0 %v2077
    %2185 = vmatpush1.bf16.msra.mxu0 %v2076
    %2186 = vmatprep.subr.bf16.mxu0 %v2079
    %2187 = vmatpush1.bf16.msra.mxu0 %v2078
    %2188 = vmatprep.subr.bf16.mxu0 %v2081
    %2189 = vmatpush1.bf16.msra.mxu0 %v2080
    %2190 = vmatprep.subr.bf16.mxu0 %v2083
    %2191 = vmatpush1.bf16.msra.mxu0 %v2082
    %2192 = vmatprep.subr.bf16.mxu0 %v2085
    %2193 = vmatpush1.bf16.msra.mxu0 %v2084
    %2194 = vmatprep.subr.bf16.mxu0 %v2087
    %2195 = vmatpush1.bf16.msra.mxu0 %v2086
    %2196 = vmatprep.subr.bf16.mxu0 %v2089
    %2197 = vmatpush1.bf16.msra.mxu0 %v2088
    %2198 = vmatprep.subr.bf16.mxu0 %v2091
    %2199 = vmatpush1.bf16.msra.mxu0 %v2090
    %2200 = vmatprep.subr.bf16.mxu0 %v2093
    %2201 = vmatpush1.bf16.msra.mxu0 %v2092
    %2202 = vmatprep.subr.bf16.mxu0 0
    %2203 = vmatpush1.bf16.msra.mxu0 0
    %2204 = vmatprep.subr.bf16.mxu0 0
    %2205 = vmatpush1.bf16.msra.mxu0 0
    %2206 = vmatprep.subr.bf16.mxu0 0
    %2207 = vmatpush1.bf16.msra.mxu0 0
    %2208 = vmatprep.subr.bf16.mxu0 0
    %2209 = vmatpush1.bf16.msra.mxu0 0
    %2210 = vmatprep.mubr.bf16.mxu0 %v2119
    %2211 = vmatmul.mubr.bf16.gmra.mrb[0].mxu0 %v1934
    %v2212 = vpop.f32.mrb[0].mxu0
    %v2213 = vadd.f32 0.0, %v2212
    %v2214 = vpop.f32.mrb[0].mxu0
    %v2215 = vadd.f32 0.0, %v2214
    %v2216 = vpop.f32.mrb[0].mxu0
    %v2217 = vadd.f32 0.0, %v2216
    %v2218 = vpop.f32.mrb[0].mxu0
    %v2219 = vadd.f32 0.0, %v2218
    %2220 = vmatprep.mubr.bf16.mxu0 %v2122
    %2221 = vmatmul.mubr.bf16.gmra.mrb[0].mxu0 %v1936
    %v2222 = vpop.f32.mrb[0].mxu0
    %v2223 = vadd.f32 0.0, %v2222
    %v2224 = vpop.f32.mrb[0].mxu0
    %v2225 = vadd.f32 0.0, %v2224
    %v2226 = vpop.f32.mrb[0].mxu0
    %v2227 = vadd.f32 0.0, %v2226
    %v2228 = vpop.f32.mrb[0].mxu0
    %v2229 = vadd.f32 0.0, %v2228
    %2230 = vmatprep.mubr.bf16.mxu0 %v2125
    %2231 = vmatmul.mubr.bf16.gmra.mrb[0].mxu0 %v1938
    %v2232 = vpop.f32.mrb[0].mxu0
    %v2233 = vadd.f32 0.0, %v2232
    %v2234 = vpop.f32.mrb[0].mxu0
    %v2235 = vadd.f32 0.0, %v2234
    %v2236 = vpop.f32.mrb[0].mxu0
    %v2237 = vadd.f32 0.0, %v2236
    %v2238 = vpop.f32.mrb[0].mxu0
    %v2239 = vadd.f32 0.0, %v2238
    %2240 = vmatprep.mubr.bf16.mxu0 %v2128
    %2241 = vmatmul.mubr.bf16.gmra.mrb[0].mxu0 %v1940
    %v2242 = vpop.f32.mrb[0].mxu0
    %v2243 = vadd.f32 0.0, %v2242
    %v2244 = vpop.f32.mrb[0].mxu0
    %v2245 = vadd.f32 0.0, %v2244
    %v2246 = vpop.f32.mrb[0].mxu0
    %v2247 = vadd.f32 0.0, %v2246
    %v2248 = vpop.f32.mrb[0].mxu0
    %v2249 = vadd.f32 0.0, %v2248
    %2250 = vmatprep.mubr.bf16.mxu0 %v2131
    %2251 = vmatmul.mubr.bf16.gmra.mrb[0].mxu0 %v1942
    %v2252 = vpop.f32.mrb[0].mxu0
    %v2253 = vadd.f32 0.0, %v2252
    %v2254 = vpop.f32.mrb[0].mxu0
    %v2255 = vadd.f32 0.0, %v2254
    %v2256 = vpop.f32.mrb[0].mxu0
    %v2257 = vadd.f32 0.0, %v2256
    %v2258 = vpop.f32.mrb[0].mxu0
    %v2259 = vadd.f32 0.0, %v2258
    %2260 = vmatprep.mubr.bf16.mxu0 %v2134
    %2261 = vmatmul.mubr.bf16.gmra.mrb[0].mxu0 %v1944
    %v2262 = vpop.f32.mrb[0].mxu0
    %v2263 = vadd.f32 0.0, %v2262
    %v2264 = vpop.f32.mrb[0].mxu0
    %v2265 = vadd.f32 0.0, %v2264
    %v2266 = vpop.f32.mrb[0].mxu0
    %v2267 = vadd.f32 0.0, %v2266
    %v2268 = vpop.f32.mrb[0].mxu0
    %v2269 = vadd.f32 0.0, %v2268
    %2270 = vmatprep.mubr.bf16.mxu0 %v2137
    %2271 = vmatmul.mubr.bf16.gmra.mrb[0].mxu0 %v1946
    %v2272 = vpop.f32.mrb[0].mxu0
    %v2273 = vadd.f32 0.0, %v2272
    %v2274 = vpop.f32.mrb[0].mxu0
    %v2275 = vadd.f32 0.0, %v2274
    %v2276 = vpop.f32.mrb[0].mxu0
    %v2277 = vadd.f32 0.0, %v2276
    %v2278 = vpop.f32.mrb[0].mxu0
    %v2279 = vadd.f32 0.0, %v2278
    %2280 = vmatprep.mubr.bf16.mxu0 %v2140
    %2281 = vmatmul.mubr.bf16.gmra.mrb[0].mxu0 %v1948
    %v2282 = vpop.f32.mrb[0].mxu0
    %v2283 = vadd.f32 0.0, %v2282
    %v2284 = vpop.f32.mrb[0].mxu0
    %v2285 = vadd.f32 0.0, %v2284
    %v2286 = vpop.f32.mrb[0].mxu0
    %v2287 = vadd.f32 0.0, %v2286
    %v2288 = vpop.f32.mrb[0].mxu0
    %v2289 = vadd.f32 0.0, %v2288
    %2290 = vmatprep.mubr.bf16.mxu0 %v2143
    %2291 = vmatmul.mubr.bf16.gmra.mrb[0].mxu0 %v1950
    %v2292 = vpop.f32.mrb[0].mxu0
    %v2293 = vadd.f32 0.0, %v2292
    %v2294 = vpop.f32.mrb[0].mxu0
    %v2295 = vadd.f32 0.0, %v2294
    %v2296 = vpop.f32.mrb[0].mxu0
    %v2297 = vadd.f32 0.0, %v2296
    %v2298 = vpop.f32.mrb[0].mxu0
    %v2299 = vadd.f32 0.0, %v2298
    %2300 = vmatprep.mubr.bf16.mxu0 %v2146
    %2301 = vmatmul.mubr.bf16.gmra.mrb[0].mxu0 %v1952
    %v2302 = vpop.f32.mrb[0].mxu0
    %v2303 = vadd.f32 0.0, %v2302
    %v2304 = vpop.f32.mrb[0].mxu0
    %v2305 = vadd.f32 0.0, %v2304
    %v2306 = vpop.f32.mrb[0].mxu0
    %v2307 = vadd.f32 0.0, %v2306
    %v2308 = vpop.f32.mrb[0].mxu0
    %v2309 = vadd.f32 0.0, %v2308
    %2310 = vmatprep.mubr.bf16.mxu0 %v2149
    %2311 = vmatmul.mubr.bf16.gmra.mrb[0].mxu0 %v1954
    %v2312 = vpop.f32.mrb[0].mxu0
    %v2313 = vadd.f32 0.0, %v2312
    %v2314 = vpop.f32.mrb[0].mxu0
    %v2315 = vadd.f32 0.0, %v2314
    %v2316 = vpop.f32.mrb[0].mxu0
    %v2317 = vadd.f32 0.0, %v2316
    %v2318 = vpop.f32.mrb[0].mxu0
    %v2319 = vadd.f32 0.0, %v2318
    %2320 = vmatprep.mubr.bf16.mxu0 %v2152
    %2321 = vmatmul.mubr.bf16.gmra.mrb[0].mxu0 %v1956
    %v2322 = vpop.f32.mrb[0].mxu0
    %v2323 = vadd.f32 0.0, %v2322
    %v2324 = vpop.f32.mrb[0].mxu0
    %v2325 = vadd.f32 0.0, %v2324
    %v2326 = vpop.f32.mrb[0].mxu0
    %v2327 = vadd.f32 0.0, %v2326
    %v2328 = vpop.f32.mrb[0].mxu0
    %v2329 = vadd.f32 0.0, %v2328
    %2330 = vmatprep.mubr.bf16.mxu0 %v2155
    %2331 = vmatmul.mubr.bf16.gmra.mrb[0].mxu0 %v1958
    %v2332 = vpop.f32.mrb[0].mxu0
    %v2333 = vadd.f32 0.0, %v2332
    %v2334 = vpop.f32.mrb[0].mxu0
    %v2335 = vadd.f32 0.0, %v2334
    %v2336 = vpop.f32.mrb[0].mxu0
    %v2337 = vadd.f32 0.0, %v2336
    %v2338 = vpop.f32.mrb[0].mxu0
    %v2339 = vadd.f32 0.0, %v2338
    %2340 = vmatprep.mubr.bf16.mxu0 %v2158
    %2341 = vmatmul.mubr.bf16.gmra.mrb[0].mxu0 %v1960
    %v2342 = vpop.f32.mrb[0].mxu0
    %v2343 = vadd.f32 0.0, %v2342
    %v2344 = vpop.f32.mrb[0].mxu0
    %v2345 = vadd.f32 0.0, %v2344
    %v2346 = vpop.f32.mrb[0].mxu0
    %v2347 = vadd.f32 0.0, %v2346
    %v2348 = vpop.f32.mrb[0].mxu0
    %v2349 = vadd.f32 0.0, %v2348
    %2350 = vmatprep.mubr.bf16.mxu0 %v2161
    %2351 = vmatmul.mubr.bf16.gmra.mrb[0].mxu0 %v1962
    %v2352 = vpop.f32.mrb[0].mxu0
    %v2353 = vadd.f32 0.0, %v2352
    %v2354 = vpop.f32.mrb[0].mxu0
    %v2355 = vadd.f32 0.0, %v2354
    %v2356 = vpop.f32.mrb[0].mxu0
    %v2357 = vadd.f32 0.0, %v2356
    %v2358 = vpop.f32.mrb[0].mxu0
    %v2359 = vadd.f32 0.0, %v2358
    %2360 = vmatprep.mubr.bf16.mxu0 %v2164
    %2361 = vmatmul.mubr.bf16.gmra.mrb[0].mxu0 %v1964
    %v2362 = vpop.f32.mrb[0].mxu0
    %v2363 = vadd.f32 0.0, %v2362
    %v2364 = vpop.f32.mrb[0].mxu0
    %v2365 = vadd.f32 0.0, %v2364
    %v2366 = vpop.f32.mrb[0].mxu0
    %v2367 = vadd.f32 0.0, %v2366
    %v2368 = vpop.f32.mrb[0].mxu0
    %v2369 = vadd.f32 0.0, %v2368
    %2370 = vmatprep.mubr.bf16.mxu0 %v2167
    %2371 = vmatmul.mubr.bf16.gmra.mrb[0].mxu0 %v1966
    %v2372 = vpop.f32.mrb[0].mxu0
    %v2373 = vadd.f32 0.0, %v2372
    %v2374 = vpop.f32.mrb[0].mxu0
    %v2375 = vadd.f32 0.0, %v2374
    %v2376 = vpop.f32.mrb[0].mxu0
    %v2377 = vadd.f32 0.0, %v2376
    %v2378 = vpop.f32.mrb[0].mxu0
    %v2379 = vadd.f32 0.0, %v2378
    %2380 = vmatprep.mubr.bf16.mxu0 %v2170
    %2381 = vmatmul.mubr.bf16.gmra.mrb[0].mxu0 %v1968
    %v2382 = vpop.f32.mrb[0].mxu0
    %v2383 = vadd.f32 0.0, %v2382
    %v2384 = vpop.f32.mrb[0].mxu0
    %v2385 = vadd.f32 0.0, %v2384
    %v2386 = vpop.f32.mrb[0].mxu0
    %v2387 = vadd.f32 0.0, %v2386
    %v2388 = vpop.f32.mrb[0].mxu0
    %v2389 = vadd.f32 0.0, %v2388
    %2390 = vmatprep.mubr.bf16.mxu0 %v2173
    %2391 = vmatmul.mubr.bf16.gmra.mrb[0].mxu0 %v1970
    %v2392 = vpop.f32.mrb[0].mxu0
    %v2393 = vadd.f32 0.0, %v2392
    %v2394 = vpop.f32.mrb[0].mxu0
    %v2395 = vadd.f32 0.0, %v2394
    %v2396 = vpop.f32.mrb[0].mxu0
    %v2397 = vadd.f32 0.0, %v2396
    %v2398 = vpop.f32.mrb[0].mxu0
    %v2399 = vadd.f32 0.0, %v2398
    %2400 = vmatprep.mubr.bf16.mxu0 %v2176
    %2401 = vmatmul.mubr.bf16.gmra.mrb[0].mxu0 %v1972
    %v2402 = vpop.f32.mrb[0].mxu0
    %v2403 = vadd.f32 0.0, %v2402
    %v2404 = vpop.f32.mrb[0].mxu0
    %v2405 = vadd.f32 0.0, %v2404
    %v2406 = vpop.f32.mrb[0].mxu0
    %v2407 = vadd.f32 0.0, %v2406
    %v2408 = vpop.f32.mrb[0].mxu0
    %v2409 = vadd.f32 0.0, %v2408
    %2410 = vdwg.mxu0
    %v2411 = vadd.f32 %v1736, %v2213
    %v2412 = vadd.f32 %v1738, %v2215
    %v2413 = vadd.f32 %v1740, %v2217
    %v2414 = vadd.f32 %v1742, %v2219
    %v2415 = vadd.f32 %v1746, %v2223
    %v2416 = vadd.f32 %v1748, %v2225
    %v2417 = vadd.f32 %v1750, %v2227
    %v2418 = vadd.f32 %v1752, %v2229
    %v2419 = vadd.f32 %v1756, %v2233
    %v2420 = vadd.f32 %v1758, %v2235
    %v2421 = vadd.f32 %v1760, %v2237
    %v2422 = vadd.f32 %v1762, %v2239
    %v2423 = vadd.f32 %v1766, %v2243
    %v2424 = vadd.f32 %v1768, %v2245
    %v2425 = vadd.f32 %v1770, %v2247
    %v2426 = vadd.f32 %v1772, %v2249
    %v2427 = vadd.f32 %v1776, %v2253
    %v2428 = vadd.f32 %v1778, %v2255
    %v2429 = vadd.f32 %v1780, %v2257
    %v2430 = vadd.f32 %v1782, %v2259
    %v2431 = vadd.f32 %v1786, %v2263
    %v2432 = vadd.f32 %v1788, %v2265
    %v2433 = vadd.f32 %v1790, %v2267
    %v2434 = vadd.f32 %v1792, %v2269
    %v2435 = vadd.f32 %v1796, %v2273
    %v2436 = vadd.f32 %v1798, %v2275
    %v2437 = vadd.f32 %v1800, %v2277
    %v2438 = vadd.f32 %v1802, %v2279
    %v2439 = vadd.f32 %v1806, %v2283
    %v2440 = vadd.f32 %v1808, %v2285
    %v2441 = vadd.f32 %v1810, %v2287
    %v2442 = vadd.f32 %v1812, %v2289
    %v2443 = vadd.f32 %v1816, %v2293
    %v2444 = vadd.f32 %v1818, %v2295
    %v2445 = vadd.f32 %v1820, %v2297
    %v2446 = vadd.f32 %v1822, %v2299
    %v2447 = vadd.f32 %v1826, %v2303
    %v2448 = vadd.f32 %v1828, %v2305
    %v2449 = vadd.f32 %v1830, %v2307
    %v2450 = vadd.f32 %v1832, %v2309
    %v2451 = vadd.f32 %v1836, %v2313
    %v2452 = vadd.f32 %v1838, %v2315
    %v2453 = vadd.f32 %v1840, %v2317
    %v2454 = vadd.f32 %v1842, %v2319
    %v2455 = vadd.f32 %v1846, %v2323
    %v2456 = vadd.f32 %v1848, %v2325
    %v2457 = vadd.f32 %v1850, %v2327
    %v2458 = vadd.f32 %v1852, %v2329
    %v2459 = vadd.f32 %v1856, %v2333
    %v2460 = vadd.f32 %v1858, %v2335
    %v2461 = vadd.f32 %v1860, %v2337
    %v2462 = vadd.f32 %v1862, %v2339
    %v2463 = vadd.f32 %v1866, %v2343
    %v2464 = vadd.f32 %v1868, %v2345
    %v2465 = vadd.f32 %v1870, %v2347
    %v2466 = vadd.f32 %v1872, %v2349
    %v2467 = vadd.f32 %v1876, %v2353
    %v2468 = vadd.f32 %v1878, %v2355
    %v2469 = vadd.f32 %v1880, %v2357
    %v2470 = vadd.f32 %v1882, %v2359
    %v2471 = vadd.f32 %v1886, %v2363
    %v2472 = vadd.f32 %v1888, %v2365
    %v2473 = vadd.f32 %v1890, %v2367
    %v2474 = vadd.f32 %v1892, %v2369
    %v2475 = vadd.f32 %v1896, %v2373
    %v2476 = vadd.f32 %v1898, %v2375
    %v2477 = vadd.f32 %v1900, %v2377
    %v2478 = vadd.f32 %v1902, %v2379
    %v2479 = vadd.f32 %v1906, %v2383
    %v2480 = vadd.f32 %v1908, %v2385
    %v2481 = vadd.f32 %v1910, %v2387
    %v2482 = vadd.f32 %v1912, %v2389
    %v2483 = vadd.f32 %v1916, %v2393
    %v2484 = vadd.f32 %v1918, %v2395
    %v2485 = vadd.f32 %v1920, %v2397
    %v2486 = vadd.f32 %v1922, %v2399
    %v2487 = vadd.f32 %v1926, %v2403
    %v2488 = vadd.f32 %v1928, %v2405
    %v2489 = vadd.f32 %v1930, %v2407
    %v2490 = vadd.f32 %v1932, %v2409
    %v2491 = vld [vmem:[#allocation9] sm:$0x3]
    %v2493 = vlaneseq
    %v2494 = vshrl.u32 %v2493, 7
    %v2495 = vsub.s32 0, %v2494
    %v2496 = vrot.slane %v2491, %v2495
    %v2497 = vlaneseq
    %v2498 = vshrl.u32 %v2497, 7
    %v2499 = vsub.s32 1, %v2498
    %v2500 = vrot.slane %v2491, %v2499
    %v2503 = vadd.f32 %v2411, %v2496
    %v2504 = vadd.f32 %v2412, %v2500
    %v2505 = vadd.f32 %v2413, %v2496
    %v2506 = vadd.f32 %v2414, %v2500
    %v2507 = vadd.f32 %v2415, %v2496
    %v2508 = vadd.f32 %v2416, %v2500
    %v2509 = vadd.f32 %v2417, %v2496
    %v2510 = vadd.f32 %v2418, %v2500
    %v2511 = vadd.f32 %v2419, %v2496
    %v2512 = vadd.f32 %v2420, %v2500
    %v2513 = vadd.f32 %v2421, %v2496
    %v2514 = vadd.f32 %v2422, %v2500
    %v2515 = vadd.f32 %v2423, %v2496
    %v2516 = vadd.f32 %v2424, %v2500
    %v2517 = vadd.f32 %v2425, %v2496
    %v2518 = vadd.f32 %v2426, %v2500
    %v2519 = vadd.f32 %v2427, %v2496
    %v2520 = vadd.f32 %v2428, %v2500
    %v2521 = vadd.f32 %v2429, %v2496
    %v2522 = vadd.f32 %v2430, %v2500
    %v2523 = vadd.f32 %v2431, %v2496
    %v2524 = vadd.f32 %v2432, %v2500
    %v2525 = vadd.f32 %v2433, %v2496
    %v2526 = vadd.f32 %v2434, %v2500
    %v2527 = vadd.f32 %v2435, %v2496
    %v2528 = vadd.f32 %v2436, %v2500
    %v2529 = vadd.f32 %v2437, %v2496
    %v2530 = vadd.f32 %v2438, %v2500
    %v2531 = vadd.f32 %v2439, %v2496
    %v2532 = vadd.f32 %v2440, %v2500
    %v2533 = vadd.f32 %v2441, %v2496
    %v2534 = vadd.f32 %v2442, %v2500
    %v2535 = vadd.f32 %v2443, %v2496
    %v2536 = vadd.f32 %v2444, %v2500
    %v2537 = vadd.f32 %v2445, %v2496
    %v2538 = vadd.f32 %v2446, %v2500
    %v2539 = vadd.f32 %v2447, %v2496
    %v2540 = vadd.f32 %v2448, %v2500
    %v2541 = vadd.f32 %v2449, %v2496
    %v2542 = vadd.f32 %v2450, %v2500
    %v2543 = vadd.f32 %v2451, %v2496
    %v2544 = vadd.f32 %v2452, %v2500
    %v2545 = vadd.f32 %v2453, %v2496
    %v2546 = vadd.f32 %v2454, %v2500
    %v2547 = vadd.f32 %v2455, %v2496
    %v2548 = vadd.f32 %v2456, %v2500
    %v2549 = vadd.f32 %v2457, %v2496
    %v2550 = vadd.f32 %v2458, %v2500
    %v2551 = vadd.f32 %v2459, %v2496
    %v2552 = vadd.f32 %v2460, %v2500
    %v2553 = vadd.f32 %v2461, %v2496
    %v2554 = vadd.f32 %v2462, %v2500
    %v2555 = vadd.f32 %v2463, %v2496
    %v2556 = vadd.f32 %v2464, %v2500
    %v2557 = vadd.f32 %v2465, %v2496
    %v2558 = vadd.f32 %v2466, %v2500
    %v2559 = vadd.f32 %v2467, %v2496
    %v2560 = vadd.f32 %v2468, %v2500
    %v2561 = vadd.f32 %v2469, %v2496
    %v2562 = vadd.f32 %v2470, %v2500
    %v2563 = vadd.f32 %v2471, %v2496
    %v2564 = vadd.f32 %v2472, %v2500
    %v2565 = vadd.f32 %v2473, %v2496
    %v2566 = vadd.f32 %v2474, %v2500
    %v2567 = vadd.f32 %v2475, %v2496
    %v2568 = vadd.f32 %v2476, %v2500
    %v2569 = vadd.f32 %v2477, %v2496
    %v2570 = vadd.f32 %v2478, %v2500
    %v2571 = vadd.f32 %v2479, %v2496
    %v2572 = vadd.f32 %v2480, %v2500
    %v2573 = vadd.f32 %v2481, %v2496
    %v2574 = vadd.f32 %v2482, %v2500
    %v2575 = vadd.f32 %v2483, %v2496
    %v2576 = vadd.f32 %v2484, %v2500
    %v2577 = vadd.f32 %v2485, %v2496
    %v2578 = vadd.f32 %v2486, %v2500
    %v2579 = vadd.f32 %v2487, %v2496
    %v2580 = vadd.f32 %v2488, %v2500
    %v2581 = vadd.f32 %v2489, %v2496
    %v2582 = vadd.f32 %v2490, %v2500
    %v2583 = vmax.f32 %v2503, 0.0
    %v2584 = vmax.f32 %v2504, 0.0
    %v2585 = vmax.f32 %v2505, 0.0
    %v2586 = vmax.f32 %v2506, 0.0
    %v2587 = vmax.f32 %v2507, 0.0
    %v2588 = vmax.f32 %v2508, 0.0
    %v2589 = vmax.f32 %v2509, 0.0
    %v2590 = vmax.f32 %v2510, 0.0
    %v2591 = vmax.f32 %v2511, 0.0
    %v2592 = vmax.f32 %v2512, 0.0
    %v2593 = vmax.f32 %v2513, 0.0
    %v2594 = vmax.f32 %v2514, 0.0
    %v2595 = vmax.f32 %v2515, 0.0
    %v2596 = vmax.f32 %v2516, 0.0
    %v2597 = vmax.f32 %v2517, 0.0
    %v2598 = vmax.f32 %v2518, 0.0
    %v2599 = vmax.f32 %v2519, 0.0
    %v2600 = vmax.f32 %v2520, 0.0
    %v2601 = vmax.f32 %v2521, 0.0
    %v2602 = vmax.f32 %v2522, 0.0
    %v2603 = vmax.f32 %v2523, 0.0
    %v2604 = vmax.f32 %v2524, 0.0
    %v2605 = vmax.f32 %v2525, 0.0
    %v2606 = vmax.f32 %v2526, 0.0
    %v2607 = vmax.f32 %v2527, 0.0
    %v2608 = vmax.f32 %v2528, 0.0
    %v2609 = vmax.f32 %v2529, 0.0
    %v2610 = vmax.f32 %v2530, 0.0
    %v2611 = vmax.f32 %v2531, 0.0
    %v2612 = vmax.f32 %v2532, 0.0
    %v2613 = vmax.f32 %v2533, 0.0
    %v2614 = vmax.f32 %v2534, 0.0
    %v2615 = vmax.f32 %v2535, 0.0
    %v2616 = vmax.f32 %v2536, 0.0
    %v2617 = vmax.f32 %v2537, 0.0
    %v2618 = vmax.f32 %v2538, 0.0
    %v2619 = vmax.f32 %v2539, 0.0
    %v2620 = vmax.f32 %v2540, 0.0
    %v2621 = vmax.f32 %v2541, 0.0
    %v2622 = vmax.f32 %v2542, 0.0
    %v2623 = vmax.f32 %v2543, 0.0
    %v2624 = vmax.f32 %v2544, 0.0
    %v2625 = vmax.f32 %v2545, 0.0
    %v2626 = vmax.f32 %v2546, 0.0
    %v2627 = vmax.f32 %v2547, 0.0
    %v2628 = vmax.f32 %v2548, 0.0
    %v2629 = vmax.f32 %v2549, 0.0
    %v2630 = vmax.f32 %v2550, 0.0
    %v2631 = vmax.f32 %v2551, 0.0
    %v2632 = vmax.f32 %v2552, 0.0
    %v2633 = vmax.f32 %v2553, 0.0
    %v2634 = vmax.f32 %v2554, 0.0
    %v2635 = vmax.f32 %v2555, 0.0
    %v2636 = vmax.f32 %v2556, 0.0
    %v2637 = vmax.f32 %v2557, 0.0
    %v2638 = vmax.f32 %v2558, 0.0
    %v2639 = vmax.f32 %v2559, 0.0
    %v2640 = vmax.f32 %v2560, 0.0
    %v2641 = vmax.f32 %v2561, 0.0
    %v2642 = vmax.f32 %v2562, 0.0
    %v2643 = vmax.f32 %v2563, 0.0
    %v2644 = vmax.f32 %v2564, 0.0
    %v2645 = vmax.f32 %v2565, 0.0
    %v2646 = vmax.f32 %v2566, 0.0
    %v2647 = vmax.f32 %v2567, 0.0
    %v2648 = vmax.f32 %v2568, 0.0
    %v2649 = vmax.f32 %v2569, 0.0
    %v2650 = vmax.f32 %v2570, 0.0
    %v2651 = vmax.f32 %v2571, 0.0
    %v2652 = vmax.f32 %v2572, 0.0
    %v2653 = vmax.f32 %v2573, 0.0
    %v2654 = vmax.f32 %v2574, 0.0
    %v2655 = vmax.f32 %v2575, 0.0
    %v2656 = vmax.f32 %v2576, 0.0
    %v2657 = vmax.f32 %v2577, 0.0
    %v2658 = vmax.f32 %v2578, 0.0
    %v2659 = vmax.f32 %v2579, 0.0
    %v2660 = vmax.f32 %v2580, 0.0
    %v2661 = vmax.f32 %v2581, 0.0
    %v2662 = vmax.f32 %v2582, 0.0
    %v2663 = vld [vmem:[#allocation11] sm:$0xf]
    %v2664 = vld [vmem:[#allocation11 + $0x4] sm:$0xf]
    %v2665 = vld [vmem:[#allocation11 + $0x8] sm:$0xf]
    %v2666 = vld [vmem:[#allocation11 + $0xc] sm:$0xf]
    %v2667 = vld [vmem:[#allocation11 + $0x10] sm:$0xf]
    %v2668 = vld [vmem:[#allocation11 + $0x14] sm:$0xf]
    %v2669 = vld [vmem:[#allocation11 + $0x18] sm:$0xf]
    %v2670 = vld [vmem:[#allocation11 + $0x1c] sm:$0xf]
    %v2671 = vld [vmem:[#allocation11 + $0x20] sm:$0xf]
    %v2672 = vld [vmem:[#allocation11 + $0x24] sm:$0xf]
    %v2673 = vld [vmem:[#allocation11 + $0x28] sm:$0xf]
    %v2674 = vld [vmem:[#allocation11 + $0x2c] sm:$0xf]
    %v2675 = vld [vmem:[#allocation11 + $0x30] sm:$0xf]
    %v2676 = vld [vmem:[#allocation11 + $0x34] sm:$0xf]
    %v2677 = vld [vmem:[#allocation11 + $0x38] sm:$0xf]
    %v2678 = vld [vmem:[#allocation11 + $0x3c] sm:$0xf]
    %v2679 = vld [vmem:[#allocation11 + $0x40] sm:$0xf]
    %v2680 = vld [vmem:[#allocation11 + $0x44] sm:$0xf]
    %v2681 = vld [vmem:[#allocation11 + $0x48] sm:$0xf]
    %v2682 = vld [vmem:[#allocation11 + $0x4c] sm:$0xf]
    %v2683 = vld [vmem:[#allocation11 + $0x50] sm:$0xf]
    %v2684 = vld [vmem:[#allocation11 + $0x54] sm:$0xf]
    %v2685 = vld [vmem:[#allocation11 + $0x58] sm:$0xf]
    %v2686 = vld [vmem:[#allocation11 + $0x5c] sm:$0xf]
    %v2687 = vld [vmem:[#allocation11 + $0x60] sm:$0xf]
    %v2688 = vld [vmem:[#allocation11 + $0x64] sm:$0xf]
    %v2689 = vld [vmem:[#allocation11 + $0x68] sm:$0xf]
    %v2690 = vld [vmem:[#allocation11 + $0x6c] sm:$0xf]
    %v2691 = vld [vmem:[#allocation11 + $0x70] sm:$0xf]
    %v2692 = vld [vmem:[#allocation11 + $0x74] sm:$0xf]
    %v2693 = vld [vmem:[#allocation11 + $0x78] sm:$0xf]
    %v2694 = vld [vmem:[#allocation11 + $0x7c] sm:$0xf]
    %v2695 = vld [vmem:[#allocation11 + $0x80] sm:$0xf]
    %v2696 = vld [vmem:[#allocation11 + $0x84] sm:$0xf]
    %v2697 = vld [vmem:[#allocation11 + $0x88] sm:$0xf]
    %v2698 = vld [vmem:[#allocation11 + $0x8c] sm:$0xf]
    %v2699 = vld [vmem:[#allocation11 + $0x90] sm:$0xf]
    %v2700 = vld [vmem:[#allocation11 + $0x94] sm:$0xf]
    %v2701 = vld [vmem:[#allocation11 + $0x98] sm:$0xf]
    %v2702 = vld [vmem:[#allocation11 + $0x9c] sm:$0xf]
    %v2703 = vld [vmem:[#allocation12] sm:$0xff]
    %v2704 = vld [vmem:[#allocation12 + $0x8] sm:$0xff]
    %v2705 = vld [vmem:[#allocation12 + $0x10] sm:$0xff]
    %v2706 = vld [vmem:[#allocation12 + $0x18] sm:$0xff]
    %v2747 = vunpack.c.l.b16 %v2663
    %v2748 = vunpack.c.l.b16 %v2664
    %v2749 = vunpack.c.l.b16 %v2665
    %v2750 = vunpack.c.l.b16 %v2666
    %v2751 = vunpack.c.l.b16 %v2667
    %v2752 = vunpack.c.l.b16 %v2668
    %v2753 = vunpack.c.l.b16 %v2669
    %v2754 = vunpack.c.l.b16 %v2670
    %v2755 = vunpack.c.l.b16 %v2671
    %v2756 = vunpack.c.l.b16 %v2672
    %v2757 = vunpack.c.l.b16 %v2673
    %v2758 = vunpack.c.l.b16 %v2674
    %v2759 = vunpack.c.l.b16 %v2675
    %v2760 = vunpack.c.l.b16 %v2676
    %v2761 = vunpack.c.l.b16 %v2677
    %v2762 = vunpack.c.l.b16 %v2678
    %v2763 = vunpack.c.l.b16 %v2679
    %v2764 = vunpack.c.l.b16 %v2680
    %v2765 = vunpack.c.l.b16 %v2681
    %v2766 = vunpack.c.l.b16 %v2682
    %v2767 = vunpack.c.l.b16 %v2683
    %v2768 = vunpack.c.l.b16 %v2684
    %v2769 = vunpack.c.l.b16 %v2685
    %v2770 = vunpack.c.l.b16 %v2686
    %v2771 = vunpack.c.l.b16 %v2687
    %v2772 = vunpack.c.l.b16 %v2688
    %v2773 = vunpack.c.l.b16 %v2689
    %v2774 = vunpack.c.l.b16 %v2690
    %v2775 = vunpack.c.l.b16 %v2691
    %v2776 = vunpack.c.l.b16 %v2692
    %v2777 = vunpack.c.l.b16 %v2693
    %v2778 = vunpack.c.l.b16 %v2694
    %v2779 = vunpack.c.l.b16 %v2695
    %v2780 = vunpack.c.l.b16 %v2696
    %v2781 = vunpack.c.l.b16 %v2697
    %v2782 = vunpack.c.l.b16 %v2698
    %v2783 = vunpack.c.l.b16 %v2699
    %v2784 = vunpack.c.l.b16 %v2700
    %v2785 = vunpack.c.l.b16 %v2701
    %v2786 = vunpack.c.l.b16 %v2702
    %v2787 = vpack.c.b16 %v2748, %v2747
    %v2788 = vpack.c.b16 %v2750, %v2749
    %v2789 = vpack.c.b16 %v2752, %v2751
    %v2790 = vpack.c.b16 %v2754, %v2753
    %v2791 = vpack.c.b16 %v2756, %v2755
    %v2792 = vpack.c.b16 %v2758, %v2757
    %v2793 = vpack.c.b16 %v2760, %v2759
    %v2794 = vpack.c.b16 %v2762, %v2761
    %v2795 = vpack.c.b16 %v2764, %v2763
    %v2796 = vpack.c.b16 %v2766, %v2765
    %v2797 = vpack.c.b16 %v2768, %v2767
    %v2798 = vpack.c.b16 %v2770, %v2769
    %v2799 = vpack.c.b16 %v2772, %v2771
    %v2800 = vpack.c.b16 %v2774, %v2773
    %v2801 = vpack.c.b16 %v2776, %v2775
    %v2802 = vpack.c.b16 %v2778, %v2777
    %v2803 = vpack.c.b16 %v2780, %v2779
    %v2804 = vpack.c.b16 %v2782, %v2781
    %v2805 = vpack.c.b16 %v2784, %v2783
    %v2806 = vpack.c.b16 %v2786, %v2785
    %v2811 = vunpack.c.l.b16 %v2703
    %v2812 = vunpack.c.h.b16 %v2703
    %v2813 = vunpack.c.l.b16 %v2704
    %v2814 = vunpack.c.h.b16 %v2704
    %v2815 = vunpack.c.l.b16 %v2705
    %v2816 = vunpack.c.h.b16 %v2705
    %v2817 = vunpack.c.l.b16 %v2706
    %v2818 = vunpack.c.h.b16 %v2706
    %v2819 = vpack.c.b16 %v2813, %v2811
    %v2820 = vpack.c.b16 %v2814, %v2812
    %v2821 = vpack.c.b16 %v2817, %v2815
    %v2822 = vpack.c.b16 %v2818, %v2816
    %vm2827 = vcmask 261120
    %v2829 = vsel %vm2827, %v2787, 0
    %v2832 = vsel %vm2827, %v2788, 0
    %v2835 = vsel %vm2827, %v2789, 0
    %v2838 = vsel %vm2827, %v2790, 0
    %v2841 = vsel %vm2827, %v2791, 0
    %v2844 = vsel %vm2827, %v2792, 0
    %v2847 = vsel %vm2827, %v2793, 0
    %v2850 = vsel %vm2827, %v2794, 0
    %v2853 = vsel %vm2827, %v2795, 0
    %v2856 = vsel %vm2827, %v2796, 0
    %v2859 = vsel %vm2827, %v2797, 0
    %v2862 = vsel %vm2827, %v2798, 0
    %v2865 = vsel %vm2827, %v2799, 0
    %v2868 = vsel %vm2827, %v2800, 0
    %v2871 = vsel %vm2827, %v2801, 0
    %v2874 = vsel %vm2827, %v2802, 0
    %v2877 = vsel %vm2827, %v2803, 0
    %v2880 = vsel %vm2827, %v2804, 0
    %v2883 = vsel %vm2827, %v2805, 0
    %v2886 = vsel %vm2827, %v2806, 0
    %2888 = vmatprep.subr.bf16.mxu0 %v2820
    %2889 = vmatpush1.bf16.msra.mxu0 %v2819
    %2890 = vmatprep.subr.bf16.mxu0 %v2822
    %2891 = vmatpush1.bf16.msra.mxu0 %v2821
    %2892 = vmatprep.subr.bf16.mxu0 0
    %2893 = vmatpush1.bf16.msra.mxu0 0
    %2894 = vmatprep.subr.bf16.mxu0 0
    %2895 = vmatpush1.bf16.msra.mxu0 0
    %2896 = vmatprep.subr.bf16.mxu0 0
    %2897 = vmatpush1.bf16.msra.mxu0 0
    %2898 = vmatprep.subr.bf16.mxu0 0
    %2899 = vmatpush1.bf16.msra.mxu0 0
    %2900 = vmatprep.subr.bf16.mxu0 0
    %2901 = vmatpush1.bf16.msra.mxu0 0
    %2902 = vmatprep.subr.bf16.mxu0 0
    %2903 = vmatpush1.bf16.msra.mxu0 0
    %2904 = vmatprep.subr.bf16.mxu0 0
    %2905 = vmatpush1.bf16.msra.mxu0 0
    %2906 = vmatprep.subr.bf16.mxu0 0
    %2907 = vmatpush1.bf16.msra.mxu0 0
    %2908 = vmatprep.subr.bf16.mxu0 0
    %2909 = vmatpush1.bf16.msra.mxu0 0
    %2910 = vmatprep.subr.bf16.mxu0 0
    %2911 = vmatpush1.bf16.msra.mxu0 0
    %2912 = vmatprep.subr.bf16.mxu0 0
    %2913 = vmatpush1.bf16.msra.mxu0 0
    %2914 = vmatprep.subr.bf16.mxu0 0
    %2915 = vmatpush1.bf16.msra.mxu0 0
    %2916 = vmatprep.subr.bf16.mxu0 0
    %2917 = vmatpush1.bf16.msra.mxu0 0
    %2918 = vmatprep.subr.bf16.mxu0 0
    %2919 = vmatpush1.bf16.msra.mxu0 0
    %2920 = vmatprep.mubr.bf16.mxu0 0
    %2921 = vmatmul.mubr.bf16.gmra.mrb[0].mxu0 %v2829
    %v2922 = vpop.f32.mrb[0].mxu0
    %v2923 = vadd.f32 0.0, %v2922
    %v2924 = vpop.f32.mrb[0].mxu0
    %v2925 = vadd.f32 0.0, %v2924
    %v2926 = vpop.f32.mrb[0].mxu0
    %v2927 = vadd.f32 0.0, %v2926
    %v2928 = vpop.f32.mrb[0].mxu0
    %v2929 = vadd.f32 0.0, %v2928
    %2930 = vmatprep.mubr.bf16.mxu0 0
    %2931 = vmatmul.mubr.bf16.gmra.mrb[0].mxu0 %v2832
    %v2932 = vpop.f32.mrb[0].mxu0
    %v2933 = vadd.f32 0.0, %v2932
    %v2934 = vpop.f32.mrb[0].mxu0
    %v2935 = vadd.f32 0.0, %v2934
    %v2936 = vpop.f32.mrb[0].mxu0
    %v2937 = vadd.f32 0.0, %v2936
    %v2938 = vpop.f32.mrb[0].mxu0
    %v2939 = vadd.f32 0.0, %v2938
    %2940 = vmatprep.mubr.bf16.mxu0 0
    %2941 = vmatmul.mubr.bf16.gmra.mrb[0].mxu0 %v2835
    %v2942 = vpop.f32.mrb[0].mxu0
    %v2943 = vadd.f32 0.0, %v2942
    %v2944 = vpop.f32.mrb[0].mxu0
    %v2945 = vadd.f32 0.0, %v2944
    %v2946 = vpop.f32.mrb[0].mxu0
    %v2947 = vadd.f32 0.0, %v2946
    %v2948 = vpop.f32.mrb[0].mxu0
    %v2949 = vadd.f32 0.0, %v2948
    %2950 = vmatprep.mubr.bf16.mxu0 0
    %2951 = vmatmul.mubr.bf16.gmra.mrb[0].mxu0 %v2838
    %v2952 = vpop.f32.mrb[0].mxu0
    %v2953 = vadd.f32 0.0, %v2952
    %v2954 = vpop.f32.mrb[0].mxu0
    %v2955 = vadd.f32 0.0, %v2954
    %v2956 = vpop.f32.mrb[0].mxu0
    %v2957 = vadd.f32 0.0, %v2956
    %v2958 = vpop.f32.mrb[0].mxu0
    %v2959 = vadd.f32 0.0, %v2958
    %2960 = vmatprep.mubr.bf16.mxu0 0
    %2961 = vmatmul.mubr.bf16.gmra.mrb[0].mxu0 %v2841
    %v2962 = vpop.f32.mrb[0].mxu0
    %v2963 = vadd.f32 0.0, %v2962
    %v2964 = vpop.f32.mrb[0].mxu0
    %v2965 = vadd.f32 0.0, %v2964
    %v2966 = vpop.f32.mrb[0].mxu0
    %v2967 = vadd.f32 0.0, %v2966
    %v2968 = vpop.f32.mrb[0].mxu0
    %v2969 = vadd.f32 0.0, %v2968
    %2970 = vmatprep.mubr.bf16.mxu0 0
    %2971 = vmatmul.mubr.bf16.gmra.mrb[0].mxu0 %v2844
    %v2972 = vpop.f32.mrb[0].mxu0
    %v2973 = vadd.f32 0.0, %v2972
    %v2974 = vpop.f32.mrb[0].mxu0
    %v2975 = vadd.f32 0.0, %v2974
    %v2976 = vpop.f32.mrb[0].mxu0
    %v2977 = vadd.f32 0.0, %v2976
    %v2978 = vpop.f32.mrb[0].mxu0
    %v2979 = vadd.f32 0.0, %v2978
    %2980 = vmatprep.mubr.bf16.mxu0 0
    %2981 = vmatmul.mubr.bf16.gmra.mrb[0].mxu0 %v2847
    %v2982 = vpop.f32.mrb[0].mxu0
    %v2983 = vadd.f32 0.0, %v2982
    %v2984 = vpop.f32.mrb[0].mxu0
    %v2985 = vadd.f32 0.0, %v2984
    %v2986 = vpop.f32.mrb[0].mxu0
    %v2987 = vadd.f32 0.0, %v2986
    %v2988 = vpop.f32.mrb[0].mxu0
    %v2989 = vadd.f32 0.0, %v2988
    %2990 = vmatprep.mubr.bf16.mxu0 0
    %2991 = vmatmul.mubr.bf16.gmra.mrb[0].mxu0 %v2850
    %v2992 = vpop.f32.mrb[0].mxu0
    %v2993 = vadd.f32 0.0, %v2992
    %v2994 = vpop.f32.mrb[0].mxu0
    %v2995 = vadd.f32 0.0, %v2994
    %v2996 = vpop.f32.mrb[0].mxu0
    %v2997 = vadd.f32 0.0, %v2996
    %v2998 = vpop.f32.mrb[0].mxu0
    %v2999 = vadd.f32 0.0, %v2998
    %3000 = vmatprep.mubr.bf16.mxu0 0
    %3001 = vmatmul.mubr.bf16.gmra.mrb[0].mxu0 %v2853
    %v3002 = vpop.f32.mrb[0].mxu0
    %v3003 = vadd.f32 0.0, %v3002
    %v3004 = vpop.f32.mrb[0].mxu0
    %v3005 = vadd.f32 0.0, %v3004
    %v3006 = vpop.f32.mrb[0].mxu0
    %v3007 = vadd.f32 0.0, %v3006
    %v3008 = vpop.f32.mrb[0].mxu0
    %v3009 = vadd.f32 0.0, %v3008
    %3010 = vmatprep.mubr.bf16.mxu0 0
    %3011 = vmatmul.mubr.bf16.gmra.mrb[0].mxu0 %v2856
    %v3012 = vpop.f32.mrb[0].mxu0
    %v3013 = vadd.f32 0.0, %v3012
    %v3014 = vpop.f32.mrb[0].mxu0
    %v3015 = vadd.f32 0.0, %v3014
    %v3016 = vpop.f32.mrb[0].mxu0
    %v3017 = vadd.f32 0.0, %v3016
    %v3018 = vpop.f32.mrb[0].mxu0
    %v3019 = vadd.f32 0.0, %v3018
    %3020 = vmatprep.mubr.bf16.mxu0 0
    %3021 = vmatmul.mubr.bf16.gmra.mrb[0].mxu0 %v2859
    %v3022 = vpop.f32.mrb[0].mxu0
    %v3023 = vadd.f32 0.0, %v3022
    %v3024 = vpop.f32.mrb[0].mxu0
    %v3025 = vadd.f32 0.0, %v3024
    %v3026 = vpop.f32.mrb[0].mxu0
    %v3027 = vadd.f32 0.0, %v3026
    %v3028 = vpop.f32.mrb[0].mxu0
    %v3029 = vadd.f32 0.0, %v3028
    %3030 = vmatprep.mubr.bf16.mxu0 0
    %3031 = vmatmul.mubr.bf16.gmra.mrb[0].mxu0 %v2862
    %v3032 = vpop.f32.mrb[0].mxu0
    %v3033 = vadd.f32 0.0, %v3032
    %v3034 = vpop.f32.mrb[0].mxu0
    %v3035 = vadd.f32 0.0, %v3034
    %v3036 = vpop.f32.mrb[0].mxu0
    %v3037 = vadd.f32 0.0, %v3036
    %v3038 = vpop.f32.mrb[0].mxu0
    %v3039 = vadd.f32 0.0, %v3038
    %3040 = vmatprep.mubr.bf16.mxu0 0
    %3041 = vmatmul.mubr.bf16.gmra.mrb[0].mxu0 %v2865
    %v3042 = vpop.f32.mrb[0].mxu0
    %v3043 = vadd.f32 0.0, %v3042
    %v3044 = vpop.f32.mrb[0].mxu0
    %v3045 = vadd.f32 0.0, %v3044
    %v3046 = vpop.f32.mrb[0].mxu0
    %v3047 = vadd.f32 0.0, %v3046
    %v3048 = vpop.f32.mrb[0].mxu0
    %v3049 = vadd.f32 0.0, %v3048
    %3050 = vmatprep.mubr.bf16.mxu0 0
    %3051 = vmatmul.mubr.bf16.gmra.mrb[0].mxu0 %v2868
    %v3052 = vpop.f32.mrb[0].mxu0
    %v3053 = vadd.f32 0.0, %v3052
    %v3054 = vpop.f32.mrb[0].mxu0
    %v3055 = vadd.f32 0.0, %v3054
    %v3056 = vpop.f32.mrb[0].mxu0
    %v3057 = vadd.f32 0.0, %v3056
    %v3058 = vpop.f32.mrb[0].mxu0
    %v3059 = vadd.f32 0.0, %v3058
    %3060 = vmatprep.mubr.bf16.mxu0 0
    %3061 = vmatmul.mubr.bf16.gmra.mrb[0].mxu0 %v2871
    %v3062 = vpop.f32.mrb[0].mxu0
    %v3063 = vadd.f32 0.0, %v3062
    %v3064 = vpop.f32.mrb[0].mxu0
    %v3065 = vadd.f32 0.0, %v3064
    %v3066 = vpop.f32.mrb[0].mxu0
    %v3067 = vadd.f32 0.0, %v3066
    %v3068 = vpop.f32.mrb[0].mxu0
    %v3069 = vadd.f32 0.0, %v3068
    %3070 = vmatprep.mubr.bf16.mxu0 0
    %3071 = vmatmul.mubr.bf16.gmra.mrb[0].mxu0 %v2874
    %v3072 = vpop.f32.mrb[0].mxu0
    %v3073 = vadd.f32 0.0, %v3072
    %v3074 = vpop.f32.mrb[0].mxu0
    %v3075 = vadd.f32 0.0, %v3074
    %v3076 = vpop.f32.mrb[0].mxu0
    %v3077 = vadd.f32 0.0, %v3076
    %v3078 = vpop.f32.mrb[0].mxu0
    %v3079 = vadd.f32 0.0, %v3078
    %3080 = vmatprep.mubr.bf16.mxu0 0
    %3081 = vmatmul.mubr.bf16.gmra.mrb[0].mxu0 %v2877
    %v3082 = vpop.f32.mrb[0].mxu0
    %v3083 = vadd.f32 0.0, %v3082
    %v3084 = vpop.f32.mrb[0].mxu0
    %v3085 = vadd.f32 0.0, %v3084
    %v3086 = vpop.f32.mrb[0].mxu0
    %v3087 = vadd.f32 0.0, %v3086
    %v3088 = vpop.f32.mrb[0].mxu0
    %v3089 = vadd.f32 0.0, %v3088
    %3090 = vmatprep.mubr.bf16.mxu0 0
    %3091 = vmatmul.mubr.bf16.gmra.mrb[0].mxu0 %v2880
    %v3092 = vpop.f32.mrb[0].mxu0
    %v3093 = vadd.f32 0.0, %v3092
    %v3094 = vpop.f32.mrb[0].mxu0
    %v3095 = vadd.f32 0.0, %v3094
    %v3096 = vpop.f32.mrb[0].mxu0
    %v3097 = vadd.f32 0.0, %v3096
    %v3098 = vpop.f32.mrb[0].mxu0
    %v3099 = vadd.f32 0.0, %v3098
    %3100 = vmatprep.mubr.bf16.mxu0 0
    %3101 = vmatmul.mubr.bf16.gmra.mrb[0].mxu0 %v2883
    %v3102 = vpop.f32.mrb[0].mxu0
    %v3103 = vadd.f32 0.0, %v3102
    %v3104 = vpop.f32.mrb[0].mxu0
    %v3105 = vadd.f32 0.0, %v3104
    %v3106 = vpop.f32.mrb[0].mxu0
    %v3107 = vadd.f32 0.0, %v3106
    %v3108 = vpop.f32.mrb[0].mxu0
    %v3109 = vadd.f32 0.0, %v3108
    %3110 = vmatprep.mubr.bf16.mxu0 0
    %3111 = vmatmul.mubr.bf16.gmra.mrb[0].mxu0 %v2886
    %v3112 = vpop.f32.mrb[0].mxu0
    %v3113 = vadd.f32 0.0, %v3112
    %v3114 = vpop.f32.mrb[0].mxu0
    %v3115 = vadd.f32 0.0, %v3114
    %v3116 = vpop.f32.mrb[0].mxu0
    %v3117 = vadd.f32 0.0, %v3116
    %v3118 = vpop.f32.mrb[0].mxu0
    %v3119 = vadd.f32 0.0, %v3118
    %3120 = vdwg.mxu0
    %v3121 = vadd.f32 %v2583, %v2923
    %v3122 = vadd.f32 %v2584, %v2925
    %v3123 = vadd.f32 %v2585, %v2927
    %v3124 = vadd.f32 %v2586, %v2929
    %v3125 = vadd.f32 %v2587, %v2933
    %v3126 = vadd.f32 %v2588, %v2935
    %v3127 = vadd.f32 %v2589, %v2937
    %v3128 = vadd.f32 %v2590, %v2939
    %v3129 = vadd.f32 %v2591, %v2943
    %v3130 = vadd.f32 %v2592, %v2945
    %v3131 = vadd.f32 %v2593, %v2947
    %v3132 = vadd.f32 %v2594, %v2949
    %v3133 = vadd.f32 %v2595, %v2953
    %v3134 = vadd.f32 %v2596, %v2955
    %v3135 = vadd.f32 %v2597, %v2957
    %v3136 = vadd.f32 %v2598, %v2959
    %v3137 = vadd.f32 %v2599, %v2963
    %v3138 = vadd.f32 %v2600, %v2965
    %v3139 = vadd.f32 %v2601, %v2967
    %v3140 = vadd.f32 %v2602, %v2969
    %v3141 = vadd.f32 %v2603, %v2973
    %v3142 = vadd.f32 %v2604, %v2975
    %v3143 = vadd.f32 %v2605, %v2977
    %v3144 = vadd.f32 %v2606, %v2979
    %v3145 = vadd.f32 %v2607, %v2983
    %v3146 = vadd.f32 %v2608, %v2985
    %v3147 = vadd.f32 %v2609, %v2987
    %v3148 = vadd.f32 %v2610, %v2989
    %v3149 = vadd.f32 %v2611, %v2993
    %v3150 = vadd.f32 %v2612, %v2995
    %v3151 = vadd.f32 %v2613, %v2997
    %v3152 = vadd.f32 %v2614, %v2999
    %v3153 = vadd.f32 %v2615, %v3003
    %v3154 = vadd.f32 %v2616, %v3005
    %v3155 = vadd.f32 %v2617, %v3007
    %v3156 = vadd.f32 %v2618, %v3009
    %v3157 = vadd.f32 %v2619, %v3013
    %v3158 = vadd.f32 %v2620, %v3015
    %v3159 = vadd.f32 %v2621, %v3017
    %v3160 = vadd.f32 %v2622, %v3019
    %v3161 = vadd.f32 %v2623, %v3023
    %v3162 = vadd.f32 %v2624, %v3025
    %v3163 = vadd.f32 %v2625, %v3027
    %v3164 = vadd.f32 %v2626, %v3029
    %v3165 = vadd.f32 %v2627, %v3033
    %v3166 = vadd.f32 %v2628, %v3035
    %v3167 = vadd.f32 %v2629, %v3037
    %v3168 = vadd.f32 %v2630, %v3039
    %v3169 = vadd.f32 %v2631, %v3043
    %v3170 = vadd.f32 %v2632, %v3045
    %v3171 = vadd.f32 %v2633, %v3047
    %v3172 = vadd.f32 %v2634, %v3049
    %v3173 = vadd.f32 %v2635, %v3053
    %v3174 = vadd.f32 %v2636, %v3055
    %v3175 = vadd.f32 %v2637, %v3057
    %v3176 = vadd.f32 %v2638, %v3059
    %v3177 = vadd.f32 %v2639, %v3063
    %v3178 = vadd.f32 %v2640, %v3065
    %v3179 = vadd.f32 %v2641, %v3067
    %v3180 = vadd.f32 %v2642, %v3069
    %v3181 = vadd.f32 %v2643, %v3073
    %v3182 = vadd.f32 %v2644, %v3075
    %v3183 = vadd.f32 %v2645, %v3077
    %v3184 = vadd.f32 %v2646, %v3079
    %v3185 = vadd.f32 %v2647, %v3083
    %v3186 = vadd.f32 %v2648, %v3085
    %v3187 = vadd.f32 %v2649, %v3087
    %v3188 = vadd.f32 %v2650, %v3089
    %v3189 = vadd.f32 %v2651, %v3093
    %v3190 = vadd.f32 %v2652, %v3095
    %v3191 = vadd.f32 %v2653, %v3097
    %v3192 = vadd.f32 %v2654, %v3099
    %v3193 = vadd.f32 %v2655, %v3103
    %v3194 = vadd.f32 %v2656, %v3105
    %v3195 = vadd.f32 %v2657, %v3107
    %v3196 = vadd.f32 %v2658, %v3109
    %v3197 = vadd.f32 %v2659, %v3113
    %v3198 = vadd.f32 %v2660, %v3115
    %v3199 = vadd.f32 %v2661, %v3117
    %v3200 = vadd.f32 %v2662, %v3119
    %v3201 = vpack.c.bf16 %v3123, %v3121
    %v3202 = vpack.c.bf16 %v3124, %v3122
    %v3203 = vpack.c.bf16 %v3127, %v3125
    %v3204 = vpack.c.bf16 %v3128, %v3126
    %v3205 = vpack.c.bf16 %v3131, %v3129
    %v3206 = vpack.c.bf16 %v3132, %v3130
    %v3207 = vpack.c.bf16 %v3135, %v3133
    %v3208 = vpack.c.bf16 %v3136, %v3134
    %v3209 = vpack.c.bf16 %v3139, %v3137
    %v3210 = vpack.c.bf16 %v3140, %v3138
    %v3211 = vpack.c.bf16 %v3143, %v3141
    %v3212 = vpack.c.bf16 %v3144, %v3142
    %v3213 = vpack.c.bf16 %v3147, %v3145
    %v3214 = vpack.c.bf16 %v3148, %v3146
    %v3215 = vpack.c.bf16 %v3151, %v3149
    %v3216 = vpack.c.bf16 %v3152, %v3150
    %v3217 = vpack.c.bf16 %v3155, %v3153
    %v3218 = vpack.c.bf16 %v3156, %v3154
    %v3219 = vpack.c.bf16 %v3159, %v3157
    %v3220 = vpack.c.bf16 %v3160, %v3158
    %v3221 = vpack.c.bf16 %v3163, %v3161
    %v3222 = vpack.c.bf16 %v3164, %v3162
    %v3223 = vpack.c.bf16 %v3167, %v3165
    %v3224 = vpack.c.bf16 %v3168, %v3166
    %v3225 = vpack.c.bf16 %v3171, %v3169
    %v3226 = vpack.c.bf16 %v3172, %v3170
    %v3227 = vpack.c.bf16 %v3175, %v3173
    %v3228 = vpack.c.bf16 %v3176, %v3174
    %v3229 = vpack.c.bf16 %v3179, %v3177
    %v3230 = vpack.c.bf16 %v3180, %v3178
    %v3231 = vpack.c.bf16 %v3183, %v3181
    %v3232 = vpack.c.bf16 %v3184, %v3182
    %v3233 = vpack.c.bf16 %v3187, %v3185
    %v3234 = vpack.c.bf16 %v3188, %v3186
    %v3235 = vpack.c.bf16 %v3191, %v3189
    %v3236 = vpack.c.bf16 %v3192, %v3190
    %v3237 = vpack.c.bf16 %v3195, %v3193
    %v3238 = vpack.c.bf16 %v3196, %v3194
    %v3239 = vpack.c.bf16 %v3199, %v3197
    %v3240 = vpack.c.bf16 %v3200, %v3198
    %v3281 = vunpack.c.l.b16 %v3201
    %v3282 = vunpack.c.l.b16 %v3202
    %v3283 = vunpack.c.h.b16 %v3201
    %v3284 = vunpack.c.h.b16 %v3202
    %v3285 = vunpack.c.l.b16 %v3203
    %v3286 = vunpack.c.l.b16 %v3204
    %v3287 = vunpack.c.h.b16 %v3203
    %v3288 = vunpack.c.h.b16 %v3204
    %v3289 = vunpack.c.l.b16 %v3205
    %v3290 = vunpack.c.l.b16 %v3206
    %v3291 = vunpack.c.h.b16 %v3205
    %v3292 = vunpack.c.h.b16 %v3206
    %v3293 = vunpack.c.l.b16 %v3207
    %v3294 = vunpack.c.l.b16 %v3208
    %v3295 = vunpack.c.h.b16 %v3207
    %v3296 = vunpack.c.h.b16 %v3208
    %v3297 = vunpack.c.l.b16 %v3209
    %v3298 = vunpack.c.l.b16 %v3210
    %v3299 = vunpack.c.h.b16 %v3209
    %v3300 = vunpack.c.h.b16 %v3210
    %v3301 = vunpack.c.l.b16 %v3211
    %v3302 = vunpack.c.l.b16 %v3212
    %v3303 = vunpack.c.h.b16 %v3211
    %v3304 = vunpack.c.h.b16 %v3212
    %v3305 = vunpack.c.l.b16 %v3213
    %v3306 = vunpack.c.l.b16 %v3214
    %v3307 = vunpack.c.h.b16 %v3213
    %v3308 = vunpack.c.h.b16 %v3214
    %v3309 = vunpack.c.l.b16 %v3215
    %v3310 = vunpack.c.l.b16 %v3216
    %v3311 = vunpack.c.h.b16 %v3215
    %v3312 = vunpack.c.h.b16 %v3216
    %v3313 = vunpack.c.l.b16 %v3217
    %v3314 = vunpack.c.l.b16 %v3218
    %v3315 = vunpack.c.h.b16 %v3217
    %v3316 = vunpack.c.h.b16 %v3218
    %v3317 = vunpack.c.l.b16 %v3219
    %v3318 = vunpack.c.l.b16 %v3220
    %v3319 = vunpack.c.h.b16 %v3219
    %v3320 = vunpack.c.h.b16 %v3220
    %v3321 = vunpack.c.l.b16 %v3221
    %v3322 = vunpack.c.l.b16 %v3222
    %v3323 = vunpack.c.h.b16 %v3221
    %v3324 = vunpack.c.h.b16 %v3222
    %v3325 = vunpack.c.l.b16 %v3223
    %v3326 = vunpack.c.l.b16 %v3224
    %v3327 = vunpack.c.h.b16 %v3223
    %v3328 = vunpack.c.h.b16 %v3224
    %v3329 = vunpack.c.l.b16 %v3225
    %v3330 = vunpack.c.l.b16 %v3226
    %v3331 = vunpack.c.h.b16 %v3225
    %v3332 = vunpack.c.h.b16 %v3226
    %v3333 = vunpack.c.l.b16 %v3227
    %v3334 = vunpack.c.l.b16 %v3228
    %v3335 = vunpack.c.h.b16 %v3227
    %v3336 = vunpack.c.h.b16 %v3228
    %v3337 = vunpack.c.l.b16 %v3229
    %v3338 = vunpack.c.l.b16 %v3230
    %v3339 = vunpack.c.h.b16 %v3229
    %v3340 = vunpack.c.h.b16 %v3230
    %v3341 = vunpack.c.l.b16 %v3231
    %v3342 = vunpack.c.l.b16 %v3232
    %v3343 = vunpack.c.h.b16 %v3231
    %v3344 = vunpack.c.h.b16 %v3232
    %v3345 = vunpack.c.l.b16 %v3233
    %v3346 = vunpack.c.l.b16 %v3234
    %v3347 = vunpack.c.h.b16 %v3233
    %v3348 = vunpack.c.h.b16 %v3234
    %v3349 = vunpack.c.l.b16 %v3235
    %v3350 = vunpack.c.l.b16 %v3236
    %v3351 = vunpack.c.h.b16 %v3235
    %v3352 = vunpack.c.h.b16 %v3236
    %v3353 = vunpack.c.l.b16 %v3237
    %v3354 = vunpack.c.l.b16 %v3238
    %v3355 = vunpack.c.h.b16 %v3237
    %v3356 = vunpack.c.h.b16 %v3238
    %v3357 = vunpack.c.l.b16 %v3239
    %v3358 = vunpack.c.l.b16 %v3240
    %v3359 = vunpack.c.h.b16 %v3239
    %v3360 = vunpack.c.h.b16 %v3240
    %v3361 = vpack.c.b16 %v3282, %v3281
    %v3362 = vpack.c.b16 %v3284, %v3283
    %v3363 = vpack.c.b16 %v3286, %v3285
    %v3364 = vpack.c.b16 %v3288, %v3287
    %v3365 = vpack.c.b16 %v3290, %v3289
    %v3366 = vpack.c.b16 %v3292, %v3291
    %v3367 = vpack.c.b16 %v3294, %v3293
    %v3368 = vpack.c.b16 %v3296, %v3295
    %v3369 = vpack.c.b16 %v3298, %v3297
    %v3370 = vpack.c.b16 %v3300, %v3299
    %v3371 = vpack.c.b16 %v3302, %v3301
    %v3372 = vpack.c.b16 %v3304, %v3303
    %v3373 = vpack.c.b16 %v3306, %v3305
    %v3374 = vpack.c.b16 %v3308, %v3307
    %v3375 = vpack.c.b16 %v3310, %v3309
    %v3376 = vpack.c.b16 %v3312, %v3311
    %v3377 = vpack.c.b16 %v3314, %v3313
    %v3378 = vpack.c.b16 %v3316, %v3315
    %v3379 = vpack.c.b16 %v3318, %v3317
    %v3380 = vpack.c.b16 %v3320, %v3319
    %v3381 = vpack.c.b16 %v3322, %v3321
    %v3382 = vpack.c.b16 %v3324, %v3323
    %v3383 = vpack.c.b16 %v3326, %v3325
    %v3384 = vpack.c.b16 %v3328, %v3327
    %v3385 = vpack.c.b16 %v3330, %v3329
    %v3386 = vpack.c.b16 %v3332, %v3331
    %v3387 = vpack.c.b16 %v3334, %v3333
    %v3388 = vpack.c.b16 %v3336, %v3335
    %v3389 = vpack.c.b16 %v3338, %v3337
    %v3390 = vpack.c.b16 %v3340, %v3339
    %v3391 = vpack.c.b16 %v3342, %v3341
    %v3392 = vpack.c.b16 %v3344, %v3343
    %v3393 = vpack.c.b16 %v3346, %v3345
    %v3394 = vpack.c.b16 %v3348, %v3347
    %v3395 = vpack.c.b16 %v3350, %v3349
    %v3396 = vpack.c.b16 %v3352, %v3351
    %v3397 = vpack.c.b16 %v3354, %v3353
    %v3398 = vpack.c.b16 %v3356, %v3355
    %v3399 = vpack.c.b16 %v3358, %v3357
    %v3400 = vpack.c.b16 %v3360, %v3359
    %3441 = vst [vmem:[#allocation14] sm:$0xff] %v3361
    %3442 = vst [vmem:[#allocation14 + $0x8] sm:$0xff] %v3362
    %3443 = vst [vmem:[#allocation14 + $0x10] sm:$0xff] %v3363
    %3444 = vst [vmem:[#allocation14 + $0x18] sm:$0xff] %v3364
    %3445 = vst [vmem:[#allocation14 + $0x20] sm:$0xff] %v3365
    %3446 = vst [vmem:[#allocation14 + $0x28] sm:$0xff] %v3366
    %3447 = vst [vmem:[#allocation14 + $0x30] sm:$0xff] %v3367
    %3448 = vst [vmem:[#allocation14 + $0x38] sm:$0xff] %v3368
    %3449 = vst [vmem:[#allocation14 + $0x40] sm:$0xff] %v3369
    %3450 = vst [vmem:[#allocation14 + $0x48] sm:$0xff] %v3370
    %3451 = vst [vmem:[#allocation14 + $0x50] sm:$0xff] %v3371
    %3452 = vst [vmem:[#allocation14 + $0x58] sm:$0xff] %v3372
    %3453 = vst [vmem:[#allocation14 + $0x60] sm:$0xff] %v3373
    %3454 = vst [vmem:[#allocation14 + $0x68] sm:$0xff] %v3374
    %3455 = vst [vmem:[#allocation14 + $0x70] sm:$0xff] %v3375
    %3456 = vst [vmem:[#allocation14 + $0x78] sm:$0xff] %v3376
    %3457 = vst [vmem:[#allocation14 + $0x80] sm:$0xff] %v3377
    %3458 = vst [vmem:[#allocation14 + $0x88] sm:$0xff] %v3378
    %3459 = vst [vmem:[#allocation14 + $0x90] sm:$0xff] %v3379
    %3460 = vst [vmem:[#allocation14 + $0x98] sm:$0xff] %v3380
    %3461 = vst [vmem:[#allocation14 + $0xa0] sm:$0xff] %v3381
    %3462 = vst [vmem:[#allocation14 + $0xa8] sm:$0xff] %v3382
    %3463 = vst [vmem:[#allocation14 + $0xb0] sm:$0xff] %v3383
    %3464 = vst [vmem:[#allocation14 + $0xb8] sm:$0xff] %v3384
    %3465 = vst [vmem:[#allocation14 + $0xc0] sm:$0xff] %v3385
    %3466 = vst [vmem:[#allocation14 + $0xc8] sm:$0xff] %v3386
    %3467 = vst [vmem:[#allocation14 + $0xd0] sm:$0xff] %v3387
    %3468 = vst [vmem:[#allocation14 + $0xd8] sm:$0xff] %v3388
    %3469 = vst [vmem:[#allocation14 + $0xe0] sm:$0xff] %v3389
    %3470 = vst [vmem:[#allocation14 + $0xe8] sm:$0xff] %v3390
    %3471 = vst [vmem:[#allocation14 + $0xf0] sm:$0xff] %v3391
    %3472 = vst [vmem:[#allocation14 + $0xf8] sm:$0xff] %v3392
    %3473 = vst [vmem:[#allocation14 + $0x100] sm:$0xff] %v3393
    %3474 = vst [vmem:[#allocation14 + $0x108] sm:$0xff] %v3394
    %3475 = vst [vmem:[#allocation14 + $0x110] sm:$0xff] %v3395
    %3476 = vst [vmem:[#allocation14 + $0x118] sm:$0xff] %v3396
    %3477 = vst [vmem:[#allocation14 + $0x120] sm:$0xff] %v3397
    %3478 = vst [vmem:[#allocation14 + $0x128] sm:$0xff] %v3398
    %3479 = vst [vmem:[#allocation14 + $0x130] sm:$0xff] %v3399
    %3480 = vst [vmem:[#allocation14 + $0x138] sm:$0xff] %v3400
    // Predicated region
    $region50: #{ttf_head_forward.6} parent=1 // pred_check
      _
    $region51: #{ttf_head_forward.6} parent=1 // pred_check_branch
      %3482 = sbr.rel (0) target = $region53
    $region52: #{ttf_head_forward.6} parent=1 // pred_region
      %s3484 = ssub.s32 5120, 5120
      %3485 = vsyncadd [#allocation5], %s3484
      %s3486 = sshll.u32 [#allocation14], 4
      %s3487 = int_to_ptr.vmem [resolvable:$true] %s3486
      %3492 = dma.vmem_to_hbm [thread:$0]  %s3487, 5120, %s6, [#allocation5], 128, 128, 8
    $region53: #{ttf_head_forward.6} parent=1 // pred_fallthru
      _
    // Predicated region
    $region54: #{ttf_head_forward.6} parent=1 // pred_check
      _
    $region55: #{ttf_head_forward.6} parent=1 // pred_check_branch
      %3494 = sbr.rel (0) target = $region57
    $region56: #{ttf_head_forward.6} parent=1 // pred_region
      %3495 = dma.done [#allocation5], 5120
    $region57: #{ttf_head_forward.6} parent=1 // pred_fallthru
      _
    %3496 = vsyncpa [#allocation4], 1
    %3497 = vsyncpa [#allocation7], 1
    %3498 = vsyncpa [#allocation10], 1
    %3499 = vsyncpa [#allocation13], 1
    %3500 = vsyncpa [#allocation5], 1

// kernel: ttf_head_forward.7
$region0: #{ttf_head_forward.7}
  #allocation0 [shape = 'u32[]', space=smem, size = 0x4, offset = 0x4, fixed_abs, tag = 'smem constant byte address 0x4 - core index']
  #allocation1 [shape = 'u32[144,128]{1,0:T(1,128)}', space=vmem, size = 0x12000, scoped, tag = 'internal scratch']
  #allocation2 [shape = 'bf16[912,192]{1,0:T(16,128)(2,1)}', space=vmem, size = 0x72000, scoped, tag = 'scratch operand']
  %s0 = inlined_call_operand.hbm [shape: bf16[914,64], index: 0, kind: input, shape index: {}]
  %s1 = inlined_call_operand.hbm [shape: bf16[576,192], index: 1, kind: input, shape index: {}]
  %s2 = inlined_call_operand.hbm [shape: f32[1,192], index: 2, kind: input, shape index: {}]
  %s3 = inlined_call_operand.hbm [shape: bf16[192,128], index: 3, kind: input, shape index: {}]
  %s4 = inlined_call_operand.hbm [shape: f32[1,128], index: 4, kind: input, shape index: {}]
  %s5 = inlined_call_operand.hbm [shape: f32[864,128], index: 5, kind: output, shape index: {}]
  %s6 = sld [smem:[#allocation0]]
  $region50: #{ttf_head_forward.7} parent=0
    _
  %s8 = ssub.s32 1, %s6
  %s9 = scalar_select 0, %s8, %s6
  $region1: #{ttf_head_forward.7} parent=0
    #allocation3 [shape = 'u8[235520]{0}', space=vmem, size = 0x39800, scoped, tag = 'input window, operand 0, single buffered']
    #allocation4 [shape = 's32[1]{0}', space=sflag, size = 0x4, scoped, tag = 'scoped memory for ttf_head_forward.7']
    #allocation5 [shape = 's32[1]{0}', space=sflag, size = 0x4, scoped, tag = 'scoped memory for ttf_head_forward.7']
    #allocation6 [shape = 'u8[294912]{0}', space=vmem, size = 0x48000, scoped, tag = 'input window, operand 1, single buffered']
    #allocation7 [shape = 's32[1]{0}', space=sflag, size = 0x4, scoped, tag = 'scoped memory for ttf_head_forward.7']
    #allocation8 [shape = 'u8[1024]{0}', space=vmem, size = 0x400, scoped, tag = 'input window, operand 2, single buffered']
    #allocation9 [shape = 'u8[49152]{0}', space=vmem, size = 0xc000, scoped, tag = 'input window, operand 3, single buffered']
    #allocation10 [shape = 's32[1]{0}', space=sflag, size = 0x4, scoped, tag = 'scoped memory for ttf_head_forward.7']
    #allocation11 [shape = 'u8[512]{0}', space=vmem, size = 0x400, scoped, tag = 'input window, operand 4, single buffered']
    #allocation12 [shape = 'u8[442368]{0}', space=vmem, size = 0x6c000, scoped, tag = 'output window, operand 0, single buffered']
    %10 = vsyncpa [#allocation4], 0
    %11 = vsyncpa [#allocation7], 0
    %12 = vsyncpa [#allocation10], 0
    %13 = vsyncpa [#allocation5], 0
    // Predicated region
    $region2: #{ttf_head_forward.7} parent=1 // pred_check
      _
    $region3: #{ttf_head_forward.7} parent=1 // pred_check_branch
      %15 = sbr.rel (0) target = $region5
    $region4: #{ttf_head_forward.7} parent=1 // pred_region
      %s17 = ssub.s32 7360, 7360
      %18 = vsyncadd [#allocation4], %s17
      %s19 = sshll.u32 [#allocation3], 4
      %s20 = int_to_ptr.vmem [resolvable:$true] %s19
      %25 = dma.hbm_to_vmem [thread:$0]  %s0, 7360, %s20, [#allocation4], 64, 64, 4
    $region5: #{ttf_head_forward.7} parent=1 // pred_fallthru
      _
    // Predicated region
    $region6: #{ttf_head_forward.7} parent=1 // pred_check
      _
    $region7: #{ttf_head_forward.7} parent=1 // pred_check_branch
      %27 = sbr.rel (0) target = $region9
    $region8: #{ttf_head_forward.7} parent=1 // pred_region
      %s29 = ssub.s32 9216, 9216
      %30 = vsyncadd [#allocation7], %s29
      %s31 = sshll.u32 [#allocation6], 4
      %s32 = int_to_ptr.vmem [resolvable:$true] %s31
      %37 = dma.hbm_to_vmem [thread:$0]  %s1, 9216, %s32, [#allocation7], 128, 128, 8
    $region9: #{ttf_head_forward.7} parent=1 // pred_fallthru
      _
    // Predicated region
    $region10: #{ttf_head_forward.7} parent=1 // pred_check
      _
    $region11: #{ttf_head_forward.7} parent=1 // pred_check_branch
      %39 = sbr.rel (0) target = $region13
    $region12: #{ttf_head_forward.7} parent=1 // pred_region
      %s41 = ssub.s32 32, 32
      %42 = vsyncadd [#allocation7], %s41
      %s44 = sshll.u32 [#allocation8], 4
      %s45 = int_to_ptr.vmem [resolvable:$true] %s44
      %47 = dma.hbm_to_vmem [thread:$0]  %s2, 32, %s45, [#allocation7]
    $region13: #{ttf_head_forward.7} parent=1 // pred_fallthru
      _
    // Predicated region
    $region14: #{ttf_head_forward.7} parent=1 // pred_check
      _
    $region15: #{ttf_head_forward.7} parent=1 // pred_check_branch
      %49 = sbr.rel (0) target = $region17
    $region16: #{ttf_head_forward.7} parent=1 // pred_region
      %s51 = ssub.s32 1536, 1536
      %52 = vsyncadd [#allocation10], %s51
      %s53 = sshll.u32 [#allocation9], 4
      %s54 = int_to_ptr.vmem [resolvable:$true] %s53
      %59 = dma.hbm_to_vmem [thread:$0]  %s3, 1536, %s54, [#allocation10], 64, 64, 4
    $region17: #{ttf_head_forward.7} parent=1 // pred_fallthru
      _
    // Predicated region
    $region18: #{ttf_head_forward.7} parent=1 // pred_check
      _
    $region19: #{ttf_head_forward.7} parent=1 // pred_check_branch
      %61 = sbr.rel (0) target = $region21
    $region20: #{ttf_head_forward.7} parent=1 // pred_region
      %s63 = ssub.s32 16, 16
      %64 = vsyncadd [#allocation10], %s63
      %s66 = sshll.u32 [#allocation11], 4
      %s67 = int_to_ptr.vmem [resolvable:$true] %s66
      %69 = dma.hbm_to_vmem [thread:$0]  %s4, 16, %s67, [#allocation10]
    $region21: #{ttf_head_forward.7} parent=1 // pred_fallthru
      _
    // Predicated region
    $region22: #{ttf_head_forward.7} parent=1 // pred_check
      _
    $region23: #{ttf_head_forward.7} parent=1 // pred_check_branch
      %71 = sbr.rel (0) target = $region25
    $region24: #{ttf_head_forward.7} parent=1 // pred_region
      %72 = dma.done [#allocation4], 7360
    $region25: #{ttf_head_forward.7} parent=1 // pred_fallthru
      _
    // Predicated region
    $region26: #{ttf_head_forward.7} parent=1 // pred_check
      _
    $region27: #{ttf_head_forward.7} parent=1 // pred_check_branch
      %74 = sbr.rel (0) target = $region29
    $region28: #{ttf_head_forward.7} parent=1 // pred_region
      %75 = dma.done [#allocation7], 9216
    $region29: #{ttf_head_forward.7} parent=1 // pred_fallthru
      _
    // Predicated region
    $region30: #{ttf_head_forward.7} parent=1 // pred_check
      _
    $region31: #{ttf_head_forward.7} parent=1 // pred_check_branch
      %77 = sbr.rel (0) target = $region33
    $region32: #{ttf_head_forward.7} parent=1 // pred_region
      %78 = dma.done [#allocation7], 32
    $region33: #{ttf_head_forward.7} parent=1 // pred_fallthru
      _
    // Predicated region
    $region34: #{ttf_head_forward.7} parent=1 // pred_check
      _
    $region35: #{ttf_head_forward.7} parent=1 // pred_check_branch
      %80 = sbr.rel (0) target = $region37
    $region36: #{ttf_head_forward.7} parent=1 // pred_region
      %81 = dma.done [#allocation10], 1536
    $region37: #{ttf_head_forward.7} parent=1 // pred_fallthru
      _
    // Predicated region
    $region38: #{ttf_head_forward.7} parent=1 // pred_check
      _
    $region39: #{ttf_head_forward.7} parent=1 // pred_check_branch
      %83 = sbr.rel (0) target = $region41
    $region40: #{ttf_head_forward.7} parent=1 // pred_region
      %84 = dma.done [#allocation10], 16
    $region41: #{ttf_head_forward.7} parent=1 // pred_fallthru
      _
    %s86 = smul.u32 0, 864
    %s87 = sshra.s32 %s86, 3
    %s88 = sand.u32 %s86, 7
    %s89 = smul.addr %s87, 4
    %s90 = scalar_lea.vmem [#allocation3], %s89
    %v91 = vld [vmem:[%s90] sm:$0xf]
    %v92 = vld [vmem:[%s90 + $0x4] sm:$0xf]
    %v93 = vld [vmem:[%s90 + $0x8] sm:$0xf]
    %v94 = vld [vmem:[%s90 + $0xc] sm:$0xf]
    %v95 = vld [vmem:[%s90 + $0x10] sm:$0xf]
    %v96 = vld [vmem:[%s90 + $0x14] sm:$0xf]
    %v97 = vld [vmem:[%s90 + $0x18] sm:$0xf]
    %v98 = vld [vmem:[%s90 + $0x1c] sm:$0xf]
    %v99 = vld [vmem:[%s90 + $0x20] sm:$0xf]
    %v100 = vld [vmem:[%s90 + $0x24] sm:$0xf]
    %v101 = vld [vmem:[%s90 + $0x28] sm:$0xf]
    %v102 = vld [vmem:[%s90 + $0x2c] sm:$0xf]
    %v103 = vld [vmem:[%s90 + $0x30] sm:$0xf]
    %v104 = vld [vmem:[%s90 + $0x34] sm:$0xf]
    %v105 = vld [vmem:[%s90 + $0x38] sm:$0xf]
    %v106 = vld [vmem:[%s90 + $0x3c] sm:$0xf]
    %v107 = vld [vmem:[%s90 + $0x40] sm:$0xf]
    %v108 = vld [vmem:[%s90 + $0x44] sm:$0xf]
    %v109 = vld [vmem:[%s90 + $0x48] sm:$0xf]
    %v110 = vld [vmem:[%s90 + $0x4c] sm:$0xf]
    %v111 = vld [vmem:[%s90 + $0x50] sm:$0xf]
    %v112 = vld [vmem:[%s90 + $0x54] sm:$0xf]
    %v113 = vld [vmem:[%s90 + $0x58] sm:$0xf]
    %v114 = vld [vmem:[%s90 + $0x5c] sm:$0xf]
    %v115 = vld [vmem:[%s90 + $0x60] sm:$0xf]
    %v116 = vld [vmem:[%s90 + $0x64] sm:$0xf]
    %v117 = vld [vmem:[%s90 + $0x68] sm:$0xf]
    %v118 = vld [vmem:[%s90 + $0x6c] sm:$0xf]
    %v119 = vld [vmem:[%s90 + $0x70] sm:$0xf]
    %v120 = vld [vmem:[%s90 + $0x74] sm:$0xf]
    %v121 = vld [vmem:[%s90 + $0x78] sm:$0xf]
    %v122 = vld [vmem:[%s90 + $0x7c] sm:$0xf]
    %v123 = vld [vmem:[%s90 + $0x80] sm:$0xf]
    %v124 = vld [vmem:[%s90 + $0x84] sm:$0xf]
    %v125 = vld [vmem:[%s90 + $0x88] sm:$0xf]
    %v126 = vld [vmem:[%s90 + $0x8c] sm:$0xf]
    %v127 = vld [vmem:[%s90 + $0x90] sm:$0xf]
    %v128 = vld [vmem:[%s90 + $0x94] sm:$0xf]
    %v129 = vld [vmem:[%s90 + $0x98] sm:$0xf]
    %v130 = vld [vmem:[%s90 + $0x9c] sm:$0xf]
    %v131 = vld [vmem:[%s90 + $0xa0] sm:$0xf]
    %v132 = vld [vmem:[%s90 + $0xa4] sm:$0xf]
    %v133 = vld [vmem:[%s90 + $0xa8] sm:$0xf]
    %v134 = vld [vmem:[%s90 + $0xac] sm:$0xf]
    %v135 = vld [vmem:[%s90 + $0xb0] sm:$0xf]
    %v136 = vld [vmem:[%s90 + $0xb4] sm:$0xf]
    %v137 = vld [vmem:[%s90 + $0xb8] sm:$0xf]
    %v138 = vld [vmem:[%s90 + $0xbc] sm:$0xf]
    %v139 = vld [vmem:[%s90 + $0xc0] sm:$0xf]
    %v140 = vld [vmem:[%s90 + $0xc4] sm:$0xf]
    %v141 = vld [vmem:[%s90 + $0xc8] sm:$0xf]
    %v142 = vld [vmem:[%s90 + $0xcc] sm:$0xf]
    %v143 = vld [vmem:[%s90 + $0xd0] sm:$0xf]
    %v144 = vld [vmem:[%s90 + $0xd4] sm:$0xf]
    %v145 = vld [vmem:[%s90 + $0xd8] sm:$0xf]
    %v146 = vld [vmem:[%s90 + $0xdc] sm:$0xf]
    %v147 = vld [vmem:[%s90 + $0xe0] sm:$0xf]
    %v148 = vld [vmem:[%s90 + $0xe4] sm:$0xf]
    %v149 = vld [vmem:[%s90 + $0xe8] sm:$0xf]
    %v150 = vld [vmem:[%s90 + $0xec] sm:$0xf]
    %v151 = vld [vmem:[%s90 + $0xf0] sm:$0xf]
    %v152 = vld [vmem:[%s90 + $0xf4] sm:$0xf]
    %v153 = vld [vmem:[%s90 + $0xf8] sm:$0xf]
    %v154 = vld [vmem:[%s90 + $0xfc] sm:$0xf]
    %v155 = vld [vmem:[%s90 + $0x100] sm:$0xf]
    %v156 = vld [vmem:[%s90 + $0x104] sm:$0xf]
    %v157 = vld [vmem:[%s90 + $0x108] sm:$0xf]
    %v158 = vld [vmem:[%s90 + $0x10c] sm:$0xf]
    %v159 = vld [vmem:[%s90 + $0x110] sm:$0xf]
    %v160 = vld [vmem:[%s90 + $0x114] sm:$0xf]
    %v161 = vld [vmem:[%s90 + $0x118] sm:$0xf]
    %v162 = vld [vmem:[%s90 + $0x11c] sm:$0xf]
    %v163 = vld [vmem:[%s90 + $0x120] sm:$0xf]
    %v164 = vld [vmem:[%s90 + $0x124] sm:$0xf]
    %v165 = vld [vmem:[%s90 + $0x128] sm:$0xf]
    %v166 = vld [vmem:[%s90 + $0x12c] sm:$0xf]
    %v167 = vld [vmem:[%s90 + $0x130] sm:$0xf]
    %v168 = vld [vmem:[%s90 + $0x134] sm:$0xf]
    %v169 = vld [vmem:[%s90 + $0x138] sm:$0xf]
    %v170 = vld [vmem:[%s90 + $0x13c] sm:$0xf]
    %v171 = vld [vmem:[%s90 + $0x140] sm:$0xf]
    %v172 = vld [vmem:[%s90 + $0x144] sm:$0xf]
    %v173 = vld [vmem:[%s90 + $0x148] sm:$0xf]
    %v174 = vld [vmem:[%s90 + $0x14c] sm:$0xf]
    %v175 = vld [vmem:[%s90 + $0x150] sm:$0xf]
    %v176 = vld [vmem:[%s90 + $0x154] sm:$0xf]
    %v177 = vld [vmem:[%s90 + $0x158] sm:$0xf]
    %v178 = vld [vmem:[%s90 + $0x15c] sm:$0xf]
    %v179 = vld [vmem:[%s90 + $0x160] sm:$0xf]
    %v180 = vld [vmem:[%s90 + $0x164] sm:$0xf]
    %v181 = vld [vmem:[%s90 + $0x168] sm:$0xf]
    %v182 = vld [vmem:[%s90 + $0x16c] sm:$0xf]
    %v183 = vld [vmem:[%s90 + $0x170] sm:$0xf]
    %v184 = vld [vmem:[%s90 + $0x174] sm:$0xf]
    %v185 = vld [vmem:[%s90 + $0x178] sm:$0xf]
    %v186 = vld [vmem:[%s90 + $0x17c] sm:$0xf]
    %v187 = vld [vmem:[%s90 + $0x180] sm:$0xf]
    %v188 = vld [vmem:[%s90 + $0x184] sm:$0xf]
    %v189 = vld [vmem:[%s90 + $0x188] sm:$0xf]
    %v190 = vld [vmem:[%s90 + $0x18c] sm:$0xf]
    %v191 = vld [vmem:[%s90 + $0x190] sm:$0xf]
    %v192 = vld [vmem:[%s90 + $0x194] sm:$0xf]
    %v193 = vld [vmem:[%s90 + $0x198] sm:$0xf]
    %v194 = vld [vmem:[%s90 + $0x19c] sm:$0xf]
    %v195 = vld [vmem:[%s90 + $0x1a0] sm:$0xf]
    %v196 = vld [vmem:[%s90 + $0x1a4] sm:$0xf]
    %v197 = vld [vmem:[%s90 + $0x1a8] sm:$0xf]
    %v198 = vld [vmem:[%s90 + $0x1ac] sm:$0xf]
    %v199 = vld [vmem:[%s90 + $0x1b0] sm:$0xf]
    %v200 = vld [vmem:[%s90 + $0x1b4] sm:$0xf]
    %v201 = vld [vmem:[%s90 + $0x1b8] sm:$0xf]
    %v202 = vld [vmem:[%s90 + $0x1bc] sm:$0xf]
    %v203 = vld [vmem:[%s90 + $0x1c0] sm:$0xf]
    %v204 = vld [vmem:[%s90 + $0x1c4] sm:$0xf]
    %v205 = vld [vmem:[%s90 + $0x1c8] sm:$0x1]
    %v320 = vunpack.c.l.b16 %v91
    %v321 = vunpack.c.l.b16 %v92
    %v322 = vunpack.c.l.b16 %v93
    %v323 = vunpack.c.l.b16 %v94
    %v324 = vunpack.c.l.b16 %v95
    %v325 = vunpack.c.l.b16 %v96
    %v326 = vunpack.c.l.b16 %v97
    %v327 = vunpack.c.l.b16 %v98
    %v328 = vunpack.c.l.b16 %v99
    %v329 = vunpack.c.l.b16 %v100
    %v330 = vunpack.c.l.b16 %v101
    %v331 = vunpack.c.l.b16 %v102
    %v332 = vunpack.c.l.b16 %v103
    %v333 = vunpack.c.l.b16 %v104
    %v334 = vunpack.c.l.b16 %v105
    %v335 = vunpack.c.l.b16 %v106
    %v336 = vunpack.c.l.b16 %v107
    %v337 = vunpack.c.l.b16 %v108
    %v338 = vunpack.c.l.b16 %v109
    %v339 = vunpack.c.l.b16 %v110
    %v340 = vunpack.c.l.b16 %v111
    %v341 = vunpack.c.l.b16 %v112
    %v342 = vunpack.c.l.b16 %v113
    %v343 = vunpack.c.l.b16 %v114
    %v344 = vunpack.c.l.b16 %v115
    %v345 = vunpack.c.l.b16 %v116
    %v346 = vunpack.c.l.b16 %v117
    %v347 = vunpack.c.l.b16 %v118
    %v348 = vunpack.c.l.b16 %v119
    %v349 = vunpack.c.l.b16 %v120
    %v350 = vunpack.c.l.b16 %v121
    %v351 = vunpack.c.l.b16 %v122
    %v352 = vunpack.c.l.b16 %v123
    %v353 = vunpack.c.l.b16 %v124
    %v354 = vunpack.c.l.b16 %v125
    %v355 = vunpack.c.l.b16 %v126
    %v356 = vunpack.c.l.b16 %v127
    %v357 = vunpack.c.l.b16 %v128
    %v358 = vunpack.c.l.b16 %v129
    %v359 = vunpack.c.l.b16 %v130
    %v360 = vunpack.c.l.b16 %v131
    %v361 = vunpack.c.l.b16 %v132
    %v362 = vunpack.c.l.b16 %v133
    %v363 = vunpack.c.l.b16 %v134
    %v364 = vunpack.c.l.b16 %v135
    %v365 = vunpack.c.l.b16 %v136
    %v366 = vunpack.c.l.b16 %v137
    %v367 = vunpack.c.l.b16 %v138
    %v368 = vunpack.c.l.b16 %v139
    %v369 = vunpack.c.l.b16 %v140
    %v370 = vunpack.c.l.b16 %v141
    %v371 = vunpack.c.l.b16 %v142
    %v372 = vunpack.c.l.b16 %v143
    %v373 = vunpack.c.l.b16 %v144
    %v374 = vunpack.c.l.b16 %v145
    %v375 = vunpack.c.l.b16 %v146
    %v376 = vunpack.c.l.b16 %v147
    %v377 = vunpack.c.l.b16 %v148
    %v378 = vunpack.c.l.b16 %v149
    %v379 = vunpack.c.l.b16 %v150
    %v380 = vunpack.c.l.b16 %v151
    %v381 = vunpack.c.l.b16 %v152
    %v382 = vunpack.c.l.b16 %v153
    %v383 = vunpack.c.l.b16 %v154
    %v384 = vunpack.c.l.b16 %v155
    %v385 = vunpack.c.l.b16 %v156
    %v386 = vunpack.c.l.b16 %v157
    %v387 = vunpack.c.l.b16 %v158
    %v388 = vunpack.c.l.b16 %v159
    %v389 = vunpack.c.l.b16 %v160
    %v390 = vunpack.c.l.b16 %v161
    %v391 = vunpack.c.l.b16 %v162
    %v392 = vunpack.c.l.b16 %v163
    %v393 = vunpack.c.l.b16 %v164
    %v394 = vunpack.c.l.b16 %v165
    %v395 = vunpack.c.l.b16 %v166
    %v396 = vunpack.c.l.b16 %v167
    %v397 = vunpack.c.l.b16 %v168
    %v398 = vunpack.c.l.b16 %v169
    %v399 = vunpack.c.l.b16 %v170
    %v400 = vunpack.c.l.b16 %v171
    %v401 = vunpack.c.l.b16 %v172
    %v402 = vunpack.c.l.b16 %v173
    %v403 = vunpack.c.l.b16 %v174
    %v404 = vunpack.c.l.b16 %v175
    %v405 = vunpack.c.l.b16 %v176
    %v406 = vunpack.c.l.b16 %v177
    %v407 = vunpack.c.l.b16 %v178
    %v408 = vunpack.c.l.b16 %v179
    %v409 = vunpack.c.l.b16 %v180
    %v410 = vunpack.c.l.b16 %v181
    %v411 = vunpack.c.l.b16 %v182
    %v412 = vunpack.c.l.b16 %v183
    %v413 = vunpack.c.l.b16 %v184
    %v414 = vunpack.c.l.b16 %v185
    %v415 = vunpack.c.l.b16 %v186
    %v416 = vunpack.c.l.b16 %v187
    %v417 = vunpack.c.l.b16 %v188
    %v418 = vunpack.c.l.b16 %v189
    %v419 = vunpack.c.l.b16 %v190
    %v420 = vunpack.c.l.b16 %v191
    %v421 = vunpack.c.l.b16 %v192
    %v422 = vunpack.c.l.b16 %v193
    %v423 = vunpack.c.l.b16 %v194
    %v424 = vunpack.c.l.b16 %v195
    %v425 = vunpack.c.l.b16 %v196
    %v426 = vunpack.c.l.b16 %v197
    %v427 = vunpack.c.l.b16 %v198
    %v428 = vunpack.c.l.b16 %v199
    %v429 = vunpack.c.l.b16 %v200
    %v430 = vunpack.c.l.b16 %v201
    %v431 = vunpack.c.l.b16 %v202
    %v432 = vunpack.c.l.b16 %v203
    %v433 = vunpack.c.l.b16 %v204
    %v434 = vpack.c.b16 %v321, %v320
    %v435 = vpack.c.b16 %v323, %v322
    %v436 = vpack.c.b16 %v325, %v324
    %v437 = vpack.c.b16 %v327, %v326
    %v438 = vpack.c.b16 %v329, %v328
    %v439 = vpack.c.b16 %v331, %v330
    %v440 = vpack.c.b16 %v333, %v332
    %v441 = vpack.c.b16 %v335, %v334
    %v442 = vpack.c.b16 %v337, %v336
    %v443 = vpack.c.b16 %v339, %v338
    %v444 = vpack.c.b16 %v341, %v340
    %v445 = vpack.c.b16 %v343, %v342
    %v446 = vpack.c.b16 %v345, %v344
    %v447 = vpack.c.b16 %v347, %v346
    %v448 = vpack.c.b16 %v349, %v348
    %v449 = vpack.c.b16 %v351, %v350
    %v450 = vpack.c.b16 %v353, %v352
    %v451 = vpack.c.b16 %v355, %v354
    %v452 = vpack.c.b16 %v357, %v356
    %v453 = vpack.c.b16 %v359, %v358
    %v454 = vpack.c.b16 %v361, %v360
    %v455 = vpack.c.b16 %v363, %v362
    %v456 = vpack.c.b16 %v365, %v364
    %v457 = vpack.c.b16 %v367, %v366
    %v458 = vpack.c.b16 %v369, %v368
    %v459 = vpack.c.b16 %v371, %v370
    %v460 = vpack.c.b16 %v373, %v372
    %v461 = vpack.c.b16 %v375, %v374
    %v462 = vpack.c.b16 %v377, %v376
    %v463 = vpack.c.b16 %v379, %v378
    %v464 = vpack.c.b16 %v381, %v380
    %v465 = vpack.c.b16 %v383, %v382
    %v466 = vpack.c.b16 %v385, %v384
    %v467 = vpack.c.b16 %v387, %v386
    %v468 = vpack.c.b16 %v389, %v388
    %v469 = vpack.c.b16 %v391, %v390
    %v470 = vpack.c.b16 %v393, %v392
    %v471 = vpack.c.b16 %v395, %v394
    %v472 = vpack.c.b16 %v397, %v396
    %v473 = vpack.c.b16 %v399, %v398
    %v474 = vpack.c.b16 %v401, %v400
    %v475 = vpack.c.b16 %v403, %v402
    %v476 = vpack.c.b16 %v405, %v404
    %v477 = vpack.c.b16 %v407, %v406
    %v478 = vpack.c.b16 %v409, %v408
    %v479 = vpack.c.b16 %v411, %v410
    %v480 = vpack.c.b16 %v413, %v412
    %v481 = vpack.c.b16 %v415, %v414
    %v482 = vpack.c.b16 %v417, %v416
    %v483 = vpack.c.b16 %v419, %v418
    %v484 = vpack.c.b16 %v421, %v420
    %v485 = vpack.c.b16 %v423, %v422
    %v486 = vpack.c.b16 %v425, %v424
    %v487 = vpack.c.b16 %v427, %v426
    %v488 = vpack.c.b16 %v429, %v428
    %v489 = vpack.c.b16 %v431, %v430
    %v490 = vpack.c.b16 %v433, %v432
    %v492 = vunpack.c.l.b16 %v205
    %v493 = vpack.c.b16 %v492, %v492
    %vm494 = vsmask.f32 7424
    %v496 = vshrl.u32 %v434, 16
    %v498 = vshll.u32 %v434, 16
    %v500 = vrot.slane %v498, 1
    %v501 = vor.u32 %v496, %v500
    %v503 = vshll.u32 %v435, 16
    %v505 = vrot.slane %v503, 1
    %v506 = vsel %vm494, %v501, %v505
    %v507 = vshrl.u32 %v435, 16
    %v509 = vor.u32 %v507, %v505
    %v511 = vshll.u32 %v436, 16
    %v513 = vrot.slane %v511, 1
    %v514 = vsel %vm494, %v509, %v513
    %v515 = vshrl.u32 %v436, 16
    %v517 = vor.u32 %v515, %v513
    %v519 = vshll.u32 %v437, 16
    %v521 = vrot.slane %v519, 1
    %v522 = vsel %vm494, %v517, %v521
    %v523 = vshrl.u32 %v437, 16
    %v525 = vor.u32 %v523, %v521
    %v527 = vshll.u32 %v438, 16
    %v529 = vrot.slane %v527, 1
    %v530 = vsel %vm494, %v525, %v529
    %v531 = vshrl.u32 %v438, 16
    %v533 = vor.u32 %v531, %v529
    %v535 = vshll.u32 %v439, 16
    %v537 = vrot.slane %v535, 1
    %v538 = vsel %vm494, %v533, %v537
    %v539 = vshrl.u32 %v439, 16
    %v541 = vor.u32 %v539, %v537
    %v543 = vshll.u32 %v440, 16
    %v545 = vrot.slane %v543, 1
    %v546 = vsel %vm494, %v541, %v545
    %v547 = vshrl.u32 %v440, 16
    %v549 = vor.u32 %v547, %v545
    %v551 = vshll.u32 %v441, 16
    %v553 = vrot.slane %v551, 1
    %v554 = vsel %vm494, %v549, %v553
    %v555 = vshrl.u32 %v441, 16
    %v557 = vor.u32 %v555, %v553
    %v559 = vshll.u32 %v442, 16
    %v561 = vrot.slane %v559, 1
    %v562 = vsel %vm494, %v557, %v561
    %v563 = vshrl.u32 %v442, 16
    %v565 = vor.u32 %v563, %v561
    %v567 = vshll.u32 %v443, 16
    %v569 = vrot.slane %v567, 1
    %v570 = vsel %vm494, %v565, %v569
    %v571 = vshrl.u32 %v443, 16
    %v573 = vor.u32 %v571, %v569
    %v575 = vshll.u32 %v444, 16
    %v577 = vrot.slane %v575, 1
    %v578 = vsel %vm494, %v573, %v577
    %v579 = vshrl.u32 %v444, 16
    %v581 = vor.u32 %v579, %v577
    %v583 = vshll.u32 %v445, 16
    %v585 = vrot.slane %v583, 1
    %v586 = vsel %vm494, %v581, %v585
    %v587 = vshrl.u32 %v445, 16
    %v589 = vor.u32 %v587, %v585
    %v591 = vshll.u32 %v446, 16
    %v593 = vrot.slane %v591, 1
    %v594 = vsel %vm494, %v589, %v593
    %v595 = vshrl.u32 %v446, 16
    %v597 = vor.u32 %v595, %v593
    %v599 = vshll.u32 %v447, 16
    %v601 = vrot.slane %v599, 1
    %v602 = vsel %vm494, %v597, %v601
    %v603 = vshrl.u32 %v447, 16
    %v605 = vor.u32 %v603, %v601
    %v607 = vshll.u32 %v448, 16
    %v609 = vrot.slane %v607, 1
    %v610 = vsel %vm494, %v605, %v609
    %v611 = vshrl.u32 %v448, 16
    %v613 = vor.u32 %v611, %v609
    %v615 = vshll.u32 %v449, 16
    %v617 = vrot.slane %v615, 1
    %v618 = vsel %vm494, %v613, %v617
    %v619 = vshrl.u32 %v449, 16
    %v621 = vor.u32 %v619, %v617
    %v623 = vshll.u32 %v450, 16
    %v625 = vrot.slane %v623, 1
    %v626 = vsel %vm494, %v621, %v625
    %v627 = vshrl.u32 %v450, 16
    %v629 = vor.u32 %v627, %v625
    %v631 = vshll.u32 %v451, 16
    %v633 = vrot.slane %v631, 1
    %v634 = vsel %vm494, %v629, %v633
    %v635 = vshrl.u32 %v451, 16
    %v637 = vor.u32 %v635, %v633
    %v639 = vshll.u32 %v452, 16
    %v641 = vrot.slane %v639, 1
    %v642 = vsel %vm494, %v637, %v641
    %v643 = vshrl.u32 %v452, 16
    %v645 = vor.u32 %v643, %v641
    %v647 = vshll.u32 %v453, 16
    %v649 = vrot.slane %v647, 1
    %v650 = vsel %vm494, %v645, %v649
    %v651 = vshrl.u32 %v453, 16
    %v653 = vor.u32 %v651, %v649
    %v655 = vshll.u32 %v454, 16
    %v657 = vrot.slane %v655, 1
    %v658 = vsel %vm494, %v653, %v657
    %v659 = vshrl.u32 %v454, 16
    %v661 = vor.u32 %v659, %v657
    %v663 = vshll.u32 %v455, 16
    %v665 = vrot.slane %v663, 1
    %v666 = vsel %vm494, %v661, %v665
    %v667 = vshrl.u32 %v455, 16
    %v669 = vor.u32 %v667, %v665
    %v671 = vshll.u32 %v456, 16
    %v673 = vrot.slane %v671, 1
    %v674 = vsel %vm494, %v669, %v673
    %v675 = vshrl.u32 %v456, 16
    %v677 = vor.u32 %v675, %v673
    %v679 = vshll.u32 %v457, 16
    %v681 = vrot.slane %v679, 1
    %v682 = vsel %vm494, %v677, %v681
    %v683 = vshrl.u32 %v457, 16
    %v685 = vor.u32 %v683, %v681
    %v687 = vshll.u32 %v458, 16
    %v689 = vrot.slane %v687, 1
    %v690 = vsel %vm494, %v685, %v689
    %v691 = vshrl.u32 %v458, 16
    %v693 = vor.u32 %v691, %v689
    %v695 = vshll.u32 %v459, 16
    %v697 = vrot.slane %v695, 1
    %v698 = vsel %vm494, %v693, %v697
    %v699 = vshrl.u32 %v459, 16
    %v701 = vor.u32 %v699, %v697
    %v703 = vshll.u32 %v460, 16
    %v705 = vrot.slane %v703, 1
    %v706 = vsel %vm494, %v701, %v705
    %v707 = vshrl.u32 %v460, 16
    %v709 = vor.u32 %v707, %v705
    %v711 = vshll.u32 %v461, 16
    %v713 = vrot.slane %v711, 1
    %v714 = vsel %vm494, %v709, %v713
    %v715 = vshrl.u32 %v461, 16
    %v717 = vor.u32 %v715, %v713
    %v719 = vshll.u32 %v462, 16
    %v721 = vrot.slane %v719, 1
    %v722 = vsel %vm494, %v717, %v721
    %v723 = vshrl.u32 %v462, 16
    %v725 = vor.u32 %v723, %v721
    %v727 = vshll.u32 %v463, 16
    %v729 = vrot.slane %v727, 1
    %v730 = vsel %vm494, %v725, %v729
    %v731 = vshrl.u32 %v463, 16
    %v733 = vor.u32 %v731, %v729
    %v735 = vshll.u32 %v464, 16
    %v737 = vrot.slane %v735, 1
    %v738 = vsel %vm494, %v733, %v737
    %v739 = vshrl.u32 %v464, 16
    %v741 = vor.u32 %v739, %v737
    %v743 = vshll.u32 %v465, 16
    %v745 = vrot.slane %v743, 1
    %v746 = vsel %vm494, %v741, %v745
    %v747 = vshrl.u32 %v465, 16
    %v749 = vor.u32 %v747, %v745
    %v751 = vshll.u32 %v466, 16
    %v753 = vrot.slane %v751, 1
    %v754 = vsel %vm494, %v749, %v753
    %v755 = vshrl.u32 %v466, 16
    %v757 = vor.u32 %v755, %v753
    %v759 = vshll.u32 %v467, 16
    %v761 = vrot.slane %v759, 1
    %v762 = vsel %vm494, %v757, %v761
    %v763 = vshrl.u32 %v467, 16
    %v765 = vor.u32 %v763, %v761
    %v767 = vshll.u32 %v468, 16
    %v769 = vrot.slane %v767, 1
    %v770 = vsel %vm494, %v765, %v769
    %v771 = vshrl.u32 %v468, 16
    %v773 = vor.u32 %v771, %v769
    %v775 = vshll.u32 %v469, 16
    %v777 = vrot.slane %v775, 1
    %v778 = vsel %vm494, %v773, %v777
    %v779 = vshrl.u32 %v469, 16
    %v781 = vor.u32 %v779, %v777
    %v783 = vshll.u32 %v470, 16
    %v785 = vrot.slane %v783, 1
    %v786 = vsel %vm494, %v781, %v785
    %v787 = vshrl.u32 %v470, 16
    %v789 = vor.u32 %v787, %v785
    %v791 = vshll.u32 %v471, 16
    %v793 = vrot.slane %v791, 1
    %v794 = vsel %vm494, %v789, %v793
    %v795 = vshrl.u32 %v471, 16
    %v797 = vor.u32 %v795, %v793
    %v799 = vshll.u32 %v472, 16
    %v801 = vrot.slane %v799, 1
    %v802 = vsel %vm494, %v797, %v801
    %v803 = vshrl.u32 %v472, 16
    %v805 = vor.u32 %v803, %v801
    %v807 = vshll.u32 %v473, 16
    %v809 = vrot.slane %v807, 1
    %v810 = vsel %vm494, %v805, %v809
    %v811 = vshrl.u32 %v473, 16
    %v813 = vor.u32 %v811, %v809
    %v815 = vshll.u32 %v474, 16
    %v817 = vrot.slane %v815, 1
    %v818 = vsel %vm494, %v813, %v817
    %v819 = vshrl.u32 %v474, 16
    %v821 = vor.u32 %v819, %v817
    %v823 = vshll.u32 %v475, 16
    %v825 = vrot.slane %v823, 1
    %v826 = vsel %vm494, %v821, %v825
    %v827 = vshrl.u32 %v475, 16
    %v829 = vor.u32 %v827, %v825
    %v831 = vshll.u32 %v476, 16
    %v833 = vrot.slane %v831, 1
    %v834 = vsel %vm494, %v829, %v833
    %v835 = vshrl.u32 %v476, 16
    %v837 = vor.u32 %v835, %v833
    %v839 = vshll.u32 %v477, 16
    %v841 = vrot.slane %v839, 1
    %v842 = vsel %vm494, %v837, %v841
    %v843 = vshrl.u32 %v477, 16
    %v845 = vor.u32 %v843, %v841
    %v847 = vshll.u32 %v478, 16
    %v849 = vrot.slane %v847, 1
    %v850 = vsel %vm494, %v845, %v849
    %v851 = vshrl.u32 %v478, 16
    %v853 = vor.u32 %v851, %v849
    %v855 = vshll.u32 %v479, 16
    %v857 = vrot.slane %v855, 1
    %v858 = vsel %vm494, %v853, %v857
    %v859 = vshrl.u32 %v479, 16
    %v861 = vor.u32 %v859, %v857
    %v863 = vshll.u32 %v480, 16
    %v865 = vrot.slane %v863, 1
    %v866 = vsel %vm494, %v861, %v865
    %v867 = vshrl.u32 %v480, 16
    %v869 = vor.u32 %v867, %v865
    %v871 = vshll.u32 %v481, 16
    %v873 = vrot.slane %v871, 1
    %v874 = vsel %vm494, %v869, %v873
    %v875 = vshrl.u32 %v481, 16
    %v877 = vor.u32 %v875, %v873
    %v879 = vshll.u32 %v482, 16
    %v881 = vrot.slane %v879, 1
    %v882 = vsel %vm494, %v877, %v881
    %v883 = vshrl.u32 %v482, 16
    %v885 = vor.u32 %v883, %v881
    %v887 = vshll.u32 %v483, 16
    %v889 = vrot.slane %v887, 1
    %v890 = vsel %vm494, %v885, %v889
    %v891 = vshrl.u32 %v483, 16
    %v893 = vor.u32 %v891, %v889
    %v895 = vshll.u32 %v484, 16
    %v897 = vrot.slane %v895, 1
    %v898 = vsel %vm494, %v893, %v897
    %v899 = vshrl.u32 %v484, 16
    %v901 = vor.u32 %v899, %v897
    %v903 = vshll.u32 %v485, 16
    %v905 = vrot.slane %v903, 1
    %v906 = vsel %vm494, %v901, %v905
    %v907 = vshrl.u32 %v485, 16
    %v909 = vor.u32 %v907, %v905
    %v911 = vshll.u32 %v486, 16
    %v913 = vrot.slane %v911, 1
    %v914 = vsel %vm494, %v909, %v913
    %v915 = vshrl.u32 %v486, 16
    %v917 = vor.u32 %v915, %v913
    %v919 = vshll.u32 %v487, 16
    %v921 = vrot.slane %v919, 1
    %v922 = vsel %vm494, %v917, %v921
    %v923 = vshrl.u32 %v487, 16
    %v925 = vor.u32 %v923, %v921
    %v927 = vshll.u32 %v488, 16
    %v929 = vrot.slane %v927, 1
    %v930 = vsel %vm494, %v925, %v929
    %v931 = vshrl.u32 %v488, 16
    %v933 = vor.u32 %v931, %v929
    %v935 = vshll.u32 %v489, 16
    %v937 = vrot.slane %v935, 1
    %v938 = vsel %vm494, %v933, %v937
    %v939 = vshrl.u32 %v489, 16
    %v941 = vor.u32 %v939, %v937
    %v943 = vshll.u32 %v490, 16
    %v945 = vrot.slane %v943, 1
    %v946 = vsel %vm494, %v941, %v945
    %v947 = vshrl.u32 %v490, 16
    %v949 = vor.u32 %v947, %v945
    %v951 = vshll.u32 %v493, 16
    %v953 = vrot.slane %v951, 1
    %v954 = vsel %vm494, %v949, %v953
    %955 = vrot.lane.b32.xlu0 %v506, 64
    %v956 = vpop.permute.xlu0 %955
    %957 = vrot.lane.b32.xlu0 %v514, 64
    %v958 = vpop.permute.xlu0 %957
    %959 = vrot.lane.b32.xlu0 %v522, 64
    %v960 = vpop.permute.xlu0 %959
    %961 = vrot.lane.b32.xlu0 %v530, 64
    %v962 = vpop.permute.xlu0 %961
    %963 = vrot.lane.b32.xlu0 %v538, 64
    %v964 = vpop.permute.xlu0 %963
    %965 = vrot.lane.b32.xlu0 %v546, 64
    %v966 = vpop.permute.xlu0 %965
    %967 = vrot.lane.b32.xlu0 %v554, 64
    %v968 = vpop.permute.xlu0 %967
    %969 = vrot.lane.b32.xlu0 %v562, 64
    %v970 = vpop.permute.xlu0 %969
    %971 = vrot.lane.b32.xlu0 %v570, 64
    %v972 = vpop.permute.xlu0 %971
    %973 = vrot.lane.b32.xlu0 %v578, 64
    %v974 = vpop.permute.xlu0 %973
    %975 = vrot.lane.b32.xlu0 %v586, 64
    %v976 = vpop.permute.xlu0 %975
    %977 = vrot.lane.b32.xlu0 %v594, 64
    %v978 = vpop.permute.xlu0 %977
    %979 = vrot.lane.b32.xlu0 %v602, 64
    %v980 = vpop.permute.xlu0 %979
    %981 = vrot.lane.b32.xlu0 %v610, 64
    %v982 = vpop.permute.xlu0 %981
    %983 = vrot.lane.b32.xlu0 %v618, 64
    %v984 = vpop.permute.xlu0 %983
    %985 = vrot.lane.b32.xlu0 %v626, 64
    %v986 = vpop.permute.xlu0 %985
    %987 = vrot.lane.b32.xlu0 %v634, 64
    %v988 = vpop.permute.xlu0 %987
    %989 = vrot.lane.b32.xlu0 %v642, 64
    %v990 = vpop.permute.xlu0 %989
    %991 = vrot.lane.b32.xlu0 %v650, 64
    %v992 = vpop.permute.xlu0 %991
    %993 = vrot.lane.b32.xlu0 %v658, 64
    %v994 = vpop.permute.xlu0 %993
    %995 = vrot.lane.b32.xlu0 %v666, 64
    %v996 = vpop.permute.xlu0 %995
    %997 = vrot.lane.b32.xlu0 %v674, 64
    %v998 = vpop.permute.xlu0 %997
    %999 = vrot.lane.b32.xlu0 %v682, 64
    %v1000 = vpop.permute.xlu0 %999
    %1001 = vrot.lane.b32.xlu0 %v690, 64
    %v1002 = vpop.permute.xlu0 %1001
    %1003 = vrot.lane.b32.xlu0 %v698, 64
    %v1004 = vpop.permute.xlu0 %1003
    %1005 = vrot.lane.b32.xlu0 %v706, 64
    %v1006 = vpop.permute.xlu0 %1005
    %1007 = vrot.lane.b32.xlu0 %v714, 64
    %v1008 = vpop.permute.xlu0 %1007
    %1009 = vrot.lane.b32.xlu0 %v722, 64
    %v1010 = vpop.permute.xlu0 %1009
    %1011 = vrot.lane.b32.xlu0 %v730, 64
    %v1012 = vpop.permute.xlu0 %1011
    %1013 = vrot.lane.b32.xlu0 %v738, 64
    %v1014 = vpop.permute.xlu0 %1013
    %1015 = vrot.lane.b32.xlu0 %v746, 64
    %v1016 = vpop.permute.xlu0 %1015
    %1017 = vrot.lane.b32.xlu0 %v754, 64
    %v1018 = vpop.permute.xlu0 %1017
    %1019 = vrot.lane.b32.xlu0 %v762, 64
    %v1020 = vpop.permute.xlu0 %1019
    %1021 = vrot.lane.b32.xlu0 %v770, 64
    %v1022 = vpop.permute.xlu0 %1021
    %1023 = vrot.lane.b32.xlu0 %v778, 64
    %v1024 = vpop.permute.xlu0 %1023
    %1025 = vrot.lane.b32.xlu0 %v786, 64
    %v1026 = vpop.permute.xlu0 %1025
    %1027 = vrot.lane.b32.xlu0 %v794, 64
    %v1028 = vpop.permute.xlu0 %1027
    %1029 = vrot.lane.b32.xlu0 %v802, 64
    %v1030 = vpop.permute.xlu0 %1029
    %1031 = vrot.lane.b32.xlu0 %v810, 64
    %v1032 = vpop.permute.xlu0 %1031
    %1033 = vrot.lane.b32.xlu0 %v818, 64
    %v1034 = vpop.permute.xlu0 %1033
    %1035 = vrot.lane.b32.xlu0 %v826, 64
    %v1036 = vpop.permute.xlu0 %1035
    %1037 = vrot.lane.b32.xlu0 %v834, 64
    %v1038 = vpop.permute.xlu0 %1037
    %1039 = vrot.lane.b32.xlu0 %v842, 64
    %v1040 = vpop.permute.xlu0 %1039
    %1041 = vrot.lane.b32.xlu0 %v850, 64
    %v1042 = vpop.permute.xlu0 %1041
    %1043 = vrot.lane.b32.xlu0 %v858, 64
    %v1044 = vpop.permute.xlu0 %1043
    %1045 = vrot.lane.b32.xlu0 %v866, 64
    %v1046 = vpop.permute.xlu0 %1045
    %1047 = vrot.lane.b32.xlu0 %v874, 64
    %v1048 = vpop.permute.xlu0 %1047
    %1049 = vrot.lane.b32.xlu0 %v882, 64
    %v1050 = vpop.permute.xlu0 %1049
    %1051 = vrot.lane.b32.xlu0 %v890, 64
    %v1052 = vpop.permute.xlu0 %1051
    %1053 = vrot.lane.b32.xlu0 %v898, 64
    %v1054 = vpop.permute.xlu0 %1053
    %1055 = vrot.lane.b32.xlu0 %v906, 64
    %v1056 = vpop.permute.xlu0 %1055
    %1057 = vrot.lane.b32.xlu0 %v914, 64
    %v1058 = vpop.permute.xlu0 %1057
    %1059 = vrot.lane.b32.xlu0 %v922, 64
    %v1060 = vpop.permute.xlu0 %1059
    %1061 = vrot.lane.b32.xlu0 %v930, 64
    %v1062 = vpop.permute.xlu0 %1061
    %1063 = vrot.lane.b32.xlu0 %v938, 64
    %v1064 = vpop.permute.xlu0 %1063
    %1065 = vrot.lane.b32.xlu0 %v946, 64
    %v1066 = vpop.permute.xlu0 %1065
    %1067 = vrot.lane.b32.xlu0 %v954, 64
    %v1068 = vpop.permute.xlu0 %1067
    %vm1069 = vcmask 1046528
    %v1070 = vrot.slane %v434, 1
    %v1071 = vrot.slane %v435, 1
    %v1072 = vsel %vm1069, %v1070, %v1071
    %v1073 = vrot.slane %v436, 1
    %v1074 = vsel %vm1069, %v1071, %v1073
    %v1075 = vrot.slane %v437, 1
    %v1076 = vsel %vm1069, %v1073, %v1075
    %v1077 = vrot.slane %v438, 1
    %v1078 = vsel %vm1069, %v1075, %v1077
    %v1079 = vrot.slane %v439, 1
    %v1080 = vsel %vm1069, %v1077, %v1079
    %v1081 = vrot.slane %v440, 1
    %v1082 = vsel %vm1069, %v1079, %v1081
    %v1083 = vrot.slane %v441, 1
    %v1084 = vsel %vm1069, %v1081, %v1083
    %v1085 = vrot.slane %v442, 1
    %v1086 = vsel %vm1069, %v1083, %v1085
    %v1087 = vrot.slane %v443, 1
    %v1088 = vsel %vm1069, %v1085, %v1087
    %v1089 = vrot.slane %v444, 1
    %v1090 = vsel %vm1069, %v1087, %v1089
    %v1091 = vrot.slane %v445, 1
    %v1092 = vsel %vm1069, %v1089, %v1091
    %v1093 = vrot.slane %v446, 1
    %v1094 = vsel %vm1069, %v1091, %v1093
    %v1095 = vrot.slane %v447, 1
    %v1096 = vsel %vm1069, %v1093, %v1095
    %v1097 = vrot.slane %v448, 1
    %v1098 = vsel %vm1069, %v1095, %v1097
    %v1099 = vrot.slane %v449, 1
    %v1100 = vsel %vm1069, %v1097, %v1099
    %v1101 = vrot.slane %v450, 1
    %v1102 = vsel %vm1069, %v1099, %v1101
    %v1103 = vrot.slane %v451, 1
    %v1104 = vsel %vm1069, %v1101, %v1103
    %v1105 = vrot.slane %v452, 1
    %v1106 = vsel %vm1069, %v1103, %v1105
    %v1107 = vrot.slane %v453, 1
    %v1108 = vsel %vm1069, %v1105, %v1107
    %v1109 = vrot.slane %v454, 1
    %v1110 = vsel %vm1069, %v1107, %v1109
    %v1111 = vrot.slane %v455, 1
    %v1112 = vsel %vm1069, %v1109, %v1111
    %v1113 = vrot.slane %v456, 1
    %v1114 = vsel %vm1069, %v1111, %v1113
    %v1115 = vrot.slane %v457, 1
    %v1116 = vsel %vm1069, %v1113, %v1115
    %v1117 = vrot.slane %v458, 1
    %v1118 = vsel %vm1069, %v1115, %v1117
    %v1119 = vrot.slane %v459, 1
    %v1120 = vsel %vm1069, %v1117, %v1119
    %v1121 = vrot.slane %v460, 1
    %v1122 = vsel %vm1069, %v1119, %v1121
    %v1123 = vrot.slane %v461, 1
    %v1124 = vsel %vm1069, %v1121, %v1123
    %v1125 = vrot.slane %v462, 1
    %v1126 = vsel %vm1069, %v1123, %v1125
    %v1127 = vrot.slane %v463, 1
    %v1128 = vsel %vm1069, %v1125, %v1127
    %v1129 = vrot.slane %v464, 1
    %v1130 = vsel %vm1069, %v1127, %v1129
    %v1131 = vrot.slane %v465, 1
    %v1132 = vsel %vm1069, %v1129, %v1131
    %v1133 = vrot.slane %v466, 1
    %v1134 = vsel %vm1069, %v1131, %v1133
    %v1135 = vrot.slane %v467, 1
    %v1136 = vsel %vm1069, %v1133, %v1135
    %v1137 = vrot.slane %v468, 1
    %v1138 = vsel %vm1069, %v1135, %v1137
    %v1139 = vrot.slane %v469, 1
    %v1140 = vsel %vm1069, %v1137, %v1139
    %v1141 = vrot.slane %v470, 1
    %v1142 = vsel %vm1069, %v1139, %v1141
    %v1143 = vrot.slane %v471, 1
    %v1144 = vsel %vm1069, %v1141, %v1143
    %v1145 = vrot.slane %v472, 1
    %v1146 = vsel %vm1069, %v1143, %v1145
    %v1147 = vrot.slane %v473, 1
    %v1148 = vsel %vm1069, %v1145, %v1147
    %v1149 = vrot.slane %v474, 1
    %v1150 = vsel %vm1069, %v1147, %v1149
    %v1151 = vrot.slane %v475, 1
    %v1152 = vsel %vm1069, %v1149, %v1151
    %v1153 = vrot.slane %v476, 1
    %v1154 = vsel %vm1069, %v1151, %v1153
    %v1155 = vrot.slane %v477, 1
    %v1156 = vsel %vm1069, %v1153, %v1155
    %v1157 = vrot.slane %v478, 1
    %v1158 = vsel %vm1069, %v1155, %v1157
    %v1159 = vrot.slane %v479, 1
    %v1160 = vsel %vm1069, %v1157, %v1159
    %v1161 = vrot.slane %v480, 1
    %v1162 = vsel %vm1069, %v1159, %v1161
    %v1163 = vrot.slane %v481, 1
    %v1164 = vsel %vm1069, %v1161, %v1163
    %v1165 = vrot.slane %v482, 1
    %v1166 = vsel %vm1069, %v1163, %v1165
    %v1167 = vrot.slane %v483, 1
    %v1168 = vsel %vm1069, %v1165, %v1167
    %v1169 = vrot.slane %v484, 1
    %v1170 = vsel %vm1069, %v1167, %v1169
    %v1171 = vrot.slane %v485, 1
    %v1172 = vsel %vm1069, %v1169, %v1171
    %v1173 = vrot.slane %v486, 1
    %v1174 = vsel %vm1069, %v1171, %v1173
    %v1175 = vrot.slane %v487, 1
    %v1176 = vsel %vm1069, %v1173, %v1175
    %v1177 = vrot.slane %v488, 1
    %v1178 = vsel %vm1069, %v1175, %v1177
    %v1179 = vrot.slane %v489, 1
    %v1180 = vsel %vm1069, %v1177, %v1179
    %v1181 = vrot.slane %v490, 1
    %v1182 = vsel %vm1069, %v1179, %v1181
    %v1183 = vrot.slane %v493, 1
    %v1184 = vsel %vm1069, %v1181, %v1183
    %vm1242 = vcmask 523264
    %v1244 = vsel %vm1242, %v434, %v956
    %v1247 = vsel %vm1242, %v435, %v958
    %v1250 = vsel %vm1242, %v436, %v960
    %v1253 = vsel %vm1242, %v437, %v962
    %v1256 = vsel %vm1242, %v438, %v964
    %v1259 = vsel %vm1242, %v439, %v966
    %v1262 = vsel %vm1242, %v440, %v968
    %v1265 = vsel %vm1242, %v441, %v970
    %v1268 = vsel %vm1242, %v442, %v972
    %v1271 = vsel %vm1242, %v443, %v974
    %v1274 = vsel %vm1242, %v444, %v976
    %v1277 = vsel %vm1242, %v445, %v978
    %v1280 = vsel %vm1242, %v446, %v980
    %v1283 = vsel %vm1242, %v447, %v982
    %v1286 = vsel %vm1242, %v448, %v984
    %v1289 = vsel %vm1242, %v449, %v986
    %v1292 = vsel %vm1242, %v450, %v988
    %v1295 = vsel %vm1242, %v451, %v990
    %v1298 = vsel %vm1242, %v452, %v992
    %v1301 = vsel %vm1242, %v453, %v994
    %v1304 = vsel %vm1242, %v454, %v996
    %v1307 = vsel %vm1242, %v455, %v998
    %v1310 = vsel %vm1242, %v456, %v1000
    %v1313 = vsel %vm1242, %v457, %v1002
    %v1316 = vsel %vm1242, %v458, %v1004
    %v1319 = vsel %vm1242, %v459, %v1006
    %v1322 = vsel %vm1242, %v460, %v1008
    %v1325 = vsel %vm1242, %v461, %v1010
    %v1328 = vsel %vm1242, %v462, %v1012
    %v1331 = vsel %vm1242, %v463, %v1014
    %v1334 = vsel %vm1242, %v464, %v1016
    %v1337 = vsel %vm1242, %v465, %v1018
    %v1340 = vsel %vm1242, %v466, %v1020
    %v1343 = vsel %vm1242, %v467, %v1022
    %v1346 = vsel %vm1242, %v468, %v1024
    %v1349 = vsel %vm1242, %v469, %v1026
    %v1352 = vsel %vm1242, %v470, %v1028
    %v1355 = vsel %vm1242, %v471, %v1030
    %v1358 = vsel %vm1242, %v472, %v1032
    %v1361 = vsel %vm1242, %v473, %v1034
    %v1364 = vsel %vm1242, %v474, %v1036
    %v1367 = vsel %vm1242, %v475, %v1038
    %v1370 = vsel %vm1242, %v476, %v1040
    %v1373 = vsel %vm1242, %v477, %v1042
    %v1376 = vsel %vm1242, %v478, %v1044
    %v1379 = vsel %vm1242, %v479, %v1046
    %v1382 = vsel %vm1242, %v480, %v1048
    %v1385 = vsel %vm1242, %v481, %v1050
    %v1388 = vsel %vm1242, %v482, %v1052
    %v1391 = vsel %vm1242, %v483, %v1054
    %v1394 = vsel %vm1242, %v484, %v1056
    %v1397 = vsel %vm1242, %v485, %v1058
    %v1400 = vsel %vm1242, %v486, %v1060
    %v1403 = vsel %vm1242, %v487, %v1062
    %v1406 = vsel %vm1242, %v488, %v1064
    %v1409 = vsel %vm1242, %v489, %v1066
    %v1412 = vsel %vm1242, %v490, %v1068
    %1414 = vst [vmem:[#allocation2] sm:$0xff] %v1244
    %1415 = vst.msk [vmem:[#allocation2 + $0x8] sm:$0xff] %vm1242, %v1072
    %1416 = vst [vmem:[#allocation2 + $0x10] sm:$0xff] %v1247
    %1417 = vst.msk [vmem:[#allocation2 + $0x18] sm:$0xff] %vm1242, %v1074
    %1418 = vst [vmem:[#allocation2 + $0x20] sm:$0xff] %v1250
    %1419 = vst.msk [vmem:[#allocation2 + $0x28] sm:$0xff] %vm1242, %v1076
    %1420 = vst [vmem:[#allocation2 + $0x30] sm:$0xff] %v1253
    %1421 = vst.msk [vmem:[#allocation2 + $0x38] sm:$0xff] %vm1242, %v1078
    %1422 = vst [vmem:[#allocation2 + $0x40] sm:$0xff] %v1256
    %1423 = vst.msk [vmem:[#allocation2 + $0x48] sm:$0xff] %vm1242, %v1080
    %1424 = vst [vmem:[#allocation2 + $0x50] sm:$0xff] %v1259
    %1425 = vst.msk [vmem:[#allocation2 + $0x58] sm:$0xff] %vm1242, %v1082
    %1426 = vst [vmem:[#allocation2 + $0x60] sm:$0xff] %v1262
    %1427 = vst.msk [vmem:[#allocation2 + $0x68] sm:$0xff] %vm1242, %v1084
    %1428 = vst [vmem:[#allocation2 + $0x70] sm:$0xff] %v1265
    %1429 = vst.msk [vmem:[#allocation2 + $0x78] sm:$0xff] %vm1242, %v1086
    %1430 = vst [vmem:[#allocation2 + $0x80] sm:$0xff] %v1268
    %1431 = vst.msk [vmem:[#allocation2 + $0x88] sm:$0xff] %vm1242, %v1088
    %1432 = vst [vmem:[#allocation2 + $0x90] sm:$0xff] %v1271
    %1433 = vst.msk [vmem:[#allocation2 + $0x98] sm:$0xff] %vm1242, %v1090
    %1434 = vst [vmem:[#allocation2 + $0xa0] sm:$0xff] %v1274
    %1435 = vst.msk [vmem:[#allocation2 + $0xa8] sm:$0xff] %vm1242, %v1092
    %1436 = vst [vmem:[#allocation2 + $0xb0] sm:$0xff] %v1277
    %1437 = vst.msk [vmem:[#allocation2 + $0xb8] sm:$0xff] %vm1242, %v1094
    %1438 = vst [vmem:[#allocation2 + $0xc0] sm:$0xff] %v1280
    %1439 = vst.msk [vmem:[#allocation2 + $0xc8] sm:$0xff] %vm1242, %v1096
    %1440 = vst [vmem:[#allocation2 + $0xd0] sm:$0xff] %v1283
    %1441 = vst.msk [vmem:[#allocation2 + $0xd8] sm:$0xff] %vm1242, %v1098
    %1442 = vst [vmem:[#allocation2 + $0xe0] sm:$0xff] %v1286
    %1443 = vst.msk [vmem:[#allocation2 + $0xe8] sm:$0xff] %vm1242, %v1100
    %1444 = vst [vmem:[#allocation2 + $0xf0] sm:$0xff] %v1289
    %1445 = vst.msk [vmem:[#allocation2 + $0xf8] sm:$0xff] %vm1242, %v1102
    %1446 = vst [vmem:[#allocation2 + $0x100] sm:$0xff] %v1292
    %1447 = vst.msk [vmem:[#allocation2 + $0x108] sm:$0xff] %vm1242, %v1104
    %1448 = vst [vmem:[#allocation2 + $0x110] sm:$0xff] %v1295
    %1449 = vst.msk [vmem:[#allocation2 + $0x118] sm:$0xff] %vm1242, %v1106
    %1450 = vst [vmem:[#allocation2 + $0x120] sm:$0xff] %v1298
    %1451 = vst.msk [vmem:[#allocation2 + $0x128] sm:$0xff] %vm1242, %v1108
    %1452 = vst [vmem:[#allocation2 + $0x130] sm:$0xff] %v1301
    %1453 = vst.msk [vmem:[#allocation2 + $0x138] sm:$0xff] %vm1242, %v1110
    %1454 = vst [vmem:[#allocation2 + $0x140] sm:$0xff] %v1304
    %1455 = vst.msk [vmem:[#allocation2 + $0x148] sm:$0xff] %vm1242, %v1112
    %1456 = vst [vmem:[#allocation2 + $0x150] sm:$0xff] %v1307
    %1457 = vst.msk [vmem:[#allocation2 + $0x158] sm:$0xff] %vm1242, %v1114
    %1458 = vst [vmem:[#allocation2 + $0x160] sm:$0xff] %v1310
    %1459 = vst.msk [vmem:[#allocation2 + $0x168] sm:$0xff] %vm1242, %v1116
    %1460 = vst [vmem:[#allocation2 + $0x170] sm:$0xff] %v1313
    %1461 = vst.msk [vmem:[#allocation2 + $0x178] sm:$0xff] %vm1242, %v1118
    %1462 = vst [vmem:[#allocation2 + $0x180] sm:$0xff] %v1316
    %1463 = vst.msk [vmem:[#allocation2 + $0x188] sm:$0xff] %vm1242, %v1120
    %1464 = vst [vmem:[#allocation2 + $0x190] sm:$0xff] %v1319
    %1465 = vst.msk [vmem:[#allocation2 + $0x198] sm:$0xff] %vm1242, %v1122
    %1466 = vst [vmem:[#allocation2 + $0x1a0] sm:$0xff] %v1322
    %1467 = vst.msk [vmem:[#allocation2 + $0x1a8] sm:$0xff] %vm1242, %v1124
    %1468 = vst [vmem:[#allocation2 + $0x1b0] sm:$0xff] %v1325
    %1469 = vst.msk [vmem:[#allocation2 + $0x1b8] sm:$0xff] %vm1242, %v1126
    %1470 = vst [vmem:[#allocation2 + $0x1c0] sm:$0xff] %v1328
    %1471 = vst.msk [vmem:[#allocation2 + $0x1c8] sm:$0xff] %vm1242, %v1128
    %1472 = vst [vmem:[#allocation2 + $0x1d0] sm:$0xff] %v1331
    %1473 = vst.msk [vmem:[#allocation2 + $0x1d8] sm:$0xff] %vm1242, %v1130
    %1474 = vst [vmem:[#allocation2 + $0x1e0] sm:$0xff] %v1334
    %1475 = vst.msk [vmem:[#allocation2 + $0x1e8] sm:$0xff] %vm1242, %v1132
    %1476 = vst [vmem:[#allocation2 + $0x1f0] sm:$0xff] %v1337
    %1477 = vst.msk [vmem:[#allocation2 + $0x1f8] sm:$0xff] %vm1242, %v1134
    %1478 = vst [vmem:[#allocation2 + $0x200] sm:$0xff] %v1340
    %1479 = vst.msk [vmem:[#allocation2 + $0x208] sm:$0xff] %vm1242, %v1136
    %1480 = vst [vmem:[#allocation2 + $0x210] sm:$0xff] %v1343
    %1481 = vst.msk [vmem:[#allocation2 + $0x218] sm:$0xff] %vm1242, %v1138
    %1482 = vst [vmem:[#allocation2 + $0x220] sm:$0xff] %v1346
    %1483 = vst.msk [vmem:[#allocation2 + $0x228] sm:$0xff] %vm1242, %v1140
    %1484 = vst [vmem:[#allocation2 + $0x230] sm:$0xff] %v1349
    %1485 = vst.msk [vmem:[#allocation2 + $0x238] sm:$0xff] %vm1242, %v1142
    %1486 = vst [vmem:[#allocation2 + $0x240] sm:$0xff] %v1352
    %1487 = vst.msk [vmem:[#allocation2 + $0x248] sm:$0xff] %vm1242, %v1144
    %1488 = vst [vmem:[#allocation2 + $0x250] sm:$0xff] %v1355
    %1489 = vst.msk [vmem:[#allocation2 + $0x258] sm:$0xff] %vm1242, %v1146
    %1490 = vst [vmem:[#allocation2 + $0x260] sm:$0xff] %v1358
    %1491 = vst.msk [vmem:[#allocation2 + $0x268] sm:$0xff] %vm1242, %v1148
    %1492 = vst [vmem:[#allocation2 + $0x270] sm:$0xff] %v1361
    %1493 = vst.msk [vmem:[#allocation2 + $0x278] sm:$0xff] %vm1242, %v1150
    %1494 = vst [vmem:[#allocation2 + $0x280] sm:$0xff] %v1364
    %1495 = vst.msk [vmem:[#allocation2 + $0x288] sm:$0xff] %vm1242, %v1152
    %1496 = vst [vmem:[#allocation2 + $0x290] sm:$0xff] %v1367
    %1497 = vst.msk [vmem:[#allocation2 + $0x298] sm:$0xff] %vm1242, %v1154
    %1498 = vst [vmem:[#allocation2 + $0x2a0] sm:$0xff] %v1370
    %1499 = vst.msk [vmem:[#allocation2 + $0x2a8] sm:$0xff] %vm1242, %v1156
    %1500 = vst [vmem:[#allocation2 + $0x2b0] sm:$0xff] %v1373
    %1501 = vst.msk [vmem:[#allocation2 + $0x2b8] sm:$0xff] %vm1242, %v1158
    %1502 = vst [vmem:[#allocation2 + $0x2c0] sm:$0xff] %v1376
    %1503 = vst.msk [vmem:[#allocation2 + $0x2c8] sm:$0xff] %vm1242, %v1160
    %1504 = vst [vmem:[#allocation2 + $0x2d0] sm:$0xff] %v1379
    %1505 = vst.msk [vmem:[#allocation2 + $0x2d8] sm:$0xff] %vm1242, %v1162
    %1506 = vst [vmem:[#allocation2 + $0x2e0] sm:$0xff] %v1382
    %1507 = vst.msk [vmem:[#allocation2 + $0x2e8] sm:$0xff] %vm1242, %v1164
    %1508 = vst [vmem:[#allocation2 + $0x2f0] sm:$0xff] %v1385
    %1509 = vst.msk [vmem:[#allocation2 + $0x2f8] sm:$0xff] %vm1242, %v1166
    %1510 = vst [vmem:[#allocation2 + $0x300] sm:$0xff] %v1388
    %1511 = vst.msk [vmem:[#allocation2 + $0x308] sm:$0xff] %vm1242, %v1168
    %1512 = vst [vmem:[#allocation2 + $0x310] sm:$0xff] %v1391
    %1513 = vst.msk [vmem:[#allocation2 + $0x318] sm:$0xff] %vm1242, %v1170
    %1514 = vst [vmem:[#allocation2 + $0x320] sm:$0xff] %v1394
    %1515 = vst.msk [vmem:[#allocation2 + $0x328] sm:$0xff] %vm1242, %v1172
    %1516 = vst [vmem:[#allocation2 + $0x330] sm:$0xff] %v1397
    %1517 = vst.msk [vmem:[#allocation2 + $0x338] sm:$0xff] %vm1242, %v1174
    %1518 = vst [vmem:[#allocation2 + $0x340] sm:$0xff] %v1400
    %1519 = vst.msk [vmem:[#allocation2 + $0x348] sm:$0xff] %vm1242, %v1176
    %1520 = vst [vmem:[#allocation2 + $0x350] sm:$0xff] %v1403
    %1521 = vst.msk [vmem:[#allocation2 + $0x358] sm:$0xff] %vm1242, %v1178
    %1522 = vst [vmem:[#allocation2 + $0x360] sm:$0xff] %v1406
    %1523 = vst.msk [vmem:[#allocation2 + $0x368] sm:$0xff] %vm1242, %v1180
    %1524 = vst [vmem:[#allocation2 + $0x370] sm:$0xff] %v1409
    %1525 = vst.msk [vmem:[#allocation2 + $0x378] sm:$0xff] %vm1242, %v1182
    %1526 = vst [vmem:[#allocation2 + $0x380] sm:$0xff] %v1412
    %1527 = vst.msk [vmem:[#allocation2 + $0x388] sm:$0xff] %vm1242, %v1184
    %v1528 = vld [vmem:[#allocation2] sm:$0xff]
    %v1529 = vld [vmem:[#allocation2 + $0x8] sm:$0xff]
    %v1530 = vld [vmem:[#allocation2 + $0x10] sm:$0xff]
    %v1531 = vld [vmem:[#allocation2 + $0x18] sm:$0xff]
    %v1532 = vld [vmem:[#allocation2 + $0x20] sm:$0xff]
    %v1533 = vld [vmem:[#allocation2 + $0x28] sm:$0xff]
    %v1534 = vld [vmem:[#allocation2 + $0x30] sm:$0xff]
    %v1535 = vld [vmem:[#allocation2 + $0x38] sm:$0xff]
    %v1536 = vld [vmem:[#allocation2 + $0x40] sm:$0xff]
    %v1537 = vld [vmem:[#allocation2 + $0x48] sm:$0xff]
    %v1538 = vld [vmem:[#allocation2 + $0x50] sm:$0xff]
    %v1539 = vld [vmem:[#allocation2 + $0x58] sm:$0xff]
    %v1540 = vld [vmem:[#allocation2 + $0x60] sm:$0xff]
    %v1541 = vld [vmem:[#allocation2 + $0x68] sm:$0xff]
    %v1542 = vld [vmem:[#allocation2 + $0x70] sm:$0xff]
    %v1543 = vld [vmem:[#allocation2 + $0x78] sm:$0xff]
    %v1544 = vld [vmem:[#allocation2 + $0x80] sm:$0xff]
    %v1545 = vld [vmem:[#allocation2 + $0x88] sm:$0xff]
    %v1546 = vld [vmem:[#allocation2 + $0x90] sm:$0xff]
    %v1547 = vld [vmem:[#allocation2 + $0x98] sm:$0xff]
    %v1548 = vld [vmem:[#allocation2 + $0xa0] sm:$0xff]
    %v1549 = vld [vmem:[#allocation2 + $0xa8] sm:$0xff]
    %v1550 = vld [vmem:[#allocation2 + $0xb0] sm:$0xff]
    %v1551 = vld [vmem:[#allocation2 + $0xb8] sm:$0xff]
    %v1552 = vld [vmem:[#allocation2 + $0xc0] sm:$0xff]
    %v1553 = vld [vmem:[#allocation2 + $0xc8] sm:$0xff]
    %v1554 = vld [vmem:[#allocation2 + $0xd0] sm:$0xff]
    %v1555 = vld [vmem:[#allocation2 + $0xd8] sm:$0xff]
    %v1556 = vld [vmem:[#allocation2 + $0xe0] sm:$0xff]
    %v1557 = vld [vmem:[#allocation2 + $0xe8] sm:$0xff]
    %v1558 = vld [vmem:[#allocation2 + $0xf0] sm:$0xff]
    %v1559 = vld [vmem:[#allocation2 + $0xf8] sm:$0xff]
    %v1560 = vld [vmem:[#allocation2 + $0x100] sm:$0xff]
    %v1561 = vld [vmem:[#allocation2 + $0x108] sm:$0xff]
    %v1562 = vld [vmem:[#allocation2 + $0x110] sm:$0xff]
    %v1563 = vld [vmem:[#allocation2 + $0x118] sm:$0xff]
    %v1564 = vld [vmem:[#allocation2 + $0x120] sm:$0xff]
    %v1565 = vld [vmem:[#allocation2 + $0x128] sm:$0xff]
    %v1566 = vld [vmem:[#allocation2 + $0x130] sm:$0xff]
    %v1567 = vld [vmem:[#allocation2 + $0x138] sm:$0xff]
    %v1568 = vld [vmem:[#allocation2 + $0x140] sm:$0xff]
    %v1569 = vld [vmem:[#allocation2 + $0x148] sm:$0xff]
    %v1570 = vld [vmem:[#allocation2 + $0x150] sm:$0xff]
    %v1571 = vld [vmem:[#allocation2 + $0x158] sm:$0xff]
    %v1572 = vld [vmem:[#allocation2 + $0x160] sm:$0xff]
    %v1573 = vld [vmem:[#allocation2 + $0x168] sm:$0xff]
    %v1574 = vld [vmem:[#allocation2 + $0x170] sm:$0xff]
    %v1575 = vld [vmem:[#allocation2 + $0x178] sm:$0xff]
    %v1576 = vld [vmem:[#allocation2 + $0x180] sm:$0xff]
    %v1577 = vld [vmem:[#allocation2 + $0x188] sm:$0xff]
    %v1578 = vld [vmem:[#allocation2 + $0x190] sm:$0xff]
    %v1579 = vld [vmem:[#allocation2 + $0x198] sm:$0xff]
    %v1580 = vld [vmem:[#allocation2 + $0x1a0] sm:$0xff]
    %v1581 = vld [vmem:[#allocation2 + $0x1a8] sm:$0xff]
    %v1582 = vld [vmem:[#allocation2 + $0x1b0] sm:$0xff]
    %v1583 = vld [vmem:[#allocation2 + $0x1b8] sm:$0xff]
    %v1584 = vld [vmem:[#allocation2 + $0x1c0] sm:$0xff]
    %v1585 = vld [vmem:[#allocation2 + $0x1c8] sm:$0xff]
    %v1586 = vld [vmem:[#allocation2 + $0x1d0] sm:$0xff]
    %v1587 = vld [vmem:[#allocation2 + $0x1d8] sm:$0xff]
    %v1588 = vld [vmem:[#allocation2 + $0x1e0] sm:$0xff]
    %v1589 = vld [vmem:[#allocation2 + $0x1e8] sm:$0xff]
    %v1590 = vld [vmem:[#allocation2 + $0x1f0] sm:$0xff]
    %v1591 = vld [vmem:[#allocation2 + $0x1f8] sm:$0xff]
    %v1592 = vld [vmem:[#allocation2 + $0x200] sm:$0xff]
    %v1593 = vld [vmem:[#allocation2 + $0x208] sm:$0xff]
    %v1594 = vld [vmem:[#allocation2 + $0x210] sm:$0xff]
    %v1595 = vld [vmem:[#allocation2 + $0x218] sm:$0xff]
    %v1596 = vld [vmem:[#allocation2 + $0x220] sm:$0xff]
    %v1597 = vld [vmem:[#allocation2 + $0x228] sm:$0xff]
    %v1598 = vld [vmem:[#allocation2 + $0x230] sm:$0xff]
    %v1599 = vld [vmem:[#allocation2 + $0x238] sm:$0xff]
    %v1600 = vld [vmem:[#allocation2 + $0x240] sm:$0xff]
    %v1601 = vld [vmem:[#allocation2 + $0x248] sm:$0xff]
    %v1602 = vld [vmem:[#allocation2 + $0x250] sm:$0xff]
    %v1603 = vld [vmem:[#allocation2 + $0x258] sm:$0xff]
    %v1604 = vld [vmem:[#allocation2 + $0x260] sm:$0xff]
    %v1605 = vld [vmem:[#allocation2 + $0x268] sm:$0xff]
    %v1606 = vld [vmem:[#allocation2 + $0x270] sm:$0xff]
    %v1607 = vld [vmem:[#allocation2 + $0x278] sm:$0xff]
    %v1608 = vld [vmem:[#allocation2 + $0x280] sm:$0xff]
    %v1609 = vld [vmem:[#allocation2 + $0x288] sm:$0xff]
    %v1610 = vld [vmem:[#allocation2 + $0x290] sm:$0xff]
    %v1611 = vld [vmem:[#allocation2 + $0x298] sm:$0xff]
    %v1612 = vld [vmem:[#allocation2 + $0x2a0] sm:$0xff]
    %v1613 = vld [vmem:[#allocation2 + $0x2a8] sm:$0xff]
    %v1614 = vld [vmem:[#allocation2 + $0x2b0] sm:$0xff]
    %v1615 = vld [vmem:[#allocation2 + $0x2b8] sm:$0xff]
    %v1616 = vld [vmem:[#allocation2 + $0x2c0] sm:$0xff]
    %v1617 = vld [vmem:[#allocation2 + $0x2c8] sm:$0xff]
    %v1618 = vld [vmem:[#allocation2 + $0x2d0] sm:$0xff]
    %v1619 = vld [vmem:[#allocation2 + $0x2d8] sm:$0xff]
    %v1620 = vld [vmem:[#allocation2 + $0x2e0] sm:$0xff]
    %v1621 = vld [vmem:[#allocation2 + $0x2e8] sm:$0xff]
    %v1622 = vld [vmem:[#allocation2 + $0x2f0] sm:$0xff]
    %v1623 = vld [vmem:[#allocation2 + $0x2f8] sm:$0xff]
    %v1624 = vld [vmem:[#allocation2 + $0x300] sm:$0xff]
    %v1625 = vld [vmem:[#allocation2 + $0x308] sm:$0xff]
    %v1626 = vld [vmem:[#allocation2 + $0x310] sm:$0xff]
    %v1627 = vld [vmem:[#allocation2 + $0x318] sm:$0xff]
    %v1628 = vld [vmem:[#allocation2 + $0x320] sm:$0xff]
    %v1629 = vld [vmem:[#allocation2 + $0x328] sm:$0xff]
    %v1630 = vld [vmem:[#allocation2 + $0x330] sm:$0xff]
    %v1631 = vld [vmem:[#allocation2 + $0x338] sm:$0xff]
    %v1632 = vld [vmem:[#allocation2 + $0x340] sm:$0xff]
    %v1633 = vld [vmem:[#allocation2 + $0x348] sm:$0xff]
    %v1634 = vld [vmem:[#allocation2 + $0x350] sm:$0xff]
    %v1635 = vld [vmem:[#allocation2 + $0x358] sm:$0xff]
    %v1636 = vld [vmem:[#allocation6] sm:$0xff]
    %v1637 = vld [vmem:[#allocation6 + $0x8] sm:$0xff]
    %v1638 = vld [vmem:[#allocation6 + $0x10] sm:$0xff]
    %v1639 = vld [vmem:[#allocation6 + $0x18] sm:$0xff]
    %v1640 = vld [vmem:[#allocation6 + $0x20] sm:$0xff]
    %v1641 = vld [vmem:[#allocation6 + $0x28] sm:$0xff]
    %v1642 = vld [vmem:[#allocation6 + $0x30] sm:$0xff]
    %v1643 = vld [vmem:[#allocation6 + $0x38] sm:$0xff]
    %v1644 = vld [vmem:[#allocation6 + $0x40] sm:$0xff]
    %v1645 = vld [vmem:[#allocation6 + $0x48] sm:$0xff]
    %v1646 = vld [vmem:[#allocation6 + $0x50] sm:$0xff]
    %v1647 = vld [vmem:[#allocation6 + $0x58] sm:$0xff]
    %v1648 = vld [vmem:[#allocation6 + $0x60] sm:$0xff]
    %v1649 = vld [vmem:[#allocation6 + $0x68] sm:$0xff]
    %v1650 = vld [vmem:[#allocation6 + $0x70] sm:$0xff]
    %v1651 = vld [vmem:[#allocation6 + $0x78] sm:$0xff]
    %v1652 = vld [vmem:[#allocation6 + $0x80] sm:$0xff]
    %v1653 = vld [vmem:[#allocation6 + $0x88] sm:$0xff]
    %v1654 = vld [vmem:[#allocation6 + $0x90] sm:$0xff]
    %v1655 = vld [vmem:[#allocation6 + $0x98] sm:$0xff]
    %v1656 = vld [vmem:[#allocation6 + $0xa0] sm:$0xff]
    %v1657 = vld [vmem:[#allocation6 + $0xa8] sm:$0xff]
    %v1658 = vld [vmem:[#allocation6 + $0xb0] sm:$0xff]
    %v1659 = vld [vmem:[#allocation6 + $0xb8] sm:$0xff]
    %v1660 = vld [vmem:[#allocation2 + $0x10] sm:$0xf0]
    %v1661 = vld [vmem:[#allocation2 + $0x18] sm:$0xf0]
    %v1662 = vld [vmem:[#allocation2 + $0x360] sm:$0xff]
    %v1663 = vld [vmem:[#allocation2 + $0x368] sm:$0xff]
    %v1664 = vld [vmem:[#allocation2 + $0x370] sm:$0xf]
    %v1665 = vld [vmem:[#allocation2 + $0x378] sm:$0xf]
    %v1666 = vld [vmem:[#allocation6 + $0xc0] sm:$0xff]
    %v1667 = vld [vmem:[#allocation6 + $0xc8] sm:$0xff]
    %v1668 = vld [vmem:[#allocation6 + $0xd0] sm:$0xff]
    %v1669 = vld [vmem:[#allocation6 + $0xd8] sm:$0xff]
    %v1670 = vld [vmem:[#allocation6 + $0xe0] sm:$0xff]
    %v1671 = vld [vmem:[#allocation6 + $0xe8] sm:$0xff]
    %v1672 = vld [vmem:[#allocation6 + $0xf0] sm:$0xff]
    %v1673 = vld [vmem:[#allocation6 + $0xf8] sm:$0xff]
    %v1674 = vld [vmem:[#allocation6 + $0x100] sm:$0xff]
    %v1675 = vld [vmem:[#allocation6 + $0x108] sm:$0xff]
    %v1676 = vld [vmem:[#allocation6 + $0x110] sm:$0xff]
    %v1677 = vld [vmem:[#allocation6 + $0x118] sm:$0xff]
    %v1678 = vld [vmem:[#allocation6 + $0x120] sm:$0xff]
    %v1679 = vld [vmem:[#allocation6 + $0x128] sm:$0xff]
    %v1680 = vld [vmem:[#allocation6 + $0x130] sm:$0xff]
    %v1681 = vld [vmem:[#allocation6 + $0x138] sm:$0xff]
    %v1682 = vld [vmem:[#allocation6 + $0x140] sm:$0xff]
    %v1683 = vld [vmem:[#allocation6 + $0x148] sm:$0xff]
    %v1684 = vld [vmem:[#allocation6 + $0x150] sm:$0xff]
    %v1685 = vld [vmem:[#allocation6 + $0x158] sm:$0xff]
    %v1686 = vld [vmem:[#allocation6 + $0x160] sm:$0xff]
    %v1687 = vld [vmem:[#allocation6 + $0x168] sm:$0xff]
    %v1688 = vld [vmem:[#allocation6 + $0x170] sm:$0xff]
    %v1689 = vld [vmem:[#allocation6 + $0x178] sm:$0xff]
    %vm1800 = vcmask 1043456
    %v1801 = vrot.slane %v1660, 4
    %v1802 = vrot.slane %v1532, 4
    %v1803 = vsel %vm1800, %v1801, %v1802
    %v1804 = vrot.slane %v1661, 4
    %v1805 = vrot.slane %v1533, 4
    %v1806 = vsel %vm1800, %v1804, %v1805
    %v1807 = vrot.slane %v1534, 4
    %v1808 = vsel %vm1800, %v1802, %v1807
    %v1809 = vrot.slane %v1535, 4
    %v1810 = vsel %vm1800, %v1805, %v1809
    %v1811 = vrot.slane %v1536, 4
    %v1812 = vsel %vm1800, %v1807, %v1811
    %v1813 = vrot.slane %v1537, 4
    %v1814 = vsel %vm1800, %v1809, %v1813
    %v1815 = vrot.slane %v1538, 4
    %v1816 = vsel %vm1800, %v1811, %v1815
    %v1817 = vrot.slane %v1539, 4
    %v1818 = vsel %vm1800, %v1813, %v1817
    %v1819 = vrot.slane %v1540, 4
    %v1820 = vsel %vm1800, %v1815, %v1819
    %v1821 = vrot.slane %v1541, 4
    %v1822 = vsel %vm1800, %v1817, %v1821
    %v1823 = vrot.slane %v1542, 4
    %v1824 = vsel %vm1800, %v1819, %v1823
    %v1825 = vrot.slane %v1543, 4
    %v1826 = vsel %vm1800, %v1821, %v1825
    %v1827 = vrot.slane %v1544, 4
    %v1828 = vsel %vm1800, %v1823, %v1827
    %v1829 = vrot.slane %v1545, 4
    %v1830 = vsel %vm1800, %v1825, %v1829
    %v1831 = vrot.slane %v1546, 4
    %v1832 = vsel %vm1800, %v1827, %v1831
    %v1833 = vrot.slane %v1547, 4
    %v1834 = vsel %vm1800, %v1829, %v1833
    %v1835 = vrot.slane %v1548, 4
    %v1836 = vsel %vm1800, %v1831, %v1835
    %v1837 = vrot.slane %v1549, 4
    %v1838 = vsel %vm1800, %v1833, %v1837
    %v1839 = vrot.slane %v1550, 4
    %v1840 = vsel %vm1800, %v1835, %v1839
    %v1841 = vrot.slane %v1551, 4
    %v1842 = vsel %vm1800, %v1837, %v1841
    %v1843 = vrot.slane %v1552, 4
    %v1844 = vsel %vm1800, %v1839, %v1843
    %v1845 = vrot.slane %v1553, 4
    %v1846 = vsel %vm1800, %v1841, %v1845
    %v1847 = vrot.slane %v1554, 4
    %v1848 = vsel %vm1800, %v1843, %v1847
    %v1849 = vrot.slane %v1555, 4
    %v1850 = vsel %vm1800, %v1845, %v1849
    %v1851 = vrot.slane %v1556, 4
    %v1852 = vsel %vm1800, %v1847, %v1851
    %v1853 = vrot.slane %v1557, 4
    %v1854 = vsel %vm1800, %v1849, %v1853
    %v1855 = vrot.slane %v1558, 4
    %v1856 = vsel %vm1800, %v1851, %v1855
    %v1857 = vrot.slane %v1559, 4
    %v1858 = vsel %vm1800, %v1853, %v1857
    %v1859 = vrot.slane %v1560, 4
    %v1860 = vsel %vm1800, %v1855, %v1859
    %v1861 = vrot.slane %v1561, 4
    %v1862 = vsel %vm1800, %v1857, %v1861
    %v1863 = vrot.slane %v1562, 4
    %v1864 = vsel %vm1800, %v1859, %v1863
    %v1865 = vrot.slane %v1563, 4
    %v1866 = vsel %vm1800, %v1861, %v1865
    %v1867 = vrot.slane %v1564, 4
    %v1868 = vsel %vm1800, %v1863, %v1867
    %v1869 = vrot.slane %v1565, 4
    %v1870 = vsel %vm1800, %v1865, %v1869
    %v1871 = vrot.slane %v1566, 4
    %v1872 = vsel %vm1800, %v1867, %v1871
    %v1873 = vrot.slane %v1567, 4
    %v1874 = vsel %vm1800, %v1869, %v1873
    %v1875 = vrot.slane %v1568, 4
    %v1876 = vsel %vm1800, %v1871, %v1875
    %v1877 = vrot.slane %v1569, 4
    %v1878 = vsel %vm1800, %v1873, %v1877
    %v1879 = vrot.slane %v1570, 4
    %v1880 = vsel %vm1800, %v1875, %v1879
    %v1881 = vrot.slane %v1571, 4
    %v1882 = vsel %vm1800, %v1877, %v1881
    %v1883 = vrot.slane %v1572, 4
    %v1884 = vsel %vm1800, %v1879, %v1883
    %v1885 = vrot.slane %v1573, 4
    %v1886 = vsel %vm1800, %v1881, %v1885
    %v1887 = vrot.slane %v1574, 4
    %v1888 = vsel %vm1800, %v1883, %v1887
    %v1889 = vrot.slane %v1575, 4
    %v1890 = vsel %vm1800, %v1885, %v1889
    %v1891 = vrot.slane %v1576, 4
    %v1892 = vsel %vm1800, %v1887, %v1891
    %v1893 = vrot.slane %v1577, 4
    %v1894 = vsel %vm1800, %v1889, %v1893
    %v1895 = vrot.slane %v1578, 4
    %v1896 = vsel %vm1800, %v1891, %v1895
    %v1897 = vrot.slane %v1579, 4
    %v1898 = vsel %vm1800, %v1893, %v1897
    %v1899 = vrot.slane %v1580, 4
    %v1900 = vsel %vm1800, %v1895, %v1899
    %v1901 = vrot.slane %v1581, 4
    %v1902 = vsel %vm1800, %v1897, %v1901
    %v1903 = vrot.slane %v1582, 4
    %v1904 = vsel %vm1800, %v1899, %v1903
    %v1905 = vrot.slane %v1583, 4
    %v1906 = vsel %vm1800, %v1901, %v1905
    %v1907 = vrot.slane %v1584, 4
    %v1908 = vsel %vm1800, %v1903, %v1907
    %v1909 = vrot.slane %v1585, 4
    %v1910 = vsel %vm1800, %v1905, %v1909
    %v1911 = vrot.slane %v1586, 4
    %v1912 = vsel %vm1800, %v1907, %v1911
    %v1913 = vrot.slane %v1587, 4
    %v1914 = vsel %vm1800, %v1909, %v1913
    %v1915 = vrot.slane %v1588, 4
    %v1916 = vsel %vm1800, %v1911, %v1915
    %v1917 = vrot.slane %v1589, 4
    %v1918 = vsel %vm1800, %v1913, %v1917
    %v1919 = vrot.slane %v1590, 4
    %v1920 = vsel %vm1800, %v1915, %v1919
    %v1921 = vrot.slane %v1591, 4
    %v1922 = vsel %vm1800, %v1917, %v1921
    %v1923 = vrot.slane %v1592, 4
    %v1924 = vsel %vm1800, %v1919, %v1923
    %v1925 = vrot.slane %v1593, 4
    %v1926 = vsel %vm1800, %v1921, %v1925
    %v1927 = vrot.slane %v1594, 4
    %v1928 = vsel %vm1800, %v1923, %v1927
    %v1929 = vrot.slane %v1595, 4
    %v1930 = vsel %vm1800, %v1925, %v1929
    %v1931 = vrot.slane %v1596, 4
    %v1932 = vsel %vm1800, %v1927, %v1931
    %v1933 = vrot.slane %v1597, 4
    %v1934 = vsel %vm1800, %v1929, %v1933
    %v1935 = vrot.slane %v1598, 4
    %v1936 = vsel %vm1800, %v1931, %v1935
    %v1937 = vrot.slane %v1599, 4
    %v1938 = vsel %vm1800, %v1933, %v1937
    %v1939 = vrot.slane %v1600, 4
    %v1940 = vsel %vm1800, %v1935, %v1939
    %v1941 = vrot.slane %v1601, 4
    %v1942 = vsel %vm1800, %v1937, %v1941
    %v1943 = vrot.slane %v1602, 4
    %v1944 = vsel %vm1800, %v1939, %v1943
    %v1945 = vrot.slane %v1603, 4
    %v1946 = vsel %vm1800, %v1941, %v1945
    %v1947 = vrot.slane %v1604, 4
    %v1948 = vsel %vm1800, %v1943, %v1947
    %v1949 = vrot.slane %v1605, 4
    %v1950 = vsel %vm1800, %v1945, %v1949
    %v1951 = vrot.slane %v1606, 4
    %v1952 = vsel %vm1800, %v1947, %v1951
    %v1953 = vrot.slane %v1607, 4
    %v1954 = vsel %vm1800, %v1949, %v1953
    %v1955 = vrot.slane %v1608, 4
    %v1956 = vsel %vm1800, %v1951, %v1955
    %v1957 = vrot.slane %v1609, 4
    %v1958 = vsel %vm1800, %v1953, %v1957
    %v1959 = vrot.slane %v1610, 4
    %v1960 = vsel %vm1800, %v1955, %v1959
    %v1961 = vrot.slane %v1611, 4
    %v1962 = vsel %vm1800, %v1957, %v1961
    %v1963 = vrot.slane %v1612, 4
    %v1964 = vsel %vm1800, %v1959, %v1963
    %v1965 = vrot.slane %v1613, 4
    %v1966 = vsel %vm1800, %v1961, %v1965
    %v1967 = vrot.slane %v1614, 4
    %v1968 = vsel %vm1800, %v1963, %v1967
    %v1969 = vrot.slane %v1615, 4
    %v1970 = vsel %vm1800, %v1965, %v1969
    %v1971 = vrot.slane %v1616, 4
    %v1972 = vsel %vm1800, %v1967, %v1971
    %v1973 = vrot.slane %v1617, 4
    %v1974 = vsel %vm1800, %v1969, %v1973
    %v1975 = vrot.slane %v1618, 4
    %v1976 = vsel %vm1800, %v1971, %v1975
    %v1977 = vrot.slane %v1619, 4
    %v1978 = vsel %vm1800, %v1973, %v1977
    %v1979 = vrot.slane %v1620, 4
    %v1980 = vsel %vm1800, %v1975, %v1979
    %v1981 = vrot.slane %v1621, 4
    %v1982 = vsel %vm1800, %v1977, %v1981
    %v1983 = vrot.slane %v1622, 4
    %v1984 = vsel %vm1800, %v1979, %v1983
    %v1985 = vrot.slane %v1623, 4
    %v1986 = vsel %vm1800, %v1981, %v1985
    %v1987 = vrot.slane %v1624, 4
    %v1988 = vsel %vm1800, %v1983, %v1987
    %v1989 = vrot.slane %v1625, 4
    %v1990 = vsel %vm1800, %v1985, %v1989
    %v1991 = vrot.slane %v1626, 4
    %v1992 = vsel %vm1800, %v1987, %v1991
    %v1993 = vrot.slane %v1627, 4
    %v1994 = vsel %vm1800, %v1989, %v1993
    %v1995 = vrot.slane %v1628, 4
    %v1996 = vsel %vm1800, %v1991, %v1995
    %v1997 = vrot.slane %v1629, 4
    %v1998 = vsel %vm1800, %v1993, %v1997
    %v1999 = vrot.slane %v1630, 4
    %v2000 = vsel %vm1800, %v1995, %v1999
    %v2001 = vrot.slane %v1631, 4
    %v2002 = vsel %vm1800, %v1997, %v2001
    %v2003 = vrot.slane %v1632, 4
    %v2004 = vsel %vm1800, %v1999, %v2003
    %v2005 = vrot.slane %v1633, 4
    %v2006 = vsel %vm1800, %v2001, %v2005
    %v2007 = vrot.slane %v1634, 4
    %v2008 = vsel %vm1800, %v2003, %v2007
    %v2009 = vrot.slane %v1635, 4
    %v2010 = vsel %vm1800, %v2005, %v2009
    %v2011 = vrot.slane %v1662, 4
    %v2012 = vsel %vm1800, %v2007, %v2011
    %v2013 = vrot.slane %v1663, 4
    %v2014 = vsel %vm1800, %v2009, %v2013
    %v2015 = vrot.slane %v1664, 4
    %v2016 = vsel %vm1800, %v2011, %v2015
    %v2017 = vrot.slane %v1665, 4
    %v2018 = vsel %vm1800, %v2013, %v2017
    %v2097 = vunpack.c.l.b16 %v1666
    %v2098 = vunpack.c.h.b16 %v1666
    %v2099 = vunpack.c.l.b16 %v1667
    %v2100 = vunpack.c.h.b16 %v1667
    %v2101 = vunpack.c.l.b16 %v1668
    %v2102 = vunpack.c.h.b16 %v1668
    %v2103 = vunpack.c.l.b16 %v1669
    %v2104 = vunpack.c.h.b16 %v1669
    %v2105 = vunpack.c.l.b16 %v1670
    %v2106 = vunpack.c.h.b16 %v1670
    %v2107 = vunpack.c.l.b16 %v1671
    %v2108 = vunpack.c.h.b16 %v1671
    %v2109 = vunpack.c.l.b16 %v1672
    %v2110 = vunpack.c.h.b16 %v1672
    %v2111 = vunpack.c.l.b16 %v1673
    %v2112 = vunpack.c.h.b16 %v1673
    %v2113 = vunpack.c.l.b16 %v1674
    %v2114 = vunpack.c.h.b16 %v1674
    %v2115 = vunpack.c.l.b16 %v1675
    %v2116 = vunpack.c.h.b16 %v1675
    %v2117 = vunpack.c.l.b16 %v1676
    %v2118 = vunpack.c.h.b16 %v1676
    %v2119 = vunpack.c.l.b16 %v1677
    %v2120 = vunpack.c.h.b16 %v1677
    %v2121 = vunpack.c.l.b16 %v1678
    %v2122 = vunpack.c.h.b16 %v1678
    %v2123 = vunpack.c.l.b16 %v1679
    %v2124 = vunpack.c.h.b16 %v1679
    %v2125 = vunpack.c.l.b16 %v1680
    %v2126 = vunpack.c.h.b16 %v1680
    %v2127 = vunpack.c.l.b16 %v1681
    %v2128 = vunpack.c.h.b16 %v1681
    %v2129 = vunpack.c.l.b16 %v1682
    %v2130 = vunpack.c.h.b16 %v1682
    %v2131 = vunpack.c.l.b16 %v1683
    %v2132 = vunpack.c.h.b16 %v1683
    %v2133 = vunpack.c.l.b16 %v1684
    %v2134 = vunpack.c.h.b16 %v1684
    %v2135 = vunpack.c.l.b16 %v1685
    %v2136 = vunpack.c.h.b16 %v1685
    %v2137 = vunpack.c.l.b16 %v1686
    %v2138 = vunpack.c.h.b16 %v1686
    %v2139 = vunpack.c.l.b16 %v1687
    %v2140 = vunpack.c.h.b16 %v1687
    %v2141 = vunpack.c.l.b16 %v1688
    %v2142 = vunpack.c.h.b16 %v1688
    %v2143 = vunpack.c.l.b16 %v1689
    %v2144 = vunpack.c.h.b16 %v1689
    %v2145 = vpack.c.b16 %v2099, %v2097
    %v2146 = vpack.c.b16 %v2100, %v2098
    %v2147 = vpack.c.b16 %v2103, %v2101
    %v2148 = vpack.c.b16 %v2104, %v2102
    %v2149 = vpack.c.b16 %v2107, %v2105
    %v2150 = vpack.c.b16 %v2108, %v2106
    %v2151 = vpack.c.b16 %v2111, %v2109
    %v2152 = vpack.c.b16 %v2112, %v2110
    %v2153 = vpack.c.b16 %v2115, %v2113
    %v2154 = vpack.c.b16 %v2116, %v2114
    %v2155 = vpack.c.b16 %v2119, %v2117
    %v2156 = vpack.c.b16 %v2120, %v2118
    %v2157 = vpack.c.b16 %v2123, %v2121
    %v2158 = vpack.c.b16 %v2124, %v2122
    %v2159 = vpack.c.b16 %v2127, %v2125
    %v2160 = vpack.c.b16 %v2128, %v2126
    %v2161 = vpack.c.b16 %v2131, %v2129
    %v2162 = vpack.c.b16 %v2132, %v2130
    %v2163 = vpack.c.b16 %v2135, %v2133
    %v2164 = vpack.c.b16 %v2136, %v2134
    %v2165 = vpack.c.b16 %v2139, %v2137
    %v2166 = vpack.c.b16 %v2140, %v2138
    %v2167 = vpack.c.b16 %v2143, %v2141
    %v2168 = vpack.c.b16 %v2144, %v2142
    %v2194 = vsel %vm1242, %v1806, 0
    %v2197 = vsel %vm1242, %v1810, 0
    %v2200 = vsel %vm1242, %v1814, 0
    %v2203 = vsel %vm1242, %v1818, 0
    %v2206 = vsel %vm1242, %v1822, 0
    %v2209 = vsel %vm1242, %v1826, 0
    %v2212 = vsel %vm1242, %v1830, 0
    %v2215 = vsel %vm1242, %v1834, 0
    %v2218 = vsel %vm1242, %v1838, 0
    %v2221 = vsel %vm1242, %v1842, 0
    %v2224 = vsel %vm1242, %v1846, 0
    %v2227 = vsel %vm1242, %v1850, 0
    %v2230 = vsel %vm1242, %v1854, 0
    %v2233 = vsel %vm1242, %v1858, 0
    %v2236 = vsel %vm1242, %v1862, 0
    %v2239 = vsel %vm1242, %v1866, 0
    %v2242 = vsel %vm1242, %v1870, 0
    %v2245 = vsel %vm1242, %v1874, 0
    %v2248 = vsel %vm1242, %v1878, 0
    %v2251 = vsel %vm1242, %v1882, 0
    %v2254 = vsel %vm1242, %v1886, 0
    %v2257 = vsel %vm1242, %v1890, 0
    %v2260 = vsel %vm1242, %v1894, 0
    %v2263 = vsel %vm1242, %v1898, 0
    %v2266 = vsel %vm1242, %v1902, 0
    %v2269 = vsel %vm1242, %v1906, 0
    %v2272 = vsel %vm1242, %v1910, 0
    %v2275 = vsel %vm1242, %v1914, 0
    %v2278 = vsel %vm1242, %v1918, 0
    %v2281 = vsel %vm1242, %v1922, 0
    %v2284 = vsel %vm1242, %v1926, 0
    %v2287 = vsel %vm1242, %v1930, 0
    %v2290 = vsel %vm1242, %v1934, 0
    %v2293 = vsel %vm1242, %v1938, 0
    %v2296 = vsel %vm1242, %v1942, 0
    %v2299 = vsel %vm1242, %v1946, 0
    %v2302 = vsel %vm1242, %v1950, 0
    %v2305 = vsel %vm1242, %v1954, 0
    %v2308 = vsel %vm1242, %v1958, 0
    %v2311 = vsel %vm1242, %v1962, 0
    %v2314 = vsel %vm1242, %v1966, 0
    %v2317 = vsel %vm1242, %v1970, 0
    %v2320 = vsel %vm1242, %v1974, 0
    %v2323 = vsel %vm1242, %v1978, 0
    %v2326 = vsel %vm1242, %v1982, 0
    %v2329 = vsel %vm1242, %v1986, 0
    %v2332 = vsel %vm1242, %v1990, 0
    %v2335 = vsel %vm1242, %v1994, 0
    %v2338 = vsel %vm1242, %v1998, 0
    %v2341 = vsel %vm1242, %v2002, 0
    %v2344 = vsel %vm1242, %v2006, 0
    %v2347 = vsel %vm1242, %v2010, 0
    %v2350 = vsel %vm1242, %v2014, 0
    %v2353 = vsel %vm1242, %v2018, 0
    %2355 = vmatprep.subr.bf16.mxu0 %v2146
    %2356 = vmatpush1.bf16.msra.mxu0 %v2145
    %2357 = vmatprep.subr.bf16.mxu0 %v2148
    %2358 = vmatpush1.bf16.msra.mxu0 %v2147
    %2359 = vmatprep.subr.bf16.mxu0 %v2150
    %2360 = vmatpush1.bf16.msra.mxu0 %v2149
    %2361 = vmatprep.subr.bf16.mxu0 %v2152
    %2362 = vmatpush1.bf16.msra.mxu0 %v2151
    %2363 = vmatprep.subr.bf16.mxu0 %v2154
    %2364 = vmatpush1.bf16.msra.mxu0 %v2153
    %2365 = vmatprep.subr.bf16.mxu0 %v2156
    %2366 = vmatpush1.bf16.msra.mxu0 %v2155
    %2367 = vmatprep.subr.bf16.mxu0 %v2158
    %2368 = vmatpush1.bf16.msra.mxu0 %v2157
    %2369 = vmatprep.subr.bf16.mxu0 %v2160
    %2370 = vmatpush1.bf16.msra.mxu0 %v2159
    %2371 = vmatprep.subr.bf16.mxu0 %v2162
    %2372 = vmatpush1.bf16.msra.mxu0 %v2161
    %2373 = vmatprep.subr.bf16.mxu0 %v2164
    %2374 = vmatpush1.bf16.msra.mxu0 %v2163
    %2375 = vmatprep.subr.bf16.mxu0 %v2166
    %2376 = vmatpush1.bf16.msra.mxu0 %v2165
    %2377 = vmatprep.subr.bf16.mxu0 %v2168
    %2378 = vmatpush1.bf16.msra.mxu0 %v2167
    %2379 = vmatprep.subr.bf16.mxu0 0
    %2380 = vmatpush1.bf16.msra.mxu0 0
    %2381 = vmatprep.subr.bf16.mxu0 0
    %2382 = vmatpush1.bf16.msra.mxu0 0
    %2383 = vmatprep.subr.bf16.mxu0 0
    %2384 = vmatpush1.bf16.msra.mxu0 0
    %2385 = vmatprep.subr.bf16.mxu0 0
    %2386 = vmatpush1.bf16.msra.mxu0 0
    %2387 = vmatprep.mubr.bf16.mxu0 %v2194
    %2388 = vmatmul.mubr.bf16.gmra.mrb[0].mxu0 %v1803
    %v2389 = vpop.f32.mrb[0].mxu0
    %v2390 = vadd.f32 0.0, %v2389
    %v2391 = vpop.f32.mrb[0].mxu0
    %v2392 = vadd.f32 0.0, %v2391
    %v2393 = vpop.f32.mrb[0].mxu0
    %v2394 = vadd.f32 0.0, %v2393
    %v2395 = vpop.f32.mrb[0].mxu0
    %v2396 = vadd.f32 0.0, %v2395
    %2397 = vmatprep.mubr.bf16.mxu0 %v2197
    %2398 = vmatmul.mubr.bf16.gmra.mrb[0].mxu0 %v1808
    %v2399 = vpop.f32.mrb[0].mxu0
    %v2400 = vadd.f32 0.0, %v2399
    %v2401 = vpop.f32.mrb[0].mxu0
    %v2402 = vadd.f32 0.0, %v2401
    %v2403 = vpop.f32.mrb[0].mxu0
    %v2404 = vadd.f32 0.0, %v2403
    %v2405 = vpop.f32.mrb[0].mxu0
    %v2406 = vadd.f32 0.0, %v2405
    %2407 = vmatprep.mubr.bf16.mxu0 %v2200
    %2408 = vmatmul.mubr.bf16.gmra.mrb[0].mxu0 %v1812
    %v2409 = vpop.f32.mrb[0].mxu0
    %v2410 = vadd.f32 0.0, %v2409
    %v2411 = vpop.f32.mrb[0].mxu0
    %v2412 = vadd.f32 0.0, %v2411
    %v2413 = vpop.f32.mrb[0].mxu0
    %v2414 = vadd.f32 0.0, %v2413
    %v2415 = vpop.f32.mrb[0].mxu0
    %v2416 = vadd.f32 0.0, %v2415
    %2417 = vmatprep.mubr.bf16.mxu0 %v2203
    %2418 = vmatmul.mubr.bf16.gmra.mrb[0].mxu0 %v1816
    %v2419 = vpop.f32.mrb[0].mxu0
    %v2420 = vadd.f32 0.0, %v2419
    %v2421 = vpop.f32.mrb[0].mxu0
    %v2422 = vadd.f32 0.0, %v2421
    %v2423 = vpop.f32.mrb[0].mxu0
    %v2424 = vadd.f32 0.0, %v2423
    %v2425 = vpop.f32.mrb[0].mxu0
    %v2426 = vadd.f32 0.0, %v2425
    %2427 = vmatprep.mubr.bf16.mxu0 %v2206
    %2428 = vmatmul.mubr.bf16.gmra.mrb[0].mxu0 %v1820
    %v2429 = vpop.f32.mrb[0].mxu0
    %v2430 = vadd.f32 0.0, %v2429
    %v2431 = vpop.f32.mrb[0].mxu0
    %v2432 = vadd.f32 0.0, %v2431
    %v2433 = vpop.f32.mrb[0].mxu0
    %v2434 = vadd.f32 0.0, %v2433
    %v2435 = vpop.f32.mrb[0].mxu0
    %v2436 = vadd.f32 0.0, %v2435
    %2437 = vmatprep.mubr.bf16.mxu0 %v2209
    %2438 = vmatmul.mubr.bf16.gmra.mrb[0].mxu0 %v1824
    %v2439 = vpop.f32.mrb[0].mxu0
    %v2440 = vadd.f32 0.0, %v2439
    %v2441 = vpop.f32.mrb[0].mxu0
    %v2442 = vadd.f32 0.0, %v2441
    %v2443 = vpop.f32.mrb[0].mxu0
    %v2444 = vadd.f32 0.0, %v2443
    %v2445 = vpop.f32.mrb[0].mxu0
    %v2446 = vadd.f32 0.0, %v2445
    %2447 = vmatprep.mubr.bf16.mxu0 %v2212
    %2448 = vmatmul.mubr.bf16.gmra.mrb[0].mxu0 %v1828
    %v2449 = vpop.f32.mrb[0].mxu0
    %v2450 = vadd.f32 0.0, %v2449
    %v2451 = vpop.f32.mrb[0].mxu0
    %v2452 = vadd.f32 0.0, %v2451
    %v2453 = vpop.f32.mrb[0].mxu0
    %v2454 = vadd.f32 0.0, %v2453
    %v2455 = vpop.f32.mrb[0].mxu0
    %v2456 = vadd.f32 0.0, %v2455
    %2457 = vmatprep.mubr.bf16.mxu0 %v2215
    %2458 = vmatmul.mubr.bf16.gmra.mrb[0].mxu0 %v1832
    %v2459 = vpop.f32.mrb[0].mxu0
    %v2460 = vadd.f32 0.0, %v2459
    %v2461 = vpop.f32.mrb[0].mxu0
    %v2462 = vadd.f32 0.0, %v2461
    %v2463 = vpop.f32.mrb[0].mxu0
    %v2464 = vadd.f32 0.0, %v2463
    %v2465 = vpop.f32.mrb[0].mxu0
    %v2466 = vadd.f32 0.0, %v2465
    %2467 = vmatprep.mubr.bf16.mxu0 %v2218
    %2468 = vmatmul.mubr.bf16.gmra.mrb[0].mxu0 %v1836
    %v2469 = vpop.f32.mrb[0].mxu0
    %v2470 = vadd.f32 0.0, %v2469
    %v2471 = vpop.f32.mrb[0].mxu0
    %v2472 = vadd.f32 0.0, %v2471
    %v2473 = vpop.f32.mrb[0].mxu0
    %v2474 = vadd.f32 0.0, %v2473
    %v2475 = vpop.f32.mrb[0].mxu0
    %v2476 = vadd.f32 0.0, %v2475
    %2477 = vmatprep.mubr.bf16.mxu0 %v2221
    %2478 = vmatmul.mubr.bf16.gmra.mrb[0].mxu0 %v1840
    %v2479 = vpop.f32.mrb[0].mxu0
    %v2480 = vadd.f32 0.0, %v2479
    %v2481 = vpop.f32.mrb[0].mxu0
    %v2482 = vadd.f32 0.0, %v2481
    %v2483 = vpop.f32.mrb[0].mxu0
    %v2484 = vadd.f32 0.0, %v2483
    %v2485 = vpop.f32.mrb[0].mxu0
    %v2486 = vadd.f32 0.0, %v2485
    %2487 = vmatprep.mubr.bf16.mxu0 %v2224
    %2488 = vmatmul.mubr.bf16.gmra.mrb[0].mxu0 %v1844
    %v2489 = vpop.f32.mrb[0].mxu0
    %v2490 = vadd.f32 0.0, %v2489
    %v2491 = vpop.f32.mrb[0].mxu0
    %v2492 = vadd.f32 0.0, %v2491
    %v2493 = vpop.f32.mrb[0].mxu0
    %v2494 = vadd.f32 0.0, %v2493
    %v2495 = vpop.f32.mrb[0].mxu0
    %v2496 = vadd.f32 0.0, %v2495
    %2497 = vmatprep.mubr.bf16.mxu0 %v2227
    %2498 = vmatmul.mubr.bf16.gmra.mrb[0].mxu0 %v1848
    %v2499 = vpop.f32.mrb[0].mxu0
    %v2500 = vadd.f32 0.0, %v2499
    %v2501 = vpop.f32.mrb[0].mxu0
    %v2502 = vadd.f32 0.0, %v2501
    %v2503 = vpop.f32.mrb[0].mxu0
    %v2504 = vadd.f32 0.0, %v2503
    %v2505 = vpop.f32.mrb[0].mxu0
    %v2506 = vadd.f32 0.0, %v2505
    %2507 = vmatprep.mubr.bf16.mxu0 %v2230
    %2508 = vmatmul.mubr.bf16.gmra.mrb[0].mxu0 %v1852
    %v2509 = vpop.f32.mrb[0].mxu0
    %v2510 = vadd.f32 0.0, %v2509
    %v2511 = vpop.f32.mrb[0].mxu0
    %v2512 = vadd.f32 0.0, %v2511
    %v2513 = vpop.f32.mrb[0].mxu0
    %v2514 = vadd.f32 0.0, %v2513
    %v2515 = vpop.f32.mrb[0].mxu0
    %v2516 = vadd.f32 0.0, %v2515
    %2517 = vmatprep.mubr.bf16.mxu0 %v2233
    %2518 = vmatmul.mubr.bf16.gmra.mrb[0].mxu0 %v1856
    %v2519 = vpop.f32.mrb[0].mxu0
    %v2520 = vadd.f32 0.0, %v2519
    %v2521 = vpop.f32.mrb[0].mxu0
    %v2522 = vadd.f32 0.0, %v2521
    %v2523 = vpop.f32.mrb[0].mxu0
    %v2524 = vadd.f32 0.0, %v2523
    %v2525 = vpop.f32.mrb[0].mxu0
    %v2526 = vadd.f32 0.0, %v2525
    %2527 = vmatprep.mubr.bf16.mxu0 %v2236
    %2528 = vmatmul.mubr.bf16.gmra.mrb[0].mxu0 %v1860
    %v2529 = vpop.f32.mrb[0].mxu0
    %v2530 = vadd.f32 0.0, %v2529
    %v2531 = vpop.f32.mrb[0].mxu0
    %v2532 = vadd.f32 0.0, %v2531
    %v2533 = vpop.f32.mrb[0].mxu0
    %v2534 = vadd.f32 0.0, %v2533
    %v2535 = vpop.f32.mrb[0].mxu0
    %v2536 = vadd.f32 0.0, %v2535
    %2537 = vmatprep.mubr.bf16.mxu0 %v2239
    %2538 = vmatmul.mubr.bf16.gmra.mrb[0].mxu0 %v1864
    %v2539 = vpop.f32.mrb[0].mxu0
    %v2540 = vadd.f32 0.0, %v2539
    %v2541 = vpop.f32.mrb[0].mxu0
    %v2542 = vadd.f32 0.0, %v2541
    %v2543 = vpop.f32.mrb[0].mxu0
    %v2544 = vadd.f32 0.0, %v2543
    %v2545 = vpop.f32.mrb[0].mxu0
    %v2546 = vadd.f32 0.0, %v2545
    %2547 = vmatprep.mubr.bf16.mxu0 %v2242
    %2548 = vmatmul.mubr.bf16.gmra.mrb[0].mxu0 %v1868
    %v2549 = vpop.f32.mrb[0].mxu0
    %v2550 = vadd.f32 0.0, %v2549
    %v2551 = vpop.f32.mrb[0].mxu0
    %v2552 = vadd.f32 0.0, %v2551
    %v2553 = vpop.f32.mrb[0].mxu0
    %v2554 = vadd.f32 0.0, %v2553
    %v2555 = vpop.f32.mrb[0].mxu0
    %v2556 = vadd.f32 0.0, %v2555
    %2557 = vmatprep.mubr.bf16.mxu0 %v2245
    %2558 = vmatmul.mubr.bf16.gmra.mrb[0].mxu0 %v1872
    %v2559 = vpop.f32.mrb[0].mxu0
    %v2560 = vadd.f32 0.0, %v2559
    %v2561 = vpop.f32.mrb[0].mxu0
    %v2562 = vadd.f32 0.0, %v2561
    %v2563 = vpop.f32.mrb[0].mxu0
    %v2564 = vadd.f32 0.0, %v2563
    %v2565 = vpop.f32.mrb[0].mxu0
    %v2566 = vadd.f32 0.0, %v2565
    %2567 = vmatprep.mubr.bf16.mxu0 %v2248
    %2568 = vmatmul.mubr.bf16.gmra.mrb[0].mxu0 %v1876
    %v2569 = vpop.f32.mrb[0].mxu0
    %v2570 = vadd.f32 0.0, %v2569
    %v2571 = vpop.f32.mrb[0].mxu0
    %v2572 = vadd.f32 0.0, %v2571
    %v2573 = vpop.f32.mrb[0].mxu0
    %v2574 = vadd.f32 0.0, %v2573
    %v2575 = vpop.f32.mrb[0].mxu0
    %v2576 = vadd.f32 0.0, %v2575
    %2577 = vmatprep.mubr.bf16.mxu0 %v2251
    %2578 = vmatmul.mubr.bf16.gmra.mrb[0].mxu0 %v1880
    %v2579 = vpop.f32.mrb[0].mxu0
    %v2580 = vadd.f32 0.0, %v2579
    %v2581 = vpop.f32.mrb[0].mxu0
    %v2582 = vadd.f32 0.0, %v2581
    %v2583 = vpop.f32.mrb[0].mxu0
    %v2584 = vadd.f32 0.0, %v2583
    %v2585 = vpop.f32.mrb[0].mxu0
    %v2586 = vadd.f32 0.0, %v2585
    %2587 = vmatprep.mubr.bf16.mxu0 %v2254
    %2588 = vmatmul.mubr.bf16.gmra.mrb[0].mxu0 %v1884
    %v2589 = vpop.f32.mrb[0].mxu0
    %v2590 = vadd.f32 0.0, %v2589
    %v2591 = vpop.f32.mrb[0].mxu0
    %v2592 = vadd.f32 0.0, %v2591
    %v2593 = vpop.f32.mrb[0].mxu0
    %v2594 = vadd.f32 0.0, %v2593
    %v2595 = vpop.f32.mrb[0].mxu0
    %v2596 = vadd.f32 0.0, %v2595
    %2597 = vmatprep.mubr.bf16.mxu0 %v2257
    %2598 = vmatmul.mubr.bf16.gmra.mrb[0].mxu0 %v1888
    %v2599 = vpop.f32.mrb[0].mxu0
    %v2600 = vadd.f32 0.0, %v2599
    %v2601 = vpop.f32.mrb[0].mxu0
    %v2602 = vadd.f32 0.0, %v2601
    %v2603 = vpop.f32.mrb[0].mxu0
    %v2604 = vadd.f32 0.0, %v2603
    %v2605 = vpop.f32.mrb[0].mxu0
    %v2606 = vadd.f32 0.0, %v2605
    %2607 = vmatprep.mubr.bf16.mxu0 %v2260
    %2608 = vmatmul.mubr.bf16.gmra.mrb[0].mxu0 %v1892
    %v2609 = vpop.f32.mrb[0].mxu0
    %v2610 = vadd.f32 0.0, %v2609
    %v2611 = vpop.f32.mrb[0].mxu0
    %v2612 = vadd.f32 0.0, %v2611
    %v2613 = vpop.f32.mrb[0].mxu0
    %v2614 = vadd.f32 0.0, %v2613
    %v2615 = vpop.f32.mrb[0].mxu0
    %v2616 = vadd.f32 0.0, %v2615
    %2617 = vmatprep.mubr.bf16.mxu0 %v2263
    %2618 = vmatmul.mubr.bf16.gmra.mrb[0].mxu0 %v1896
    %v2619 = vpop.f32.mrb[0].mxu0
    %v2620 = vadd.f32 0.0, %v2619
    %v2621 = vpop.f32.mrb[0].mxu0
    %v2622 = vadd.f32 0.0, %v2621
    %v2623 = vpop.f32.mrb[0].mxu0
    %v2624 = vadd.f32 0.0, %v2623
    %v2625 = vpop.f32.mrb[0].mxu0
    %v2626 = vadd.f32 0.0, %v2625
    %2627 = vmatprep.mubr.bf16.mxu0 %v2266
    %2628 = vmatmul.mubr.bf16.gmra.mrb[0].mxu0 %v1900
    %v2629 = vpop.f32.mrb[0].mxu0
    %v2630 = vadd.f32 0.0, %v2629
    %v2631 = vpop.f32.mrb[0].mxu0
    %v2632 = vadd.f32 0.0, %v2631
    %v2633 = vpop.f32.mrb[0].mxu0
    %v2634 = vadd.f32 0.0, %v2633
    %v2635 = vpop.f32.mrb[0].mxu0
    %v2636 = vadd.f32 0.0, %v2635
    %2637 = vmatprep.mubr.bf16.mxu0 %v2269
    %2638 = vmatmul.mubr.bf16.gmra.mrb[0].mxu0 %v1904
    %v2639 = vpop.f32.mrb[0].mxu0
    %v2640 = vadd.f32 0.0, %v2639
    %v2641 = vpop.f32.mrb[0].mxu0
    %v2642 = vadd.f32 0.0, %v2641
    %v2643 = vpop.f32.mrb[0].mxu0
    %v2644 = vadd.f32 0.0, %v2643
    %v2645 = vpop.f32.mrb[0].mxu0
    %v2646 = vadd.f32 0.0, %v2645
    %2647 = vmatprep.mubr.bf16.mxu0 %v2272
    %2648 = vmatmul.mubr.bf16.gmra.mrb[0].mxu0 %v1908
    %v2649 = vpop.f32.mrb[0].mxu0
    %v2650 = vadd.f32 0.0, %v2649
    %v2651 = vpop.f32.mrb[0].mxu0
    %v2652 = vadd.f32 0.0, %v2651
    %v2653 = vpop.f32.mrb[0].mxu0
    %v2654 = vadd.f32 0.0, %v2653
    %v2655 = vpop.f32.mrb[0].mxu0
    %v2656 = vadd.f32 0.0, %v2655
    %2657 = vmatprep.mubr.bf16.mxu0 %v2275
    %2658 = vmatmul.mubr.bf16.gmra.mrb[0].mxu0 %v1912
    %v2659 = vpop.f32.mrb[0].mxu0
    %v2660 = vadd.f32 0.0, %v2659
    %v2661 = vpop.f32.mrb[0].mxu0
    %v2662 = vadd.f32 0.0, %v2661
    %v2663 = vpop.f32.mrb[0].mxu0
    %v2664 = vadd.f32 0.0, %v2663
    %v2665 = vpop.f32.mrb[0].mxu0
    %v2666 = vadd.f32 0.0, %v2665
    %2667 = vmatprep.mubr.bf16.mxu0 %v2278
    %2668 = vmatmul.mubr.bf16.gmra.mrb[0].mxu0 %v1916
    %v2669 = vpop.f32.mrb[0].mxu0
    %v2670 = vadd.f32 0.0, %v2669
    %v2671 = vpop.f32.mrb[0].mxu0
    %v2672 = vadd.f32 0.0, %v2671
    %v2673 = vpop.f32.mrb[0].mxu0
    %v2674 = vadd.f32 0.0, %v2673
    %v2675 = vpop.f32.mrb[0].mxu0
    %v2676 = vadd.f32 0.0, %v2675
    %2677 = vmatprep.mubr.bf16.mxu0 %v2281
    %2678 = vmatmul.mubr.bf16.gmra.mrb[0].mxu0 %v1920
    %v2679 = vpop.f32.mrb[0].mxu0
    %v2680 = vadd.f32 0.0, %v2679
    %v2681 = vpop.f32.mrb[0].mxu0
    %v2682 = vadd.f32 0.0, %v2681
    %v2683 = vpop.f32.mrb[0].mxu0
    %v2684 = vadd.f32 0.0, %v2683
    %v2685 = vpop.f32.mrb[0].mxu0
    %v2686 = vadd.f32 0.0, %v2685
    %2687 = vmatprep.mubr.bf16.mxu0 %v2284
    %2688 = vmatmul.mubr.bf16.gmra.mrb[0].mxu0 %v1924
    %v2689 = vpop.f32.mrb[0].mxu0
    %v2690 = vadd.f32 0.0, %v2689
    %v2691 = vpop.f32.mrb[0].mxu0
    %v2692 = vadd.f32 0.0, %v2691
    %v2693 = vpop.f32.mrb[0].mxu0
    %v2694 = vadd.f32 0.0, %v2693
    %v2695 = vpop.f32.mrb[0].mxu0
    %v2696 = vadd.f32 0.0, %v2695
    %2697 = vmatprep.mubr.bf16.mxu0 %v2287
    %2698 = vmatmul.mubr.bf16.gmra.mrb[0].mxu0 %v1928
    %v2699 = vpop.f32.mrb[0].mxu0
    %v2700 = vadd.f32 0.0, %v2699
    %v2701 = vpop.f32.mrb[0].mxu0
    %v2702 = vadd.f32 0.0, %v2701
    %v2703 = vpop.f32.mrb[0].mxu0
    %v2704 = vadd.f32 0.0, %v2703
    %v2705 = vpop.f32.mrb[0].mxu0
    %v2706 = vadd.f32 0.0, %v2705
    %2707 = vmatprep.mubr.bf16.mxu0 %v2290
    %2708 = vmatmul.mubr.bf16.gmra.mrb[0].mxu0 %v1932
    %v2709 = vpop.f32.mrb[0].mxu0
    %v2710 = vadd.f32 0.0, %v2709
    %v2711 = vpop.f32.mrb[0].mxu0
    %v2712 = vadd.f32 0.0, %v2711
    %v2713 = vpop.f32.mrb[0].mxu0
    %v2714 = vadd.f32 0.0, %v2713
    %v2715 = vpop.f32.mrb[0].mxu0
    %v2716 = vadd.f32 0.0, %v2715
    %2717 = vmatprep.mubr.bf16.mxu0 %v2293
    %2718 = vmatmul.mubr.bf16.gmra.mrb[0].mxu0 %v1936
    %v2719 = vpop.f32.mrb[0].mxu0
    %v2720 = vadd.f32 0.0, %v2719
    %v2721 = vpop.f32.mrb[0].mxu0
    %v2722 = vadd.f32 0.0, %v2721
    %v2723 = vpop.f32.mrb[0].mxu0
    %v2724 = vadd.f32 0.0, %v2723
    %v2725 = vpop.f32.mrb[0].mxu0
    %v2726 = vadd.f32 0.0, %v2725
    %2727 = vmatprep.mubr.bf16.mxu0 %v2296
    %2728 = vmatmul.mubr.bf16.gmra.mrb[0].mxu0 %v1940
    %v2729 = vpop.f32.mrb[0].mxu0
    %v2730 = vadd.f32 0.0, %v2729
    %v2731 = vpop.f32.mrb[0].mxu0
    %v2732 = vadd.f32 0.0, %v2731
    %v2733 = vpop.f32.mrb[0].mxu0
    %v2734 = vadd.f32 0.0, %v2733
    %v2735 = vpop.f32.mrb[0].mxu0
    %v2736 = vadd.f32 0.0, %v2735
    %2737 = vmatprep.mubr.bf16.mxu0 %v2299
    %2738 = vmatmul.mubr.bf16.gmra.mrb[0].mxu0 %v1944
    %v2739 = vpop.f32.mrb[0].mxu0
    %v2740 = vadd.f32 0.0, %v2739
    %v2741 = vpop.f32.mrb[0].mxu0
    %v2742 = vadd.f32 0.0, %v2741
    %v2743 = vpop.f32.mrb[0].mxu0
    %v2744 = vadd.f32 0.0, %v2743
    %v2745 = vpop.f32.mrb[0].mxu0
    %v2746 = vadd.f32 0.0, %v2745
    %2747 = vmatprep.mubr.bf16.mxu0 %v2302
    %2748 = vmatmul.mubr.bf16.gmra.mrb[0].mxu0 %v1948
    %v2749 = vpop.f32.mrb[0].mxu0
    %v2750 = vadd.f32 0.0, %v2749
    %v2751 = vpop.f32.mrb[0].mxu0
    %v2752 = vadd.f32 0.0, %v2751
    %v2753 = vpop.f32.mrb[0].mxu0
    %v2754 = vadd.f32 0.0, %v2753
    %v2755 = vpop.f32.mrb[0].mxu0
    %v2756 = vadd.f32 0.0, %v2755
    %2757 = vmatprep.mubr.bf16.mxu0 %v2305
    %2758 = vmatmul.mubr.bf16.gmra.mrb[0].mxu0 %v1952
    %v2759 = vpop.f32.mrb[0].mxu0
    %v2760 = vadd.f32 0.0, %v2759
    %v2761 = vpop.f32.mrb[0].mxu0
    %v2762 = vadd.f32 0.0, %v2761
    %v2763 = vpop.f32.mrb[0].mxu0
    %v2764 = vadd.f32 0.0, %v2763
    %v2765 = vpop.f32.mrb[0].mxu0
    %v2766 = vadd.f32 0.0, %v2765
    %2767 = vmatprep.mubr.bf16.mxu0 %v2308
    %2768 = vmatmul.mubr.bf16.gmra.mrb[0].mxu0 %v1956
    %v2769 = vpop.f32.mrb[0].mxu0
    %v2770 = vadd.f32 0.0, %v2769
    %v2771 = vpop.f32.mrb[0].mxu0
    %v2772 = vadd.f32 0.0, %v2771
    %v2773 = vpop.f32.mrb[0].mxu0
    %v2774 = vadd.f32 0.0, %v2773
    %v2775 = vpop.f32.mrb[0].mxu0
    %v2776 = vadd.f32 0.0, %v2775
    %2777 = vmatprep.mubr.bf16.mxu0 %v2311
    %2778 = vmatmul.mubr.bf16.gmra.mrb[0].mxu0 %v1960
    %v2779 = vpop.f32.mrb[0].mxu0
    %v2780 = vadd.f32 0.0, %v2779
    %v2781 = vpop.f32.mrb[0].mxu0
    %v2782 = vadd.f32 0.0, %v2781
    %v2783 = vpop.f32.mrb[0].mxu0
    %v2784 = vadd.f32 0.0, %v2783
    %v2785 = vpop.f32.mrb[0].mxu0
    %v2786 = vadd.f32 0.0, %v2785
    %2787 = vmatprep.mubr.bf16.mxu0 %v2314
    %2788 = vmatmul.mubr.bf16.gmra.mrb[0].mxu0 %v1964
    %v2789 = vpop.f32.mrb[0].mxu0
    %v2790 = vadd.f32 0.0, %v2789
    %v2791 = vpop.f32.mrb[0].mxu0
    %v2792 = vadd.f32 0.0, %v2791
    %v2793 = vpop.f32.mrb[0].mxu0
    %v2794 = vadd.f32 0.0, %v2793
    %v2795 = vpop.f32.mrb[0].mxu0
    %v2796 = vadd.f32 0.0, %v2795
    %2797 = vmatprep.mubr.bf16.mxu0 %v2317
    %2798 = vmatmul.mubr.bf16.gmra.mrb[0].mxu0 %v1968
    %v2799 = vpop.f32.mrb[0].mxu0
    %v2800 = vadd.f32 0.0, %v2799
    %v2801 = vpop.f32.mrb[0].mxu0
    %v2802 = vadd.f32 0.0, %v2801
    %v2803 = vpop.f32.mrb[0].mxu0
    %v2804 = vadd.f32 0.0, %v2803
    %v2805 = vpop.f32.mrb[0].mxu0
    %v2806 = vadd.f32 0.0, %v2805
    %2807 = vmatprep.mubr.bf16.mxu0 %v2320
    %2808 = vmatmul.mubr.bf16.gmra.mrb[0].mxu0 %v1972
    %v2809 = vpop.f32.mrb[0].mxu0
    %v2810 = vadd.f32 0.0, %v2809
    %v2811 = vpop.f32.mrb[0].mxu0
    %v2812 = vadd.f32 0.0, %v2811
    %v2813 = vpop.f32.mrb[0].mxu0
    %v2814 = vadd.f32 0.0, %v2813
    %v2815 = vpop.f32.mrb[0].mxu0
    %v2816 = vadd.f32 0.0, %v2815
    %2817 = vmatprep.mubr.bf16.mxu0 %v2323
    %2818 = vmatmul.mubr.bf16.gmra.mrb[0].mxu0 %v1976
    %v2819 = vpop.f32.mrb[0].mxu0
    %v2820 = vadd.f32 0.0, %v2819
    %v2821 = vpop.f32.mrb[0].mxu0
    %v2822 = vadd.f32 0.0, %v2821
    %v2823 = vpop.f32.mrb[0].mxu0
    %v2824 = vadd.f32 0.0, %v2823
    %v2825 = vpop.f32.mrb[0].mxu0
    %v2826 = vadd.f32 0.0, %v2825
    %2827 = vmatprep.mubr.bf16.mxu0 %v2326
    %2828 = vmatmul.mubr.bf16.gmra.mrb[0].mxu0 %v1980
    %v2829 = vpop.f32.mrb[0].mxu0
    %v2830 = vadd.f32 0.0, %v2829
    %v2831 = vpop.f32.mrb[0].mxu0
    %v2832 = vadd.f32 0.0, %v2831
    %v2833 = vpop.f32.mrb[0].mxu0
    %v2834 = vadd.f32 0.0, %v2833
    %v2835 = vpop.f32.mrb[0].mxu0
    %v2836 = vadd.f32 0.0, %v2835
    %2837 = vmatprep.mubr.bf16.mxu0 %v2329
    %2838 = vmatmul.mubr.bf16.gmra.mrb[0].mxu0 %v1984
    %v2839 = vpop.f32.mrb[0].mxu0
    %v2840 = vadd.f32 0.0, %v2839
    %v2841 = vpop.f32.mrb[0].mxu0
    %v2842 = vadd.f32 0.0, %v2841
    %v2843 = vpop.f32.mrb[0].mxu0
    %v2844 = vadd.f32 0.0, %v2843
    %v2845 = vpop.f32.mrb[0].mxu0
    %v2846 = vadd.f32 0.0, %v2845
    %2847 = vmatprep.mubr.bf16.mxu0 %v2332
    %2848 = vmatmul.mubr.bf16.gmra.mrb[0].mxu0 %v1988
    %v2849 = vpop.f32.mrb[0].mxu0
    %v2850 = vadd.f32 0.0, %v2849
    %v2851 = vpop.f32.mrb[0].mxu0
    %v2852 = vadd.f32 0.0, %v2851
    %v2853 = vpop.f32.mrb[0].mxu0
    %v2854 = vadd.f32 0.0, %v2853
    %v2855 = vpop.f32.mrb[0].mxu0
    %v2856 = vadd.f32 0.0, %v2855
    %2857 = vmatprep.mubr.bf16.mxu0 %v2335
    %2858 = vmatmul.mubr.bf16.gmra.mrb[0].mxu0 %v1992
    %v2859 = vpop.f32.mrb[0].mxu0
    %v2860 = vadd.f32 0.0, %v2859
    %v2861 = vpop.f32.mrb[0].mxu0
    %v2862 = vadd.f32 0.0, %v2861
    %v2863 = vpop.f32.mrb[0].mxu0
    %v2864 = vadd.f32 0.0, %v2863
    %v2865 = vpop.f32.mrb[0].mxu0
    %v2866 = vadd.f32 0.0, %v2865
    %2867 = vmatprep.mubr.bf16.mxu0 %v2338
    %2868 = vmatmul.mubr.bf16.gmra.mrb[0].mxu0 %v1996
    %v2869 = vpop.f32.mrb[0].mxu0
    %v2870 = vadd.f32 0.0, %v2869
    %v2871 = vpop.f32.mrb[0].mxu0
    %v2872 = vadd.f32 0.0, %v2871
    %v2873 = vpop.f32.mrb[0].mxu0
    %v2874 = vadd.f32 0.0, %v2873
    %v2875 = vpop.f32.mrb[0].mxu0
    %v2876 = vadd.f32 0.0, %v2875
    %2877 = vmatprep.mubr.bf16.mxu0 %v2341
    %2878 = vmatmul.mubr.bf16.gmra.mrb[0].mxu0 %v2000
    %v2879 = vpop.f32.mrb[0].mxu0
    %v2880 = vadd.f32 0.0, %v2879
    %v2881 = vpop.f32.mrb[0].mxu0
    %v2882 = vadd.f32 0.0, %v2881
    %v2883 = vpop.f32.mrb[0].mxu0
    %v2884 = vadd.f32 0.0, %v2883
    %v2885 = vpop.f32.mrb[0].mxu0
    %v2886 = vadd.f32 0.0, %v2885
    %2887 = vmatprep.mubr.bf16.mxu0 %v2344
    %2888 = vmatmul.mubr.bf16.gmra.mrb[0].mxu0 %v2004
    %v2889 = vpop.f32.mrb[0].mxu0
    %v2890 = vadd.f32 0.0, %v2889
    %v2891 = vpop.f32.mrb[0].mxu0
    %v2892 = vadd.f32 0.0, %v2891
    %v2893 = vpop.f32.mrb[0].mxu0
    %v2894 = vadd.f32 0.0, %v2893
    %v2895 = vpop.f32.mrb[0].mxu0
    %v2896 = vadd.f32 0.0, %v2895
    %2897 = vmatprep.mubr.bf16.mxu0 %v2347
    %2898 = vmatmul.mubr.bf16.gmra.mrb[0].mxu0 %v2008
    %v2899 = vpop.f32.mrb[0].mxu0
    %v2900 = vadd.f32 0.0, %v2899
    %v2901 = vpop.f32.mrb[0].mxu0
    %v2902 = vadd.f32 0.0, %v2901
    %v2903 = vpop.f32.mrb[0].mxu0
    %v2904 = vadd.f32 0.0, %v2903
    %v2905 = vpop.f32.mrb[0].mxu0
    %v2906 = vadd.f32 0.0, %v2905
    %2907 = vmatprep.mubr.bf16.mxu0 %v2350
    %2908 = vmatmul.mubr.bf16.gmra.mrb[0].mxu0 %v2012
    %v2909 = vpop.f32.mrb[0].mxu0
    %v2910 = vadd.f32 0.0, %v2909
    %v2911 = vpop.f32.mrb[0].mxu0
    %v2912 = vadd.f32 0.0, %v2911
    %v2913 = vpop.f32.mrb[0].mxu0
    %v2914 = vadd.f32 0.0, %v2913
    %v2915 = vpop.f32.mrb[0].mxu0
    %v2916 = vadd.f32 0.0, %v2915
    %2917 = vmatprep.mubr.bf16.mxu0 %v2353
    %2918 = vmatmul.mubr.bf16.gmra.mrb[0].mxu0 %v2016
    %v2919 = vpop.f32.mrb[0].mxu0
    %v2920 = vadd.f32 0.0, %v2919
    %v2921 = vpop.f32.mrb[0].mxu0
    %v2922 = vadd.f32 0.0, %v2921
    %v2923 = vpop.f32.mrb[0].mxu0
    %v2924 = vadd.f32 0.0, %v2923
    %v2925 = vpop.f32.mrb[0].mxu0
    %v2926 = vadd.f32 0.0, %v2925
    %2927 = vdwg.mxu0
    %v2952 = vunpack.c.l.b16 %v1636
    %v2953 = vunpack.c.h.b16 %v1636
    %v2954 = vunpack.c.l.b16 %v1637
    %v2955 = vunpack.c.h.b16 %v1637
    %v2956 = vunpack.c.l.b16 %v1638
    %v2957 = vunpack.c.h.b16 %v1638
    %v2958 = vunpack.c.l.b16 %v1639
    %v2959 = vunpack.c.h.b16 %v1639
    %v2960 = vunpack.c.l.b16 %v1640
    %v2961 = vunpack.c.h.b16 %v1640
    %v2962 = vunpack.c.l.b16 %v1641
    %v2963 = vunpack.c.h.b16 %v1641
    %v2964 = vunpack.c.l.b16 %v1642
    %v2965 = vunpack.c.h.b16 %v1642
    %v2966 = vunpack.c.l.b16 %v1643
    %v2967 = vunpack.c.h.b16 %v1643
    %v2968 = vunpack.c.l.b16 %v1644
    %v2969 = vunpack.c.h.b16 %v1644
    %v2970 = vunpack.c.l.b16 %v1645
    %v2971 = vunpack.c.h.b16 %v1645
    %v2972 = vunpack.c.l.b16 %v1646
    %v2973 = vunpack.c.h.b16 %v1646
    %v2974 = vunpack.c.l.b16 %v1647
    %v2975 = vunpack.c.h.b16 %v1647
    %v2976 = vunpack.c.l.b16 %v1648
    %v2977 = vunpack.c.h.b16 %v1648
    %v2978 = vunpack.c.l.b16 %v1649
    %v2979 = vunpack.c.h.b16 %v1649
    %v2980 = vunpack.c.l.b16 %v1650
    %v2981 = vunpack.c.h.b16 %v1650
    %v2982 = vunpack.c.l.b16 %v1651
    %v2983 = vunpack.c.h.b16 %v1651
    %v2984 = vunpack.c.l.b16 %v1652
    %v2985 = vunpack.c.h.b16 %v1652
    %v2986 = vunpack.c.l.b16 %v1653
    %v2987 = vunpack.c.h.b16 %v1653
    %v2988 = vunpack.c.l.b16 %v1654
    %v2989 = vunpack.c.h.b16 %v1654
    %v2990 = vunpack.c.l.b16 %v1655
    %v2991 = vunpack.c.h.b16 %v1655
    %v2992 = vunpack.c.l.b16 %v1656
    %v2993 = vunpack.c.h.b16 %v1656
    %v2994 = vunpack.c.l.b16 %v1657
    %v2995 = vunpack.c.h.b16 %v1657
    %v2996 = vunpack.c.l.b16 %v1658
    %v2997 = vunpack.c.h.b16 %v1658
    %v2998 = vunpack.c.l.b16 %v1659
    %v2999 = vunpack.c.h.b16 %v1659
    %v3000 = vpack.c.b16 %v2954, %v2952
    %v3001 = vpack.c.b16 %v2955, %v2953
    %v3002 = vpack.c.b16 %v2958, %v2956
    %v3003 = vpack.c.b16 %v2959, %v2957
    %v3004 = vpack.c.b16 %v2962, %v2960
    %v3005 = vpack.c.b16 %v2963, %v2961
    %v3006 = vpack.c.b16 %v2966, %v2964
    %v3007 = vpack.c.b16 %v2967, %v2965
    %v3008 = vpack.c.b16 %v2970, %v2968
    %v3009 = vpack.c.b16 %v2971, %v2969
    %v3010 = vpack.c.b16 %v2974, %v2972
    %v3011 = vpack.c.b16 %v2975, %v2973
    %v3012 = vpack.c.b16 %v2978, %v2976
    %v3013 = vpack.c.b16 %v2979, %v2977
    %v3014 = vpack.c.b16 %v2982, %v2980
    %v3015 = vpack.c.b16 %v2983, %v2981
    %v3016 = vpack.c.b16 %v2986, %v2984
    %v3017 = vpack.c.b16 %v2987, %v2985
    %v3018 = vpack.c.b16 %v2990, %v2988
    %v3019 = vpack.c.b16 %v2991, %v2989
    %v3020 = vpack.c.b16 %v2994, %v2992
    %v3021 = vpack.c.b16 %v2995, %v2993
    %v3022 = vpack.c.b16 %v2998, %v2996
    %v3023 = vpack.c.b16 %v2999, %v2997
    %v3049 = vsel %vm1242, %v1529, 0
    %v3052 = vsel %vm1242, %v1531, 0
    %v3055 = vsel %vm1242, %v1533, 0
    %v3058 = vsel %vm1242, %v1535, 0
    %v3061 = vsel %vm1242, %v1537, 0
    %v3064 = vsel %vm1242, %v1539, 0
    %v3067 = vsel %vm1242, %v1541, 0
    %v3070 = vsel %vm1242, %v1543, 0
    %v3073 = vsel %vm1242, %v1545, 0
    %v3076 = vsel %vm1242, %v1547, 0
    %v3079 = vsel %vm1242, %v1549, 0
    %v3082 = vsel %vm1242, %v1551, 0
    %v3085 = vsel %vm1242, %v1553, 0
    %v3088 = vsel %vm1242, %v1555, 0
    %v3091 = vsel %vm1242, %v1557, 0
    %v3094 = vsel %vm1242, %v1559, 0
    %v3097 = vsel %vm1242, %v1561, 0
    %v3100 = vsel %vm1242, %v1563, 0
    %v3103 = vsel %vm1242, %v1565, 0
    %v3106 = vsel %vm1242, %v1567, 0
    %v3109 = vsel %vm1242, %v1569, 0
    %v3112 = vsel %vm1242, %v1571, 0
    %v3115 = vsel %vm1242, %v1573, 0
    %v3118 = vsel %vm1242, %v1575, 0
    %v3121 = vsel %vm1242, %v1577, 0
    %v3124 = vsel %vm1242, %v1579, 0
    %v3127 = vsel %vm1242, %v1581, 0
    %v3130 = vsel %vm1242, %v1583, 0
    %v3133 = vsel %vm1242, %v1585, 0
    %v3136 = vsel %vm1242, %v1587, 0
    %v3139 = vsel %vm1242, %v1589, 0
    %v3142 = vsel %vm1242, %v1591, 0
    %v3145 = vsel %vm1242, %v1593, 0
    %v3148 = vsel %vm1242, %v1595, 0
    %v3151 = vsel %vm1242, %v1597, 0
    %v3154 = vsel %vm1242, %v1599, 0
    %v3157 = vsel %vm1242, %v1601, 0
    %v3160 = vsel %vm1242, %v1603, 0
    %v3163 = vsel %vm1242, %v1605, 0
    %v3166 = vsel %vm1242, %v1607, 0
    %v3169 = vsel %vm1242, %v1609, 0
    %v3172 = vsel %vm1242, %v1611, 0
    %v3175 = vsel %vm1242, %v1613, 0
    %v3178 = vsel %vm1242, %v1615, 0
    %v3181 = vsel %vm1242, %v1617, 0
    %v3184 = vsel %vm1242, %v1619, 0
    %v3187 = vsel %vm1242, %v1621, 0
    %v3190 = vsel %vm1242, %v1623, 0
    %v3193 = vsel %vm1242, %v1625, 0
    %v3196 = vsel %vm1242, %v1627, 0
    %v3199 = vsel %vm1242, %v1629, 0
    %v3202 = vsel %vm1242, %v1631, 0
    %v3205 = vsel %vm1242, %v1633, 0
    %v3208 = vsel %vm1242, %v1635, 0
    %3210 = vmatprep.subr.bf16.mxu0 %v3001
    %3211 = vmatpush1.bf16.msra.mxu0 %v3000
    %3212 = vmatprep.subr.bf16.mxu0 %v3003
    %3213 = vmatpush1.bf16.msra.mxu0 %v3002
    %3214 = vmatprep.subr.bf16.mxu0 %v3005
    %3215 = vmatpush1.bf16.msra.mxu0 %v3004
    %3216 = vmatprep.subr.bf16.mxu0 %v3007
    %3217 = vmatpush1.bf16.msra.mxu0 %v3006
    %3218 = vmatprep.subr.bf16.mxu0 %v3009
    %3219 = vmatpush1.bf16.msra.mxu0 %v3008
    %3220 = vmatprep.subr.bf16.mxu0 %v3011
    %3221 = vmatpush1.bf16.msra.mxu0 %v3010
    %3222 = vmatprep.subr.bf16.mxu0 %v3013
    %3223 = vmatpush1.bf16.msra.mxu0 %v3012
    %3224 = vmatprep.subr.bf16.mxu0 %v3015
    %3225 = vmatpush1.bf16.msra.mxu0 %v3014
    %3226 = vmatprep.subr.bf16.mxu0 %v3017
    %3227 = vmatpush1.bf16.msra.mxu0 %v3016
    %3228 = vmatprep.subr.bf16.mxu0 %v3019
    %3229 = vmatpush1.bf16.msra.mxu0 %v3018
    %3230 = vmatprep.subr.bf16.mxu0 %v3021
    %3231 = vmatpush1.bf16.msra.mxu0 %v3020
    %3232 = vmatprep.subr.bf16.mxu0 %v3023
    %3233 = vmatpush1.bf16.msra.mxu0 %v3022
    %3234 = vmatprep.subr.bf16.mxu0 0
    %3235 = vmatpush1.bf16.msra.mxu0 0
    %3236 = vmatprep.subr.bf16.mxu0 0
    %3237 = vmatpush1.bf16.msra.mxu0 0
    %3238 = vmatprep.subr.bf16.mxu0 0
    %3239 = vmatpush1.bf16.msra.mxu0 0
    %3240 = vmatprep.subr.bf16.mxu0 0
    %3241 = vmatpush1.bf16.msra.mxu0 0
    %3242 = vmatprep.mubr.bf16.mxu0 %v3049
    %3243 = vmatmul.mubr.bf16.gmra.mrb[0].mxu0 %v1528
    %v3244 = vpop.f32.mrb[0].mxu0
    %v3245 = vadd.f32 %v2390, %v3244
    %v3246 = vpop.f32.mrb[0].mxu0
    %v3247 = vadd.f32 %v2392, %v3246
    %v3248 = vpop.f32.mrb[0].mxu0
    %v3249 = vadd.f32 %v2394, %v3248
    %v3250 = vpop.f32.mrb[0].mxu0
    %v3251 = vadd.f32 %v2396, %v3250
    %3252 = vmatprep.mubr.bf16.mxu0 %v3052
    %3253 = vmatmul.mubr.bf16.gmra.mrb[0].mxu0 %v1530
    %v3254 = vpop.f32.mrb[0].mxu0
    %v3255 = vadd.f32 %v2400, %v3254
    %v3256 = vpop.f32.mrb[0].mxu0
    %v3257 = vadd.f32 %v2402, %v3256
    %v3258 = vpop.f32.mrb[0].mxu0
    %v3259 = vadd.f32 %v2404, %v3258
    %v3260 = vpop.f32.mrb[0].mxu0
    %v3261 = vadd.f32 %v2406, %v3260
    %3262 = vmatprep.mubr.bf16.mxu0 %v3055
    %3263 = vmatmul.mubr.bf16.gmra.mrb[0].mxu0 %v1532
    %v3264 = vpop.f32.mrb[0].mxu0
    %v3265 = vadd.f32 %v2410, %v3264
    %v3266 = vpop.f32.mrb[0].mxu0
    %v3267 = vadd.f32 %v2412, %v3266
    %v3268 = vpop.f32.mrb[0].mxu0
    %v3269 = vadd.f32 %v2414, %v3268
    %v3270 = vpop.f32.mrb[0].mxu0
    %v3271 = vadd.f32 %v2416, %v3270
    %3272 = vmatprep.mubr.bf16.mxu0 %v3058
    %3273 = vmatmul.mubr.bf16.gmra.mrb[0].mxu0 %v1534
    %v3274 = vpop.f32.mrb[0].mxu0
    %v3275 = vadd.f32 %v2420, %v3274
    %v3276 = vpop.f32.mrb[0].mxu0
    %v3277 = vadd.f32 %v2422, %v3276
    %v3278 = vpop.f32.mrb[0].mxu0
    %v3279 = vadd.f32 %v2424, %v3278
    %v3280 = vpop.f32.mrb[0].mxu0
    %v3281 = vadd.f32 %v2426, %v3280
    %3282 = vmatprep.mubr.bf16.mxu0 %v3061
    %3283 = vmatmul.mubr.bf16.gmra.mrb[0].mxu0 %v1536
    %v3284 = vpop.f32.mrb[0].mxu0
    %v3285 = vadd.f32 %v2430, %v3284
    %v3286 = vpop.f32.mrb[0].mxu0
    %v3287 = vadd.f32 %v2432, %v3286
    %v3288 = vpop.f32.mrb[0].mxu0
    %v3289 = vadd.f32 %v2434, %v3288
    %v3290 = vpop.f32.mrb[0].mxu0
    %v3291 = vadd.f32 %v2436, %v3290
    %3292 = vmatprep.mubr.bf16.mxu0 %v3064
    %3293 = vmatmul.mubr.bf16.gmra.mrb[0].mxu0 %v1538
    %v3294 = vpop.f32.mrb[0].mxu0
    %v3295 = vadd.f32 %v2440, %v3294
    %v3296 = vpop.f32.mrb[0].mxu0
    %v3297 = vadd.f32 %v2442, %v3296
    %v3298 = vpop.f32.mrb[0].mxu0
    %v3299 = vadd.f32 %v2444, %v3298
    %v3300 = vpop.f32.mrb[0].mxu0
    %v3301 = vadd.f32 %v2446, %v3300
    %3302 = vmatprep.mubr.bf16.mxu0 %v3067
    %3303 = vmatmul.mubr.bf16.gmra.mrb[0].mxu0 %v1540
    %v3304 = vpop.f32.mrb[0].mxu0
    %v3305 = vadd.f32 %v2450, %v3304
    %v3306 = vpop.f32.mrb[0].mxu0
    %v3307 = vadd.f32 %v2452, %v3306
    %v3308 = vpop.f32.mrb[0].mxu0
    %v3309 = vadd.f32 %v2454, %v3308
    %v3310 = vpop.f32.mrb[0].mxu0
    %v3311 = vadd.f32 %v2456, %v3310
    %3312 = vmatprep.mubr.bf16.mxu0 %v3070
    %3313 = vmatmul.mubr.bf16.gmra.mrb[0].mxu0 %v1542
    %v3314 = vpop.f32.mrb[0].mxu0
    %v3315 = vadd.f32 %v2460, %v3314
    %v3316 = vpop.f32.mrb[0].mxu0
    %v3317 = vadd.f32 %v2462, %v3316
    %v3318 = vpop.f32.mrb[0].mxu0
    %v3319 = vadd.f32 %v2464, %v3318
    %v3320 = vpop.f32.mrb[0].mxu0
    %v3321 = vadd.f32 %v2466, %v3320
    %3322 = vmatprep.mubr.bf16.mxu0 %v3073
    %3323 = vmatmul.mubr.bf16.gmra.mrb[0].mxu0 %v1544
    %v3324 = vpop.f32.mrb[0].mxu0
    %v3325 = vadd.f32 %v2470, %v3324
    %v3326 = vpop.f32.mrb[0].mxu0
    %v3327 = vadd.f32 %v2472, %v3326
    %v3328 = vpop.f32.mrb[0].mxu0
    %v3329 = vadd.f32 %v2474, %v3328
    %v3330 = vpop.f32.mrb[0].mxu0
    %v3331 = vadd.f32 %v2476, %v3330
    %3332 = vmatprep.mubr.bf16.mxu0 %v3076
    %3333 = vmatmul.mubr.bf16.gmra.mrb[0].mxu0 %v1546
    %v3334 = vpop.f32.mrb[0].mxu0
    %v3335 = vadd.f32 %v2480, %v3334
    %v3336 = vpop.f32.mrb[0].mxu0
    %v3337 = vadd.f32 %v2482, %v3336
    %v3338 = vpop.f32.mrb[0].mxu0
    %v3339 = vadd.f32 %v2484, %v3338
    %v3340 = vpop.f32.mrb[0].mxu0
    %v3341 = vadd.f32 %v2486, %v3340
    %3342 = vmatprep.mubr.bf16.mxu0 %v3079
    %3343 = vmatmul.mubr.bf16.gmra.mrb[0].mxu0 %v1548
    %v3344 = vpop.f32.mrb[0].mxu0
    %v3345 = vadd.f32 %v2490, %v3344
    %v3346 = vpop.f32.mrb[0].mxu0
    %v3347 = vadd.f32 %v2492, %v3346
    %v3348 = vpop.f32.mrb[0].mxu0
    %v3349 = vadd.f32 %v2494, %v3348
    %v3350 = vpop.f32.mrb[0].mxu0
    %v3351 = vadd.f32 %v2496, %v3350
    %3352 = vmatprep.mubr.bf16.mxu0 %v3082
    %3353 = vmatmul.mubr.bf16.gmra.mrb[0].mxu0 %v1550
    %v3354 = vpop.f32.mrb[0].mxu0
    %v3355 = vadd.f32 %v2500, %v3354
    %v3356 = vpop.f32.mrb[0].mxu0
    %v3357 = vadd.f32 %v2502, %v3356
    %v3358 = vpop.f32.mrb[0].mxu0
    %v3359 = vadd.f32 %v2504, %v3358
    %v3360 = vpop.f32.mrb[0].mxu0
    %v3361 = vadd.f32 %v2506, %v3360
    %3362 = vmatprep.mubr.bf16.mxu0 %v3085
    %3363 = vmatmul.mubr.bf16.gmra.mrb[0].mxu0 %v1552
    %v3364 = vpop.f32.mrb[0].mxu0
    %v3365 = vadd.f32 %v2510, %v3364
    %v3366 = vpop.f32.mrb[0].mxu0
    %v3367 = vadd.f32 %v2512, %v3366
    %v3368 = vpop.f32.mrb[0].mxu0
    %v3369 = vadd.f32 %v2514, %v3368
    %v3370 = vpop.f32.mrb[0].mxu0
    %v3371 = vadd.f32 %v2516, %v3370
    %3372 = vmatprep.mubr.bf16.mxu0 %v3088
    %3373 = vmatmul.mubr.bf16.gmra.mrb[0].mxu0 %v1554
    %v3374 = vpop.f32.mrb[0].mxu0
    %v3375 = vadd.f32 %v2520, %v3374
    %v3376 = vpop.f32.mrb[0].mxu0
    %v3377 = vadd.f32 %v2522, %v3376
    %v3378 = vpop.f32.mrb[0].mxu0
    %v3379 = vadd.f32 %v2524, %v3378
    %v3380 = vpop.f32.mrb[0].mxu0
    %v3381 = vadd.f32 %v2526, %v3380
    %3382 = vmatprep.mubr.bf16.mxu0 %v3091
    %3383 = vmatmul.mubr.bf16.gmra.mrb[0].mxu0 %v1556
    %v3384 = vpop.f32.mrb[0].mxu0
    %v3385 = vadd.f32 %v2530, %v3384
    %v3386 = vpop.f32.mrb[0].mxu0
    %v3387 = vadd.f32 %v2532, %v3386
    %v3388 = vpop.f32.mrb[0].mxu0
    %v3389 = vadd.f32 %v2534, %v3388
    %v3390 = vpop.f32.mrb[0].mxu0
    %v3391 = vadd.f32 %v2536, %v3390
    %3392 = vmatprep.mubr.bf16.mxu0 %v3094
    %3393 = vmatmul.mubr.bf16.gmra.mrb[0].mxu0 %v1558
    %v3394 = vpop.f32.mrb[0].mxu0
    %v3395 = vadd.f32 %v2540, %v3394
    %v3396 = vpop.f32.mrb[0].mxu0
    %v3397 = vadd.f32 %v2542, %v3396
    %v3398 = vpop.f32.mrb[0].mxu0
    %v3399 = vadd.f32 %v2544, %v3398
    %v3400 = vpop.f32.mrb[0].mxu0
    %v3401 = vadd.f32 %v2546, %v3400
    %3402 = vmatprep.mubr.bf16.mxu0 %v3097
    %3403 = vmatmul.mubr.bf16.gmra.mrb[0].mxu0 %v1560
    %v3404 = vpop.f32.mrb[0].mxu0
    %v3405 = vadd.f32 %v2550, %v3404
    %v3406 = vpop.f32.mrb[0].mxu0
    %v3407 = vadd.f32 %v2552, %v3406
    %v3408 = vpop.f32.mrb[0].mxu0
    %v3409 = vadd.f32 %v2554, %v3408
    %v3410 = vpop.f32.mrb[0].mxu0
    %v3411 = vadd.f32 %v2556, %v3410
    %3412 = vmatprep.mubr.bf16.mxu0 %v3100
    %3413 = vmatmul.mubr.bf16.gmra.mrb[0].mxu0 %v1562
    %v3414 = vpop.f32.mrb[0].mxu0
    %v3415 = vadd.f32 %v2560, %v3414
    %v3416 = vpop.f32.mrb[0].mxu0
    %v3417 = vadd.f32 %v2562, %v3416
    %v3418 = vpop.f32.mrb[0].mxu0
    %v3419 = vadd.f32 %v2564, %v3418
    %v3420 = vpop.f32.mrb[0].mxu0
    %v3421 = vadd.f32 %v2566, %v3420
    %3422 = vmatprep.mubr.bf16.mxu0 %v3103
    %3423 = vmatmul.mubr.bf16.gmra.mrb[0].mxu0 %v1564
    %v3424 = vpop.f32.mrb[0].mxu0
    %v3425 = vadd.f32 %v2570, %v3424
    %v3426 = vpop.f32.mrb[0].mxu0
    %v3427 = vadd.f32 %v2572, %v3426
    %v3428 = vpop.f32.mrb[0].mxu0
    %v3429 = vadd.f32 %v2574, %v3428
    %v3430 = vpop.f32.mrb[0].mxu0
    %v3431 = vadd.f32 %v2576, %v3430
    %3432 = vmatprep.mubr.bf16.mxu0 %v3106
    %3433 = vmatmul.mubr.bf16.gmra.mrb[0].mxu0 %v1566
    %v3434 = vpop.f32.mrb[0].mxu0
    %v3435 = vadd.f32 %v2580, %v3434
    %v3436 = vpop.f32.mrb[0].mxu0
    %v3437 = vadd.f32 %v2582, %v3436
    %v3438 = vpop.f32.mrb[0].mxu0
    %v3439 = vadd.f32 %v2584, %v3438
    %v3440 = vpop.f32.mrb[0].mxu0
    %v3441 = vadd.f32 %v2586, %v3440
    %3442 = vmatprep.mubr.bf16.mxu0 %v3109
    %3443 = vmatmul.mubr.bf16.gmra.mrb[0].mxu0 %v1568
    %v3444 = vpop.f32.mrb[0].mxu0
    %v3445 = vadd.f32 %v2590, %v3444
    %v3446 = vpop.f32.mrb[0].mxu0
    %v3447 = vadd.f32 %v2592, %v3446
    %v3448 = vpop.f32.mrb[0].mxu0
    %v3449 = vadd.f32 %v2594, %v3448
    %v3450 = vpop.f32.mrb[0].mxu0
    %v3451 = vadd.f32 %v2596, %v3450
    %3452 = vmatprep.mubr.bf16.mxu0 %v3112
    %3453 = vmatmul.mubr.bf16.gmra.mrb[0].mxu0 %v1570
    %v3454 = vpop.f32.mrb[0].mxu0
    %v3455 = vadd.f32 %v2600, %v3454
    %v3456 = vpop.f32.mrb[0].mxu0
    %v3457 = vadd.f32 %v2602, %v3456
    %v3458 = vpop.f32.mrb[0].mxu0
    %v3459 = vadd.f32 %v2604, %v3458
    %v3460 = vpop.f32.mrb[0].mxu0
    %v3461 = vadd.f32 %v2606, %v3460
    %3462 = vmatprep.mubr.bf16.mxu0 %v3115
    %3463 = vmatmul.mubr.bf16.gmra.mrb[0].mxu0 %v1572
    %v3464 = vpop.f32.mrb[0].mxu0
    %v3465 = vadd.f32 %v2610, %v3464
    %v3466 = vpop.f32.mrb[0].mxu0
    %v3467 = vadd.f32 %v2612, %v3466
    %v3468 = vpop.f32.mrb[0].mxu0
    %v3469 = vadd.f32 %v2614, %v3468
    %v3470 = vpop.f32.mrb[0].mxu0
    %v3471 = vadd.f32 %v2616, %v3470
    %3472 = vmatprep.mubr.bf16.mxu0 %v3118
    %3473 = vmatmul.mubr.bf16.gmra.mrb[0].mxu0 %v1574
    %v3474 = vpop.f32.mrb[0].mxu0
    %v3475 = vadd.f32 %v2620, %v3474
    %v3476 = vpop.f32.mrb[0].mxu0
    %v3477 = vadd.f32 %v2622, %v3476
    %v3478 = vpop.f32.mrb[0].mxu0
    %v3479 = vadd.f32 %v2624, %v3478
    %v3480 = vpop.f32.mrb[0].mxu0
    %v3481 = vadd.f32 %v2626, %v3480
    %3482 = vmatprep.mubr.bf16.mxu0 %v3121
    %3483 = vmatmul.mubr.bf16.gmra.mrb[0].mxu0 %v1576
    %v3484 = vpop.f32.mrb[0].mxu0
    %v3485 = vadd.f32 %v2630, %v3484
    %v3486 = vpop.f32.mrb[0].mxu0
    %v3487 = vadd.f32 %v2632, %v3486
    %v3488 = vpop.f32.mrb[0].mxu0
    %v3489 = vadd.f32 %v2634, %v3488
    %v3490 = vpop.f32.mrb[0].mxu0
    %v3491 = vadd.f32 %v2636, %v3490
    %3492 = vmatprep.mubr.bf16.mxu0 %v3124
    %3493 = vmatmul.mubr.bf16.gmra.mrb[0].mxu0 %v1578
    %v3494 = vpop.f32.mrb[0].mxu0
    %v3495 = vadd.f32 %v2640, %v3494
    %v3496 = vpop.f32.mrb[0].mxu0
    %v3497 = vadd.f32 %v2642, %v3496
    %v3498 = vpop.f32.mrb[0].mxu0
    %v3499 = vadd.f32 %v2644, %v3498
    %v3500 = vpop.f32.mrb[0].mxu0
    %v3501 = vadd.f32 %v2646, %v3500
    %3502 = vmatprep.mubr.bf16.mxu0 %v3127
    %3503 = vmatmul.mubr.bf16.gmra.mrb[0].mxu0 %v1580
    %v3504 = vpop.f32.mrb[0].mxu0
    %v3505 = vadd.f32 %v2650, %v3504
    %v3506 = vpop.f32.mrb[0].mxu0
    %v3507 = vadd.f32 %v2652, %v3506
    %v3508 = vpop.f32.mrb[0].mxu0
    %v3509 = vadd.f32 %v2654, %v3508
    %v3510 = vpop.f32.mrb[0].mxu0
    %v3511 = vadd.f32 %v2656, %v3510
    %3512 = vmatprep.mubr.bf16.mxu0 %v3130
    %3513 = vmatmul.mubr.bf16.gmra.mrb[0].mxu0 %v1582
    %v3514 = vpop.f32.mrb[0].mxu0
    %v3515 = vadd.f32 %v2660, %v3514
    %v3516 = vpop.f32.mrb[0].mxu0
    %v3517 = vadd.f32 %v2662, %v3516
    %v3518 = vpop.f32.mrb[0].mxu0
    %v3519 = vadd.f32 %v2664, %v3518
    %v3520 = vpop.f32.mrb[0].mxu0
    %v3521 = vadd.f32 %v2666, %v3520
    %3522 = vmatprep.mubr.bf16.mxu0 %v3133
    %3523 = vmatmul.mubr.bf16.gmra.mrb[0].mxu0 %v1584
    %v3524 = vpop.f32.mrb[0].mxu0
    %v3525 = vadd.f32 %v2670, %v3524
    %v3526 = vpop.f32.mrb[0].mxu0
    %v3527 = vadd.f32 %v2672, %v3526
    %v3528 = vpop.f32.mrb[0].mxu0
    %v3529 = vadd.f32 %v2674, %v3528
    %v3530 = vpop.f32.mrb[0].mxu0
    %v3531 = vadd.f32 %v2676, %v3530
    %3532 = vmatprep.mubr.bf16.mxu0 %v3136
    %3533 = vmatmul.mubr.bf16.gmra.mrb[0].mxu0 %v1586
    %v3534 = vpop.f32.mrb[0].mxu0
    %v3535 = vadd.f32 %v2680, %v3534
    %v3536 = vpop.f32.mrb[0].mxu0
    %v3537 = vadd.f32 %v2682, %v3536
    %v3538 = vpop.f32.mrb[0].mxu0
    %v3539 = vadd.f32 %v2684, %v3538
    %v3540 = vpop.f32.mrb[0].mxu0
    %v3541 = vadd.f32 %v2686, %v3540
    %3542 = vmatprep.mubr.bf16.mxu0 %v3139
    %3543 = vmatmul.mubr.bf16.gmra.mrb[0].mxu0 %v1588
    %v3544 = vpop.f32.mrb[0].mxu0
    %v3545 = vadd.f32 %v2690, %v3544
    %v3546 = vpop.f32.mrb[0].mxu0
    %v3547 = vadd.f32 %v2692, %v3546
    %v3548 = vpop.f32.mrb[0].mxu0
    %v3549 = vadd.f32 %v2694, %v3548
    %v3550 = vpop.f32.mrb[0].mxu0
    %v3551 = vadd.f32 %v2696, %v3550
    %3552 = vmatprep.mubr.bf16.mxu0 %v3142
    %3553 = vmatmul.mubr.bf16.gmra.mrb[0].mxu0 %v1590
    %v3554 = vpop.f32.mrb[0].mxu0
    %v3555 = vadd.f32 %v2700, %v3554
    %v3556 = vpop.f32.mrb[0].mxu0
    %v3557 = vadd.f32 %v2702, %v3556
    %v3558 = vpop.f32.mrb[0].mxu0
    %v3559 = vadd.f32 %v2704, %v3558
    %v3560 = vpop.f32.mrb[0].mxu0
    %v3561 = vadd.f32 %v2706, %v3560
    %3562 = vmatprep.mubr.bf16.mxu0 %v3145
    %3563 = vmatmul.mubr.bf16.gmra.mrb[0].mxu0 %v1592
    %v3564 = vpop.f32.mrb[0].mxu0
    %v3565 = vadd.f32 %v2710, %v3564
    %v3566 = vpop.f32.mrb[0].mxu0
    %v3567 = vadd.f32 %v2712, %v3566
    %v3568 = vpop.f32.mrb[0].mxu0
    %v3569 = vadd.f32 %v2714, %v3568
    %v3570 = vpop.f32.mrb[0].mxu0
    %v3571 = vadd.f32 %v2716, %v3570
    %3572 = vmatprep.mubr.bf16.mxu0 %v3148
    %3573 = vmatmul.mubr.bf16.gmra.mrb[0].mxu0 %v1594
    %v3574 = vpop.f32.mrb[0].mxu0
    %v3575 = vadd.f32 %v2720, %v3574
    %v3576 = vpop.f32.mrb[0].mxu0
    %v3577 = vadd.f32 %v2722, %v3576
    %v3578 = vpop.f32.mrb[0].mxu0
    %v3579 = vadd.f32 %v2724, %v3578
    %v3580 = vpop.f32.mrb[0].mxu0
    %v3581 = vadd.f32 %v2726, %v3580
    %3582 = vmatprep.mubr.bf16.mxu0 %v3151
    %3583 = vmatmul.mubr.bf16.gmra.mrb[0].mxu0 %v1596
    %v3584 = vpop.f32.mrb[0].mxu0
    %v3585 = vadd.f32 %v2730, %v3584
    %v3586 = vpop.f32.mrb[0].mxu0
    %v3587 = vadd.f32 %v2732, %v3586
    %v3588 = vpop.f32.mrb[0].mxu0
    %v3589 = vadd.f32 %v2734, %v3588
    %v3590 = vpop.f32.mrb[0].mxu0
    %v3591 = vadd.f32 %v2736, %v3590
    %3592 = vmatprep.mubr.bf16.mxu0 %v3154
    %3593 = vmatmul.mubr.bf16.gmra.mrb[0].mxu0 %v1598
    %v3594 = vpop.f32.mrb[0].mxu0
    %v3595 = vadd.f32 %v2740, %v3594
    %v3596 = vpop.f32.mrb[0].mxu0
    %v3597 = vadd.f32 %v2742, %v3596
    %v3598 = vpop.f32.mrb[0].mxu0
    %v3599 = vadd.f32 %v2744, %v3598
    %v3600 = vpop.f32.mrb[0].mxu0
    %v3601 = vadd.f32 %v2746, %v3600
    %3602 = vmatprep.mubr.bf16.mxu0 %v3157
    %3603 = vmatmul.mubr.bf16.gmra.mrb[0].mxu0 %v1600
    %v3604 = vpop.f32.mrb[0].mxu0
    %v3605 = vadd.f32 %v2750, %v3604
    %v3606 = vpop.f32.mrb[0].mxu0
    %v3607 = vadd.f32 %v2752, %v3606
    %v3608 = vpop.f32.mrb[0].mxu0
    %v3609 = vadd.f32 %v2754, %v3608
    %v3610 = vpop.f32.mrb[0].mxu0
    %v3611 = vadd.f32 %v2756, %v3610
    %3612 = vmatprep.mubr.bf16.mxu0 %v3160
    %3613 = vmatmul.mubr.bf16.gmra.mrb[0].mxu0 %v1602
    %v3614 = vpop.f32.mrb[0].mxu0
    %v3615 = vadd.f32 %v2760, %v3614
    %v3616 = vpop.f32.mrb[0].mxu0
    %v3617 = vadd.f32 %v2762, %v3616
    %v3618 = vpop.f32.mrb[0].mxu0
    %v3619 = vadd.f32 %v2764, %v3618
    %v3620 = vpop.f32.mrb[0].mxu0
    %v3621 = vadd.f32 %v2766, %v3620
    %3622 = vmatprep.mubr.bf16.mxu0 %v3163
    %3623 = vmatmul.mubr.bf16.gmra.mrb[0].mxu0 %v1604
    %v3624 = vpop.f32.mrb[0].mxu0
    %v3625 = vadd.f32 %v2770, %v3624
    %v3626 = vpop.f32.mrb[0].mxu0
    %v3627 = vadd.f32 %v2772, %v3626
    %v3628 = vpop.f32.mrb[0].mxu0
    %v3629 = vadd.f32 %v2774, %v3628
    %v3630 = vpop.f32.mrb[0].mxu0
    %v3631 = vadd.f32 %v2776, %v3630
    %3632 = vmatprep.mubr.bf16.mxu0 %v3166
    %3633 = vmatmul.mubr.bf16.gmra.mrb[0].mxu0 %v1606
    %v3634 = vpop.f32.mrb[0].mxu0
    %v3635 = vadd.f32 %v2780, %v3634
    %v3636 = vpop.f32.mrb[0].mxu0
    %v3637 = vadd.f32 %v2782, %v3636
    %v3638 = vpop.f32.mrb[0].mxu0
    %v3639 = vadd.f32 %v2784, %v3638
    %v3640 = vpop.f32.mrb[0].mxu0
    %v3641 = vadd.f32 %v2786, %v3640
    %3642 = vmatprep.mubr.bf16.mxu0 %v3169
    %3643 = vmatmul.mubr.bf16.gmra.mrb[0].mxu0 %v1608
    %v3644 = vpop.f32.mrb[0].mxu0
    %v3645 = vadd.f32 %v2790, %v3644
    %v3646 = vpop.f32.mrb[0].mxu0
    %v3647 = vadd.f32 %v2792, %v3646
    %v3648 = vpop.f32.mrb[0].mxu0
    %v3649 = vadd.f32 %v2794, %v3648
    %v3650 = vpop.f32.mrb[0].mxu0
    %v3651 = vadd.f32 %v2796, %v3650
    %3652 = vmatprep.mubr.bf16.mxu0 %v3172
    %3653 = vmatmul.mubr.bf16.gmra.mrb[0].mxu0 %v1610
    %v3654 = vpop.f32.mrb[0].mxu0
    %v3655 = vadd.f32 %v2800, %v3654
    %v3656 = vpop.f32.mrb[0].mxu0
    %v3657 = vadd.f32 %v2802, %v3656
    %v3658 = vpop.f32.mrb[0].mxu0
    %v3659 = vadd.f32 %v2804, %v3658
    %v3660 = vpop.f32.mrb[0].mxu0
    %v3661 = vadd.f32 %v2806, %v3660
    %3662 = vmatprep.mubr.bf16.mxu0 %v3175
    %3663 = vmatmul.mubr.bf16.gmra.mrb[0].mxu0 %v1612
    %v3664 = vpop.f32.mrb[0].mxu0
    %v3665 = vadd.f32 %v2810, %v3664
    %v3666 = vpop.f32.mrb[0].mxu0
    %v3667 = vadd.f32 %v2812, %v3666
    %v3668 = vpop.f32.mrb[0].mxu0
    %v3669 = vadd.f32 %v2814, %v3668
    %v3670 = vpop.f32.mrb[0].mxu0
    %v3671 = vadd.f32 %v2816, %v3670
    %3672 = vmatprep.mubr.bf16.mxu0 %v3178
    %3673 = vmatmul.mubr.bf16.gmra.mrb[0].mxu0 %v1614
    %v3674 = vpop.f32.mrb[0].mxu0
    %v3675 = vadd.f32 %v2820, %v3674
    %v3676 = vpop.f32.mrb[0].mxu0
    %v3677 = vadd.f32 %v2822, %v3676
    %v3678 = vpop.f32.mrb[0].mxu0
    %v3679 = vadd.f32 %v2824, %v3678
    %v3680 = vpop.f32.mrb[0].mxu0
    %v3681 = vadd.f32 %v2826, %v3680
    %3682 = vmatprep.mubr.bf16.mxu0 %v3181
    %3683 = vmatmul.mubr.bf16.gmra.mrb[0].mxu0 %v1616
    %v3684 = vpop.f32.mrb[0].mxu0
    %v3685 = vadd.f32 %v2830, %v3684
    %v3686 = vpop.f32.mrb[0].mxu0
    %v3687 = vadd.f32 %v2832, %v3686
    %v3688 = vpop.f32.mrb[0].mxu0
    %v3689 = vadd.f32 %v2834, %v3688
    %v3690 = vpop.f32.mrb[0].mxu0
    %v3691 = vadd.f32 %v2836, %v3690
    %3692 = vmatprep.mubr.bf16.mxu0 %v3184
    %3693 = vmatmul.mubr.bf16.gmra.mrb[0].mxu0 %v1618
    %v3694 = vpop.f32.mrb[0].mxu0
    %v3695 = vadd.f32 %v2840, %v3694
    %v3696 = vpop.f32.mrb[0].mxu0
    %v3697 = vadd.f32 %v2842, %v3696
    %v3698 = vpop.f32.mrb[0].mxu0
    %v3699 = vadd.f32 %v2844, %v3698
    %v3700 = vpop.f32.mrb[0].mxu0
    %v3701 = vadd.f32 %v2846, %v3700
    %3702 = vmatprep.mubr.bf16.mxu0 %v3187
    %3703 = vmatmul.mubr.bf16.gmra.mrb[0].mxu0 %v1620
    %v3704 = vpop.f32.mrb[0].mxu0
    %v3705 = vadd.f32 %v2850, %v3704
    %v3706 = vpop.f32.mrb[0].mxu0
    %v3707 = vadd.f32 %v2852, %v3706
    %v3708 = vpop.f32.mrb[0].mxu0
    %v3709 = vadd.f32 %v2854, %v3708
    %v3710 = vpop.f32.mrb[0].mxu0
    %v3711 = vadd.f32 %v2856, %v3710
    %3712 = vmatprep.mubr.bf16.mxu0 %v3190
    %3713 = vmatmul.mubr.bf16.gmra.mrb[0].mxu0 %v1622
    %v3714 = vpop.f32.mrb[0].mxu0
    %v3715 = vadd.f32 %v2860, %v3714
    %v3716 = vpop.f32.mrb[0].mxu0
    %v3717 = vadd.f32 %v2862, %v3716
    %v3718 = vpop.f32.mrb[0].mxu0
    %v3719 = vadd.f32 %v2864, %v3718
    %v3720 = vpop.f32.mrb[0].mxu0
    %v3721 = vadd.f32 %v2866, %v3720
    %3722 = vmatprep.mubr.bf16.mxu0 %v3193
    %3723 = vmatmul.mubr.bf16.gmra.mrb[0].mxu0 %v1624
    %v3724 = vpop.f32.mrb[0].mxu0
    %v3725 = vadd.f32 %v2870, %v3724
    %v3726 = vpop.f32.mrb[0].mxu0
    %v3727 = vadd.f32 %v2872, %v3726
    %v3728 = vpop.f32.mrb[0].mxu0
    %v3729 = vadd.f32 %v2874, %v3728
    %v3730 = vpop.f32.mrb[0].mxu0
    %v3731 = vadd.f32 %v2876, %v3730
    %3732 = vmatprep.mubr.bf16.mxu0 %v3196
    %3733 = vmatmul.mubr.bf16.gmra.mrb[0].mxu0 %v1626
    %v3734 = vpop.f32.mrb[0].mxu0
    %v3735 = vadd.f32 %v2880, %v3734
    %v3736 = vpop.f32.mrb[0].mxu0
    %v3737 = vadd.f32 %v2882, %v3736
    %v3738 = vpop.f32.mrb[0].mxu0
    %v3739 = vadd.f32 %v2884, %v3738
    %v3740 = vpop.f32.mrb[0].mxu0
    %v3741 = vadd.f32 %v2886, %v3740
    %3742 = vmatprep.mubr.bf16.mxu0 %v3199
    %3743 = vmatmul.mubr.bf16.gmra.mrb[0].mxu0 %v1628
    %v3744 = vpop.f32.mrb[0].mxu0
    %v3745 = vadd.f32 %v2890, %v3744
    %v3746 = vpop.f32.mrb[0].mxu0
    %v3747 = vadd.f32 %v2892, %v3746
    %v3748 = vpop.f32.mrb[0].mxu0
    %v3749 = vadd.f32 %v2894, %v3748
    %v3750 = vpop.f32.mrb[0].mxu0
    %v3751 = vadd.f32 %v2896, %v3750
    %3752 = vmatprep.mubr.bf16.mxu0 %v3202
    %3753 = vmatmul.mubr.bf16.gmra.mrb[0].mxu0 %v1630
    %v3754 = vpop.f32.mrb[0].mxu0
    %v3755 = vadd.f32 %v2900, %v3754
    %v3756 = vpop.f32.mrb[0].mxu0
    %v3757 = vadd.f32 %v2902, %v3756
    %v3758 = vpop.f32.mrb[0].mxu0
    %v3759 = vadd.f32 %v2904, %v3758
    %v3760 = vpop.f32.mrb[0].mxu0
    %v3761 = vadd.f32 %v2906, %v3760
    %3762 = vmatprep.mubr.bf16.mxu0 %v3205
    %3763 = vmatmul.mubr.bf16.gmra.mrb[0].mxu0 %v1632
    %v3764 = vpop.f32.mrb[0].mxu0
    %v3765 = vadd.f32 %v2910, %v3764
    %v3766 = vpop.f32.mrb[0].mxu0
    %v3767 = vadd.f32 %v2912, %v3766
    %v3768 = vpop.f32.mrb[0].mxu0
    %v3769 = vadd.f32 %v2914, %v3768
    %v3770 = vpop.f32.mrb[0].mxu0
    %v3771 = vadd.f32 %v2916, %v3770
    %3772 = vmatprep.mubr.bf16.mxu0 %v3208
    %3773 = vmatmul.mubr.bf16.gmra.mrb[0].mxu0 %v1634
    %v3774 = vpop.f32.mrb[0].mxu0
    %v3775 = vadd.f32 %v2920, %v3774
    %v3776 = vpop.f32.mrb[0].mxu0
    %v3777 = vadd.f32 %v2922, %v3776
    %v3778 = vpop.f32.mrb[0].mxu0
    %v3779 = vadd.f32 %v2924, %v3778
    %v3780 = vpop.f32.mrb[0].mxu0
    %v3781 = vadd.f32 %v2926, %v3780
    %3782 = vdwg.mxu0
    %v3783 = vld [vmem:[#allocation2 + $0x30] sm:$0xff]
    %v3784 = vld [vmem:[#allocation2 + $0x38] sm:$0xff]
    %v3785 = vld [vmem:[#allocation2 + $0x40] sm:$0xff]
    %v3786 = vld [vmem:[#allocation2 + $0x48] sm:$0xff]
    %v3787 = vld [vmem:[#allocation2 + $0x50] sm:$0xff]
    %v3788 = vld [vmem:[#allocation2 + $0x58] sm:$0xff]
    %v3789 = vld [vmem:[#allocation2 + $0x60] sm:$0xff]
    %v3790 = vld [vmem:[#allocation2 + $0x68] sm:$0xff]
    %v3791 = vld [vmem:[#allocation2 + $0x70] sm:$0xff]
    %v3792 = vld [vmem:[#allocation2 + $0x78] sm:$0xff]
    %v3793 = vld [vmem:[#allocation2 + $0x80] sm:$0xff]
    %v3794 = vld [vmem:[#allocation2 + $0x88] sm:$0xff]
    %v3795 = vld [vmem:[#allocation2 + $0x90] sm:$0xff]
    %v3796 = vld [vmem:[#allocation2 + $0x98] sm:$0xff]
    %v3797 = vld [vmem:[#allocation2 + $0xa0] sm:$0xff]
    %v3798 = vld [vmem:[#allocation2 + $0xa8] sm:$0xff]
    %v3799 = vld [vmem:[#allocation2 + $0xb0] sm:$0xff]
    %v3800 = vld [vmem:[#allocation2 + $0xb8] sm:$0xff]
    %v3801 = vld [vmem:[#allocation2 + $0xc0] sm:$0xff]
    %v3802 = vld [vmem:[#allocation2 + $0xc8] sm:$0xff]
    %v3803 = vld [vmem:[#allocation2 + $0xd0] sm:$0xff]
    %v3804 = vld [vmem:[#allocation2 + $0xd8] sm:$0xff]
    %v3805 = vld [vmem:[#allocation2 + $0xe0] sm:$0xff]
    %v3806 = vld [vmem:[#allocation2 + $0xe8] sm:$0xff]
    %v3807 = vld [vmem:[#allocation2 + $0xf0] sm:$0xff]
    %v3808 = vld [vmem:[#allocation2 + $0xf8] sm:$0xff]
    %v3809 = vld [vmem:[#allocation2 + $0x100] sm:$0xff]
    %v3810 = vld [vmem:[#allocation2 + $0x108] sm:$0xff]
    %v3811 = vld [vmem:[#allocation2 + $0x110] sm:$0xff]
    %v3812 = vld [vmem:[#allocation2 + $0x118] sm:$0xff]
    %v3813 = vld [vmem:[#allocation2 + $0x120] sm:$0xff]
    %v3814 = vld [vmem:[#allocation2 + $0x128] sm:$0xff]
    %v3815 = vld [vmem:[#allocation2 + $0x130] sm:$0xff]
    %v3816 = vld [vmem:[#allocation2 + $0x138] sm:$0xff]
    %v3817 = vld [vmem:[#allocation2 + $0x140] sm:$0xff]
    %v3818 = vld [vmem:[#allocation2 + $0x148] sm:$0xff]
    %v3819 = vld [vmem:[#allocation2 + $0x150] sm:$0xff]
    %v3820 = vld [vmem:[#allocation2 + $0x158] sm:$0xff]
    %v3821 = vld [vmem:[#allocation2 + $0x160] sm:$0xff]
    %v3822 = vld [vmem:[#allocation2 + $0x168] sm:$0xff]
    %v3823 = vld [vmem:[#allocation2 + $0x170] sm:$0xff]
    %v3824 = vld [vmem:[#allocation2 + $0x178] sm:$0xff]
    %v3825 = vld [vmem:[#allocation2 + $0x180] sm:$0xff]
    %v3826 = vld [vmem:[#allocation2 + $0x188] sm:$0xff]
    %v3827 = vld [vmem:[#allocation2 + $0x190] sm:$0xff]
    %v3828 = vld [vmem:[#allocation2 + $0x198] sm:$0xff]
    %v3829 = vld [vmem:[#allocation2 + $0x1a0] sm:$0xff]
    %v3830 = vld [vmem:[#allocation2 + $0x1a8] sm:$0xff]
    %v3831 = vld [vmem:[#allocation2 + $0x1b0] sm:$0xff]
    %v3832 = vld [vmem:[#allocation2 + $0x1b8] sm:$0xff]
    %v3833 = vld [vmem:[#allocation2 + $0x1c0] sm:$0xff]
    %v3834 = vld [vmem:[#allocation2 + $0x1c8] sm:$0xff]
    %v3835 = vld [vmem:[#allocation2 + $0x1d0] sm:$0xff]
    %v3836 = vld [vmem:[#allocation2 + $0x1d8] sm:$0xff]
    %v3837 = vld [vmem:[#allocation2 + $0x1e0] sm:$0xff]
    %v3838 = vld [vmem:[#allocation2 + $0x1e8] sm:$0xff]
    %v3839 = vld [vmem:[#allocation2 + $0x1f0] sm:$0xff]
    %v3840 = vld [vmem:[#allocation2 + $0x1f8] sm:$0xff]
    %v3841 = vld [vmem:[#allocation2 + $0x200] sm:$0xff]
    %v3842 = vld [vmem:[#allocation2 + $0x208] sm:$0xff]
    %v3843 = vld [vmem:[#allocation2 + $0x210] sm:$0xff]
    %v3844 = vld [vmem:[#allocation2 + $0x218] sm:$0xff]
    %v3845 = vld [vmem:[#allocation2 + $0x220] sm:$0xff]
    %v3846 = vld [vmem:[#allocation2 + $0x228] sm:$0xff]
    %v3847 = vld [vmem:[#allocation2 + $0x230] sm:$0xff]
    %v3848 = vld [vmem:[#allocation2 + $0x238] sm:$0xff]
    %v3849 = vld [vmem:[#allocation2 + $0x240] sm:$0xff]
    %v3850 = vld [vmem:[#allocation2 + $0x248] sm:$0xff]
    %v3851 = vld [vmem:[#allocation2 + $0x250] sm:$0xff]
    %v3852 = vld [vmem:[#allocation2 + $0x258] sm:$0xff]
    %v3853 = vld [vmem:[#allocation2 + $0x260] sm:$0xff]
    %v3854 = vld [vmem:[#allocation2 + $0x268] sm:$0xff]
    %v3855 = vld [vmem:[#allocation2 + $0x270] sm:$0xff]
    %v3856 = vld [vmem:[#allocation2 + $0x278] sm:$0xff]
    %v3857 = vld [vmem:[#allocation2 + $0x280] sm:$0xff]
    %v3858 = vld [vmem:[#allocation2 + $0x288] sm:$0xff]
    %v3859 = vld [vmem:[#allocation2 + $0x290] sm:$0xff]
    %v3860 = vld [vmem:[#allocation2 + $0x298] sm:$0xff]
    %v3861 = vld [vmem:[#allocation2 + $0x2a0] sm:$0xff]
    %v3862 = vld [vmem:[#allocation2 + $0x2a8] sm:$0xff]
    %v3863 = vld [vmem:[#allocation2 + $0x2b0] sm:$0xff]
    %v3864 = vld [vmem:[#allocation2 + $0x2b8] sm:$0xff]
    %v3865 = vld [vmem:[#allocation2 + $0x2c0] sm:$0xff]
    %v3866 = vld [vmem:[#allocation2 + $0x2c8] sm:$0xff]
    %v3867 = vld [vmem:[#allocation2 + $0x2d0] sm:$0xff]
    %v3868 = vld [vmem:[#allocation2 + $0x2d8] sm:$0xff]
    %v3869 = vld [vmem:[#allocation2 + $0x2e0] sm:$0xff]
    %v3870 = vld [vmem:[#allocation2 + $0x2e8] sm:$0xff]
    %v3871 = vld [vmem:[#allocation2 + $0x2f0] sm:$0xff]
    %v3872 = vld [vmem:[#allocation2 + $0x2f8] sm:$0xff]
    %v3873 = vld [vmem:[#allocation2 + $0x300] sm:$0xff]
    %v3874 = vld [vmem:[#allocation2 + $0x308] sm:$0xff]
    %v3875 = vld [vmem:[#allocation2 + $0x310] sm:$0xff]
    %v3876 = vld [vmem:[#allocation2 + $0x318] sm:$0xff]
    %v3877 = vld [vmem:[#allocation2 + $0x320] sm:$0xff]
    %v3878 = vld [vmem:[#allocation2 + $0x328] sm:$0xff]
    %v3879 = vld [vmem:[#allocation2 + $0x330] sm:$0xff]
    %v3880 = vld [vmem:[#allocation2 + $0x338] sm:$0xff]
    %v3881 = vld [vmem:[#allocation2 + $0x340] sm:$0xff]
    %v3882 = vld [vmem:[#allocation2 + $0x348] sm:$0xff]
    %v3883 = vld [vmem:[#allocation2 + $0x350] sm:$0xff]
    %v3884 = vld [vmem:[#allocation2 + $0x358] sm:$0xff]
    %v3885 = vld [vmem:[#allocation2 + $0x360] sm:$0xff]
    %v3886 = vld [vmem:[#allocation2 + $0x368] sm:$0xff]
    %v3887 = vld [vmem:[#allocation2 + $0x370] sm:$0xff]
    %v3888 = vld [vmem:[#allocation2 + $0x378] sm:$0xff]
    %v3889 = vld [vmem:[#allocation2 + $0x380] sm:$0xff]
    %v3890 = vld [vmem:[#allocation2 + $0x388] sm:$0xff]
    %v3891 = vld [vmem:[#allocation6 + $0x180] sm:$0xff]
    %v3892 = vld [vmem:[#allocation6 + $0x188] sm:$0xff]
    %v3893 = vld [vmem:[#allocation6 + $0x190] sm:$0xff]
    %v3894 = vld [vmem:[#allocation6 + $0x198] sm:$0xff]
    %v3895 = vld [vmem:[#allocation6 + $0x1a0] sm:$0xff]
    %v3896 = vld [vmem:[#allocation6 + $0x1a8] sm:$0xff]
    %v3897 = vld [vmem:[#allocation6 + $0x1b0] sm:$0xff]
    %v3898 = vld [vmem:[#allocation6 + $0x1b8] sm:$0xff]
    %v3899 = vld [vmem:[#allocation6 + $0x1c0] sm:$0xff]
    %v3900 = vld [vmem:[#allocation6 + $0x1c8] sm:$0xff]
    %v3901 = vld [vmem:[#allocation6 + $0x1d0] sm:$0xff]
    %v3902 = vld [vmem:[#allocation6 + $0x1d8] sm:$0xff]
    %v3903 = vld [vmem:[#allocation6 + $0x1e0] sm:$0xff]
    %v3904 = vld [vmem:[#allocation6 + $0x1e8] sm:$0xff]
    %v3905 = vld [vmem:[#allocation6 + $0x1f0] sm:$0xff]
    %v3906 = vld [vmem:[#allocation6 + $0x1f8] sm:$0xff]
    %v3907 = vld [vmem:[#allocation6 + $0x200] sm:$0xff]
    %v3908 = vld [vmem:[#allocation6 + $0x208] sm:$0xff]
    %v3909 = vld [vmem:[#allocation6 + $0x210] sm:$0xff]
    %v3910 = vld [vmem:[#allocation6 + $0x218] sm:$0xff]
    %v3911 = vld [vmem:[#allocation6 + $0x220] sm:$0xff]
    %v3912 = vld [vmem:[#allocation6 + $0x228] sm:$0xff]
    %v3913 = vld [vmem:[#allocation6 + $0x230] sm:$0xff]
    %v3914 = vld [vmem:[#allocation6 + $0x238] sm:$0xff]
    %v3939 = vunpack.c.l.b16 %v3891
    %v3940 = vunpack.c.h.b16 %v3891
    %v3941 = vunpack.c.l.b16 %v3892
    %v3942 = vunpack.c.h.b16 %v3892
    %v3943 = vunpack.c.l.b16 %v3893
    %v3944 = vunpack.c.h.b16 %v3893
    %v3945 = vunpack.c.l.b16 %v3894
    %v3946 = vunpack.c.h.b16 %v3894
    %v3947 = vunpack.c.l.b16 %v3895
    %v3948 = vunpack.c.h.b16 %v3895
    %v3949 = vunpack.c.l.b16 %v3896
    %v3950 = vunpack.c.h.b16 %v3896
    %v3951 = vunpack.c.l.b16 %v3897
    %v3952 = vunpack.c.h.b16 %v3897
    %v3953 = vunpack.c.l.b16 %v3898
    %v3954 = vunpack.c.h.b16 %v3898
    %v3955 = vunpack.c.l.b16 %v3899
    %v3956 = vunpack.c.h.b16 %v3899
    %v3957 = vunpack.c.l.b16 %v3900
    %v3958 = vunpack.c.h.b16 %v3900
    %v3959 = vunpack.c.l.b16 %v3901
    %v3960 = vunpack.c.h.b16 %v3901
    %v3961 = vunpack.c.l.b16 %v3902
    %v3962 = vunpack.c.h.b16 %v3902
    %v3963 = vunpack.c.l.b16 %v3903
    %v3964 = vunpack.c.h.b16 %v3903
    %v3965 = vunpack.c.l.b16 %v3904
    %v3966 = vunpack.c.h.b16 %v3904
    %v3967 = vunpack.c.l.b16 %v3905
    %v3968 = vunpack.c.h.b16 %v3905
    %v3969 = vunpack.c.l.b16 %v3906
    %v3970 = vunpack.c.h.b16 %v3906
    %v3971 = vunpack.c.l.b16 %v3907
    %v3972 = vunpack.c.h.b16 %v3907
    %v3973 = vunpack.c.l.b16 %v3908
    %v3974 = vunpack.c.h.b16 %v3908
    %v3975 = vunpack.c.l.b16 %v3909
    %v3976 = vunpack.c.h.b16 %v3909
    %v3977 = vunpack.c.l.b16 %v3910
    %v3978 = vunpack.c.h.b16 %v3910
    %v3979 = vunpack.c.l.b16 %v3911
    %v3980 = vunpack.c.h.b16 %v3911
    %v3981 = vunpack.c.l.b16 %v3912
    %v3982 = vunpack.c.h.b16 %v3912
    %v3983 = vunpack.c.l.b16 %v3913
    %v3984 = vunpack.c.h.b16 %v3913
    %v3985 = vunpack.c.l.b16 %v3914
    %v3986 = vunpack.c.h.b16 %v3914
    %v3987 = vpack.c.b16 %v3941, %v3939
    %v3988 = vpack.c.b16 %v3942, %v3940
    %v3989 = vpack.c.b16 %v3945, %v3943
    %v3990 = vpack.c.b16 %v3946, %v3944
    %v3991 = vpack.c.b16 %v3949, %v3947
    %v3992 = vpack.c.b16 %v3950, %v3948
    %v3993 = vpack.c.b16 %v3953, %v3951
    %v3994 = vpack.c.b16 %v3954, %v3952
    %v3995 = vpack.c.b16 %v3957, %v3955
    %v3996 = vpack.c.b16 %v3958, %v3956
    %v3997 = vpack.c.b16 %v3961, %v3959
    %v3998 = vpack.c.b16 %v3962, %v3960
    %v3999 = vpack.c.b16 %v3965, %v3963
    %v4000 = vpack.c.b16 %v3966, %v3964
    %v4001 = vpack.c.b16 %v3969, %v3967
    %v4002 = vpack.c.b16 %v3970, %v3968
    %v4003 = vpack.c.b16 %v3973, %v3971
    %v4004 = vpack.c.b16 %v3974, %v3972
    %v4005 = vpack.c.b16 %v3977, %v3975
    %v4006 = vpack.c.b16 %v3978, %v3976
    %v4007 = vpack.c.b16 %v3981, %v3979
    %v4008 = vpack.c.b16 %v3982, %v3980
    %v4009 = vpack.c.b16 %v3985, %v3983
    %v4010 = vpack.c.b16 %v3986, %v3984
    %v4036 = vsel %vm1242, %v3784, 0
    %v4039 = vsel %vm1242, %v3786, 0
    %v4042 = vsel %vm1242, %v3788, 0
    %v4045 = vsel %vm1242, %v3790, 0
    %v4048 = vsel %vm1242, %v3792, 0
    %v4051 = vsel %vm1242, %v3794, 0
    %v4054 = vsel %vm1242, %v3796, 0
    %v4057 = vsel %vm1242, %v3798, 0
    %v4060 = vsel %vm1242, %v3800, 0
    %v4063 = vsel %vm1242, %v3802, 0
    %v4066 = vsel %vm1242, %v3804, 0
    %v4069 = vsel %vm1242, %v3806, 0
    %v4072 = vsel %vm1242, %v3808, 0
    %v4075 = vsel %vm1242, %v3810, 0
    %v4078 = vsel %vm1242, %v3812, 0
    %v4081 = vsel %vm1242, %v3814, 0
    %v4084 = vsel %vm1242, %v3816, 0
    %v4087 = vsel %vm1242, %v3818, 0
    %v4090 = vsel %vm1242, %v3820, 0
    %v4093 = vsel %vm1242, %v3822, 0
    %v4096 = vsel %vm1242, %v3824, 0
    %v4099 = vsel %vm1242, %v3826, 0
    %v4102 = vsel %vm1242, %v3828, 0
    %v4105 = vsel %vm1242, %v3830, 0
    %v4108 = vsel %vm1242, %v3832, 0
    %v4111 = vsel %vm1242, %v3834, 0
    %v4114 = vsel %vm1242, %v3836, 0
    %v4117 = vsel %vm1242, %v3838, 0
    %v4120 = vsel %vm1242, %v3840, 0
    %v4123 = vsel %vm1242, %v3842, 0
    %v4126 = vsel %vm1242, %v3844, 0
    %v4129 = vsel %vm1242, %v3846, 0
    %v4132 = vsel %vm1242, %v3848, 0
    %v4135 = vsel %vm1242, %v3850, 0
    %v4138 = vsel %vm1242, %v3852, 0
    %v4141 = vsel %vm1242, %v3854, 0
    %v4144 = vsel %vm1242, %v3856, 0
    %v4147 = vsel %vm1242, %v3858, 0
    %v4150 = vsel %vm1242, %v3860, 0
    %v4153 = vsel %vm1242, %v3862, 0
    %v4156 = vsel %vm1242, %v3864, 0
    %v4159 = vsel %vm1242, %v3866, 0
    %v4162 = vsel %vm1242, %v3868, 0
    %v4165 = vsel %vm1242, %v3870, 0
    %v4168 = vsel %vm1242, %v3872, 0
    %v4171 = vsel %vm1242, %v3874, 0
    %v4174 = vsel %vm1242, %v3876, 0
    %v4177 = vsel %vm1242, %v3878, 0
    %v4180 = vsel %vm1242, %v3880, 0
    %v4183 = vsel %vm1242, %v3882, 0
    %v4186 = vsel %vm1242, %v3884, 0
    %v4189 = vsel %vm1242, %v3886, 0
    %v4192 = vsel %vm1242, %v3888, 0
    %v4195 = vsel %vm1242, %v3890, 0
    %4197 = vmatprep.subr.bf16.mxu0 %v3988
    %4198 = vmatpush1.bf16.msra.mxu0 %v3987
    %4199 = vmatprep.subr.bf16.mxu0 %v3990
    %4200 = vmatpush1.bf16.msra.mxu0 %v3989
    %4201 = vmatprep.subr.bf16.mxu0 %v3992
    %4202 = vmatpush1.bf16.msra.mxu0 %v3991
    %4203 = vmatprep.subr.bf16.mxu0 %v3994
    %4204 = vmatpush1.bf16.msra.mxu0 %v3993
    %4205 = vmatprep.subr.bf16.mxu0 %v3996
    %4206 = vmatpush1.bf16.msra.mxu0 %v3995
    %4207 = vmatprep.subr.bf16.mxu0 %v3998
    %4208 = vmatpush1.bf16.msra.mxu0 %v3997
    %4209 = vmatprep.subr.bf16.mxu0 %v4000
    %4210 = vmatpush1.bf16.msra.mxu0 %v3999
    %4211 = vmatprep.subr.bf16.mxu0 %v4002
    %4212 = vmatpush1.bf16.msra.mxu0 %v4001
    %4213 = vmatprep.subr.bf16.mxu0 %v4004
    %4214 = vmatpush1.bf16.msra.mxu0 %v4003
    %4215 = vmatprep.subr.bf16.mxu0 %v4006
    %4216 = vmatpush1.bf16.msra.mxu0 %v4005
    %4217 = vmatprep.subr.bf16.mxu0 %v4008
    %4218 = vmatpush1.bf16.msra.mxu0 %v4007
    %4219 = vmatprep.subr.bf16.mxu0 %v4010
    %4220 = vmatpush1.bf16.msra.mxu0 %v4009
    %4221 = vmatprep.subr.bf16.mxu0 0
    %4222 = vmatpush1.bf16.msra.mxu0 0
    %4223 = vmatprep.subr.bf16.mxu0 0
    %4224 = vmatpush1.bf16.msra.mxu0 0
    %4225 = vmatprep.subr.bf16.mxu0 0
    %4226 = vmatpush1.bf16.msra.mxu0 0
    %4227 = vmatprep.subr.bf16.mxu0 0
    %4228 = vmatpush1.bf16.msra.mxu0 0
    %4229 = vmatprep.mubr.bf16.mxu0 %v4036
    %4230 = vmatmul.mubr.bf16.gmra.mrb[0].mxu0 %v3783
    %v4231 = vpop.f32.mrb[0].mxu0
    %v4232 = vadd.f32 0.0, %v4231
    %v4233 = vpop.f32.mrb[0].mxu0
    %v4234 = vadd.f32 0.0, %v4233
    %v4235 = vpop.f32.mrb[0].mxu0
    %v4236 = vadd.f32 0.0, %v4235
    %v4237 = vpop.f32.mrb[0].mxu0
    %v4238 = vadd.f32 0.0, %v4237
    %4239 = vmatprep.mubr.bf16.mxu0 %v4039
    %4240 = vmatmul.mubr.bf16.gmra.mrb[0].mxu0 %v3785
    %v4241 = vpop.f32.mrb[0].mxu0
    %v4242 = vadd.f32 0.0, %v4241
    %v4243 = vpop.f32.mrb[0].mxu0
    %v4244 = vadd.f32 0.0, %v4243
    %v4245 = vpop.f32.mrb[0].mxu0
    %v4246 = vadd.f32 0.0, %v4245
    %v4247 = vpop.f32.mrb[0].mxu0
    %v4248 = vadd.f32 0.0, %v4247
    %4249 = vmatprep.mubr.bf16.mxu0 %v4042
    %4250 = vmatmul.mubr.bf16.gmra.mrb[0].mxu0 %v3787
    %v4251 = vpop.f32.mrb[0].mxu0
    %v4252 = vadd.f32 0.0, %v4251
    %v4253 = vpop.f32.mrb[0].mxu0
    %v4254 = vadd.f32 0.0, %v4253
    %v4255 = vpop.f32.mrb[0].mxu0
    %v4256 = vadd.f32 0.0, %v4255
    %v4257 = vpop.f32.mrb[0].mxu0
    %v4258 = vadd.f32 0.0, %v4257
    %4259 = vmatprep.mubr.bf16.mxu0 %v4045
    %4260 = vmatmul.mubr.bf16.gmra.mrb[0].mxu0 %v3789
    %v4261 = vpop.f32.mrb[0].mxu0
    %v4262 = vadd.f32 0.0, %v4261
    %v4263 = vpop.f32.mrb[0].mxu0
    %v4264 = vadd.f32 0.0, %v4263
    %v4265 = vpop.f32.mrb[0].mxu0
    %v4266 = vadd.f32 0.0, %v4265
    %v4267 = vpop.f32.mrb[0].mxu0
    %v4268 = vadd.f32 0.0, %v4267
    %4269 = vmatprep.mubr.bf16.mxu0 %v4048
    %4270 = vmatmul.mubr.bf16.gmra.mrb[0].mxu0 %v3791
    %v4271 = vpop.f32.mrb[0].mxu0
    %v4272 = vadd.f32 0.0, %v4271
    %v4273 = vpop.f32.mrb[0].mxu0
    %v4274 = vadd.f32 0.0, %v4273
    %v4275 = vpop.f32.mrb[0].mxu0
    %v4276 = vadd.f32 0.0, %v4275
    %v4277 = vpop.f32.mrb[0].mxu0
    %v4278 = vadd.f32 0.0, %v4277
    %4279 = vmatprep.mubr.bf16.mxu0 %v4051
    %4280 = vmatmul.mubr.bf16.gmra.mrb[0].mxu0 %v3793
    %v4281 = vpop.f32.mrb[0].mxu0
    %v4282 = vadd.f32 0.0, %v4281
    %v4283 = vpop.f32.mrb[0].mxu0
    %v4284 = vadd.f32 0.0, %v4283
    %v4285 = vpop.f32.mrb[0].mxu0
    %v4286 = vadd.f32 0.0, %v4285
    %v4287 = vpop.f32.mrb[0].mxu0
    %v4288 = vadd.f32 0.0, %v4287
    %4289 = vmatprep.mubr.bf16.mxu0 %v4054
    %4290 = vmatmul.mubr.bf16.gmra.mrb[0].mxu0 %v3795
    %v4291 = vpop.f32.mrb[0].mxu0
    %v4292 = vadd.f32 0.0, %v4291
    %v4293 = vpop.f32.mrb[0].mxu0
    %v4294 = vadd.f32 0.0, %v4293
    %v4295 = vpop.f32.mrb[0].mxu0
    %v4296 = vadd.f32 0.0, %v4295
    %v4297 = vpop.f32.mrb[0].mxu0
    %v4298 = vadd.f32 0.0, %v4297
    %4299 = vmatprep.mubr.bf16.mxu0 %v4057
    %4300 = vmatmul.mubr.bf16.gmra.mrb[0].mxu0 %v3797
    %v4301 = vpop.f32.mrb[0].mxu0
    %v4302 = vadd.f32 0.0, %v4301
    %v4303 = vpop.f32.mrb[0].mxu0
    %v4304 = vadd.f32 0.0, %v4303
    %v4305 = vpop.f32.mrb[0].mxu0
    %v4306 = vadd.f32 0.0, %v4305
    %v4307 = vpop.f32.mrb[0].mxu0
    %v4308 = vadd.f32 0.0, %v4307
    %4309 = vmatprep.mubr.bf16.mxu0 %v4060
    %4310 = vmatmul.mubr.bf16.gmra.mrb[0].mxu0 %v3799
    %v4311 = vpop.f32.mrb[0].mxu0
    %v4312 = vadd.f32 0.0, %v4311
    %v4313 = vpop.f32.mrb[0].mxu0
    %v4314 = vadd.f32 0.0, %v4313
    %v4315 = vpop.f32.mrb[0].mxu0
    %v4316 = vadd.f32 0.0, %v4315
    %v4317 = vpop.f32.mrb[0].mxu0
    %v4318 = vadd.f32 0.0, %v4317
    %4319 = vmatprep.mubr.bf16.mxu0 %v4063
    %4320 = vmatmul.mubr.bf16.gmra.mrb[0].mxu0 %v3801
    %v4321 = vpop.f32.mrb[0].mxu0
    %v4322 = vadd.f32 0.0, %v4321
    %v4323 = vpop.f32.mrb[0].mxu0
    %v4324 = vadd.f32 0.0, %v4323
    %v4325 = vpop.f32.mrb[0].mxu0
    %v4326 = vadd.f32 0.0, %v4325
    %v4327 = vpop.f32.mrb[0].mxu0
    %v4328 = vadd.f32 0.0, %v4327
    %4329 = vmatprep.mubr.bf16.mxu0 %v4066
    %4330 = vmatmul.mubr.bf16.gmra.mrb[0].mxu0 %v3803
    %v4331 = vpop.f32.mrb[0].mxu0
    %v4332 = vadd.f32 0.0, %v4331
    %v4333 = vpop.f32.mrb[0].mxu0
    %v4334 = vadd.f32 0.0, %v4333
    %v4335 = vpop.f32.mrb[0].mxu0
    %v4336 = vadd.f32 0.0, %v4335
    %v4337 = vpop.f32.mrb[0].mxu0
    %v4338 = vadd.f32 0.0, %v4337
    %4339 = vmatprep.mubr.bf16.mxu0 %v4069
    %4340 = vmatmul.mubr.bf16.gmra.mrb[0].mxu0 %v3805
    %v4341 = vpop.f32.mrb[0].mxu0
    %v4342 = vadd.f32 0.0, %v4341
    %v4343 = vpop.f32.mrb[0].mxu0
    %v4344 = vadd.f32 0.0, %v4343
    %v4345 = vpop.f32.mrb[0].mxu0
    %v4346 = vadd.f32 0.0, %v4345
    %v4347 = vpop.f32.mrb[0].mxu0
    %v4348 = vadd.f32 0.0, %v4347
    %4349 = vmatprep.mubr.bf16.mxu0 %v4072
    %4350 = vmatmul.mubr.bf16.gmra.mrb[0].mxu0 %v3807
    %v4351 = vpop.f32.mrb[0].mxu0
    %v4352 = vadd.f32 0.0, %v4351
    %v4353 = vpop.f32.mrb[0].mxu0
    %v4354 = vadd.f32 0.0, %v4353
    %v4355 = vpop.f32.mrb[0].mxu0
    %v4356 = vadd.f32 0.0, %v4355
    %v4357 = vpop.f32.mrb[0].mxu0
    %v4358 = vadd.f32 0.0, %v4357
    %4359 = vmatprep.mubr.bf16.mxu0 %v4075
    %4360 = vmatmul.mubr.bf16.gmra.mrb[0].mxu0 %v3809
    %v4361 = vpop.f32.mrb[0].mxu0
    %v4362 = vadd.f32 0.0, %v4361
    %v4363 = vpop.f32.mrb[0].mxu0
    %v4364 = vadd.f32 0.0, %v4363
    %v4365 = vpop.f32.mrb[0].mxu0
    %v4366 = vadd.f32 0.0, %v4365
    %v4367 = vpop.f32.mrb[0].mxu0
    %v4368 = vadd.f32 0.0, %v4367
    %4369 = vmatprep.mubr.bf16.mxu0 %v4078
    %4370 = vmatmul.mubr.bf16.gmra.mrb[0].mxu0 %v3811
    %v4371 = vpop.f32.mrb[0].mxu0
    %v4372 = vadd.f32 0.0, %v4371
    %v4373 = vpop.f32.mrb[0].mxu0
    %v4374 = vadd.f32 0.0, %v4373
    %v4375 = vpop.f32.mrb[0].mxu0
    %v4376 = vadd.f32 0.0, %v4375
    %v4377 = vpop.f32.mrb[0].mxu0
    %v4378 = vadd.f32 0.0, %v4377
    %4379 = vmatprep.mubr.bf16.mxu0 %v4081
    %4380 = vmatmul.mubr.bf16.gmra.mrb[0].mxu0 %v3813
    %v4381 = vpop.f32.mrb[0].mxu0
    %v4382 = vadd.f32 0.0, %v4381
    %v4383 = vpop.f32.mrb[0].mxu0
    %v4384 = vadd.f32 0.0, %v4383
    %v4385 = vpop.f32.mrb[0].mxu0
    %v4386 = vadd.f32 0.0, %v4385
    %v4387 = vpop.f32.mrb[0].mxu0
    %v4388 = vadd.f32 0.0, %v4387
    %4389 = vmatprep.mubr.bf16.mxu0 %v4084
    %4390 = vmatmul.mubr.bf16.gmra.mrb[0].mxu0 %v3815
    %v4391 = vpop.f32.mrb[0].mxu0
    %v4392 = vadd.f32 0.0, %v4391
    %v4393 = vpop.f32.mrb[0].mxu0
    %v4394 = vadd.f32 0.0, %v4393
    %v4395 = vpop.f32.mrb[0].mxu0
    %v4396 = vadd.f32 0.0, %v4395
    %v4397 = vpop.f32.mrb[0].mxu0
    %v4398 = vadd.f32 0.0, %v4397
    %4399 = vmatprep.mubr.bf16.mxu0 %v4087
    %4400 = vmatmul.mubr.bf16.gmra.mrb[0].mxu0 %v3817
    %v4401 = vpop.f32.mrb[0].mxu0
    %v4402 = vadd.f32 0.0, %v4401
    %v4403 = vpop.f32.mrb[0].mxu0
    %v4404 = vadd.f32 0.0, %v4403
    %v4405 = vpop.f32.mrb[0].mxu0
    %v4406 = vadd.f32 0.0, %v4405
    %v4407 = vpop.f32.mrb[0].mxu0
    %v4408 = vadd.f32 0.0, %v4407
    %4409 = vmatprep.mubr.bf16.mxu0 %v4090
    %4410 = vmatmul.mubr.bf16.gmra.mrb[0].mxu0 %v3819
    %v4411 = vpop.f32.mrb[0].mxu0
    %v4412 = vadd.f32 0.0, %v4411
    %v4413 = vpop.f32.mrb[0].mxu0
    %v4414 = vadd.f32 0.0, %v4413
    %v4415 = vpop.f32.mrb[0].mxu0
    %v4416 = vadd.f32 0.0, %v4415
    %v4417 = vpop.f32.mrb[0].mxu0
    %v4418 = vadd.f32 0.0, %v4417
    %4419 = vmatprep.mubr.bf16.mxu0 %v4093
    %4420 = vmatmul.mubr.bf16.gmra.mrb[0].mxu0 %v3821
    %v4421 = vpop.f32.mrb[0].mxu0
    %v4422 = vadd.f32 0.0, %v4421
    %v4423 = vpop.f32.mrb[0].mxu0
    %v4424 = vadd.f32 0.0, %v4423
    %v4425 = vpop.f32.mrb[0].mxu0
    %v4426 = vadd.f32 0.0, %v4425
    %v4427 = vpop.f32.mrb[0].mxu0
    %v4428 = vadd.f32 0.0, %v4427
    %4429 = vmatprep.mubr.bf16.mxu0 %v4096
    %4430 = vmatmul.mubr.bf16.gmra.mrb[0].mxu0 %v3823
    %v4431 = vpop.f32.mrb[0].mxu0
    %v4432 = vadd.f32 0.0, %v4431
    %v4433 = vpop.f32.mrb[0].mxu0
    %v4434 = vadd.f32 0.0, %v4433
    %v4435 = vpop.f32.mrb[0].mxu0
    %v4436 = vadd.f32 0.0, %v4435
    %v4437 = vpop.f32.mrb[0].mxu0
    %v4438 = vadd.f32 0.0, %v4437
    %4439 = vmatprep.mubr.bf16.mxu0 %v4099
    %4440 = vmatmul.mubr.bf16.gmra.mrb[0].mxu0 %v3825
    %v4441 = vpop.f32.mrb[0].mxu0
    %v4442 = vadd.f32 0.0, %v4441
    %v4443 = vpop.f32.mrb[0].mxu0
    %v4444 = vadd.f32 0.0, %v4443
    %v4445 = vpop.f32.mrb[0].mxu0
    %v4446 = vadd.f32 0.0, %v4445
    %v4447 = vpop.f32.mrb[0].mxu0
    %v4448 = vadd.f32 0.0, %v4447
    %4449 = vmatprep.mubr.bf16.mxu0 %v4102
    %4450 = vmatmul.mubr.bf16.gmra.mrb[0].mxu0 %v3827
    %v4451 = vpop.f32.mrb[0].mxu0
    %v4452 = vadd.f32 0.0, %v4451
    %v4453 = vpop.f32.mrb[0].mxu0
    %v4454 = vadd.f32 0.0, %v4453
    %v4455 = vpop.f32.mrb[0].mxu0
    %v4456 = vadd.f32 0.0, %v4455
    %v4457 = vpop.f32.mrb[0].mxu0
    %v4458 = vadd.f32 0.0, %v4457
    %4459 = vmatprep.mubr.bf16.mxu0 %v4105
    %4460 = vmatmul.mubr.bf16.gmra.mrb[0].mxu0 %v3829
    %v4461 = vpop.f32.mrb[0].mxu0
    %v4462 = vadd.f32 0.0, %v4461
    %v4463 = vpop.f32.mrb[0].mxu0
    %v4464 = vadd.f32 0.0, %v4463
    %v4465 = vpop.f32.mrb[0].mxu0
    %v4466 = vadd.f32 0.0, %v4465
    %v4467 = vpop.f32.mrb[0].mxu0
    %v4468 = vadd.f32 0.0, %v4467
    %4469 = vmatprep.mubr.bf16.mxu0 %v4108
    %4470 = vmatmul.mubr.bf16.gmra.mrb[0].mxu0 %v3831
    %v4471 = vpop.f32.mrb[0].mxu0
    %v4472 = vadd.f32 0.0, %v4471
    %v4473 = vpop.f32.mrb[0].mxu0
    %v4474 = vadd.f32 0.0, %v4473
    %v4475 = vpop.f32.mrb[0].mxu0
    %v4476 = vadd.f32 0.0, %v4475
    %v4477 = vpop.f32.mrb[0].mxu0
    %v4478 = vadd.f32 0.0, %v4477
    %4479 = vmatprep.mubr.bf16.mxu0 %v4111
    %4480 = vmatmul.mubr.bf16.gmra.mrb[0].mxu0 %v3833
    %v4481 = vpop.f32.mrb[0].mxu0
    %v4482 = vadd.f32 0.0, %v4481
    %v4483 = vpop.f32.mrb[0].mxu0
    %v4484 = vadd.f32 0.0, %v4483
    %v4485 = vpop.f32.mrb[0].mxu0
    %v4486 = vadd.f32 0.0, %v4485
    %v4487 = vpop.f32.mrb[0].mxu0
    %v4488 = vadd.f32 0.0, %v4487
    %4489 = vmatprep.mubr.bf16.mxu0 %v4114
    %4490 = vmatmul.mubr.bf16.gmra.mrb[0].mxu0 %v3835
    %v4491 = vpop.f32.mrb[0].mxu0
    %v4492 = vadd.f32 0.0, %v4491
    %v4493 = vpop.f32.mrb[0].mxu0
    %v4494 = vadd.f32 0.0, %v4493
    %v4495 = vpop.f32.mrb[0].mxu0
    %v4496 = vadd.f32 0.0, %v4495
    %v4497 = vpop.f32.mrb[0].mxu0
    %v4498 = vadd.f32 0.0, %v4497
    %4499 = vmatprep.mubr.bf16.mxu0 %v4117
    %4500 = vmatmul.mubr.bf16.gmra.mrb[0].mxu0 %v3837
    %v4501 = vpop.f32.mrb[0].mxu0
    %v4502 = vadd.f32 0.0, %v4501
    %v4503 = vpop.f32.mrb[0].mxu0
    %v4504 = vadd.f32 0.0, %v4503
    %v4505 = vpop.f32.mrb[0].mxu0
    %v4506 = vadd.f32 0.0, %v4505
    %v4507 = vpop.f32.mrb[0].mxu0
    %v4508 = vadd.f32 0.0, %v4507
    %4509 = vmatprep.mubr.bf16.mxu0 %v4120
    %4510 = vmatmul.mubr.bf16.gmra.mrb[0].mxu0 %v3839
    %v4511 = vpop.f32.mrb[0].mxu0
    %v4512 = vadd.f32 0.0, %v4511
    %v4513 = vpop.f32.mrb[0].mxu0
    %v4514 = vadd.f32 0.0, %v4513
    %v4515 = vpop.f32.mrb[0].mxu0
    %v4516 = vadd.f32 0.0, %v4515
    %v4517 = vpop.f32.mrb[0].mxu0
    %v4518 = vadd.f32 0.0, %v4517
    %4519 = vmatprep.mubr.bf16.mxu0 %v4123
    %4520 = vmatmul.mubr.bf16.gmra.mrb[0].mxu0 %v3841
    %v4521 = vpop.f32.mrb[0].mxu0
    %v4522 = vadd.f32 0.0, %v4521
    %v4523 = vpop.f32.mrb[0].mxu0
    %v4524 = vadd.f32 0.0, %v4523
    %v4525 = vpop.f32.mrb[0].mxu0
    %v4526 = vadd.f32 0.0, %v4525
    %v4527 = vpop.f32.mrb[0].mxu0
    %v4528 = vadd.f32 0.0, %v4527
    %4529 = vmatprep.mubr.bf16.mxu0 %v4126
    %4530 = vmatmul.mubr.bf16.gmra.mrb[0].mxu0 %v3843
    %v4531 = vpop.f32.mrb[0].mxu0
    %v4532 = vadd.f32 0.0, %v4531
    %v4533 = vpop.f32.mrb[0].mxu0
    %v4534 = vadd.f32 0.0, %v4533
    %v4535 = vpop.f32.mrb[0].mxu0
    %v4536 = vadd.f32 0.0, %v4535
    %v4537 = vpop.f32.mrb[0].mxu0
    %v4538 = vadd.f32 0.0, %v4537
    %4539 = vmatprep.mubr.bf16.mxu0 %v4129
    %4540 = vmatmul.mubr.bf16.gmra.mrb[0].mxu0 %v3845
    %v4541 = vpop.f32.mrb[0].mxu0
    %v4542 = vadd.f32 0.0, %v4541
    %v4543 = vpop.f32.mrb[0].mxu0
    %v4544 = vadd.f32 0.0, %v4543
    %v4545 = vpop.f32.mrb[0].mxu0
    %v4546 = vadd.f32 0.0, %v4545
    %v4547 = vpop.f32.mrb[0].mxu0
    %v4548 = vadd.f32 0.0, %v4547
    %4549 = vmatprep.mubr.bf16.mxu0 %v4132
    %4550 = vmatmul.mubr.bf16.gmra.mrb[0].mxu0 %v3847
    %v4551 = vpop.f32.mrb[0].mxu0
    %v4552 = vadd.f32 0.0, %v4551
    %v4553 = vpop.f32.mrb[0].mxu0
    %v4554 = vadd.f32 0.0, %v4553
    %v4555 = vpop.f32.mrb[0].mxu0
    %v4556 = vadd.f32 0.0, %v4555
    %v4557 = vpop.f32.mrb[0].mxu0
    %v4558 = vadd.f32 0.0, %v4557
    %4559 = vmatprep.mubr.bf16.mxu0 %v4135
    %4560 = vmatmul.mubr.bf16.gmra.mrb[0].mxu0 %v3849
    %v4561 = vpop.f32.mrb[0].mxu0
    %v4562 = vadd.f32 0.0, %v4561
    %v4563 = vpop.f32.mrb[0].mxu0
    %v4564 = vadd.f32 0.0, %v4563
    %v4565 = vpop.f32.mrb[0].mxu0
    %v4566 = vadd.f32 0.0, %v4565
    %v4567 = vpop.f32.mrb[0].mxu0
    %v4568 = vadd.f32 0.0, %v4567
    %4569 = vmatprep.mubr.bf16.mxu0 %v4138
    %4570 = vmatmul.mubr.bf16.gmra.mrb[0].mxu0 %v3851
    %v4571 = vpop.f32.mrb[0].mxu0
    %v4572 = vadd.f32 0.0, %v4571
    %v4573 = vpop.f32.mrb[0].mxu0
    %v4574 = vadd.f32 0.0, %v4573
    %v4575 = vpop.f32.mrb[0].mxu0
    %v4576 = vadd.f32 0.0, %v4575
    %v4577 = vpop.f32.mrb[0].mxu0
    %v4578 = vadd.f32 0.0, %v4577
    %4579 = vmatprep.mubr.bf16.mxu0 %v4141
    %4580 = vmatmul.mubr.bf16.gmra.mrb[0].mxu0 %v3853
    %v4581 = vpop.f32.mrb[0].mxu0
    %v4582 = vadd.f32 0.0, %v4581
    %v4583 = vpop.f32.mrb[0].mxu0
    %v4584 = vadd.f32 0.0, %v4583
    %v4585 = vpop.f32.mrb[0].mxu0
    %v4586 = vadd.f32 0.0, %v4585
    %v4587 = vpop.f32.mrb[0].mxu0
    %v4588 = vadd.f32 0.0, %v4587
    %4589 = vmatprep.mubr.bf16.mxu0 %v4144
    %4590 = vmatmul.mubr.bf16.gmra.mrb[0].mxu0 %v3855
    %v4591 = vpop.f32.mrb[0].mxu0
    %v4592 = vadd.f32 0.0, %v4591
    %v4593 = vpop.f32.mrb[0].mxu0
    %v4594 = vadd.f32 0.0, %v4593
    %v4595 = vpop.f32.mrb[0].mxu0
    %v4596 = vadd.f32 0.0, %v4595
    %v4597 = vpop.f32.mrb[0].mxu0
    %v4598 = vadd.f32 0.0, %v4597
    %4599 = vmatprep.mubr.bf16.mxu0 %v4147
    %4600 = vmatmul.mubr.bf16.gmra.mrb[0].mxu0 %v3857
    %v4601 = vpop.f32.mrb[0].mxu0
    %v4602 = vadd.f32 0.0, %v4601
    %v4603 = vpop.f32.mrb[0].mxu0
    %v4604 = vadd.f32 0.0, %v4603
    %v4605 = vpop.f32.mrb[0].mxu0
    %v4606 = vadd.f32 0.0, %v4605
    %v4607 = vpop.f32.mrb[0].mxu0
    %v4608 = vadd.f32 0.0, %v4607
    %4609 = vmatprep.mubr.bf16.mxu0 %v4150
    %4610 = vmatmul.mubr.bf16.gmra.mrb[0].mxu0 %v3859
    %v4611 = vpop.f32.mrb[0].mxu0
    %v4612 = vadd.f32 0.0, %v4611
    %v4613 = vpop.f32.mrb[0].mxu0
    %v4614 = vadd.f32 0.0, %v4613
    %v4615 = vpop.f32.mrb[0].mxu0
    %v4616 = vadd.f32 0.0, %v4615
    %v4617 = vpop.f32.mrb[0].mxu0
    %v4618 = vadd.f32 0.0, %v4617
    %4619 = vmatprep.mubr.bf16.mxu0 %v4153
    %4620 = vmatmul.mubr.bf16.gmra.mrb[0].mxu0 %v3861
    %v4621 = vpop.f32.mrb[0].mxu0
    %v4622 = vadd.f32 0.0, %v4621
    %v4623 = vpop.f32.mrb[0].mxu0
    %v4624 = vadd.f32 0.0, %v4623
    %v4625 = vpop.f32.mrb[0].mxu0
    %v4626 = vadd.f32 0.0, %v4625
    %v4627 = vpop.f32.mrb[0].mxu0
    %v4628 = vadd.f32 0.0, %v4627
    %4629 = vmatprep.mubr.bf16.mxu0 %v4156
    %4630 = vmatmul.mubr.bf16.gmra.mrb[0].mxu0 %v3863
    %v4631 = vpop.f32.mrb[0].mxu0
    %v4632 = vadd.f32 0.0, %v4631
    %v4633 = vpop.f32.mrb[0].mxu0
    %v4634 = vadd.f32 0.0, %v4633
    %v4635 = vpop.f32.mrb[0].mxu0
    %v4636 = vadd.f32 0.0, %v4635
    %v4637 = vpop.f32.mrb[0].mxu0
    %v4638 = vadd.f32 0.0, %v4637
    %4639 = vmatprep.mubr.bf16.mxu0 %v4159
    %4640 = vmatmul.mubr.bf16.gmra.mrb[0].mxu0 %v3865
    %v4641 = vpop.f32.mrb[0].mxu0
    %v4642 = vadd.f32 0.0, %v4641
    %v4643 = vpop.f32.mrb[0].mxu0
    %v4644 = vadd.f32 0.0, %v4643
    %v4645 = vpop.f32.mrb[0].mxu0
    %v4646 = vadd.f32 0.0, %v4645
    %v4647 = vpop.f32.mrb[0].mxu0
    %v4648 = vadd.f32 0.0, %v4647
    %4649 = vmatprep.mubr.bf16.mxu0 %v4162
    %4650 = vmatmul.mubr.bf16.gmra.mrb[0].mxu0 %v3867
    %v4651 = vpop.f32.mrb[0].mxu0
    %v4652 = vadd.f32 0.0, %v4651
    %v4653 = vpop.f32.mrb[0].mxu0
    %v4654 = vadd.f32 0.0, %v4653
    %v4655 = vpop.f32.mrb[0].mxu0
    %v4656 = vadd.f32 0.0, %v4655
    %v4657 = vpop.f32.mrb[0].mxu0
    %v4658 = vadd.f32 0.0, %v4657
    %4659 = vmatprep.mubr.bf16.mxu0 %v4165
    %4660 = vmatmul.mubr.bf16.gmra.mrb[0].mxu0 %v3869
    %v4661 = vpop.f32.mrb[0].mxu0
    %v4662 = vadd.f32 0.0, %v4661
    %v4663 = vpop.f32.mrb[0].mxu0
    %v4664 = vadd.f32 0.0, %v4663
    %v4665 = vpop.f32.mrb[0].mxu0
    %v4666 = vadd.f32 0.0, %v4665
    %v4667 = vpop.f32.mrb[0].mxu0
    %v4668 = vadd.f32 0.0, %v4667
    %4669 = vmatprep.mubr.bf16.mxu0 %v4168
    %4670 = vmatmul.mubr.bf16.gmra.mrb[0].mxu0 %v3871
    %v4671 = vpop.f32.mrb[0].mxu0
    %v4672 = vadd.f32 0.0, %v4671
    %v4673 = vpop.f32.mrb[0].mxu0
    %v4674 = vadd.f32 0.0, %v4673
    %v4675 = vpop.f32.mrb[0].mxu0
    %v4676 = vadd.f32 0.0, %v4675
    %v4677 = vpop.f32.mrb[0].mxu0
    %v4678 = vadd.f32 0.0, %v4677
    %4679 = vmatprep.mubr.bf16.mxu0 %v4171
    %4680 = vmatmul.mubr.bf16.gmra.mrb[0].mxu0 %v3873
    %v4681 = vpop.f32.mrb[0].mxu0
    %v4682 = vadd.f32 0.0, %v4681
    %v4683 = vpop.f32.mrb[0].mxu0
    %v4684 = vadd.f32 0.0, %v4683
    %v4685 = vpop.f32.mrb[0].mxu0
    %v4686 = vadd.f32 0.0, %v4685
    %v4687 = vpop.f32.mrb[0].mxu0
    %v4688 = vadd.f32 0.0, %v4687
    %4689 = vmatprep.mubr.bf16.mxu0 %v4174
    %4690 = vmatmul.mubr.bf16.gmra.mrb[0].mxu0 %v3875
    %v4691 = vpop.f32.mrb[0].mxu0
    %v4692 = vadd.f32 0.0, %v4691
    %v4693 = vpop.f32.mrb[0].mxu0
    %v4694 = vadd.f32 0.0, %v4693
    %v4695 = vpop.f32.mrb[0].mxu0
    %v4696 = vadd.f32 0.0, %v4695
    %v4697 = vpop.f32.mrb[0].mxu0
    %v4698 = vadd.f32 0.0, %v4697
    %4699 = vmatprep.mubr.bf16.mxu0 %v4177
    %4700 = vmatmul.mubr.bf16.gmra.mrb[0].mxu0 %v3877
    %v4701 = vpop.f32.mrb[0].mxu0
    %v4702 = vadd.f32 0.0, %v4701
    %v4703 = vpop.f32.mrb[0].mxu0
    %v4704 = vadd.f32 0.0, %v4703
    %v4705 = vpop.f32.mrb[0].mxu0
    %v4706 = vadd.f32 0.0, %v4705
    %v4707 = vpop.f32.mrb[0].mxu0
    %v4708 = vadd.f32 0.0, %v4707
    %4709 = vmatprep.mubr.bf16.mxu0 %v4180
    %4710 = vmatmul.mubr.bf16.gmra.mrb[0].mxu0 %v3879
    %v4711 = vpop.f32.mrb[0].mxu0
    %v4712 = vadd.f32 0.0, %v4711
    %v4713 = vpop.f32.mrb[0].mxu0
    %v4714 = vadd.f32 0.0, %v4713
    %v4715 = vpop.f32.mrb[0].mxu0
    %v4716 = vadd.f32 0.0, %v4715
    %v4717 = vpop.f32.mrb[0].mxu0
    %v4718 = vadd.f32 0.0, %v4717
    %4719 = vmatprep.mubr.bf16.mxu0 %v4183
    %4720 = vmatmul.mubr.bf16.gmra.mrb[0].mxu0 %v3881
    %v4721 = vpop.f32.mrb[0].mxu0
    %v4722 = vadd.f32 0.0, %v4721
    %v4723 = vpop.f32.mrb[0].mxu0
    %v4724 = vadd.f32 0.0, %v4723
    %v4725 = vpop.f32.mrb[0].mxu0
    %v4726 = vadd.f32 0.0, %v4725
    %v4727 = vpop.f32.mrb[0].mxu0
    %v4728 = vadd.f32 0.0, %v4727
    %4729 = vmatprep.mubr.bf16.mxu0 %v4186
    %4730 = vmatmul.mubr.bf16.gmra.mrb[0].mxu0 %v3883
    %v4731 = vpop.f32.mrb[0].mxu0
    %v4732 = vadd.f32 0.0, %v4731
    %v4733 = vpop.f32.mrb[0].mxu0
    %v4734 = vadd.f32 0.0, %v4733
    %v4735 = vpop.f32.mrb[0].mxu0
    %v4736 = vadd.f32 0.0, %v4735
    %v4737 = vpop.f32.mrb[0].mxu0
    %v4738 = vadd.f32 0.0, %v4737
    %4739 = vmatprep.mubr.bf16.mxu0 %v4189
    %4740 = vmatmul.mubr.bf16.gmra.mrb[0].mxu0 %v3885
    %v4741 = vpop.f32.mrb[0].mxu0
    %v4742 = vadd.f32 0.0, %v4741
    %v4743 = vpop.f32.mrb[0].mxu0
    %v4744 = vadd.f32 0.0, %v4743
    %v4745 = vpop.f32.mrb[0].mxu0
    %v4746 = vadd.f32 0.0, %v4745
    %v4747 = vpop.f32.mrb[0].mxu0
    %v4748 = vadd.f32 0.0, %v4747
    %4749 = vmatprep.mubr.bf16.mxu0 %v4192
    %4750 = vmatmul.mubr.bf16.gmra.mrb[0].mxu0 %v3887
    %v4751 = vpop.f32.mrb[0].mxu0
    %v4752 = vadd.f32 0.0, %v4751
    %v4753 = vpop.f32.mrb[0].mxu0
    %v4754 = vadd.f32 0.0, %v4753
    %v4755 = vpop.f32.mrb[0].mxu0
    %v4756 = vadd.f32 0.0, %v4755
    %v4757 = vpop.f32.mrb[0].mxu0
    %v4758 = vadd.f32 0.0, %v4757
    %4759 = vmatprep.mubr.bf16.mxu0 %v4195
    %4760 = vmatmul.mubr.bf16.gmra.mrb[0].mxu0 %v3889
    %v4761 = vpop.f32.mrb[0].mxu0
    %v4762 = vadd.f32 0.0, %v4761
    %v4763 = vpop.f32.mrb[0].mxu0
    %v4764 = vadd.f32 0.0, %v4763
    %v4765 = vpop.f32.mrb[0].mxu0
    %v4766 = vadd.f32 0.0, %v4765
    %v4767 = vpop.f32.mrb[0].mxu0
    %v4768 = vadd.f32 0.0, %v4767
    %4769 = vdwg.mxu0
    %v4770 = vadd.f32 %v3245, %v4232
    %v4771 = vadd.f32 %v3247, %v4234
    %v4772 = vadd.f32 %v3249, %v4236
    %v4773 = vadd.f32 %v3251, %v4238
    %v4774 = vadd.f32 %v3255, %v4242
    %v4775 = vadd.f32 %v3257, %v4244
    %v4776 = vadd.f32 %v3259, %v4246
    %v4777 = vadd.f32 %v3261, %v4248
    %v4778 = vadd.f32 %v3265, %v4252
    %v4779 = vadd.f32 %v3267, %v4254
    %v4780 = vadd.f32 %v3269, %v4256
    %v4781 = vadd.f32 %v3271, %v4258
    %v4782 = vadd.f32 %v3275, %v4262
    %v4783 = vadd.f32 %v3277, %v4264
    %v4784 = vadd.f32 %v3279, %v4266
    %v4785 = vadd.f32 %v3281, %v4268
    %v4786 = vadd.f32 %v3285, %v4272
    %v4787 = vadd.f32 %v3287, %v4274
    %v4788 = vadd.f32 %v3289, %v4276
    %v4789 = vadd.f32 %v3291, %v4278
    %v4790 = vadd.f32 %v3295, %v4282
    %v4791 = vadd.f32 %v3297, %v4284
    %v4792 = vadd.f32 %v3299, %v4286
    %v4793 = vadd.f32 %v3301, %v4288
    %v4794 = vadd.f32 %v3305, %v4292
    %v4795 = vadd.f32 %v3307, %v4294
    %v4796 = vadd.f32 %v3309, %v4296
    %v4797 = vadd.f32 %v3311, %v4298
    %v4798 = vadd.f32 %v3315, %v4302
    %v4799 = vadd.f32 %v3317, %v4304
    %v4800 = vadd.f32 %v3319, %v4306
    %v4801 = vadd.f32 %v3321, %v4308
    %v4802 = vadd.f32 %v3325, %v4312
    %v4803 = vadd.f32 %v3327, %v4314
    %v4804 = vadd.f32 %v3329, %v4316
    %v4805 = vadd.f32 %v3331, %v4318
    %v4806 = vadd.f32 %v3335, %v4322
    %v4807 = vadd.f32 %v3337, %v4324
    %v4808 = vadd.f32 %v3339, %v4326
    %v4809 = vadd.f32 %v3341, %v4328
    %v4810 = vadd.f32 %v3345, %v4332
    %v4811 = vadd.f32 %v3347, %v4334
    %v4812 = vadd.f32 %v3349, %v4336
    %v4813 = vadd.f32 %v3351, %v4338
    %v4814 = vadd.f32 %v3355, %v4342
    %v4815 = vadd.f32 %v3357, %v4344
    %v4816 = vadd.f32 %v3359, %v4346
    %v4817 = vadd.f32 %v3361, %v4348
    %v4818 = vadd.f32 %v3365, %v4352
    %v4819 = vadd.f32 %v3367, %v4354
    %v4820 = vadd.f32 %v3369, %v4356
    %v4821 = vadd.f32 %v3371, %v4358
    %v4822 = vadd.f32 %v3375, %v4362
    %v4823 = vadd.f32 %v3377, %v4364
    %v4824 = vadd.f32 %v3379, %v4366
    %v4825 = vadd.f32 %v3381, %v4368
    %v4826 = vadd.f32 %v3385, %v4372
    %v4827 = vadd.f32 %v3387, %v4374
    %v4828 = vadd.f32 %v3389, %v4376
    %v4829 = vadd.f32 %v3391, %v4378
    %v4830 = vadd.f32 %v3395, %v4382
    %v4831 = vadd.f32 %v3397, %v4384
    %v4832 = vadd.f32 %v3399, %v4386
    %v4833 = vadd.f32 %v3401, %v4388
    %v4834 = vadd.f32 %v3405, %v4392
    %v4835 = vadd.f32 %v3407, %v4394
    %v4836 = vadd.f32 %v3409, %v4396
    %v4837 = vadd.f32 %v3411, %v4398
    %v4838 = vadd.f32 %v3415, %v4402
    %v4839 = vadd.f32 %v3417, %v4404
    %v4840 = vadd.f32 %v3419, %v4406
    %v4841 = vadd.f32 %v3421, %v4408
    %v4842 = vadd.f32 %v3425, %v4412
    %v4843 = vadd.f32 %v3427, %v4414
    %v4844 = vadd.f32 %v3429, %v4416
    %v4845 = vadd.f32 %v3431, %v4418
    %v4846 = vadd.f32 %v3435, %v4422
    %v4847 = vadd.f32 %v3437, %v4424
    %v4848 = vadd.f32 %v3439, %v4426
    %v4849 = vadd.f32 %v3441, %v4428
    %v4850 = vadd.f32 %v3445, %v4432
    %v4851 = vadd.f32 %v3447, %v4434
    %v4852 = vadd.f32 %v3449, %v4436
    %v4853 = vadd.f32 %v3451, %v4438
    %v4854 = vadd.f32 %v3455, %v4442
    %v4855 = vadd.f32 %v3457, %v4444
    %v4856 = vadd.f32 %v3459, %v4446
    %v4857 = vadd.f32 %v3461, %v4448
    %v4858 = vadd.f32 %v3465, %v4452
    %v4859 = vadd.f32 %v3467, %v4454
    %v4860 = vadd.f32 %v3469, %v4456
    %v4861 = vadd.f32 %v3471, %v4458
    %v4862 = vadd.f32 %v3475, %v4462
    %v4863 = vadd.f32 %v3477, %v4464
    %v4864 = vadd.f32 %v3479, %v4466
    %v4865 = vadd.f32 %v3481, %v4468
    %v4866 = vadd.f32 %v3485, %v4472
    %v4867 = vadd.f32 %v3487, %v4474
    %v4868 = vadd.f32 %v3489, %v4476
    %v4869 = vadd.f32 %v3491, %v4478
    %v4870 = vadd.f32 %v3495, %v4482
    %v4871 = vadd.f32 %v3497, %v4484
    %v4872 = vadd.f32 %v3499, %v4486
    %v4873 = vadd.f32 %v3501, %v4488
    %v4874 = vadd.f32 %v3505, %v4492
    %v4875 = vadd.f32 %v3507, %v4494
    %v4876 = vadd.f32 %v3509, %v4496
    %v4877 = vadd.f32 %v3511, %v4498
    %v4878 = vadd.f32 %v3515, %v4502
    %v4879 = vadd.f32 %v3517, %v4504
    %v4880 = vadd.f32 %v3519, %v4506
    %v4881 = vadd.f32 %v3521, %v4508
    %v4882 = vadd.f32 %v3525, %v4512
    %v4883 = vadd.f32 %v3527, %v4514
    %v4884 = vadd.f32 %v3529, %v4516
    %v4885 = vadd.f32 %v3531, %v4518
    %v4886 = vadd.f32 %v3535, %v4522
    %v4887 = vadd.f32 %v3537, %v4524
    %v4888 = vadd.f32 %v3539, %v4526
    %v4889 = vadd.f32 %v3541, %v4528
    %v4890 = vadd.f32 %v3545, %v4532
    %v4891 = vadd.f32 %v3547, %v4534
    %v4892 = vadd.f32 %v3549, %v4536
    %v4893 = vadd.f32 %v3551, %v4538
    %v4894 = vadd.f32 %v3555, %v4542
    %v4895 = vadd.f32 %v3557, %v4544
    %v4896 = vadd.f32 %v3559, %v4546
    %v4897 = vadd.f32 %v3561, %v4548
    %v4898 = vadd.f32 %v3565, %v4552
    %v4899 = vadd.f32 %v3567, %v4554
    %v4900 = vadd.f32 %v3569, %v4556
    %v4901 = vadd.f32 %v3571, %v4558
    %v4902 = vadd.f32 %v3575, %v4562
    %v4903 = vadd.f32 %v3577, %v4564
    %v4904 = vadd.f32 %v3579, %v4566
    %v4905 = vadd.f32 %v3581, %v4568
    %v4906 = vadd.f32 %v3585, %v4572
    %v4907 = vadd.f32 %v3587, %v4574
    %v4908 = vadd.f32 %v3589, %v4576
    %v4909 = vadd.f32 %v3591, %v4578
    %v4910 = vadd.f32 %v3595, %v4582
    %v4911 = vadd.f32 %v3597, %v4584
    %v4912 = vadd.f32 %v3599, %v4586
    %v4913 = vadd.f32 %v3601, %v4588
    %v4914 = vadd.f32 %v3605, %v4592
    %v4915 = vadd.f32 %v3607, %v4594
    %v4916 = vadd.f32 %v3609, %v4596
    %v4917 = vadd.f32 %v3611, %v4598
    %v4918 = vadd.f32 %v3615, %v4602
    %v4919 = vadd.f32 %v3617, %v4604
    %v4920 = vadd.f32 %v3619, %v4606
    %v4921 = vadd.f32 %v3621, %v4608
    %v4922 = vadd.f32 %v3625, %v4612
    %v4923 = vadd.f32 %v3627, %v4614
    %v4924 = vadd.f32 %v3629, %v4616
    %v4925 = vadd.f32 %v3631, %v4618
    %v4926 = vadd.f32 %v3635, %v4622
    %v4927 = vadd.f32 %v3637, %v4624
    %v4928 = vadd.f32 %v3639, %v4626
    %v4929 = vadd.f32 %v3641, %v4628
    %v4930 = vadd.f32 %v3645, %v4632
    %v4931 = vadd.f32 %v3647, %v4634
    %v4932 = vadd.f32 %v3649, %v4636
    %v4933 = vadd.f32 %v3651, %v4638
    %v4934 = vadd.f32 %v3655, %v4642
    %v4935 = vadd.f32 %v3657, %v4644
    %v4936 = vadd.f32 %v3659, %v4646
    %v4937 = vadd.f32 %v3661, %v4648
    %v4938 = vadd.f32 %v3665, %v4652
    %v4939 = vadd.f32 %v3667, %v4654
    %v4940 = vadd.f32 %v3669, %v4656
    %v4941 = vadd.f32 %v3671, %v4658
    %v4942 = vadd.f32 %v3675, %v4662
    %v4943 = vadd.f32 %v3677, %v4664
    %v4944 = vadd.f32 %v3679, %v4666
    %v4945 = vadd.f32 %v3681, %v4668
    %v4946 = vadd.f32 %v3685, %v4672
    %v4947 = vadd.f32 %v3687, %v4674
    %v4948 = vadd.f32 %v3689, %v4676
    %v4949 = vadd.f32 %v3691, %v4678
    %v4950 = vadd.f32 %v3695, %v4682
    %v4951 = vadd.f32 %v3697, %v4684
    %v4952 = vadd.f32 %v3699, %v4686
    %v4953 = vadd.f32 %v3701, %v4688
    %v4954 = vadd.f32 %v3705, %v4692
    %v4955 = vadd.f32 %v3707, %v4694
    %v4956 = vadd.f32 %v3709, %v4696
    %v4957 = vadd.f32 %v3711, %v4698
    %v4958 = vadd.f32 %v3715, %v4702
    %v4959 = vadd.f32 %v3717, %v4704
    %v4960 = vadd.f32 %v3719, %v4706
    %v4961 = vadd.f32 %v3721, %v4708
    %v4962 = vadd.f32 %v3725, %v4712
    %v4963 = vadd.f32 %v3727, %v4714
    %v4964 = vadd.f32 %v3729, %v4716
    %v4965 = vadd.f32 %v3731, %v4718
    %v4966 = vadd.f32 %v3735, %v4722
    %v4967 = vadd.f32 %v3737, %v4724
    %v4968 = vadd.f32 %v3739, %v4726
    %v4969 = vadd.f32 %v3741, %v4728
    %v4970 = vadd.f32 %v3745, %v4732
    %v4971 = vadd.f32 %v3747, %v4734
    %v4972 = vadd.f32 %v3749, %v4736
    %v4973 = vadd.f32 %v3751, %v4738
    %v4974 = vadd.f32 %v3755, %v4742
    %v4975 = vadd.f32 %v3757, %v4744
    %v4976 = vadd.f32 %v3759, %v4746
    %v4977 = vadd.f32 %v3761, %v4748
    %v4978 = vadd.f32 %v3765, %v4752
    %v4979 = vadd.f32 %v3767, %v4754
    %v4980 = vadd.f32 %v3769, %v4756
    %v4981 = vadd.f32 %v3771, %v4758
    %v4982 = vadd.f32 %v3775, %v4762
    %v4983 = vadd.f32 %v3777, %v4764
    %v4984 = vadd.f32 %v3779, %v4766
    %v4985 = vadd.f32 %v3781, %v4768
    %v4986 = vld [vmem:[#allocation8] sm:$0x3]
    %v4988 = vlaneseq
    %v4989 = vshrl.u32 %v4988, 7
    %v4990 = vsub.s32 0, %v4989
    %v4991 = vrot.slane %v4986, %v4990
    %v4992 = vlaneseq
    %v4993 = vshrl.u32 %v4992, 7
    %v4994 = vsub.s32 1, %v4993
    %v4995 = vrot.slane %v4986, %v4994
    %v4998 = vadd.f32 %v4770, %v4991
    %v4999 = vadd.f32 %v4771, %v4995
    %v5000 = vadd.f32 %v4772, %v4991
    %v5001 = vadd.f32 %v4773, %v4995
    %v5002 = vadd.f32 %v4774, %v4991
    %v5003 = vadd.f32 %v4775, %v4995
    %v5004 = vadd.f32 %v4776, %v4991
    %v5005 = vadd.f32 %v4777, %v4995
    %v5006 = vadd.f32 %v4778, %v4991
    %v5007 = vadd.f32 %v4779, %v4995
    %v5008 = vadd.f32 %v4780, %v4991
    %v5009 = vadd.f32 %v4781, %v4995
    %v5010 = vadd.f32 %v4782, %v4991
    %v5011 = vadd.f32 %v4783, %v4995
    %v5012 = vadd.f32 %v4784, %v4991
    %v5013 = vadd.f32 %v4785, %v4995
    %v5014 = vadd.f32 %v4786, %v4991
    %v5015 = vadd.f32 %v4787, %v4995
    %v5016 = vadd.f32 %v4788, %v4991
    %v5017 = vadd.f32 %v4789, %v4995
    %v5018 = vadd.f32 %v4790, %v4991
    %v5019 = vadd.f32 %v4791, %v4995
    %v5020 = vadd.f32 %v4792, %v4991
    %v5021 = vadd.f32 %v4793, %v4995
    %v5022 = vadd.f32 %v4794, %v4991
    %v5023 = vadd.f32 %v4795, %v4995
    %v5024 = vadd.f32 %v4796, %v4991
    %v5025 = vadd.f32 %v4797, %v4995
    %v5026 = vadd.f32 %v4798, %v4991
    %v5027 = vadd.f32 %v4799, %v4995
    %v5028 = vadd.f32 %v4800, %v4991
    %v5029 = vadd.f32 %v4801, %v4995
    %v5030 = vadd.f32 %v4802, %v4991
    %v5031 = vadd.f32 %v4803, %v4995
    %v5032 = vadd.f32 %v4804, %v4991
    %v5033 = vadd.f32 %v4805, %v4995
    %v5034 = vadd.f32 %v4806, %v4991
    %v5035 = vadd.f32 %v4807, %v4995
    %v5036 = vadd.f32 %v4808, %v4991
    %v5037 = vadd.f32 %v4809, %v4995
    %v5038 = vadd.f32 %v4810, %v4991
    %v5039 = vadd.f32 %v4811, %v4995
    %v5040 = vadd.f32 %v4812, %v4991
    %v5041 = vadd.f32 %v4813, %v4995
    %v5042 = vadd.f32 %v4814, %v4991
    %v5043 = vadd.f32 %v4815, %v4995
    %v5044 = vadd.f32 %v4816, %v4991
    %v5045 = vadd.f32 %v4817, %v4995
    %v5046 = vadd.f32 %v4818, %v4991
    %v5047 = vadd.f32 %v4819, %v4995
    %v5048 = vadd.f32 %v4820, %v4991
    %v5049 = vadd.f32 %v4821, %v4995
    %v5050 = vadd.f32 %v4822, %v4991
    %v5051 = vadd.f32 %v4823, %v4995
    %v5052 = vadd.f32 %v4824, %v4991
    %v5053 = vadd.f32 %v4825, %v4995
    %v5054 = vadd.f32 %v4826, %v4991
    %v5055 = vadd.f32 %v4827, %v4995
    %v5056 = vadd.f32 %v4828, %v4991
    %v5057 = vadd.f32 %v4829, %v4995
    %v5058 = vadd.f32 %v4830, %v4991
    %v5059 = vadd.f32 %v4831, %v4995
    %v5060 = vadd.f32 %v4832, %v4991
    %v5061 = vadd.f32 %v4833, %v4995
    %v5062 = vadd.f32 %v4834, %v4991
    %v5063 = vadd.f32 %v4835, %v4995
    %v5064 = vadd.f32 %v4836, %v4991
    %v5065 = vadd.f32 %v4837, %v4995
    %v5066 = vadd.f32 %v4838, %v4991
    %v5067 = vadd.f32 %v4839, %v4995
    %v5068 = vadd.f32 %v4840, %v4991
    %v5069 = vadd.f32 %v4841, %v4995
    %v5070 = vadd.f32 %v4842, %v4991
    %v5071 = vadd.f32 %v4843, %v4995
    %v5072 = vadd.f32 %v4844, %v4991
    %v5073 = vadd.f32 %v4845, %v4995
    %v5074 = vadd.f32 %v4846, %v4991
    %v5075 = vadd.f32 %v4847, %v4995
    %v5076 = vadd.f32 %v4848, %v4991
    %v5077 = vadd.f32 %v4849, %v4995
    %v5078 = vadd.f32 %v4850, %v4991
    %v5079 = vadd.f32 %v4851, %v4995
    %v5080 = vadd.f32 %v4852, %v4991
    %v5081 = vadd.f32 %v4853, %v4995
    %v5082 = vadd.f32 %v4854, %v4991
    %v5083 = vadd.f32 %v4855, %v4995
    %v5084 = vadd.f32 %v4856, %v4991
    %v5085 = vadd.f32 %v4857, %v4995
    %v5086 = vadd.f32 %v4858, %v4991
    %v5087 = vadd.f32 %v4859, %v4995
    %v5088 = vadd.f32 %v4860, %v4991
    %v5089 = vadd.f32 %v4861, %v4995
    %v5090 = vadd.f32 %v4862, %v4991
    %v5091 = vadd.f32 %v4863, %v4995
    %v5092 = vadd.f32 %v4864, %v4991
    %v5093 = vadd.f32 %v4865, %v4995
    %v5094 = vadd.f32 %v4866, %v4991
    %v5095 = vadd.f32 %v4867, %v4995
    %v5096 = vadd.f32 %v4868, %v4991
    %v5097 = vadd.f32 %v4869, %v4995
    %v5098 = vadd.f32 %v4870, %v4991
    %v5099 = vadd.f32 %v4871, %v4995
    %v5100 = vadd.f32 %v4872, %v4991
    %v5101 = vadd.f32 %v4873, %v4995
    %v5102 = vadd.f32 %v4874, %v4991
    %v5103 = vadd.f32 %v4875, %v4995
    %v5104 = vadd.f32 %v4876, %v4991
    %v5105 = vadd.f32 %v4877, %v4995
    %v5106 = vadd.f32 %v4878, %v4991
    %v5107 = vadd.f32 %v4879, %v4995
    %v5108 = vadd.f32 %v4880, %v4991
    %v5109 = vadd.f32 %v4881, %v4995
    %v5110 = vadd.f32 %v4882, %v4991
    %v5111 = vadd.f32 %v4883, %v4995
    %v5112 = vadd.f32 %v4884, %v4991
    %v5113 = vadd.f32 %v4885, %v4995
    %v5114 = vadd.f32 %v4886, %v4991
    %v5115 = vadd.f32 %v4887, %v4995
    %v5116 = vadd.f32 %v4888, %v4991
    %v5117 = vadd.f32 %v4889, %v4995
    %v5118 = vadd.f32 %v4890, %v4991
    %v5119 = vadd.f32 %v4891, %v4995
    %v5120 = vadd.f32 %v4892, %v4991
    %v5121 = vadd.f32 %v4893, %v4995
    %v5122 = vadd.f32 %v4894, %v4991
    %v5123 = vadd.f32 %v4895, %v4995
    %v5124 = vadd.f32 %v4896, %v4991
    %v5125 = vadd.f32 %v4897, %v4995
    %v5126 = vadd.f32 %v4898, %v4991
    %v5127 = vadd.f32 %v4899, %v4995
    %v5128 = vadd.f32 %v4900, %v4991
    %v5129 = vadd.f32 %v4901, %v4995
    %v5130 = vadd.f32 %v4902, %v4991
    %v5131 = vadd.f32 %v4903, %v4995
    %v5132 = vadd.f32 %v4904, %v4991
    %v5133 = vadd.f32 %v4905, %v4995
    %v5134 = vadd.f32 %v4906, %v4991
    %v5135 = vadd.f32 %v4907, %v4995
    %v5136 = vadd.f32 %v4908, %v4991
    %v5137 = vadd.f32 %v4909, %v4995
    %v5138 = vadd.f32 %v4910, %v4991
    %v5139 = vadd.f32 %v4911, %v4995
    %v5140 = vadd.f32 %v4912, %v4991
    %v5141 = vadd.f32 %v4913, %v4995
    %v5142 = vadd.f32 %v4914, %v4991
    %v5143 = vadd.f32 %v4915, %v4995
    %v5144 = vadd.f32 %v4916, %v4991
    %v5145 = vadd.f32 %v4917, %v4995
    %v5146 = vadd.f32 %v4918, %v4991
    %v5147 = vadd.f32 %v4919, %v4995
    %v5148 = vadd.f32 %v4920, %v4991
    %v5149 = vadd.f32 %v4921, %v4995
    %v5150 = vadd.f32 %v4922, %v4991
    %v5151 = vadd.f32 %v4923, %v4995
    %v5152 = vadd.f32 %v4924, %v4991
    %v5153 = vadd.f32 %v4925, %v4995
    %v5154 = vadd.f32 %v4926, %v4991
    %v5155 = vadd.f32 %v4927, %v4995
    %v5156 = vadd.f32 %v4928, %v4991
    %v5157 = vadd.f32 %v4929, %v4995
    %v5158 = vadd.f32 %v4930, %v4991
    %v5159 = vadd.f32 %v4931, %v4995
    %v5160 = vadd.f32 %v4932, %v4991
    %v5161 = vadd.f32 %v4933, %v4995
    %v5162 = vadd.f32 %v4934, %v4991
    %v5163 = vadd.f32 %v4935, %v4995
    %v5164 = vadd.f32 %v4936, %v4991
    %v5165 = vadd.f32 %v4937, %v4995
    %v5166 = vadd.f32 %v4938, %v4991
    %v5167 = vadd.f32 %v4939, %v4995
    %v5168 = vadd.f32 %v4940, %v4991
    %v5169 = vadd.f32 %v4941, %v4995
    %v5170 = vadd.f32 %v4942, %v4991
    %v5171 = vadd.f32 %v4943, %v4995
    %v5172 = vadd.f32 %v4944, %v4991
    %v5173 = vadd.f32 %v4945, %v4995
    %v5174 = vadd.f32 %v4946, %v4991
    %v5175 = vadd.f32 %v4947, %v4995
    %v5176 = vadd.f32 %v4948, %v4991
    %v5177 = vadd.f32 %v4949, %v4995
    %v5178 = vadd.f32 %v4950, %v4991
    %v5179 = vadd.f32 %v4951, %v4995
    %v5180 = vadd.f32 %v4952, %v4991
    %v5181 = vadd.f32 %v4953, %v4995
    %v5182 = vadd.f32 %v4954, %v4991
    %v5183 = vadd.f32 %v4955, %v4995
    %v5184 = vadd.f32 %v4956, %v4991
    %v5185 = vadd.f32 %v4957, %v4995
    %v5186 = vadd.f32 %v4958, %v4991
    %v5187 = vadd.f32 %v4959, %v4995
    %v5188 = vadd.f32 %v4960, %v4991
    %v5189 = vadd.f32 %v4961, %v4995
    %v5190 = vadd.f32 %v4962, %v4991
    %v5191 = vadd.f32 %v4963, %v4995
    %v5192 = vadd.f32 %v4964, %v4991
    %v5193 = vadd.f32 %v4965, %v4995
    %v5194 = vadd.f32 %v4966, %v4991
    %v5195 = vadd.f32 %v4967, %v4995
    %v5196 = vadd.f32 %v4968, %v4991
    %v5197 = vadd.f32 %v4969, %v4995
    %v5198 = vadd.f32 %v4970, %v4991
    %v5199 = vadd.f32 %v4971, %v4995
    %v5200 = vadd.f32 %v4972, %v4991
    %v5201 = vadd.f32 %v4973, %v4995
    %v5202 = vadd.f32 %v4974, %v4991
    %v5203 = vadd.f32 %v4975, %v4995
    %v5204 = vadd.f32 %v4976, %v4991
    %v5205 = vadd.f32 %v4977, %v4995
    %v5206 = vadd.f32 %v4978, %v4991
    %v5207 = vadd.f32 %v4979, %v4995
    %v5208 = vadd.f32 %v4980, %v4991
    %v5209 = vadd.f32 %v4981, %v4995
    %v5210 = vadd.f32 %v4982, %v4991
    %v5211 = vadd.f32 %v4983, %v4995
    %v5212 = vadd.f32 %v4984, %v4991
    %v5213 = vadd.f32 %v4985, %v4995
    %v5214 = vmax.f32 %v4998, 0.0
    %v5215 = vmax.f32 %v4999, 0.0
    %v5216 = vmax.f32 %v5000, 0.0
    %v5217 = vmax.f32 %v5001, 0.0
    %v5218 = vmax.f32 %v5002, 0.0
    %v5219 = vmax.f32 %v5003, 0.0
    %v5220 = vmax.f32 %v5004, 0.0
    %v5221 = vmax.f32 %v5005, 0.0
    %v5222 = vmax.f32 %v5006, 0.0
    %v5223 = vmax.f32 %v5007, 0.0
    %v5224 = vmax.f32 %v5008, 0.0
    %v5225 = vmax.f32 %v5009, 0.0
    %v5226 = vmax.f32 %v5010, 0.0
    %v5227 = vmax.f32 %v5011, 0.0
    %v5228 = vmax.f32 %v5012, 0.0
    %v5229 = vmax.f32 %v5013, 0.0
    %v5230 = vmax.f32 %v5014, 0.0
    %v5231 = vmax.f32 %v5015, 0.0
    %v5232 = vmax.f32 %v5016, 0.0
    %v5233 = vmax.f32 %v5017, 0.0
    %v5234 = vmax.f32 %v5018, 0.0
    %v5235 = vmax.f32 %v5019, 0.0
    %v5236 = vmax.f32 %v5020, 0.0
    %v5237 = vmax.f32 %v5021, 0.0
    %v5238 = vmax.f32 %v5022, 0.0
    %v5239 = vmax.f32 %v5023, 0.0
    %v5240 = vmax.f32 %v5024, 0.0
    %v5241 = vmax.f32 %v5025, 0.0
    %v5242 = vmax.f32 %v5026, 0.0
    %v5243 = vmax.f32 %v5027, 0.0
    %v5244 = vmax.f32 %v5028, 0.0
    %v5245 = vmax.f32 %v5029, 0.0
    %v5246 = vmax.f32 %v5030, 0.0
    %v5247 = vmax.f32 %v5031, 0.0
    %v5248 = vmax.f32 %v5032, 0.0
    %v5249 = vmax.f32 %v5033, 0.0
    %v5250 = vmax.f32 %v5034, 0.0
    %v5251 = vmax.f32 %v5035, 0.0
    %v5252 = vmax.f32 %v5036, 0.0
    %v5253 = vmax.f32 %v5037, 0.0
    %v5254 = vmax.f32 %v5038, 0.0
    %v5255 = vmax.f32 %v5039, 0.0
    %v5256 = vmax.f32 %v5040, 0.0
    %v5257 = vmax.f32 %v5041, 0.0
    %v5258 = vmax.f32 %v5042, 0.0
    %v5259 = vmax.f32 %v5043, 0.0
    %v5260 = vmax.f32 %v5044, 0.0
    %v5261 = vmax.f32 %v5045, 0.0
    %v5262 = vmax.f32 %v5046, 0.0
    %v5263 = vmax.f32 %v5047, 0.0
    %v5264 = vmax.f32 %v5048, 0.0
    %v5265 = vmax.f32 %v5049, 0.0
    %v5266 = vmax.f32 %v5050, 0.0
    %v5267 = vmax.f32 %v5051, 0.0
    %v5268 = vmax.f32 %v5052, 0.0
    %v5269 = vmax.f32 %v5053, 0.0
    %v5270 = vmax.f32 %v5054, 0.0
    %v5271 = vmax.f32 %v5055, 0.0
    %v5272 = vmax.f32 %v5056, 0.0
    %v5273 = vmax.f32 %v5057, 0.0
    %v5274 = vmax.f32 %v5058, 0.0
    %v5275 = vmax.f32 %v5059, 0.0
    %v5276 = vmax.f32 %v5060, 0.0
    %v5277 = vmax.f32 %v5061, 0.0
    %v5278 = vmax.f32 %v5062, 0.0
    %v5279 = vmax.f32 %v5063, 0.0
    %v5280 = vmax.f32 %v5064, 0.0
    %v5281 = vmax.f32 %v5065, 0.0
    %v5282 = vmax.f32 %v5066, 0.0
    %v5283 = vmax.f32 %v5067, 0.0
    %v5284 = vmax.f32 %v5068, 0.0
    %v5285 = vmax.f32 %v5069, 0.0
    %v5286 = vmax.f32 %v5070, 0.0
    %v5287 = vmax.f32 %v5071, 0.0
    %v5288 = vmax.f32 %v5072, 0.0
    %v5289 = vmax.f32 %v5073, 0.0
    %v5290 = vmax.f32 %v5074, 0.0
    %v5291 = vmax.f32 %v5075, 0.0
    %v5292 = vmax.f32 %v5076, 0.0
    %v5293 = vmax.f32 %v5077, 0.0
    %v5294 = vmax.f32 %v5078, 0.0
    %v5295 = vmax.f32 %v5079, 0.0
    %v5296 = vmax.f32 %v5080, 0.0
    %v5297 = vmax.f32 %v5081, 0.0
    %v5298 = vmax.f32 %v5082, 0.0
    %v5299 = vmax.f32 %v5083, 0.0
    %v5300 = vmax.f32 %v5084, 0.0
    %v5301 = vmax.f32 %v5085, 0.0
    %v5302 = vmax.f32 %v5086, 0.0
    %v5303 = vmax.f32 %v5087, 0.0
    %v5304 = vmax.f32 %v5088, 0.0
    %v5305 = vmax.f32 %v5089, 0.0
    %v5306 = vmax.f32 %v5090, 0.0
    %v5307 = vmax.f32 %v5091, 0.0
    %v5308 = vmax.f32 %v5092, 0.0
    %v5309 = vmax.f32 %v5093, 0.0
    %v5310 = vmax.f32 %v5094, 0.0
    %v5311 = vmax.f32 %v5095, 0.0
    %v5312 = vmax.f32 %v5096, 0.0
    %v5313 = vmax.f32 %v5097, 0.0
    %v5314 = vmax.f32 %v5098, 0.0
    %v5315 = vmax.f32 %v5099, 0.0
    %v5316 = vmax.f32 %v5100, 0.0
    %v5317 = vmax.f32 %v5101, 0.0
    %v5318 = vmax.f32 %v5102, 0.0
    %v5319 = vmax.f32 %v5103, 0.0
    %v5320 = vmax.f32 %v5104, 0.0
    %v5321 = vmax.f32 %v5105, 0.0
    %v5322 = vmax.f32 %v5106, 0.0
    %v5323 = vmax.f32 %v5107, 0.0
    %v5324 = vmax.f32 %v5108, 0.0
    %v5325 = vmax.f32 %v5109, 0.0
    %v5326 = vmax.f32 %v5110, 0.0
    %v5327 = vmax.f32 %v5111, 0.0
    %v5328 = vmax.f32 %v5112, 0.0
    %v5329 = vmax.f32 %v5113, 0.0
    %v5330 = vmax.f32 %v5114, 0.0
    %v5331 = vmax.f32 %v5115, 0.0
    %v5332 = vmax.f32 %v5116, 0.0
    %v5333 = vmax.f32 %v5117, 0.0
    %v5334 = vmax.f32 %v5118, 0.0
    %v5335 = vmax.f32 %v5119, 0.0
    %v5336 = vmax.f32 %v5120, 0.0
    %v5337 = vmax.f32 %v5121, 0.0
    %v5338 = vmax.f32 %v5122, 0.0
    %v5339 = vmax.f32 %v5123, 0.0
    %v5340 = vmax.f32 %v5124, 0.0
    %v5341 = vmax.f32 %v5125, 0.0
    %v5342 = vmax.f32 %v5126, 0.0
    %v5343 = vmax.f32 %v5127, 0.0
    %v5344 = vmax.f32 %v5128, 0.0
    %v5345 = vmax.f32 %v5129, 0.0
    %v5346 = vmax.f32 %v5130, 0.0
    %v5347 = vmax.f32 %v5131, 0.0
    %v5348 = vmax.f32 %v5132, 0.0
    %v5349 = vmax.f32 %v5133, 0.0
    %v5350 = vmax.f32 %v5134, 0.0
    %v5351 = vmax.f32 %v5135, 0.0
    %v5352 = vmax.f32 %v5136, 0.0
    %v5353 = vmax.f32 %v5137, 0.0
    %v5354 = vmax.f32 %v5138, 0.0
    %v5355 = vmax.f32 %v5139, 0.0
    %v5356 = vmax.f32 %v5140, 0.0
    %v5357 = vmax.f32 %v5141, 0.0
    %v5358 = vmax.f32 %v5142, 0.0
    %v5359 = vmax.f32 %v5143, 0.0
    %v5360 = vmax.f32 %v5144, 0.0
    %v5361 = vmax.f32 %v5145, 0.0
    %v5362 = vmax.f32 %v5146, 0.0
    %v5363 = vmax.f32 %v5147, 0.0
    %v5364 = vmax.f32 %v5148, 0.0
    %v5365 = vmax.f32 %v5149, 0.0
    %v5366 = vmax.f32 %v5150, 0.0
    %v5367 = vmax.f32 %v5151, 0.0
    %v5368 = vmax.f32 %v5152, 0.0
    %v5369 = vmax.f32 %v5153, 0.0
    %v5370 = vmax.f32 %v5154, 0.0
    %v5371 = vmax.f32 %v5155, 0.0
    %v5372 = vmax.f32 %v5156, 0.0
    %v5373 = vmax.f32 %v5157, 0.0
    %v5374 = vmax.f32 %v5158, 0.0
    %v5375 = vmax.f32 %v5159, 0.0
    %v5376 = vmax.f32 %v5160, 0.0
    %v5377 = vmax.f32 %v5161, 0.0
    %v5378 = vmax.f32 %v5162, 0.0
    %v5379 = vmax.f32 %v5163, 0.0
    %v5380 = vmax.f32 %v5164, 0.0
    %v5381 = vmax.f32 %v5165, 0.0
    %v5382 = vmax.f32 %v5166, 0.0
    %v5383 = vmax.f32 %v5167, 0.0
    %v5384 = vmax.f32 %v5168, 0.0
    %v5385 = vmax.f32 %v5169, 0.0
    %v5386 = vmax.f32 %v5170, 0.0
    %v5387 = vmax.f32 %v5171, 0.0
    %v5388 = vmax.f32 %v5172, 0.0
    %v5389 = vmax.f32 %v5173, 0.0
    %v5390 = vmax.f32 %v5174, 0.0
    %v5391 = vmax.f32 %v5175, 0.0
    %v5392 = vmax.f32 %v5176, 0.0
    %v5393 = vmax.f32 %v5177, 0.0
    %v5394 = vmax.f32 %v5178, 0.0
    %v5395 = vmax.f32 %v5179, 0.0
    %v5396 = vmax.f32 %v5180, 0.0
    %v5397 = vmax.f32 %v5181, 0.0
    %v5398 = vmax.f32 %v5182, 0.0
    %v5399 = vmax.f32 %v5183, 0.0
    %v5400 = vmax.f32 %v5184, 0.0
    %v5401 = vmax.f32 %v5185, 0.0
    %v5402 = vmax.f32 %v5186, 0.0
    %v5403 = vmax.f32 %v5187, 0.0
    %v5404 = vmax.f32 %v5188, 0.0
    %v5405 = vmax.f32 %v5189, 0.0
    %v5406 = vmax.f32 %v5190, 0.0
    %v5407 = vmax.f32 %v5191, 0.0
    %v5408 = vmax.f32 %v5192, 0.0
    %v5409 = vmax.f32 %v5193, 0.0
    %v5410 = vmax.f32 %v5194, 0.0
    %v5411 = vmax.f32 %v5195, 0.0
    %v5412 = vmax.f32 %v5196, 0.0
    %v5413 = vmax.f32 %v5197, 0.0
    %v5414 = vmax.f32 %v5198, 0.0
    %v5415 = vmax.f32 %v5199, 0.0
    %v5416 = vmax.f32 %v5200, 0.0
    %v5417 = vmax.f32 %v5201, 0.0
    %v5418 = vmax.f32 %v5202, 0.0
    %v5419 = vmax.f32 %v5203, 0.0
    %v5420 = vmax.f32 %v5204, 0.0
    %v5421 = vmax.f32 %v5205, 0.0
    %v5422 = vmax.f32 %v5206, 0.0
    %v5423 = vmax.f32 %v5207, 0.0
    %v5424 = vmax.f32 %v5208, 0.0
    %v5425 = vmax.f32 %v5209, 0.0
    %v5426 = vmax.f32 %v5210, 0.0
    %v5427 = vmax.f32 %v5211, 0.0
    %v5428 = vmax.f32 %v5212, 0.0
    %v5429 = vmax.f32 %v5213, 0.0
    %v5430 = vpack.c.bf16 %v5216, %v5214
    %v5431 = vpack.c.bf16 %v5217, %v5215
    %v5432 = vpack.c.bf16 %v5220, %v5218
    %v5433 = vpack.c.bf16 %v5221, %v5219
    %v5434 = vpack.c.bf16 %v5224, %v5222
    %v5435 = vpack.c.bf16 %v5225, %v5223
    %v5436 = vpack.c.bf16 %v5228, %v5226
    %v5437 = vpack.c.bf16 %v5229, %v5227
    %v5438 = vpack.c.bf16 %v5232, %v5230
    %v5439 = vpack.c.bf16 %v5233, %v5231
    %v5440 = vpack.c.bf16 %v5236, %v5234
    %v5441 = vpack.c.bf16 %v5237, %v5235
    %v5442 = vpack.c.bf16 %v5240, %v5238
    %v5443 = vpack.c.bf16 %v5241, %v5239
    %v5444 = vpack.c.bf16 %v5244, %v5242
    %v5445 = vpack.c.bf16 %v5245, %v5243
    %v5446 = vpack.c.bf16 %v5248, %v5246
    %v5447 = vpack.c.bf16 %v5249, %v5247
    %v5448 = vpack.c.bf16 %v5252, %v5250
    %v5449 = vpack.c.bf16 %v5253, %v5251
    %v5450 = vpack.c.bf16 %v5256, %v5254
    %v5451 = vpack.c.bf16 %v5257, %v5255
    %v5452 = vpack.c.bf16 %v5260, %v5258
    %v5453 = vpack.c.bf16 %v5261, %v5259
    %v5454 = vpack.c.bf16 %v5264, %v5262
    %v5455 = vpack.c.bf16 %v5265, %v5263
    %v5456 = vpack.c.bf16 %v5268, %v5266
    %v5457 = vpack.c.bf16 %v5269, %v5267
    %v5458 = vpack.c.bf16 %v5272, %v5270
    %v5459 = vpack.c.bf16 %v5273, %v5271
    %v5460 = vpack.c.bf16 %v5276, %v5274
    %v5461 = vpack.c.bf16 %v5277, %v5275
    %v5462 = vpack.c.bf16 %v5280, %v5278
    %v5463 = vpack.c.bf16 %v5281, %v5279
    %v5464 = vpack.c.bf16 %v5284, %v5282
    %v5465 = vpack.c.bf16 %v5285, %v5283
    %v5466 = vpack.c.bf16 %v5288, %v5286
    %v5467 = vpack.c.bf16 %v5289, %v5287
    %v5468 = vpack.c.bf16 %v5292, %v5290
    %v5469 = vpack.c.bf16 %v5293, %v5291
    %v5470 = vpack.c.bf16 %v5296, %v5294
    %v5471 = vpack.c.bf16 %v5297, %v5295
    %v5472 = vpack.c.bf16 %v5300, %v5298
    %v5473 = vpack.c.bf16 %v5301, %v5299
    %v5474 = vpack.c.bf16 %v5304, %v5302
    %v5475 = vpack.c.bf16 %v5305, %v5303
    %v5476 = vpack.c.bf16 %v5308, %v5306
    %v5477 = vpack.c.bf16 %v5309, %v5307
    %v5478 = vpack.c.bf16 %v5312, %v5310
    %v5479 = vpack.c.bf16 %v5313, %v5311
    %v5480 = vpack.c.bf16 %v5316, %v5314
    %v5481 = vpack.c.bf16 %v5317, %v5315
    %v5482 = vpack.c.bf16 %v5320, %v5318
    %v5483 = vpack.c.bf16 %v5321, %v5319
    %v5484 = vpack.c.bf16 %v5324, %v5322
    %v5485 = vpack.c.bf16 %v5325, %v5323
    %v5486 = vpack.c.bf16 %v5328, %v5326
    %v5487 = vpack.c.bf16 %v5329, %v5327
    %v5488 = vpack.c.bf16 %v5332, %v5330
    %v5489 = vpack.c.bf16 %v5333, %v5331
    %v5490 = vpack.c.bf16 %v5336, %v5334
    %v5491 = vpack.c.bf16 %v5337, %v5335
    %v5492 = vpack.c.bf16 %v5340, %v5338
    %v5493 = vpack.c.bf16 %v5341, %v5339
    %v5494 = vpack.c.bf16 %v5344, %v5342
    %v5495 = vpack.c.bf16 %v5345, %v5343
    %v5496 = vpack.c.bf16 %v5348, %v5346
    %v5497 = vpack.c.bf16 %v5349, %v5347
    %v5498 = vpack.c.bf16 %v5352, %v5350
    %v5499 = vpack.c.bf16 %v5353, %v5351
    %v5500 = vpack.c.bf16 %v5356, %v5354
    %v5501 = vpack.c.bf16 %v5357, %v5355
    %v5502 = vpack.c.bf16 %v5360, %v5358
    %v5503 = vpack.c.bf16 %v5361, %v5359
    %v5504 = vpack.c.bf16 %v5364, %v5362
    %v5505 = vpack.c.bf16 %v5365, %v5363
    %v5506 = vpack.c.bf16 %v5368, %v5366
    %v5507 = vpack.c.bf16 %v5369, %v5367
    %v5508 = vpack.c.bf16 %v5372, %v5370
    %v5509 = vpack.c.bf16 %v5373, %v5371
    %v5510 = vpack.c.bf16 %v5376, %v5374
    %v5511 = vpack.c.bf16 %v5377, %v5375
    %v5512 = vpack.c.bf16 %v5380, %v5378
    %v5513 = vpack.c.bf16 %v5381, %v5379
    %v5514 = vpack.c.bf16 %v5384, %v5382
    %v5515 = vpack.c.bf16 %v5385, %v5383
    %v5516 = vpack.c.bf16 %v5388, %v5386
    %v5517 = vpack.c.bf16 %v5389, %v5387
    %v5518 = vpack.c.bf16 %v5392, %v5390
    %v5519 = vpack.c.bf16 %v5393, %v5391
    %v5520 = vpack.c.bf16 %v5396, %v5394
    %v5521 = vpack.c.bf16 %v5397, %v5395
    %v5522 = vpack.c.bf16 %v5400, %v5398
    %v5523 = vpack.c.bf16 %v5401, %v5399
    %v5524 = vpack.c.bf16 %v5404, %v5402
    %v5525 = vpack.c.bf16 %v5405, %v5403
    %v5526 = vpack.c.bf16 %v5408, %v5406
    %v5527 = vpack.c.bf16 %v5409, %v5407
    %v5528 = vpack.c.bf16 %v5412, %v5410
    %v5529 = vpack.c.bf16 %v5413, %v5411
    %v5530 = vpack.c.bf16 %v5416, %v5414
    %v5531 = vpack.c.bf16 %v5417, %v5415
    %v5532 = vpack.c.bf16 %v5420, %v5418
    %v5533 = vpack.c.bf16 %v5421, %v5419
    %v5534 = vpack.c.bf16 %v5424, %v5422
    %v5535 = vpack.c.bf16 %v5425, %v5423
    %v5536 = vpack.c.bf16 %v5428, %v5426
    %v5537 = vpack.c.bf16 %v5429, %v5427
    %v5538 = vld [vmem:[#allocation9] sm:$0xf]
    %v5539 = vld [vmem:[#allocation9 + $0x4] sm:$0xf]
    %v5540 = vld [vmem:[#allocation9 + $0x8] sm:$0xf]
    %v5541 = vld [vmem:[#allocation9 + $0xc] sm:$0xf]
    %v5542 = vld [vmem:[#allocation9 + $0x10] sm:$0xf]
    %v5543 = vld [vmem:[#allocation9 + $0x14] sm:$0xf]
    %v5544 = vld [vmem:[#allocation9 + $0x18] sm:$0xf]
    %v5545 = vld [vmem:[#allocation9 + $0x1c] sm:$0xf]
    %v5546 = vld [vmem:[#allocation9 + $0x20] sm:$0xf]
    %v5547 = vld [vmem:[#allocation9 + $0x24] sm:$0xf]
    %v5548 = vld [vmem:[#allocation9 + $0x28] sm:$0xf]
    %v5549 = vld [vmem:[#allocation9 + $0x2c] sm:$0xf]
    %v5550 = vld [vmem:[#allocation9 + $0x30] sm:$0xf]
    %v5551 = vld [vmem:[#allocation9 + $0x34] sm:$0xf]
    %v5552 = vld [vmem:[#allocation9 + $0x38] sm:$0xf]
    %v5553 = vld [vmem:[#allocation9 + $0x3c] sm:$0xf]
    %v5554 = vld [vmem:[#allocation9 + $0x40] sm:$0xf]
    %v5555 = vld [vmem:[#allocation9 + $0x44] sm:$0xf]
    %v5556 = vld [vmem:[#allocation9 + $0x48] sm:$0xf]
    %v5557 = vld [vmem:[#allocation9 + $0x4c] sm:$0xf]
    %v5558 = vld [vmem:[#allocation9 + $0x50] sm:$0xf]
    %v5559 = vld [vmem:[#allocation9 + $0x54] sm:$0xf]
    %v5560 = vld [vmem:[#allocation9 + $0x58] sm:$0xf]
    %v5561 = vld [vmem:[#allocation9 + $0x5c] sm:$0xf]
    %v5562 = vld [vmem:[#allocation11] sm:$0x1]
    %v5564 = vlaneseq
    %v5565 = vshrl.u32 %v5564, 7
    %v5566 = vsub.s32 0, %v5565
    %v5567 = vrot.slane %v5562, %v5566
    %v5593 = vunpack.c.l.b16 %v5538
    %v5594 = vunpack.c.l.b16 %v5539
    %v5595 = vunpack.c.l.b16 %v5540
    %v5596 = vunpack.c.l.b16 %v5541
    %v5597 = vunpack.c.l.b16 %v5542
    %v5598 = vunpack.c.l.b16 %v5543
    %v5599 = vunpack.c.l.b16 %v5544
    %v5600 = vunpack.c.l.b16 %v5545
    %v5601 = vunpack.c.l.b16 %v5546
    %v5602 = vunpack.c.l.b16 %v5547
    %v5603 = vunpack.c.l.b16 %v5548
    %v5604 = vunpack.c.l.b16 %v5549
    %v5605 = vunpack.c.l.b16 %v5550
    %v5606 = vunpack.c.l.b16 %v5551
    %v5607 = vunpack.c.l.b16 %v5552
    %v5608 = vunpack.c.l.b16 %v5553
    %v5609 = vunpack.c.l.b16 %v5554
    %v5610 = vunpack.c.l.b16 %v5555
    %v5611 = vunpack.c.l.b16 %v5556
    %v5612 = vunpack.c.l.b16 %v5557
    %v5613 = vunpack.c.l.b16 %v5558
    %v5614 = vunpack.c.l.b16 %v5559
    %v5615 = vunpack.c.l.b16 %v5560
    %v5616 = vunpack.c.l.b16 %v5561
    %v5617 = vpack.c.b16 %v5594, %v5593
    %v5618 = vpack.c.b16 %v5596, %v5595
    %v5619 = vpack.c.b16 %v5598, %v5597
    %v5620 = vpack.c.b16 %v5600, %v5599
    %v5621 = vpack.c.b16 %v5602, %v5601
    %v5622 = vpack.c.b16 %v5604, %v5603
    %v5623 = vpack.c.b16 %v5606, %v5605
    %v5624 = vpack.c.b16 %v5608, %v5607
    %v5625 = vpack.c.b16 %v5610, %v5609
    %v5626 = vpack.c.b16 %v5612, %v5611
    %v5627 = vpack.c.b16 %v5614, %v5613
    %v5628 = vpack.c.b16 %v5616, %v5615
    %v5642 = vsel %vm1242, %v5431, 0
    %v5645 = vsel %vm1242, %v5433, 0
    %v5648 = vsel %vm1242, %v5435, 0
    %v5651 = vsel %vm1242, %v5437, 0
    %v5654 = vsel %vm1242, %v5439, 0
    %v5657 = vsel %vm1242, %v5441, 0
    %v5660 = vsel %vm1242, %v5443, 0
    %v5663 = vsel %vm1242, %v5445, 0
    %v5666 = vsel %vm1242, %v5447, 0
    %v5669 = vsel %vm1242, %v5449, 0
    %v5672 = vsel %vm1242, %v5451, 0
    %v5675 = vsel %vm1242, %v5453, 0
    %v5678 = vsel %vm1242, %v5455, 0
    %v5681 = vsel %vm1242, %v5457, 0
    %v5684 = vsel %vm1242, %v5459, 0
    %v5687 = vsel %vm1242, %v5461, 0
    %v5690 = vsel %vm1242, %v5463, 0
    %v5693 = vsel %vm1242, %v5465, 0
    %v5696 = vsel %vm1242, %v5467, 0
    %v5699 = vsel %vm1242, %v5469, 0
    %v5702 = vsel %vm1242, %v5471, 0
    %v5705 = vsel %vm1242, %v5473, 0
    %v5708 = vsel %vm1242, %v5475, 0
    %v5711 = vsel %vm1242, %v5477, 0
    %v5714 = vsel %vm1242, %v5479, 0
    %v5717 = vsel %vm1242, %v5481, 0
    %v5720 = vsel %vm1242, %v5483, 0
    %v5723 = vsel %vm1242, %v5485, 0
    %v5726 = vsel %vm1242, %v5487, 0
    %v5729 = vsel %vm1242, %v5489, 0
    %v5732 = vsel %vm1242, %v5491, 0
    %v5735 = vsel %vm1242, %v5493, 0
    %v5738 = vsel %vm1242, %v5495, 0
    %v5741 = vsel %vm1242, %v5497, 0
    %v5744 = vsel %vm1242, %v5499, 0
    %v5747 = vsel %vm1242, %v5501, 0
    %v5750 = vsel %vm1242, %v5503, 0
    %v5753 = vsel %vm1242, %v5505, 0
    %v5756 = vsel %vm1242, %v5507, 0
    %v5759 = vsel %vm1242, %v5509, 0
    %v5762 = vsel %vm1242, %v5511, 0
    %v5765 = vsel %vm1242, %v5513, 0
    %v5768 = vsel %vm1242, %v5515, 0
    %v5771 = vsel %vm1242, %v5517, 0
    %v5774 = vsel %vm1242, %v5519, 0
    %v5777 = vsel %vm1242, %v5521, 0
    %v5780 = vsel %vm1242, %v5523, 0
    %v5783 = vsel %vm1242, %v5525, 0
    %v5786 = vsel %vm1242, %v5527, 0
    %v5789 = vsel %vm1242, %v5529, 0
    %v5792 = vsel %vm1242, %v5531, 0
    %v5795 = vsel %vm1242, %v5533, 0
    %v5798 = vsel %vm1242, %v5535, 0
    %v5801 = vsel %vm1242, %v5537, 0
    %5803 = vmatprep.subr.bf16.mxu0 0
    %5804 = vmatpush1.bf16.msra.mxu0 %v5617
    %5805 = vmatprep.subr.bf16.mxu0 0
    %5806 = vmatpush1.bf16.msra.mxu0 %v5618
    %5807 = vmatprep.subr.bf16.mxu0 0
    %5808 = vmatpush1.bf16.msra.mxu0 %v5619
    %5809 = vmatprep.subr.bf16.mxu0 0
    %5810 = vmatpush1.bf16.msra.mxu0 %v5620
    %5811 = vmatprep.subr.bf16.mxu0 0
    %5812 = vmatpush1.bf16.msra.mxu0 %v5621
    %5813 = vmatprep.subr.bf16.mxu0 0
    %5814 = vmatpush1.bf16.msra.mxu0 %v5622
    %5815 = vmatprep.subr.bf16.mxu0 0
    %5816 = vmatpush1.bf16.msra.mxu0 %v5623
    %5817 = vmatprep.subr.bf16.mxu0 0
    %5818 = vmatpush1.bf16.msra.mxu0 %v5624
    %5819 = vmatprep.subr.bf16.mxu0 0
    %5820 = vmatpush1.bf16.msra.mxu0 %v5625
    %5821 = vmatprep.subr.bf16.mxu0 0
    %5822 = vmatpush1.bf16.msra.mxu0 %v5626
    %5823 = vmatprep.subr.bf16.mxu0 0
    %5824 = vmatpush1.bf16.msra.mxu0 %v5627
    %5825 = vmatprep.subr.bf16.mxu0 0
    %5826 = vmatpush1.bf16.msra.mxu0 %v5628
    %5827 = vmatprep.subr.bf16.mxu0 0
    %5828 = vmatpush1.bf16.msra.mxu0 0
    %5829 = vmatprep.subr.bf16.mxu0 0
    %5830 = vmatpush1.bf16.msra.mxu0 0
    %5831 = vmatprep.subr.bf16.mxu0 0
    %5832 = vmatpush1.bf16.msra.mxu0 0
    %5833 = vmatprep.subr.bf16.mxu0 0
    %5834 = vmatpush1.bf16.msra.mxu0 0
    %5835 = vmatprep.mubr.bf16.mxu0 %v5642
    %5836 = vmatmul.mubr.bf16.gmra.mrb[0].mxu0 %v5430
    %v5837 = vpop.f32.mrb[0].mxu0
    %v5838 = vadd.f32 %v5567, %v5837
    %v5839 = vpop.f32.mrb[0].mxu0
    %v5840 = vpop.f32.mrb[0].mxu0
    %v5841 = vadd.f32 %v5567, %v5840
    %v5842 = vpop.f32.mrb[0].mxu0
    %5843 = vmatprep.mubr.bf16.mxu0 %v5645
    %5844 = vmatmul.mubr.bf16.gmra.mrb[0].mxu0 %v5432
    %v5845 = vpop.f32.mrb[0].mxu0
    %v5846 = vadd.f32 %v5567, %v5845
    %v5847 = vpop.f32.mrb[0].mxu0
    %v5848 = vpop.f32.mrb[0].mxu0
    %v5849 = vadd.f32 %v5567, %v5848
    %v5850 = vpop.f32.mrb[0].mxu0
    %5851 = vmatprep.mubr.bf16.mxu0 %v5648
    %5852 = vmatmul.mubr.bf16.gmra.mrb[0].mxu0 %v5434
    %v5853 = vpop.f32.mrb[0].mxu0
    %v5854 = vadd.f32 %v5567, %v5853
    %v5855 = vpop.f32.mrb[0].mxu0
    %v5856 = vpop.f32.mrb[0].mxu0
    %v5857 = vadd.f32 %v5567, %v5856
    %v5858 = vpop.f32.mrb[0].mxu0
    %5859 = vmatprep.mubr.bf16.mxu0 %v5651
    %5860 = vmatmul.mubr.bf16.gmra.mrb[0].mxu0 %v5436
    %v5861 = vpop.f32.mrb[0].mxu0
    %v5862 = vadd.f32 %v5567, %v5861
    %v5863 = vpop.f32.mrb[0].mxu0
    %v5864 = vpop.f32.mrb[0].mxu0
    %v5865 = vadd.f32 %v5567, %v5864
    %v5866 = vpop.f32.mrb[0].mxu0
    %5867 = vmatprep.mubr.bf16.mxu0 %v5654
    %5868 = vmatmul.mubr.bf16.gmra.mrb[0].mxu0 %v5438
    %v5869 = vpop.f32.mrb[0].mxu0
    %v5870 = vadd.f32 %v5567, %v5869
    %v5871 = vpop.f32.mrb[0].mxu0
    %v5872 = vpop.f32.mrb[0].mxu0
    %v5873 = vadd.f32 %v5567, %v5872
    %v5874 = vpop.f32.mrb[0].mxu0
    %5875 = vmatprep.mubr.bf16.mxu0 %v5657
    %5876 = vmatmul.mubr.bf16.gmra.mrb[0].mxu0 %v5440
    %v5877 = vpop.f32.mrb[0].mxu0
    %v5878 = vadd.f32 %v5567, %v5877
    %v5879 = vpop.f32.mrb[0].mxu0
    %v5880 = vpop.f32.mrb[0].mxu0
    %v5881 = vadd.f32 %v5567, %v5880
    %v5882 = vpop.f32.mrb[0].mxu0
    %5883 = vmatprep.mubr.bf16.mxu0 %v5660
    %5884 = vmatmul.mubr.bf16.gmra.mrb[0].mxu0 %v5442
    %v5885 = vpop.f32.mrb[0].mxu0
    %v5886 = vadd.f32 %v5567, %v5885
    %v5887 = vpop.f32.mrb[0].mxu0
    %v5888 = vpop.f32.mrb[0].mxu0
    %v5889 = vadd.f32 %v5567, %v5888
    %v5890 = vpop.f32.mrb[0].mxu0
    %5891 = vmatprep.mubr.bf16.mxu0 %v5663
    %5892 = vmatmul.mubr.bf16.gmra.mrb[0].mxu0 %v5444
    %v5893 = vpop.f32.mrb[0].mxu0
    %v5894 = vadd.f32 %v5567, %v5893
    %v5895 = vpop.f32.mrb[0].mxu0
    %v5896 = vpop.f32.mrb[0].mxu0
    %v5897 = vadd.f32 %v5567, %v5896
    %v5898 = vpop.f32.mrb[0].mxu0
    %5899 = vmatprep.mubr.bf16.mxu0 %v5666
    %5900 = vmatmul.mubr.bf16.gmra.mrb[0].mxu0 %v5446
    %v5901 = vpop.f32.mrb[0].mxu0
    %v5902 = vadd.f32 %v5567, %v5901
    %v5903 = vpop.f32.mrb[0].mxu0
    %v5904 = vpop.f32.mrb[0].mxu0
    %v5905 = vadd.f32 %v5567, %v5904
    %v5906 = vpop.f32.mrb[0].mxu0
    %5907 = vmatprep.mubr.bf16.mxu0 %v5669
    %5908 = vmatmul.mubr.bf16.gmra.mrb[0].mxu0 %v5448
    %v5909 = vpop.f32.mrb[0].mxu0
    %v5910 = vadd.f32 %v5567, %v5909
    %v5911 = vpop.f32.mrb[0].mxu0
    %v5912 = vpop.f32.mrb[0].mxu0
    %v5913 = vadd.f32 %v5567, %v5912
    %v5914 = vpop.f32.mrb[0].mxu0
    %5915 = vmatprep.mubr.bf16.mxu0 %v5672
    %5916 = vmatmul.mubr.bf16.gmra.mrb[0].mxu0 %v5450
    %v5917 = vpop.f32.mrb[0].mxu0
    %v5918 = vadd.f32 %v5567, %v5917
    %v5919 = vpop.f32.mrb[0].mxu0
    %v5920 = vpop.f32.mrb[0].mxu0
    %v5921 = vadd.f32 %v5567, %v5920
    %v5922 = vpop.f32.mrb[0].mxu0
    %5923 = vmatprep.mubr.bf16.mxu0 %v5675
    %5924 = vmatmul.mubr.bf16.gmra.mrb[0].mxu0 %v5452
    %v5925 = vpop.f32.mrb[0].mxu0
    %v5926 = vadd.f32 %v5567, %v5925
    %v5927 = vpop.f32.mrb[0].mxu0
    %v5928 = vpop.f32.mrb[0].mxu0
    %v5929 = vadd.f32 %v5567, %v5928
    %v5930 = vpop.f32.mrb[0].mxu0
    %5931 = vmatprep.mubr.bf16.mxu0 %v5678
    %5932 = vmatmul.mubr.bf16.gmra.mrb[0].mxu0 %v5454
    %v5933 = vpop.f32.mrb[0].mxu0
    %v5934 = vadd.f32 %v5567, %v5933
    %v5935 = vpop.f32.mrb[0].mxu0
    %v5936 = vpop.f32.mrb[0].mxu0
    %v5937 = vadd.f32 %v5567, %v5936
    %v5938 = vpop.f32.mrb[0].mxu0
    %5939 = vmatprep.mubr.bf16.mxu0 %v5681
    %5940 = vmatmul.mubr.bf16.gmra.mrb[0].mxu0 %v5456
    %v5941 = vpop.f32.mrb[0].mxu0
    %v5942 = vadd.f32 %v5567, %v5941
    %v5943 = vpop.f32.mrb[0].mxu0
    %v5944 = vpop.f32.mrb[0].mxu0
    %v5945 = vadd.f32 %v5567, %v5944
    %v5946 = vpop.f32.mrb[0].mxu0
    %5947 = vmatprep.mubr.bf16.mxu0 %v5684
    %5948 = vmatmul.mubr.bf16.gmra.mrb[0].mxu0 %v5458
    %v5949 = vpop.f32.mrb[0].mxu0
    %v5950 = vadd.f32 %v5567, %v5949
    %v5951 = vpop.f32.mrb[0].mxu0
    %v5952 = vpop.f32.mrb[0].mxu0
    %v5953 = vadd.f32 %v5567, %v5952
    %v5954 = vpop.f32.mrb[0].mxu0
    %5955 = vmatprep.mubr.bf16.mxu0 %v5687
    %5956 = vmatmul.mubr.bf16.gmra.mrb[0].mxu0 %v5460
    %v5957 = vpop.f32.mrb[0].mxu0
    %v5958 = vadd.f32 %v5567, %v5957
    %v5959 = vpop.f32.mrb[0].mxu0
    %v5960 = vpop.f32.mrb[0].mxu0
    %v5961 = vadd.f32 %v5567, %v5960
    %v5962 = vpop.f32.mrb[0].mxu0
    %5963 = vmatprep.mubr.bf16.mxu0 %v5690
    %5964 = vmatmul.mubr.bf16.gmra.mrb[0].mxu0 %v5462
    %v5965 = vpop.f32.mrb[0].mxu0
    %v5966 = vadd.f32 %v5567, %v5965
    %v5967 = vpop.f32.mrb[0].mxu0
    %v5968 = vpop.f32.mrb[0].mxu0
    %v5969 = vadd.f32 %v5567, %v5968
    %v5970 = vpop.f32.mrb[0].mxu0
    %5971 = vmatprep.mubr.bf16.mxu0 %v5693
    %5972 = vmatmul.mubr.bf16.gmra.mrb[0].mxu0 %v5464
    %v5973 = vpop.f32.mrb[0].mxu0
    %v5974 = vadd.f32 %v5567, %v5973
    %v5975 = vpop.f32.mrb[0].mxu0
    %v5976 = vpop.f32.mrb[0].mxu0
    %v5977 = vadd.f32 %v5567, %v5976
    %v5978 = vpop.f32.mrb[0].mxu0
    %5979 = vmatprep.mubr.bf16.mxu0 %v5696
    %5980 = vmatmul.mubr.bf16.gmra.mrb[0].mxu0 %v5466
    %v5981 = vpop.f32.mrb[0].mxu0
    %v5982 = vadd.f32 %v5567, %v5981
    %v5983 = vpop.f32.mrb[0].mxu0
    %v5984 = vpop.f32.mrb[0].mxu0
    %v5985 = vadd.f32 %v5567, %v5984
    %v5986 = vpop.f32.mrb[0].mxu0
    %5987 = vmatprep.mubr.bf16.mxu0 %v5699
    %5988 = vmatmul.mubr.bf16.gmra.mrb[0].mxu0 %v5468
    %v5989 = vpop.f32.mrb[0].mxu0
    %v5990 = vadd.f32 %v5567, %v5989
    %v5991 = vpop.f32.mrb[0].mxu0
    %v5992 = vpop.f32.mrb[0].mxu0
    %v5993 = vadd.f32 %v5567, %v5992
    %v5994 = vpop.f32.mrb[0].mxu0
    %5995 = vmatprep.mubr.bf16.mxu0 %v5702
    %5996 = vmatmul.mubr.bf16.gmra.mrb[0].mxu0 %v5470
    %v5997 = vpop.f32.mrb[0].mxu0
    %v5998 = vadd.f32 %v5567, %v5997
    %v5999 = vpop.f32.mrb[0].mxu0
    %v6000 = vpop.f32.mrb[0].mxu0
    %v6001 = vadd.f32 %v5567, %v6000
    %v6002 = vpop.f32.mrb[0].mxu0
    %6003 = vmatprep.mubr.bf16.mxu0 %v5705
    %6004 = vmatmul.mubr.bf16.gmra.mrb[0].mxu0 %v5472
    %v6005 = vpop.f32.mrb[0].mxu0
    %v6006 = vadd.f32 %v5567, %v6005
    %v6007 = vpop.f32.mrb[0].mxu0
    %v6008 = vpop.f32.mrb[0].mxu0
    %v6009 = vadd.f32 %v5567, %v6008
    %v6010 = vpop.f32.mrb[0].mxu0
    %6011 = vmatprep.mubr.bf16.mxu0 %v5708
    %6012 = vmatmul.mubr.bf16.gmra.mrb[0].mxu0 %v5474
    %v6013 = vpop.f32.mrb[0].mxu0
    %v6014 = vadd.f32 %v5567, %v6013
    %v6015 = vpop.f32.mrb[0].mxu0
    %v6016 = vpop.f32.mrb[0].mxu0
    %v6017 = vadd.f32 %v5567, %v6016
    %v6018 = vpop.f32.mrb[0].mxu0
    %6019 = vmatprep.mubr.bf16.mxu0 %v5711
    %6020 = vmatmul.mubr.bf16.gmra.mrb[0].mxu0 %v5476
    %v6021 = vpop.f32.mrb[0].mxu0
    %v6022 = vadd.f32 %v5567, %v6021
    %v6023 = vpop.f32.mrb[0].mxu0
    %v6024 = vpop.f32.mrb[0].mxu0
    %v6025 = vadd.f32 %v5567, %v6024
    %v6026 = vpop.f32.mrb[0].mxu0
    %6027 = vmatprep.mubr.bf16.mxu0 %v5714
    %6028 = vmatmul.mubr.bf16.gmra.mrb[0].mxu0 %v5478
    %v6029 = vpop.f32.mrb[0].mxu0
    %v6030 = vadd.f32 %v5567, %v6029
    %v6031 = vpop.f32.mrb[0].mxu0
    %v6032 = vpop.f32.mrb[0].mxu0
    %v6033 = vadd.f32 %v5567, %v6032
    %v6034 = vpop.f32.mrb[0].mxu0
    %6035 = vmatprep.mubr.bf16.mxu0 %v5717
    %6036 = vmatmul.mubr.bf16.gmra.mrb[0].mxu0 %v5480
    %v6037 = vpop.f32.mrb[0].mxu0
    %v6038 = vadd.f32 %v5567, %v6037
    %v6039 = vpop.f32.mrb[0].mxu0
    %v6040 = vpop.f32.mrb[0].mxu0
    %v6041 = vadd.f32 %v5567, %v6040
    %v6042 = vpop.f32.mrb[0].mxu0
    %6043 = vmatprep.mubr.bf16.mxu0 %v5720
    %6044 = vmatmul.mubr.bf16.gmra.mrb[0].mxu0 %v5482
    %v6045 = vpop.f32.mrb[0].mxu0
    %v6046 = vadd.f32 %v5567, %v6045
    %v6047 = vpop.f32.mrb[0].mxu0
    %v6048 = vpop.f32.mrb[0].mxu0
    %v6049 = vadd.f32 %v5567, %v6048
    %v6050 = vpop.f32.mrb[0].mxu0
    %6051 = vmatprep.mubr.bf16.mxu0 %v5723
    %6052 = vmatmul.mubr.bf16.gmra.mrb[0].mxu0 %v5484
    %v6053 = vpop.f32.mrb[0].mxu0
    %v6054 = vadd.f32 %v5567, %v6053
    %v6055 = vpop.f32.mrb[0].mxu0
    %v6056 = vpop.f32.mrb[0].mxu0
    %v6057 = vadd.f32 %v5567, %v6056
    %v6058 = vpop.f32.mrb[0].mxu0
    %6059 = vmatprep.mubr.bf16.mxu0 %v5726
    %6060 = vmatmul.mubr.bf16.gmra.mrb[0].mxu0 %v5486
    %v6061 = vpop.f32.mrb[0].mxu0
    %v6062 = vadd.f32 %v5567, %v6061
    %v6063 = vpop.f32.mrb[0].mxu0
    %v6064 = vpop.f32.mrb[0].mxu0
    %v6065 = vadd.f32 %v5567, %v6064
    %v6066 = vpop.f32.mrb[0].mxu0
    %6067 = vmatprep.mubr.bf16.mxu0 %v5729
    %6068 = vmatmul.mubr.bf16.gmra.mrb[0].mxu0 %v5488
    %v6069 = vpop.f32.mrb[0].mxu0
    %v6070 = vadd.f32 %v5567, %v6069
    %v6071 = vpop.f32.mrb[0].mxu0
    %v6072 = vpop.f32.mrb[0].mxu0
    %v6073 = vadd.f32 %v5567, %v6072
    %v6074 = vpop.f32.mrb[0].mxu0
    %6075 = vmatprep.mubr.bf16.mxu0 %v5732
    %6076 = vmatmul.mubr.bf16.gmra.mrb[0].mxu0 %v5490
    %v6077 = vpop.f32.mrb[0].mxu0
    %v6078 = vadd.f32 %v5567, %v6077
    %v6079 = vpop.f32.mrb[0].mxu0
    %v6080 = vpop.f32.mrb[0].mxu0
    %v6081 = vadd.f32 %v5567, %v6080
    %v6082 = vpop.f32.mrb[0].mxu0
    %6083 = vmatprep.mubr.bf16.mxu0 %v5735
    %6084 = vmatmul.mubr.bf16.gmra.mrb[0].mxu0 %v5492
    %v6085 = vpop.f32.mrb[0].mxu0
    %v6086 = vadd.f32 %v5567, %v6085
    %v6087 = vpop.f32.mrb[0].mxu0
    %v6088 = vpop.f32.mrb[0].mxu0
    %v6089 = vadd.f32 %v5567, %v6088
    %v6090 = vpop.f32.mrb[0].mxu0
    %6091 = vmatprep.mubr.bf16.mxu0 %v5738
    %6092 = vmatmul.mubr.bf16.gmra.mrb[0].mxu0 %v5494
    %v6093 = vpop.f32.mrb[0].mxu0
    %v6094 = vadd.f32 %v5567, %v6093
    %v6095 = vpop.f32.mrb[0].mxu0
    %v6096 = vpop.f32.mrb[0].mxu0
    %v6097 = vadd.f32 %v5567, %v6096
    %v6098 = vpop.f32.mrb[0].mxu0
    %6099 = vmatprep.mubr.bf16.mxu0 %v5741
    %6100 = vmatmul.mubr.bf16.gmra.mrb[0].mxu0 %v5496
    %v6101 = vpop.f32.mrb[0].mxu0
    %v6102 = vadd.f32 %v5567, %v6101
    %v6103 = vpop.f32.mrb[0].mxu0
    %v6104 = vpop.f32.mrb[0].mxu0
    %v6105 = vadd.f32 %v5567, %v6104
    %v6106 = vpop.f32.mrb[0].mxu0
    %6107 = vmatprep.mubr.bf16.mxu0 %v5744
    %6108 = vmatmul.mubr.bf16.gmra.mrb[0].mxu0 %v5498
    %v6109 = vpop.f32.mrb[0].mxu0
    %v6110 = vadd.f32 %v5567, %v6109
    %v6111 = vpop.f32.mrb[0].mxu0
    %v6112 = vpop.f32.mrb[0].mxu0
    %v6113 = vadd.f32 %v5567, %v6112
    %v6114 = vpop.f32.mrb[0].mxu0
    %6115 = vmatprep.mubr.bf16.mxu0 %v5747
    %6116 = vmatmul.mubr.bf16.gmra.mrb[0].mxu0 %v5500
    %v6117 = vpop.f32.mrb[0].mxu0
    %v6118 = vadd.f32 %v5567, %v6117
    %v6119 = vpop.f32.mrb[0].mxu0
    %v6120 = vpop.f32.mrb[0].mxu0
    %v6121 = vadd.f32 %v5567, %v6120
    %v6122 = vpop.f32.mrb[0].mxu0
    %6123 = vmatprep.mubr.bf16.mxu0 %v5750
    %6124 = vmatmul.mubr.bf16.gmra.mrb[0].mxu0 %v5502
    %v6125 = vpop.f32.mrb[0].mxu0
    %v6126 = vadd.f32 %v5567, %v6125
    %v6127 = vpop.f32.mrb[0].mxu0
    %v6128 = vpop.f32.mrb[0].mxu0
    %v6129 = vadd.f32 %v5567, %v6128
    %v6130 = vpop.f32.mrb[0].mxu0
    %6131 = vmatprep.mubr.bf16.mxu0 %v5753
    %6132 = vmatmul.mubr.bf16.gmra.mrb[0].mxu0 %v5504
    %v6133 = vpop.f32.mrb[0].mxu0
    %v6134 = vadd.f32 %v5567, %v6133
    %v6135 = vpop.f32.mrb[0].mxu0
    %v6136 = vpop.f32.mrb[0].mxu0
    %v6137 = vadd.f32 %v5567, %v6136
    %v6138 = vpop.f32.mrb[0].mxu0
    %6139 = vmatprep.mubr.bf16.mxu0 %v5756
    %6140 = vmatmul.mubr.bf16.gmra.mrb[0].mxu0 %v5506
    %v6141 = vpop.f32.mrb[0].mxu0
    %v6142 = vadd.f32 %v5567, %v6141
    %v6143 = vpop.f32.mrb[0].mxu0
    %v6144 = vpop.f32.mrb[0].mxu0
    %v6145 = vadd.f32 %v5567, %v6144
    %v6146 = vpop.f32.mrb[0].mxu0
    %6147 = vmatprep.mubr.bf16.mxu0 %v5759
    %6148 = vmatmul.mubr.bf16.gmra.mrb[0].mxu0 %v5508
    %v6149 = vpop.f32.mrb[0].mxu0
    %v6150 = vadd.f32 %v5567, %v6149
    %v6151 = vpop.f32.mrb[0].mxu0
    %v6152 = vpop.f32.mrb[0].mxu0
    %v6153 = vadd.f32 %v5567, %v6152
    %v6154 = vpop.f32.mrb[0].mxu0
    %6155 = vmatprep.mubr.bf16.mxu0 %v5762
    %6156 = vmatmul.mubr.bf16.gmra.mrb[0].mxu0 %v5510
    %v6157 = vpop.f32.mrb[0].mxu0
    %v6158 = vadd.f32 %v5567, %v6157
    %v6159 = vpop.f32.mrb[0].mxu0
    %v6160 = vpop.f32.mrb[0].mxu0
    %v6161 = vadd.f32 %v5567, %v6160
    %v6162 = vpop.f32.mrb[0].mxu0
    %6163 = vmatprep.mubr.bf16.mxu0 %v5765
    %6164 = vmatmul.mubr.bf16.gmra.mrb[0].mxu0 %v5512
    %v6165 = vpop.f32.mrb[0].mxu0
    %v6166 = vadd.f32 %v5567, %v6165
    %v6167 = vpop.f32.mrb[0].mxu0
    %v6168 = vpop.f32.mrb[0].mxu0
    %v6169 = vadd.f32 %v5567, %v6168
    %v6170 = vpop.f32.mrb[0].mxu0
    %6171 = vmatprep.mubr.bf16.mxu0 %v5768
    %6172 = vmatmul.mubr.bf16.gmra.mrb[0].mxu0 %v5514
    %v6173 = vpop.f32.mrb[0].mxu0
    %v6174 = vadd.f32 %v5567, %v6173
    %v6175 = vpop.f32.mrb[0].mxu0
    %v6176 = vpop.f32.mrb[0].mxu0
    %v6177 = vadd.f32 %v5567, %v6176
    %v6178 = vpop.f32.mrb[0].mxu0
    %6179 = vmatprep.mubr.bf16.mxu0 %v5771
    %6180 = vmatmul.mubr.bf16.gmra.mrb[0].mxu0 %v5516
    %v6181 = vpop.f32.mrb[0].mxu0
    %v6182 = vadd.f32 %v5567, %v6181
    %v6183 = vpop.f32.mrb[0].mxu0
    %v6184 = vpop.f32.mrb[0].mxu0
    %v6185 = vadd.f32 %v5567, %v6184
    %v6186 = vpop.f32.mrb[0].mxu0
    %6187 = vmatprep.mubr.bf16.mxu0 %v5774
    %6188 = vmatmul.mubr.bf16.gmra.mrb[0].mxu0 %v5518
    %v6189 = vpop.f32.mrb[0].mxu0
    %v6190 = vadd.f32 %v5567, %v6189
    %v6191 = vpop.f32.mrb[0].mxu0
    %v6192 = vpop.f32.mrb[0].mxu0
    %v6193 = vadd.f32 %v5567, %v6192
    %v6194 = vpop.f32.mrb[0].mxu0
    %6195 = vmatprep.mubr.bf16.mxu0 %v5777
    %6196 = vmatmul.mubr.bf16.gmra.mrb[0].mxu0 %v5520
    %v6197 = vpop.f32.mrb[0].mxu0
    %v6198 = vadd.f32 %v5567, %v6197
    %v6199 = vpop.f32.mrb[0].mxu0
    %v6200 = vpop.f32.mrb[0].mxu0
    %v6201 = vadd.f32 %v5567, %v6200
    %v6202 = vpop.f32.mrb[0].mxu0
    %6203 = vmatprep.mubr.bf16.mxu0 %v5780
    %6204 = vmatmul.mubr.bf16.gmra.mrb[0].mxu0 %v5522
    %v6205 = vpop.f32.mrb[0].mxu0
    %v6206 = vadd.f32 %v5567, %v6205
    %v6207 = vpop.f32.mrb[0].mxu0
    %v6208 = vpop.f32.mrb[0].mxu0
    %v6209 = vadd.f32 %v5567, %v6208
    %v6210 = vpop.f32.mrb[0].mxu0
    %6211 = vmatprep.mubr.bf16.mxu0 %v5783
    %6212 = vmatmul.mubr.bf16.gmra.mrb[0].mxu0 %v5524
    %v6213 = vpop.f32.mrb[0].mxu0
    %v6214 = vadd.f32 %v5567, %v6213
    %v6215 = vpop.f32.mrb[0].mxu0
    %v6216 = vpop.f32.mrb[0].mxu0
    %v6217 = vadd.f32 %v5567, %v6216
    %v6218 = vpop.f32.mrb[0].mxu0
    %6219 = vmatprep.mubr.bf16.mxu0 %v5786
    %6220 = vmatmul.mubr.bf16.gmra.mrb[0].mxu0 %v5526
    %v6221 = vpop.f32.mrb[0].mxu0
    %v6222 = vadd.f32 %v5567, %v6221
    %v6223 = vpop.f32.mrb[0].mxu0
    %v6224 = vpop.f32.mrb[0].mxu0
    %v6225 = vadd.f32 %v5567, %v6224
    %v6226 = vpop.f32.mrb[0].mxu0
    %6227 = vmatprep.mubr.bf16.mxu0 %v5789
    %6228 = vmatmul.mubr.bf16.gmra.mrb[0].mxu0 %v5528
    %v6229 = vpop.f32.mrb[0].mxu0
    %v6230 = vadd.f32 %v5567, %v6229
    %v6231 = vpop.f32.mrb[0].mxu0
    %v6232 = vpop.f32.mrb[0].mxu0
    %v6233 = vadd.f32 %v5567, %v6232
    %v6234 = vpop.f32.mrb[0].mxu0
    %6235 = vmatprep.mubr.bf16.mxu0 %v5792
    %6236 = vmatmul.mubr.bf16.gmra.mrb[0].mxu0 %v5530
    %v6237 = vpop.f32.mrb[0].mxu0
    %v6238 = vadd.f32 %v5567, %v6237
    %v6239 = vpop.f32.mrb[0].mxu0
    %v6240 = vpop.f32.mrb[0].mxu0
    %v6241 = vadd.f32 %v5567, %v6240
    %v6242 = vpop.f32.mrb[0].mxu0
    %6243 = vmatprep.mubr.bf16.mxu0 %v5795
    %6244 = vmatmul.mubr.bf16.gmra.mrb[0].mxu0 %v5532
    %v6245 = vpop.f32.mrb[0].mxu0
    %v6246 = vadd.f32 %v5567, %v6245
    %v6247 = vpop.f32.mrb[0].mxu0
    %v6248 = vpop.f32.mrb[0].mxu0
    %v6249 = vadd.f32 %v5567, %v6248
    %v6250 = vpop.f32.mrb[0].mxu0
    %6251 = vmatprep.mubr.bf16.mxu0 %v5798
    %6252 = vmatmul.mubr.bf16.gmra.mrb[0].mxu0 %v5534
    %v6253 = vpop.f32.mrb[0].mxu0
    %v6254 = vadd.f32 %v5567, %v6253
    %v6255 = vpop.f32.mrb[0].mxu0
    %v6256 = vpop.f32.mrb[0].mxu0
    %v6257 = vadd.f32 %v5567, %v6256
    %v6258 = vpop.f32.mrb[0].mxu0
    %6259 = vmatprep.mubr.bf16.mxu0 %v5801
    %6260 = vmatmul.mubr.bf16.gmra.mrb[0].mxu0 %v5536
    %v6261 = vpop.f32.mrb[0].mxu0
    %v6262 = vadd.f32 %v5567, %v6261
    %v6263 = vpop.f32.mrb[0].mxu0
    %v6264 = vpop.f32.mrb[0].mxu0
    %v6265 = vadd.f32 %v5567, %v6264
    %v6266 = vpop.f32.mrb[0].mxu0
    %6267 = vdwg.mxu0
    %6268 = vst [vmem:[#allocation12] sm:$0xff] %v5838
    %6269 = vst [vmem:[#allocation12 + $0x8] sm:$0xff] %v5841
    %6270 = vst [vmem:[#allocation12 + $0x10] sm:$0xff] %v5846
    %6271 = vst [vmem:[#allocation12 + $0x18] sm:$0xff] %v5849
    %6272 = vst [vmem:[#allocation12 + $0x20] sm:$0xff] %v5854
    %6273 = vst [vmem:[#allocation12 + $0x28] sm:$0xff] %v5857
    %6274 = vst [vmem:[#allocation12 + $0x30] sm:$0xff] %v5862
    %6275 = vst [vmem:[#allocation12 + $0x38] sm:$0xff] %v5865
    %6276 = vst [vmem:[#allocation12 + $0x40] sm:$0xff] %v5870
    %6277 = vst [vmem:[#allocation12 + $0x48] sm:$0xff] %v5873
    %6278 = vst [vmem:[#allocation12 + $0x50] sm:$0xff] %v5878
    %6279 = vst [vmem:[#allocation12 + $0x58] sm:$0xff] %v5881
    %6280 = vst [vmem:[#allocation12 + $0x60] sm:$0xff] %v5886
    %6281 = vst [vmem:[#allocation12 + $0x68] sm:$0xff] %v5889
    %6282 = vst [vmem:[#allocation12 + $0x70] sm:$0xff] %v5894
    %6283 = vst [vmem:[#allocation12 + $0x78] sm:$0xff] %v5897
    %6284 = vst [vmem:[#allocation12 + $0x80] sm:$0xff] %v5902
    %6285 = vst [vmem:[#allocation12 + $0x88] sm:$0xff] %v5905
    %6286 = vst [vmem:[#allocation12 + $0x90] sm:$0xff] %v5910
    %6287 = vst [vmem:[#allocation12 + $0x98] sm:$0xff] %v5913
    %6288 = vst [vmem:[#allocation12 + $0xa0] sm:$0xff] %v5918
    %6289 = vst [vmem:[#allocation12 + $0xa8] sm:$0xff] %v5921
    %6290 = vst [vmem:[#allocation12 + $0xb0] sm:$0xff] %v5926
    %6291 = vst [vmem:[#allocation12 + $0xb8] sm:$0xff] %v5929
    %6292 = vst [vmem:[#allocation12 + $0xc0] sm:$0xff] %v5934
    %6293 = vst [vmem:[#allocation12 + $0xc8] sm:$0xff] %v5937
    %6294 = vst [vmem:[#allocation12 + $0xd0] sm:$0xff] %v5942
    %6295 = vst [vmem:[#allocation12 + $0xd8] sm:$0xff] %v5945
    %6296 = vst [vmem:[#allocation12 + $0xe0] sm:$0xff] %v5950
    %6297 = vst [vmem:[#allocation12 + $0xe8] sm:$0xff] %v5953
    %6298 = vst [vmem:[#allocation12 + $0xf0] sm:$0xff] %v5958
    %6299 = vst [vmem:[#allocation12 + $0xf8] sm:$0xff] %v5961
    %6300 = vst [vmem:[#allocation12 + $0x100] sm:$0xff] %v5966
    %6301 = vst [vmem:[#allocation12 + $0x108] sm:$0xff] %v5969
    %6302 = vst [vmem:[#allocation12 + $0x110] sm:$0xff] %v5974
    %6303 = vst [vmem:[#allocation12 + $0x118] sm:$0xff] %v5977
    %6304 = vst [vmem:[#allocation12 + $0x120] sm:$0xff] %v5982
    %6305 = vst [vmem:[#allocation12 + $0x128] sm:$0xff] %v5985
    %6306 = vst [vmem:[#allocation12 + $0x130] sm:$0xff] %v5990
    %6307 = vst [vmem:[#allocation12 + $0x138] sm:$0xff] %v5993
    %6308 = vst [vmem:[#allocation12 + $0x140] sm:$0xff] %v5998
    %6309 = vst [vmem:[#allocation12 + $0x148] sm:$0xff] %v6001
    %6310 = vst [vmem:[#allocation12 + $0x150] sm:$0xff] %v6006
    %6311 = vst [vmem:[#allocation12 + $0x158] sm:$0xff] %v6009
    %6312 = vst [vmem:[#allocation12 + $0x160] sm:$0xff] %v6014
    %6313 = vst [vmem:[#allocation12 + $0x168] sm:$0xff] %v6017
    %6314 = vst [vmem:[#allocation12 + $0x170] sm:$0xff] %v6022
    %6315 = vst [vmem:[#allocation12 + $0x178] sm:$0xff] %v6025
    %6316 = vst [vmem:[#allocation12 + $0x180] sm:$0xff] %v6030
    %6317 = vst [vmem:[#allocation12 + $0x188] sm:$0xff] %v6033
    %6318 = vst [vmem:[#allocation12 + $0x190] sm:$0xff] %v6038
    %6319 = vst [vmem:[#allocation12 + $0x198] sm:$0xff] %v6041
    %6320 = vst [vmem:[#allocation12 + $0x1a0] sm:$0xff] %v6046
    %6321 = vst [vmem:[#allocation12 + $0x1a8] sm:$0xff] %v6049
    %6322 = vst [vmem:[#allocation12 + $0x1b0] sm:$0xff] %v6054
    %6323 = vst [vmem:[#allocation12 + $0x1b8] sm:$0xff] %v6057
    %6324 = vst [vmem:[#allocation12 + $0x1c0] sm:$0xff] %v6062
    %6325 = vst [vmem:[#allocation12 + $0x1c8] sm:$0xff] %v6065
    %6326 = vst [vmem:[#allocation12 + $0x1d0] sm:$0xff] %v6070
    %6327 = vst [vmem:[#allocation12 + $0x1d8] sm:$0xff] %v6073
    %6328 = vst [vmem:[#allocation12 + $0x1e0] sm:$0xff] %v6078
    %6329 = vst [vmem:[#allocation12 + $0x1e8] sm:$0xff] %v6081
    %6330 = vst [vmem:[#allocation12 + $0x1f0] sm:$0xff] %v6086
    %6331 = vst [vmem:[#allocation12 + $0x1f8] sm:$0xff] %v6089
    %6332 = vst [vmem:[#allocation12 + $0x200] sm:$0xff] %v6094
    %6333 = vst [vmem:[#allocation12 + $0x208] sm:$0xff] %v6097
    %6334 = vst [vmem:[#allocation12 + $0x210] sm:$0xff] %v6102
    %6335 = vst [vmem:[#allocation12 + $0x218] sm:$0xff] %v6105
    %6336 = vst [vmem:[#allocation12 + $0x220] sm:$0xff] %v6110
    %6337 = vst [vmem:[#allocation12 + $0x228] sm:$0xff] %v6113
    %6338 = vst [vmem:[#allocation12 + $0x230] sm:$0xff] %v6118
    %6339 = vst [vmem:[#allocation12 + $0x238] sm:$0xff] %v6121
    %6340 = vst [vmem:[#allocation12 + $0x240] sm:$0xff] %v6126
    %6341 = vst [vmem:[#allocation12 + $0x248] sm:$0xff] %v6129
    %6342 = vst [vmem:[#allocation12 + $0x250] sm:$0xff] %v6134
    %6343 = vst [vmem:[#allocation12 + $0x258] sm:$0xff] %v6137
    %6344 = vst [vmem:[#allocation12 + $0x260] sm:$0xff] %v6142
    %6345 = vst [vmem:[#allocation12 + $0x268] sm:$0xff] %v6145
    %6346 = vst [vmem:[#allocation12 + $0x270] sm:$0xff] %v6150
    %6347 = vst [vmem:[#allocation12 + $0x278] sm:$0xff] %v6153
    %6348 = vst [vmem:[#allocation12 + $0x280] sm:$0xff] %v6158
    %6349 = vst [vmem:[#allocation12 + $0x288] sm:$0xff] %v6161
    %6350 = vst [vmem:[#allocation12 + $0x290] sm:$0xff] %v6166
    %6351 = vst [vmem:[#allocation12 + $0x298] sm:$0xff] %v6169
    %6352 = vst [vmem:[#allocation12 + $0x2a0] sm:$0xff] %v6174
    %6353 = vst [vmem:[#allocation12 + $0x2a8] sm:$0xff] %v6177
    %6354 = vst [vmem:[#allocation12 + $0x2b0] sm:$0xff] %v6182
    %6355 = vst [vmem:[#allocation12 + $0x2b8] sm:$0xff] %v6185
    %6356 = vst [vmem:[#allocation12 + $0x2c0] sm:$0xff] %v6190
    %6357 = vst [vmem:[#allocation12 + $0x2c8] sm:$0xff] %v6193
    %6358 = vst [vmem:[#allocation12 + $0x2d0] sm:$0xff] %v6198
    %6359 = vst [vmem:[#allocation12 + $0x2d8] sm:$0xff] %v6201
    %6360 = vst [vmem:[#allocation12 + $0x2e0] sm:$0xff] %v6206
    %6361 = vst [vmem:[#allocation12 + $0x2e8] sm:$0xff] %v6209
    %6362 = vst [vmem:[#allocation12 + $0x2f0] sm:$0xff] %v6214
    %6363 = vst [vmem:[#allocation12 + $0x2f8] sm:$0xff] %v6217
    %6364 = vst [vmem:[#allocation12 + $0x300] sm:$0xff] %v6222
    %6365 = vst [vmem:[#allocation12 + $0x308] sm:$0xff] %v6225
    %6366 = vst [vmem:[#allocation12 + $0x310] sm:$0xff] %v6230
    %6367 = vst [vmem:[#allocation12 + $0x318] sm:$0xff] %v6233
    %6368 = vst [vmem:[#allocation12 + $0x320] sm:$0xff] %v6238
    %6369 = vst [vmem:[#allocation12 + $0x328] sm:$0xff] %v6241
    %6370 = vst [vmem:[#allocation12 + $0x330] sm:$0xff] %v6246
    %6371 = vst [vmem:[#allocation12 + $0x338] sm:$0xff] %v6249
    %6372 = vst [vmem:[#allocation12 + $0x340] sm:$0xff] %v6254
    %6373 = vst [vmem:[#allocation12 + $0x348] sm:$0xff] %v6257
    %6374 = vst [vmem:[#allocation12 + $0x350] sm:$0xff] %v6262
    %6375 = vst [vmem:[#allocation12 + $0x358] sm:$0xff] %v6265
    // Predicated region
    $region42: #{ttf_head_forward.7} parent=1 // pred_check
      _
    $region43: #{ttf_head_forward.7} parent=1 // pred_check_branch
      %6377 = sbr.rel (0) target = $region45
    $region44: #{ttf_head_forward.7} parent=1 // pred_region
      %s6379 = ssub.s32 13824, 13824
      %6380 = vsyncadd [#allocation5], %s6379
      %s6381 = sshll.u32 [#allocation12], 4
      %s6382 = int_to_ptr.vmem [resolvable:$true] %s6381
      %6387 = dma.vmem_to_hbm [thread:$0]  %s6382, 13824, %s5, [#allocation5], 128, 128, 8
    $region45: #{ttf_head_forward.7} parent=1 // pred_fallthru
      _
    // Predicated region
    $region46: #{ttf_head_forward.7} parent=1 // pred_check
      _
    $region47: #{ttf_head_forward.7} parent=1 // pred_check_branch
      %6389 = sbr.rel (0) target = $region49
    $region48: #{ttf_head_forward.7} parent=1 // pred_region
      %6390 = dma.done [#allocation5], 13824
    $region49: #{ttf_head_forward.7} parent=1 // pred_fallthru
      _
    %6391 = vsyncpa [#allocation4], 1
    %6392 = vsyncpa [#allocation7], 1
    %6393 = vsyncpa [#allocation10], 1
    %6394 = vsyncpa [#allocation5], 1

</llo_original>
